<compile_context>
chip_gen: v5e
topology: v5e:2x2
jax: 0.10.0
libtpu: 0.0.40
codegen_flags: <defaults>
</compile_context>

<pallas_src>
import math

import jax
import jax.numpy as jnp
from jax import lax
from jax.experimental import pallas as pl
from jax.experimental.pallas import tpu as pltpu

STAGE_NUM = 3


def _build_kernel(C, N, K, Kpad, NT, stage_num):
    n_chunks = N // NT
    unroll = n_chunks <= 8

    def kernel(x_ref, w1_ref, b1_ref, mu0_ref, w2_ref, b2_ref, o_ref,
               x1_ref, z_ref):
        # x_ref / o_ref blocks: (C, N) (leading batch dim squeezed by BlockSpec).
        # x1_ref: (C, N) bf16 scratch, z_ref: (Kpad, N) bf16 scratch.

        # ---- conv1 (1x1 + bias), N-tiled: only the bf16 result slab is kept ----
        w1_bf = w1_ref[...].astype(jnp.bfloat16)                 # (C, C)
        b1 = b1_ref[...].astype(jnp.float32)                     # (C, 1)

        def conv1_chunk(nt, carry):
            s = pl.multiple_of(nt * NT, NT)
            xc = x_ref[:, pl.ds(s, NT)].astype(jnp.bfloat16)     # (C, NT)
            x1c = jnp.dot(w1_bf, xc, preferred_element_type=jnp.float32) + b1
            x1_ref[:, pl.ds(s, NT)] = x1c.astype(jnp.bfloat16)
            return carry

        lax.fori_loop(0, n_chunks, conv1_chunk, 0, unroll=unroll)

        x1_bf = x1_ref[...]                                      # (C, N) bf16

        # ---- EM iterations (f32 softmax / norms, bf16 MXU operands) ----
        mu = mu0_ref[...].astype(jnp.float32)                    # (C, Kpad)
        if Kpad != K:
            # Mask logits of the zero-padded bases so the K-softmax is exact.
            kmask = lax.broadcasted_iota(jnp.int32, (Kpad, 1), 0) < K

        zT = None
        for _ in range(stage_num):
            # E-step: z^T = mu^T @ x1 (contract C of both; no materialized transpose).
            logits = lax.dot_general(
                mu.astype(jnp.bfloat16), x1_bf,
                dimension_numbers=(((0,), (0,)), ((), ())),
                preferred_element_type=jnp.float32)              # (Kpad, N)
            if Kpad != K:
                logits = jnp.where(kmask, logits, -1e30)
            # softmax over K (sublane axis); exact reciprocal for the denominator.
            zT = jnp.exp(logits - jnp.max(logits, axis=0, keepdims=True))
            zT = zT * pl.reciprocal(jnp.sum(zT, axis=0, keepdims=True))
            # column normalisation (torch: z_ = z / (1e-6 + z.sum(dim=1))).
            z_nrm = zT * pl.reciprocal(
                1e-6 + jnp.sum(zT, axis=1, keepdims=True), approx=True)
            # M-step: mu = x1 @ z_  (contract N of both).
            mu = lax.dot_general(
                x1_bf, z_nrm.astype(jnp.bfloat16),
                dimension_numbers=(((1,), (1,)), ((), ())),
                preferred_element_type=jnp.float32)              # (C, Kpad)
            # l2-norm over channels, exactly as torch: mu / (1e-6 + ||mu||).
            mu = mu * pl.reciprocal(
                1e-6 + jnp.sqrt(jnp.sum(mu * mu, axis=0, keepdims=True)))

        # ---- reconstruction + ReLU + conv2(+BN), N-tiled epilogue ----
        z_ref[...] = zT.astype(jnp.bfloat16)
        mu_bf = mu.astype(jnp.bfloat16)
        w2_bf = w2_ref[...].astype(jnp.bfloat16)
        b2 = b2_ref[...].astype(jnp.float32)

        def epilogue_chunk(nt, carry):
            s = pl.multiple_of(nt * NT, NT)
            zc = z_ref[:, pl.ds(s, NT)]                          # (Kpad, NT)
            yc = jnp.dot(mu_bf, zc, preferred_element_type=jnp.float32)
            yc = jnp.maximum(yc, 0.0).astype(jnp.bfloat16)       # ReLU
            oc = jnp.dot(w2_bf, yc, preferred_element_type=jnp.float32) + b2
            o_ref[:, pl.ds(s, NT)] = oc.astype(o_ref.dtype)
            return carry

        lax.fori_loop(0, n_chunks, epilogue_chunk, 0, unroll=unroll)

    return kernel


def ema_forward(x, w1, b1, mu0, w2_eff, b2_eff, *, stage_num=STAGE_NUM,
                n_chunk=512):
    B, C, H, W = x.shape
    N = H * W
    K = mu0.shape[1]

    # Lane-dense bases: pad K up to a multiple of 128 (exact; padded bases stay 0).
    Kpad = max(128, -(-K // 128) * 128)
    if Kpad != K:
        mu0 = jnp.pad(mu0, ((0, 0), (0, Kpad - K)))

    # Chunk width for the in-kernel conv1 / epilogue N-tiling (multiple of 128).
    NT = n_chunk if (N % n_chunk == 0 and N > n_chunk) else N

    # bf16 MXU operands are cast once in the wrapper (halves weight buffers/DMA);
    # x / out keep the caller's dtype (pass bf16 activations for bf16 I/O).
    w1 = w1.astype(jnp.bfloat16)
    w2_eff = w2_eff.astype(jnp.bfloat16)
    b1 = b1.astype(jnp.float32)
    b2_eff = b2_eff.astype(jnp.float32)
    mu0 = mu0.astype(jnp.float32)

    x_flat = x.reshape(B, C, N)
    kernel = _build_kernel(C, N, K, Kpad, NT, stage_num)

    out = pl.pallas_call(
        kernel,
        out_shape=jax.ShapeDtypeStruct((B, C, N), x.dtype),
        grid_spec=pltpu.PrefetchScalarGridSpec(
            num_scalar_prefetch=0,
            grid=(B,),
            in_specs=[
                pl.BlockSpec((None, C, N), lambda b: (b, 0, 0)),   # x (per batch)
                pl.BlockSpec((C, C), lambda b: (0, 0)),            # conv1 weight (bf16)
                pl.BlockSpec((C, 1), lambda b: (0, 0)),            # conv1 bias
                pl.BlockSpec((C, Kpad), lambda b: (0, 0)),         # mu bases (padded)
                pl.BlockSpec((C, C), lambda b: (0, 0)),            # conv2 weight (BN folded, bf16)
                pl.BlockSpec((C, 1), lambda b: (0, 0)),            # conv2 bias   (BN folded)
            ],
            out_specs=pl.BlockSpec((None, C, N), lambda b: (b, 0, 0)),
            scratch_shapes=[
                pltpu.VMEM((C, N), jnp.bfloat16),      # x1 = conv1 output (bf16 only)
                pltpu.VMEM((Kpad, N), jnp.bfloat16),   # final responsibilities z^T
            ],
        ),
        compiler_params=pltpu.CompilerParams(
            dimension_semantics=("parallel",),          # batch -> 2 TCs on v7x
            vmem_limit_bytes=48 * 1024 * 1024,          # headroom vs v7x 64 MiB
        ),
    )(x_flat, w1, b1, mu0, w2_eff, b2_eff)

    return out.reshape(B, C, H, W)


def make_params(key, c, k):
    """Deterministic parameter init mirroring EMA.__init__ shapes (eval mode)."""
    k_mu, k_w1, k_b1, k_w2 = jax.random.split(key, 4)

    # mu: normal(0, sqrt(2/k)) then l2-norm over channel dim (dim=0)
    mu = jax.random.normal(k_mu, (c, k), jnp.float32) * math.sqrt(2.0 / k)
    mu = mu / (1e-6 + jnp.sqrt(jnp.sum(mu * mu, axis=0, keepdims=True)))

    # conv weights: normal(0, sqrt(2/n)), n = 1*1*out_channels = c
    w1 = jax.random.normal(k_w1, (c, c), jnp.float32) * math.sqrt(2.0 / c)
    b1 = jax.random.normal(k_b1, (c, 1), jnp.float32) * 0.1
    w2 = jax.random.normal(k_w2, (c, c), jnp.float32) * math.sqrt(2.0 / c)

    # BatchNorm2d defaults: gamma=1, beta=0, running_mean=0, running_var=1, eps=1e-5
    gamma = jnp.ones((c,), jnp.float32)
    beta = jnp.zeros((c,), jnp.float32)
    running_mean = jnp.zeros((c,), jnp.float32)
    running_var = jnp.ones((c,), jnp.float32)
    eps = 1e-5

    # Fold eval-mode BN into conv2 (no bias): y = scale*(W2 x) + (beta - scale*rm)
    scale = gamma / jnp.sqrt(running_var + eps)
    w2_eff = scale[:, None] * w2
    b2_eff = (beta - scale * running_mean)[:, None]

    return mu, w1, b1, w2_eff, b2_eff


if __name__ == "__main__":
    B, C, H, W = 2, 32, 32, 32     # N = 1024 -> 2 epilogue chunks of 512 lanes
    K = 16                          # padded to Kpad = 128 inside the wrapper

    key = jax.random.PRNGKey(0)
    k_params, k_x = jax.random.split(key)

    mu, w1, b1, w2_eff, b2_eff = make_params(k_params, C, K)
    # bf16 activations -> bf16 HBM I/O (the model's compute dtype).
    x = jax.random.normal(k_x, (B, C, H, W), jnp.float32).astype(jnp.bfloat16)

    out = ema_forward(x, w1, b1, mu, w2_eff, b2_eff)
    jax.block_until_ready(out)

    assert out.shape == (B, C, H, W)
    assert out.dtype == x.dtype
    assert bool(jnp.all(jnp.isfinite(out.astype(jnp.float32))))
    print("KERNEL_OK")
</pallas_src>

<mosaic_0001>
module attributes {stable_mosaic.version = 11 : i64} {
  func.func @kernel(%arg0: i32, %arg1: memref<1x32x1024xbf16, #tpu.memory_space<vmem>>, %arg2: memref<32x32xbf16, #tpu.memory_space<vmem>>, %arg3: memref<32x1xf32, #tpu.memory_space<vmem>>, %arg4: memref<32x128xf32, #tpu.memory_space<vmem>>, %arg5: memref<32x32xbf16, #tpu.memory_space<vmem>>, %arg6: memref<32x1xf32, #tpu.memory_space<vmem>>, %arg7: memref<1x32x1024xbf16, #tpu.memory_space<vmem>>, %arg8: memref<32x1024xbf16, #tpu.memory_space<vmem>>, %arg9: memref<128x1024xbf16, #tpu.memory_space<vmem>>) attributes {dimension_semantics = [#tpu.dimension_semantics<parallel>], iteration_bounds = array<i64: 2>, scalar_prefetch = 0 : i64, scratch_operands = 2 : i64, tpu.core_type = #tpu.core_type<tc>, window_params = [{transform_indices = @transform_0, window_bounds = array<i64: 1, 32, 1024>}, {pipeline_mode = #tpu.pipeline_mode<synchronous>, transform_indices = @transform_1, window_bounds = array<i64: 32, 32>}, {pipeline_mode = #tpu.pipeline_mode<synchronous>, transform_indices = @transform_2, window_bounds = array<i64: 32, 1>}, {pipeline_mode = #tpu.pipeline_mode<synchronous>, transform_indices = @transform_3, window_bounds = array<i64: 32, 128>}, {pipeline_mode = #tpu.pipeline_mode<synchronous>, transform_indices = @transform_4, window_bounds = array<i64: 32, 32>}, {pipeline_mode = #tpu.pipeline_mode<synchronous>, transform_indices = @transform_5, window_bounds = array<i64: 32, 1>}, {transform_indices = @transform_6, window_bounds = array<i64: 1, 32, 1024>}]} {
    %c0 = arith.constant 0 : index
    %c0_0 = arith.constant 0 : index
    %0 = vector.load %arg2[%c0, %c0_0] : memref<32x32xbf16, #tpu.memory_space<vmem>>, vector<32x32xbf16>
    %c0_1 = arith.constant 0 : index
    %c0_2 = arith.constant 0 : index
    %1 = vector.load %arg3[%c0_1, %c0_2] : memref<32x1xf32, #tpu.memory_space<vmem>>, vector<32x1xf32>
    %c0_i32 = arith.constant 0 : i32
    %c512_i32 = arith.constant 512 : i32
    %2 = arith.muli %c0_i32, %c512_i32 : i32
    %3 = tpu.assume_multiple %2, 512 : i32
    %c0_3 = arith.constant 0 : index
    %c0_4 = arith.constant 0 : index
    %4 = arith.index_cast %3 : i32 to index
    %5 = vector.load %arg1[%c0_3, %c0_4, %4] : memref<1x32x1024xbf16, #tpu.memory_space<vmem>>, vector<1x32x512xbf16>
    %6 = vector.shape_cast %5 : vector<1x32x512xbf16> to vector<32x512xbf16>
    %cst = arith.constant dense<0.000000e+00> : vector<32x512xf32>
    %7 = tpu.matmul %0, %6, %cst {dimension_numbers = #tpu.dot_dimension_numbers<[1], [0], [0], [1], [0, 0, 1, 1], [], []>} : vector<32x32xbf16>, vector<32x512xbf16>, vector<32x512xf32> -> vector<32x512xf32>
    %8 = vector.broadcast %1 : vector<32x1xf32> to vector<32x512xf32>
    %9 = arith.addf %7, %8 : vector<32x512xf32>
    %10 = arith.truncf %9 : vector<32x512xf32> to vector<32x512xbf16>
    %c0_5 = arith.constant 0 : index
    %11 = arith.index_cast %3 : i32 to index
    %12 = vector.load %arg8[%c0_5, %11] : memref<32x1024xbf16, #tpu.memory_space<vmem>>, vector<32x512xbf16>
    tpu.vector_store %arg8[%c0_5, %11], %10 {strides = array<i32>} : memref<32x1024xbf16, #tpu.memory_space<vmem>>, vector<32x512xbf16>,
    %c1_i32 = arith.constant 1 : i32
    %c512_i32_6 = arith.constant 512 : i32
    %13 = arith.muli %c1_i32, %c512_i32_6 : i32
    %14 = tpu.assume_multiple %13, 512 : i32
    %c0_7 = arith.constant 0 : index
    %c0_8 = arith.constant 0 : index
    %15 = arith.index_cast %14 : i32 to index
    %16 = vector.load %arg1[%c0_7, %c0_8, %15] : memref<1x32x1024xbf16, #tpu.memory_space<vmem>>, vector<1x32x512xbf16>
    %17 = vector.shape_cast %16 : vector<1x32x512xbf16> to vector<32x512xbf16>
    %cst_9 = arith.constant dense<0.000000e+00> : vector<32x512xf32>
    %18 = tpu.matmul %0, %17, %cst_9 {dimension_numbers = #tpu.dot_dimension_numbers<[1], [0], [0], [1], [0, 0, 1, 1], [], []>} : vector<32x32xbf16>, vector<32x512xbf16>, vector<32x512xf32> -> vector<32x512xf32>
    %19 = vector.broadcast %1 : vector<32x1xf32> to vector<32x512xf32>
    %20 = arith.addf %18, %19 : vector<32x512xf32>
    %21 = arith.truncf %20 : vector<32x512xf32> to vector<32x512xbf16>
    %c0_10 = arith.constant 0 : index
    %22 = arith.index_cast %14 : i32 to index
    %23 = vector.load %arg8[%c0_10, %22] : memref<32x1024xbf16, #tpu.memory_space<vmem>>, vector<32x512xbf16>
    tpu.vector_store %arg8[%c0_10, %22], %21 {strides = array<i32>} : memref<32x1024xbf16, #tpu.memory_space<vmem>>, vector<32x512xbf16>,
    %c2_i32 = arith.constant 2 : i32
    %c0_11 = arith.constant 0 : index
    %c0_12 = arith.constant 0 : index
    %24 = vector.load %arg8[%c0_11, %c0_12] : memref<32x1024xbf16, #tpu.memory_space<vmem>>, vector<32x1024xbf16>
    %c0_13 = arith.constant 0 : index
    %c0_14 = arith.constant 0 : index
    %25 = vector.load %arg4[%c0_13, %c0_14] : memref<32x128xf32, #tpu.memory_space<vmem>>, vector<32x128xf32>
    %26 = tpu.iota {dimensions = array<i32: 0>} : vector<128x1xi32>
    %c16_i32 = arith.constant 16 : i32
    %27 = vector.broadcast %c16_i32 : i32 to vector<128x1xi32>
    %28 = arith.cmpi slt, %26, %27 : vector<128x1xi32>
    %29 = arith.truncf %25 : vector<32x128xf32> to vector<32x128xbf16>
    %cst_15 = arith.constant dense<0.000000e+00> : vector<128x1024xf32>
    %30 = tpu.matmul %29, %24, %cst_15 {dimension_numbers = #tpu.dot_dimension_numbers<[0], [0], [1], [1], [0, 1, 1, 1], [], []>} : vector<32x128xbf16>, vector<32x1024xbf16>, vector<128x1024xf32> -> vector<128x1024xf32>
    %cst_16 = arith.constant -1.000000e+30 : f32
    %31 = vector.shape_cast %28 : vector<128x1xi1> to vector<128x1xi1>
    %32 = vector.broadcast %31 : vector<128x1xi1> to vector<128x1024xi1>
    %33 = vector.broadcast %cst_16 : f32 to vector<128x1024xf32>
    %34 = arith.select %32, %30, %33 : vector<128x1024xi1>, vector<128x1024xf32>
    %cst_17 = arith.constant dense<0xFF800000> : vector<1024xf32>
    %35 = vector.multi_reduction <maximumf>, %34, %cst_17 [0] : vector<128x1024xf32> to vector<1024xf32>
    %36 = vector.shape_cast %35 : vector<1024xf32> to vector<1x1024xf32>
    %37 = vector.broadcast %36 : vector<1x1024xf32> to vector<128x1024xf32>
    %38 = arith.subf %34, %37 : vector<128x1024xf32>
    %39 = math.exp %38 : vector<128x1024xf32>
    %cst_18 = arith.constant dense<0.000000e+00> : vector<1024xf32>
    %40 = vector.multi_reduction <add>, %39, %cst_18 [0] : vector<128x1024xf32> to vector<1024xf32>
    %41 = vector.shape_cast %40 : vector<1024xf32> to vector<1x1024xf32>
    %42 = tpu.reciprocal %41 : vector<1x1024xf32> -> vector<1x1024xf32>
    %43 = vector.broadcast %42 : vector<1x1024xf32> to vector<128x1024xf32>
    %44 = arith.mulf %39, %43 : vector<128x1024xf32>
    %cst_19 = arith.constant dense<0.000000e+00> : vector<128xf32>
    %45 = vector.multi_reduction <add>, %44, %cst_19 [1] : vector<128x1024xf32> to vector<128xf32>
    %46 = vector.shape_cast %45 : vector<128xf32> to vector<128x1xf32>
    %cst_20 = arith.constant 9.99999997E-7 : f32
    %47 = vector.broadcast %cst_20 : f32 to vector<128x1xf32>
    %48 = arith.addf %47, %46 : vector<128x1xf32>
    %49 = tpu.reciprocal %48 {approx = true} : vector<128x1xf32> -> vector<128x1xf32>
    %50 = vector.broadcast %49 : vector<128x1xf32> to vector<128x1024xf32>
    %51 = arith.mulf %44, %50 : vector<128x1024xf32>
    %52 = arith.truncf %51 : vector<128x1024xf32> to vector<128x1024xbf16>
    %cst_21 = arith.constant dense<0.000000e+00> : vector<32x128xf32>
    %53 = tpu.matmul %24, %52, %cst_21 {dimension_numbers = #tpu.dot_dimension_numbers<[1], [1], [0], [0], [0, 0, 1, 0], [], []>} : vector<32x1024xbf16>, vector<128x1024xbf16>, vector<32x128xf32> -> vector<32x128xf32>
    %54 = arith.mulf %53, %53 : vector<32x128xf32>
    %cst_22 = arith.constant dense<0.000000e+00> : vector<128xf32>
    %55 = vector.multi_reduction <add>, %54, %cst_22 [0] : vector<32x128xf32> to vector<128xf32>
    %56 = vector.shape_cast %55 : vector<128xf32> to vector<1x128xf32>
    %57 = math.sqrt %56 : vector<1x128xf32>
    %cst_23 = arith.constant 9.99999997E-7 : f32
    %58 = vector.broadcast %cst_23 : f32 to vector<1x128xf32>
    %59 = arith.addf %58, %57 : vector<1x128xf32>
    %60 = tpu.reciprocal %59 : vector<1x128xf32> -> vector<1x128xf32>
    %61 = vector.broadcast %60 : vector<1x128xf32> to vector<32x128xf32>
    %62 = arith.mulf %53, %61 : vector<32x128xf32>
    %63 = arith.truncf %62 : vector<32x128xf32> to vector<32x128xbf16>
    %cst_24 = arith.constant dense<0.000000e+00> : vector<128x1024xf32>
    %64 = tpu.matmul %63, %24, %cst_24 {dimension_numbers = #tpu.dot_dimension_numbers<[0], [0], [1], [1], [0, 1, 1, 1], [], []>} : vector<32x128xbf16>, vector<32x1024xbf16>, vector<128x1024xf32> -> vector<128x1024xf32>
    %cst_25 = arith.constant -1.000000e+30 : f32
    %65 = vector.shape_cast %28 : vector<128x1xi1> to vector<128x1xi1>
    %66 = vector.broadcast %65 : vector<128x1xi1> to vector<128x1024xi1>
    %67 = vector.broadcast %cst_25 : f32 to vector<128x1024xf32>
    %68 = arith.select %66, %64, %67 : vector<128x1024xi1>, vector<128x1024xf32>
    %cst_26 = arith.constant dense<0xFF800000> : vector<1024xf32>
    %69 = vector.multi_reduction <maximumf>, %68, %cst_26 [0] : vector<128x1024xf32> to vector<1024xf32>
    %70 = vector.shape_cast %69 : vector<1024xf32> to vector<1x1024xf32>
    %71 = vector.broadcast %70 : vector<1x1024xf32> to vector<128x1024xf32>
    %72 = arith.subf %68, %71 : vector<128x1024xf32>
    %73 = math.exp %72 : vector<128x1024xf32>
    %cst_27 = arith.constant dense<0.000000e+00> : vector<1024xf32>
    %74 = vector.multi_reduction <add>, %73, %cst_27 [0] : vector<128x1024xf32> to vector<1024xf32>
    %75 = vector.shape_cast %74 : vector<1024xf32> to vector<1x1024xf32>
    %76 = tpu.reciprocal %75 : vector<1x1024xf32> -> vector<1x1024xf32>
    %77 = vector.broadcast %76 : vector<1x1024xf32> to vector<128x1024xf32>
    %78 = arith.mulf %73, %77 : vector<128x1024xf32>
    %cst_28 = arith.constant dense<0.000000e+00> : vector<128xf32>
    %79 = vector.multi_reduction <add>, %78, %cst_28 [1] : vector<128x1024xf32> to vector<128xf32>
    %80 = vector.shape_cast %79 : vector<128xf32> to vector<128x1xf32>
    %cst_29 = arith.constant 9.99999997E-7 : f32
    %81 = vector.broadcast %cst_29 : f32 to vector<128x1xf32>
    %82 = arith.addf %81, %80 : vector<128x1xf32>
    %83 = tpu.reciprocal %82 {approx = true} : vector<128x1xf32> -> vector<128x1xf32>
    %84 = vector.broadcast %83 : vector<128x1xf32> to vector<128x1024xf32>
    %85 = arith.mulf %78, %84 : vector<128x1024xf32>
    %86 = arith.truncf %85 : vector<128x1024xf32> to vector<128x1024xbf16>
    %cst_30 = arith.constant dense<0.000000e+00> : vector<32x128xf32>
    %87 = tpu.matmul %24, %86, %cst_30 {dimension_numbers = #tpu.dot_dimension_numbers<[1], [1], [0], [0], [0, 0, 1, 0], [], []>} : vector<32x1024xbf16>, vector<128x1024xbf16>, vector<32x128xf32> -> vector<32x128xf32>
    %88 = arith.mulf %87, %87 : vector<32x128xf32>
    %cst_31 = arith.constant dense<0.000000e+00> : vector<128xf32>
    %89 = vector.multi_reduction <add>, %88, %cst_31 [0] : vector<32x128xf32> to vector<128xf32>
    %90 = vector.shape_cast %89 : vector<128xf32> to vector<1x128xf32>
    %91 = math.sqrt %90 : vector<1x128xf32>
    %cst_32 = arith.constant 9.99999997E-7 : f32
    %92 = vector.broadcast %cst_32 : f32 to vector<1x128xf32>
    %93 = arith.addf %92, %91 : vector<1x128xf32>
    %94 = tpu.reciprocal %93 : vector<1x128xf32> -> vector<1x128xf32>
    %95 = vector.broadcast %94 : vector<1x128xf32> to vector<32x128xf32>
    %96 = arith.mulf %87, %95 : vector<32x128xf32>
    %97 = arith.truncf %96 : vector<32x128xf32> to vector<32x128xbf16>
    %cst_33 = arith.constant dense<0.000000e+00> : vector<128x1024xf32>
    %98 = tpu.matmul %97, %24, %cst_33 {dimension_numbers = #tpu.dot_dimension_numbers<[0], [0], [1], [1], [0, 1, 1, 1], [], []>} : vector<32x128xbf16>, vector<32x1024xbf16>, vector<128x1024xf32> -> vector<128x1024xf32>
    %cst_34 = arith.constant -1.000000e+30 : f32
    %99 = vector.shape_cast %28 : vector<128x1xi1> to vector<128x1xi1>
    %100 = vector.broadcast %99 : vector<128x1xi1> to vector<128x1024xi1>
    %101 = vector.broadcast %cst_34 : f32 to vector<128x1024xf32>
    %102 = arith.select %100, %98, %101 : vector<128x1024xi1>, vector<128x1024xf32>
    %cst_35 = arith.constant dense<0xFF800000> : vector<1024xf32>
    %103 = vector.multi_reduction <maximumf>, %102, %cst_35 [0] : vector<128x1024xf32> to vector<1024xf32>
    %104 = vector.shape_cast %103 : vector<1024xf32> to vector<1x1024xf32>
    %105 = vector.broadcast %104 : vector<1x1024xf32> to vector<128x1024xf32>
    %106 = arith.subf %102, %105 : vector<128x1024xf32>
    %107 = math.exp %106 : vector<128x1024xf32>
    %cst_36 = arith.constant dense<0.000000e+00> : vector<1024xf32>
    %108 = vector.multi_reduction <add>, %107, %cst_36 [0] : vector<128x1024xf32> to vector<1024xf32>
    %109 = vector.shape_cast %108 : vector<1024xf32> to vector<1x1024xf32>
    %110 = tpu.reciprocal %109 : vector<1x1024xf32> -> vector<1x1024xf32>
    %111 = vector.broadcast %110 : vector<1x1024xf32> to vector<128x1024xf32>
    %112 = arith.mulf %107, %111 : vector<128x1024xf32>
    %cst_37 = arith.constant dense<0.000000e+00> : vector<128xf32>
    %113 = vector.multi_reduction <add>, %112, %cst_37 [1] : vector<128x1024xf32> to vector<128xf32>
    %114 = vector.shape_cast %113 : vector<128xf32> to vector<128x1xf32>
    %cst_38 = arith.constant 9.99999997E-7 : f32
    %115 = vector.broadcast %cst_38 : f32 to vector<128x1xf32>
    %116 = arith.addf %115, %114 : vector<128x1xf32>
    %117 = tpu.reciprocal %116 {approx = true} : vector<128x1xf32> -> vector<128x1xf32>
    %118 = vector.broadcast %117 : vector<128x1xf32> to vector<128x1024xf32>
    %119 = arith.mulf %112, %118 : vector<128x1024xf32>
    %120 = arith.truncf %119 : vector<128x1024xf32> to vector<128x1024xbf16>
    %cst_39 = arith.constant dense<0.000000e+00> : vector<32x128xf32>
    %121 = tpu.matmul %24, %120, %cst_39 {dimension_numbers = #tpu.dot_dimension_numbers<[1], [1], [0], [0], [0, 0, 1, 0], [], []>} : vector<32x1024xbf16>, vector<128x1024xbf16>, vector<32x128xf32> -> vector<32x128xf32>
    %122 = arith.mulf %121, %121 : vector<32x128xf32>
    %cst_40 = arith.constant dense<0.000000e+00> : vector<128xf32>
    %123 = vector.multi_reduction <add>, %122, %cst_40 [0] : vector<32x128xf32> to vector<128xf32>
    %124 = vector.shape_cast %123 : vector<128xf32> to vector<1x128xf32>
    %125 = math.sqrt %124 : vector<1x128xf32>
    %cst_41 = arith.constant 9.99999997E-7 : f32
    %126 = vector.broadcast %cst_41 : f32 to vector<1x128xf32>
    %127 = arith.addf %126, %125 : vector<1x128xf32>
    %128 = tpu.reciprocal %127 : vector<1x128xf32> -> vector<1x128xf32>
    %129 = vector.broadcast %128 : vector<1x128xf32> to vector<32x128xf32>
    %130 = arith.mulf %121, %129 : vector<32x128xf32>
    %131 = arith.truncf %112 : vector<128x1024xf32> to vector<128x1024xbf16>
    %c0_42 = arith.constant 0 : index
    %c0_43 = arith.constant 0 : index
    %132 = vector.load %arg9[%c0_42, %c0_43] : memref<128x1024xbf16, #tpu.memory_space<vmem>>, vector<128x1024xbf16>
    tpu.vector_store %arg9[%c0_42, %c0_43], %131 {strides = array<i32>} : memref<128x1024xbf16, #tpu.memory_space<vmem>>, vector<128x1024xbf16>,
    %133 = arith.truncf %130 : vector<32x128xf32> to vector<32x128xbf16>
    %c0_44 = arith.constant 0 : index
    %c0_45 = arith.constant 0 : index
    %134 = vector.load %arg5[%c0_44, %c0_45] : memref<32x32xbf16, #tpu.memory_space<vmem>>, vector<32x32xbf16>
    %c0_46 = arith.constant 0 : index
    %c0_47 = arith.constant 0 : index
    %135 = vector.load %arg6[%c0_46, %c0_47] : memref<32x1xf32, #tpu.memory_space<vmem>>, vector<32x1xf32>
    %c0_i32_48 = arith.constant 0 : i32
    %c512_i32_49 = arith.constant 512 : i32
    %136 = arith.muli %c0_i32_48, %c512_i32_49 : i32
    %137 = tpu.assume_multiple %136, 512 : i32
    %c0_50 = arith.constant 0 : index
    %138 = arith.index_cast %137 : i32 to index
    %139 = vector.load %arg9[%c0_50, %138] : memref<128x1024xbf16, #tpu.memory_space<vmem>>, vector<128x512xbf16>
    %cst_51 = arith.constant dense<0.000000e+00> : vector<32x512xf32>
    %140 = tpu.matmul %133, %139, %cst_51 {dimension_numbers = #tpu.dot_dimension_numbers<[1], [0], [0], [1], [0, 0, 1, 1], [], []>} : vector<32x128xbf16>, vector<128x512xbf16>, vector<32x512xf32> -> vector<32x512xf32>
    %cst_52 = arith.constant 0.000000e+00 : f32
    %141 = vector.broadcast %cst_52 : f32 to vector<32x512xf32>
    %142 = arith.maximumf %140, %141 : vector<32x512xf32>
    %143 = arith.truncf %142 : vector<32x512xf32> to vector<32x512xbf16>
    %cst_53 = arith.constant dense<0.000000e+00> : vector<32x512xf32>
    %144 = tpu.matmul %134, %143, %cst_53 {dimension_numbers = #tpu.dot_dimension_numbers<[1], [0], [0], [1], [0, 0, 1, 1], [], []>} : vector<32x32xbf16>, vector<32x512xbf16>, vector<32x512xf32> -> vector<32x512xf32>
    %145 = vector.broadcast %135 : vector<32x1xf32> to vector<32x512xf32>
    %146 = arith.addf %144, %145 : vector<32x512xf32>
    %147 = arith.truncf %146 : vector<32x512xf32> to vector<32x512xbf16>
    %c0_54 = arith.constant 0 : index
    %c0_55 = arith.constant 0 : index
    %148 = arith.index_cast %137 : i32 to index
    %149 = vector.load %arg7[%c0_54, %c0_55, %148] : memref<1x32x1024xbf16, #tpu.memory_space<vmem>>, vector<1x32x512xbf16>
    %150 = vector.shape_cast %149 : vector<1x32x512xbf16> to vector<32x512xbf16>
    %151 = vector.shape_cast %147 : vector<32x512xbf16> to vector<1x32x512xbf16>
    tpu.vector_store %arg7[%c0_54, %c0_55, %148], %151 {strides = array<i32>} : memref<1x32x1024xbf16, #tpu.memory_space<vmem>>, vector<1x32x512xbf16>,
    %c1_i32_56 = arith.constant 1 : i32
    %c512_i32_57 = arith.constant 512 : i32
    %152 = arith.muli %c1_i32_56, %c512_i32_57 : i32
    %153 = tpu.assume_multiple %152, 512 : i32
    %c0_58 = arith.constant 0 : index
    %154 = arith.index_cast %153 : i32 to index
    %155 = vector.load %arg9[%c0_58, %154] : memref<128x1024xbf16, #tpu.memory_space<vmem>>, vector<128x512xbf16>
    %cst_59 = arith.constant dense<0.000000e+00> : vector<32x512xf32>
    %156 = tpu.matmul %133, %155, %cst_59 {dimension_numbers = #tpu.dot_dimension_numbers<[1], [0], [0], [1], [0, 0, 1, 1], [], []>} : vector<32x128xbf16>, vector<128x512xbf16>, vector<32x512xf32> -> vector<32x512xf32>
    %cst_60 = arith.constant 0.000000e+00 : f32
    %157 = vector.broadcast %cst_60 : f32 to vector<32x512xf32>
    %158 = arith.maximumf %156, %157 : vector<32x512xf32>
    %159 = arith.truncf %158 : vector<32x512xf32> to vector<32x512xbf16>
    %cst_61 = arith.constant dense<0.000000e+00> : vector<32x512xf32>
    %160 = tpu.matmul %134, %159, %cst_61 {dimension_numbers = #tpu.dot_dimension_numbers<[1], [0], [0], [1], [0, 0, 1, 1], [], []>} : vector<32x32xbf16>, vector<32x512xbf16>, vector<32x512xf32> -> vector<32x512xf32>
    %161 = vector.broadcast %135 : vector<32x1xf32> to vector<32x512xf32>
    %162 = arith.addf %160, %161 : vector<32x512xf32>
    %163 = arith.truncf %162 : vector<32x512xf32> to vector<32x512xbf16>
    %c0_62 = arith.constant 0 : index
    %c0_63 = arith.constant 0 : index
    %164 = arith.index_cast %153 : i32 to index
    %165 = vector.load %arg7[%c0_62, %c0_63, %164] : memref<1x32x1024xbf16, #tpu.memory_space<vmem>>, vector<1x32x512xbf16>
    %166 = vector.shape_cast %165 : vector<1x32x512xbf16> to vector<32x512xbf16>
    %167 = vector.shape_cast %163 : vector<32x512xbf16> to vector<1x32x512xbf16>
    tpu.vector_store %arg7[%c0_62, %c0_63, %164], %167 {strides = array<i32>} : memref<1x32x1024xbf16, #tpu.memory_space<vmem>>, vector<1x32x512xbf16>,
    %c2_i32_64 = arith.constant 2 : i32
    return
  }
  func.func @transform_0(%arg0: i32) -> (i32, i32, i32) {
    %c0_i32 = arith.constant 0 : i32
    %c0_i32_0 = arith.constant 0 : i32
    %c0_i32_1 = arith.constant 0 : i32
    return %arg0, %c0_i32, %c0_i32_0 : i32, i32, i32
  }
  func.func @transform_1(%arg0: i32) -> (i32, i32) {
    %c0_i32 = arith.constant 0 : i32
    %c0_i32_0 = arith.constant 0 : i32
    %c0_i32_1 = arith.constant 0 : i32
    return %c0_i32, %c0_i32_0 : i32, i32
  }
  func.func @transform_2(%arg0: i32) -> (i32, i32) {
    %c0_i32 = arith.constant 0 : i32
    %c0_i32_0 = arith.constant 0 : i32
    %c0_i32_1 = arith.constant 0 : i32
    return %c0_i32, %c0_i32_0 : i32, i32
  }
  func.func @transform_3(%arg0: i32) -> (i32, i32) {
    %c0_i32 = arith.constant 0 : i32
    %c0_i32_0 = arith.constant 0 : i32
    %c0_i32_1 = arith.constant 0 : i32
    return %c0_i32, %c0_i32_0 : i32, i32
  }
  func.func @transform_4(%arg0: i32) -> (i32, i32) {
    %c0_i32 = arith.constant 0 : i32
    %c0_i32_0 = arith.constant 0 : i32
    %c0_i32_1 = arith.constant 0 : i32
    return %c0_i32, %c0_i32_0 : i32, i32
  }
  func.func @transform_5(%arg0: i32) -> (i32, i32) {
    %c0_i32 = arith.constant 0 : i32
    %c0_i32_0 = arith.constant 0 : i32
    %c0_i32_1 = arith.constant 0 : i32
    return %c0_i32, %c0_i32_0 : i32, i32
  }
  func.func @transform_6(%arg0: i32) -> (i32, i32, i32) {
    %c0_i32 = arith.constant 0 : i32
    %c0_i32_0 = arith.constant 0 : i32
    %c0_i32_1 = arith.constant 0 : i32
    return %arg0, %c0_i32, %c0_i32_0 : i32, i32, i32
  }
}

</mosaic_0001>

<llo_original>
// kernel: tpu_custom_call.1
$region0: #{tpu_custom_call.1}
  #allocation0 [shape = 'u32[]', space=smem, size = 0x4, offset = 0x4, fixed_abs, tag = 'smem constant byte address 0x4 - core index']
  #allocation1 [shape = 'u32[72,128]{1,0:T(1,128)}', space=vmem, size = 0x9000, scoped, tag = 'internal scratch']
  #allocation2 [shape = 'bf16[32,1024]{1,0:T(8,128)(2,1)}', space=vmem, size = 0x10000, scoped, tag = 'scratch operand']
  #allocation3 [shape = 'bf16[128,1024]{1,0:T(8,128)(2,1)}', space=vmem, size = 0x40000, scoped, tag = 'scratch operand']
  %s0 = inlined_call_operand.hbm [shape: bf16[2,32,1024], index: 0, kind: input, shape index: {}]
  %s1 = inlined_call_operand.vmem [shape: bf16[32,32], index: 1, kind: input, shape index: {}]
  %s2 = inlined_call_operand.vmem [shape: f32[32,1], index: 2, kind: input, shape index: {}]
  %s3 = inlined_call_operand.vmem [shape: f32[32,128], index: 3, kind: input, shape index: {}]
  %s4 = inlined_call_operand.vmem [shape: bf16[32,32], index: 4, kind: input, shape index: {}]
  %s5 = inlined_call_operand.vmem [shape: f32[32,1], index: 5, kind: input, shape index: {}]
  %s6 = inlined_call_operand.hbm [shape: bf16[2,32,1024], index: 6, kind: output, shape index: {}]
  %s7 = sld [smem:[#allocation0]]
  $region61: #{tpu_custom_call.1} parent=0
    _
  %s9 = ssub.s32 1, %s7
  %s10 = scalar_select 0, %s9, %s7
  $region1: #{tpu_custom_call.1} parent=0
    #allocation4 [shape = 'u8[131072]{0}', space=vmem, size = 0x20000, scoped, tag = 'input window, operand 0']
    #allocation5 [shape = 's32[2]{0}', space=sflag, size = 0x8, scoped, tag = 'scoped memory for tpu_custom_call.1']
    #allocation6 [shape = 's32[2]{0}', space=sflag, size = 0x8, scoped, tag = 'scoped memory for tpu_custom_call.1']
    #allocation7 [shape = 'u8[131072]{0}', space=vmem, size = 0x20000, scoped, tag = 'output window, operand 0']
    %11 = vsyncpa [#allocation5], 0
    %s12 = scalar_lea.sflag [#allocation5], 1
    %13 = vsyncpa %s12, 0
    %14 = vsyncpa [#allocation6], 0
    %s15 = scalar_lea.sflag [#allocation6], 1
    %16 = vsyncpa %s15, 0
    loop: start=0, step=1, limit=4
    $region2: #{tpu_custom_call.1} parent=1 // loop_pre_header
      _
    $region3: #{tpu_custom_call.1} parent=1 // loop_header
      %s18 = sphi 0, %s22
      %p19 = scmp.ge.s32.totalorder %s18, 4
      %s28 = sphi 0, %s30
      %s31 = sphi 0, %s28
      %s32 = sphi 0, %s31
      %s48 = sphi 0, %s32
      %s52 = sphi 0, %s52
      %s54 = sphi 0, %s52
      %s55 = sphi 0, %s54
      %s69 = sphi 0, %s55
      %s73 = sphi 0, %s73
      %s75 = sphi 0, %s73
      %s76 = sphi 0, %s75
      %s90 = sphi 0, %s76
      %s94 = sphi 0, %s94
      %s96 = sphi 0, %s94
      %s97 = sphi 0, %s96
      %s111 = sphi 0, %s97
      %s115 = sphi 0, %s115
      %s117 = sphi 0, %s115
      %s118 = sphi 0, %s117
      %s132 = sphi 0, %s118
      %s136 = sphi 0, %s136
      %s138 = sphi 0, %s136
      %s139 = sphi 0, %s138
      %s153 = sphi 0, %s139
      %s159 = sphi 0, %s161
      %s162 = sphi 0, %s159
      %s163 = sphi 0, %s162
      %s179 = sphi 0, %s163
    $region4: #{tpu_custom_call.1} parent=1 // loop_header_branch
      %21 = sbr.rel (%p19) target = $region8
    $region5: #{tpu_custom_call.1} parent=1 // loop_body
      %s23 = ssub.s32 %s18, 1
      %s24 = ssub.s32 %s18, 2
      %s25 = sadd.s32 %s18, 1
      %s26 = ssub.s32 %s18, %s25
      %p27 = scmp.eq.s32.totalorder %s26, 0
      %s29 = sadd.s32 %s28, 1
      %s30 = scalar_select %p27, %s28, %s29
      %p33 = pneg %p27
      %p34 = scmp.eq.s32.totalorder %s18, 1
      %p35 = por %p33, %p34
      %p36 = scmp.ne.s32.totalorder %s28, %s31
      %p37 = scmp.eq.s32.totalorder %s18, 0
      %p38 = por %p36, %p37
      %p39 = scmp.ne.s32.totalorder %s28, %s31
      %p40 = scmp.eq.s32.totalorder %s23, 1
      %p41 = por %p39, %p40
      %p42 = scmp.ne.s32.totalorder %s31, %s32
      %p43 = scmp.eq.s32.totalorder %s23, 0
      %p44 = por %p42, %p43
      %p45 = scmp.ne.s32.totalorder %s31, %s32
      %p46 = scmp.eq.s32.totalorder %s24, 1
      %p47 = por %p45, %p46
      %p49 = scmp.ne.s32.totalorder %s32, %s48
      %p50 = scmp.eq.s32.totalorder %s24, 0
      %p51 = por %p49, %p50
      %s53 = sadd.s32 %s52, 1
      %p56 = scmp.eq.s32.totalorder %s18, 1
      %p57 = scmp.ne.s32.totalorder %s52, %s54
      %p58 = scmp.eq.s32.totalorder %s18, 0
      %p59 = por %p57, %p58
      %p60 = scmp.ne.s32.totalorder %s52, %s54
      %p61 = scmp.eq.s32.totalorder %s23, 1
      %p62 = por %p60, %p61
      %p63 = scmp.ne.s32.totalorder %s54, %s55
      %p64 = scmp.eq.s32.totalorder %s23, 0
      %p65 = por %p63, %p64
      %p66 = scmp.ne.s32.totalorder %s54, %s55
      %p67 = scmp.eq.s32.totalorder %s24, 1
      %p68 = por %p66, %p67
      %p70 = scmp.ne.s32.totalorder %s55, %s69
      %p71 = scmp.eq.s32.totalorder %s24, 0
      %p72 = por %p70, %p71
      %s74 = sadd.s32 %s73, 1
      %p77 = scmp.eq.s32.totalorder %s18, 1
      %p78 = scmp.ne.s32.totalorder %s73, %s75
      %p79 = scmp.eq.s32.totalorder %s18, 0
      %p80 = por %p78, %p79
      %p81 = scmp.ne.s32.totalorder %s73, %s75
      %p82 = scmp.eq.s32.totalorder %s23, 1
      %p83 = por %p81, %p82
      %p84 = scmp.ne.s32.totalorder %s75, %s76
      %p85 = scmp.eq.s32.totalorder %s23, 0
      %p86 = por %p84, %p85
      %p87 = scmp.ne.s32.totalorder %s75, %s76
      %p88 = scmp.eq.s32.totalorder %s24, 1
      %p89 = por %p87, %p88
      %p91 = scmp.ne.s32.totalorder %s76, %s90
      %p92 = scmp.eq.s32.totalorder %s24, 0
      %p93 = por %p91, %p92
      %s95 = sadd.s32 %s94, 1
      %p98 = scmp.eq.s32.totalorder %s18, 1
      %p99 = scmp.ne.s32.totalorder %s94, %s96
      %p100 = scmp.eq.s32.totalorder %s18, 0
      %p101 = por %p99, %p100
      %p102 = scmp.ne.s32.totalorder %s94, %s96
      %p103 = scmp.eq.s32.totalorder %s23, 1
      %p104 = por %p102, %p103
      %p105 = scmp.ne.s32.totalorder %s96, %s97
      %p106 = scmp.eq.s32.totalorder %s23, 0
      %p107 = por %p105, %p106
      %p108 = scmp.ne.s32.totalorder %s96, %s97
      %p109 = scmp.eq.s32.totalorder %s24, 1
      %p110 = por %p108, %p109
      %p112 = scmp.ne.s32.totalorder %s97, %s111
      %p113 = scmp.eq.s32.totalorder %s24, 0
      %p114 = por %p112, %p113
      %s116 = sadd.s32 %s115, 1
      %p119 = scmp.eq.s32.totalorder %s18, 1
      %p120 = scmp.ne.s32.totalorder %s115, %s117
      %p121 = scmp.eq.s32.totalorder %s18, 0
      %p122 = por %p120, %p121
      %p123 = scmp.ne.s32.totalorder %s115, %s117
      %p124 = scmp.eq.s32.totalorder %s23, 1
      %p125 = por %p123, %p124
      %p126 = scmp.ne.s32.totalorder %s117, %s118
      %p127 = scmp.eq.s32.totalorder %s23, 0
      %p128 = por %p126, %p127
      %p129 = scmp.ne.s32.totalorder %s117, %s118
      %p130 = scmp.eq.s32.totalorder %s24, 1
      %p131 = por %p129, %p130
      %p133 = scmp.ne.s32.totalorder %s118, %s132
      %p134 = scmp.eq.s32.totalorder %s24, 0
      %p135 = por %p133, %p134
      %s137 = sadd.s32 %s136, 1
      %p140 = scmp.eq.s32.totalorder %s18, 1
      %p141 = scmp.ne.s32.totalorder %s136, %s138
      %p142 = scmp.eq.s32.totalorder %s18, 0
      %p143 = por %p141, %p142
      %p144 = scmp.ne.s32.totalorder %s136, %s138
      %p145 = scmp.eq.s32.totalorder %s23, 1
      %p146 = por %p144, %p145
      %p147 = scmp.ne.s32.totalorder %s138, %s139
      %p148 = scmp.eq.s32.totalorder %s23, 0
      %p149 = por %p147, %p148
      %p150 = scmp.ne.s32.totalorder %s138, %s139
      %p151 = scmp.eq.s32.totalorder %s24, 1
      %p152 = por %p150, %p151
      %p154 = scmp.ne.s32.totalorder %s139, %s153
      %p155 = scmp.eq.s32.totalorder %s24, 0
      %p156 = por %p154, %p155
      %s157 = ssub.s32 %s18, %s25
      %p158 = scmp.eq.s32.totalorder %s157, 0
      %s160 = sadd.s32 %s159, 1
      %s161 = scalar_select %p158, %s159, %s160
      %p164 = pneg %p158
      %p165 = scmp.eq.s32.totalorder %s18, 1
      %p166 = por %p164, %p165
      %p167 = scmp.ne.s32.totalorder %s159, %s162
      %p168 = scmp.eq.s32.totalorder %s18, 0
      %p169 = por %p167, %p168
      %p170 = scmp.ne.s32.totalorder %s159, %s162
      %p171 = scmp.eq.s32.totalorder %s23, 1
      %p172 = por %p170, %p171
      %p173 = scmp.ne.s32.totalorder %s162, %s163
      %p174 = scmp.eq.s32.totalorder %s23, 0
      %p175 = por %p173, %p174
      %p176 = scmp.ne.s32.totalorder %s162, %s163
      %p177 = scmp.eq.s32.totalorder %s24, 1
      %p178 = por %p176, %p177
      %p180 = scmp.ne.s32.totalorder %s163, %s179
      %p181 = scmp.eq.s32.totalorder %s24, 0
      %p182 = por %p180, %p181
      %p183 = scmp.le.s32.totalorder 1, %s18
      %p184 = scmp.lt.s32.totalorder %s18, 3
      %p185 = pnand %p183, %p184
      %p186 = pneg %p185
      // Predicated region
      $region9: #{tpu_custom_call.1} parent=5 // pred_check
        _
      $region10: #{tpu_custom_call.1} parent=5 // pred_check_branch
        %188 = sbr.rel (%p185) target = $region12
      $region11: #{tpu_custom_call.1} parent=5 // pred_region
        %s189 = ssub.s32 %s18, 1
        // Predicated region
        $region13: #{tpu_custom_call.1} parent=11 // pred_check
          %p190 = pneg %p65
        $region14: #{tpu_custom_call.1} parent=11 // pred_check_branch
          %192 = sbr.rel (%p190) target = $region16
        $region15: #{tpu_custom_call.1} parent=11 // pred_region
          _
        $region16: #{tpu_custom_call.1} parent=11 // pred_fallthru
          _
        // Predicated region
        $region17: #{tpu_custom_call.1} parent=11 // pred_check
          %p193 = pneg %p86
        $region18: #{tpu_custom_call.1} parent=11 // pred_check_branch
          %195 = sbr.rel (%p193) target = $region20
        $region19: #{tpu_custom_call.1} parent=11 // pred_region
          _
        $region20: #{tpu_custom_call.1} parent=11 // pred_fallthru
          _
        // Predicated region
        $region21: #{tpu_custom_call.1} parent=11 // pred_check
          %p196 = pneg %p107
        $region22: #{tpu_custom_call.1} parent=11 // pred_check_branch
          %198 = sbr.rel (%p196) target = $region24
        $region23: #{tpu_custom_call.1} parent=11 // pred_region
          _
        $region24: #{tpu_custom_call.1} parent=11 // pred_fallthru
          _
        // Predicated region
        $region25: #{tpu_custom_call.1} parent=11 // pred_check
          %p199 = pneg %p128
        $region26: #{tpu_custom_call.1} parent=11 // pred_check_branch
          %201 = sbr.rel (%p199) target = $region28
        $region27: #{tpu_custom_call.1} parent=11 // pred_region
          _
        $region28: #{tpu_custom_call.1} parent=11 // pred_fallthru
          _
        // Predicated region
        $region29: #{tpu_custom_call.1} parent=11 // pred_check
          %p202 = pneg %p149
        $region30: #{tpu_custom_call.1} parent=11 // pred_check_branch
          %204 = sbr.rel (%p202) target = $region32
        $region31: #{tpu_custom_call.1} parent=11 // pred_region
          _
        $region32: #{tpu_custom_call.1} parent=11 // pred_fallthru
          _
      $region12: #{tpu_custom_call.1} parent=5 // pred_fallthru
        _
      %p205 = scmp.lt.s32.totalorder %s18, 2
      // Predicated region
      $region33: #{tpu_custom_call.1} parent=5 // pred_check
        %p206 = pneg %p205
      $region34: #{tpu_custom_call.1} parent=5 // pred_check_branch
        %208 = sbr.rel (%p206) target = $region36
      $region35: #{tpu_custom_call.1} parent=5 // pred_region
        // Predicated region
        $region37: #{tpu_custom_call.1} parent=35 // pred_check
          %p209 = pneg %p38
        $region38: #{tpu_custom_call.1} parent=35 // pred_check_branch
          %211 = sbr.rel (%p209) target = $region40
        $region39: #{tpu_custom_call.1} parent=35 // pred_region
          %s212 = sand.u32 %s28, 1
          %s213 = scalar_lea.sflag [#allocation5], %s212
          %s214 = sand.u32 %s28, 1
          %s215 = smul.addr %s214, 128
          %s216 = scalar_lea.vmem [#allocation4], %s215
          %218 = vsyncadd %s213, 0
          %s219 = smul.addr %s18, 32
          %s220 = smul.addr %s219, 4
          %s221 = scalar_lea.hbm %s0, %s220
          %s222 = sshll.u32 %s221, 4
          %s223 = int_to_ptr.hbm [resolvable:$true] %s222
          %s224 = sshll.u32 %s216, 4
          %s225 = int_to_ptr.vmem [resolvable:$true] %s224
          %230 = dma.hbm_to_vmem [thread:$0]  %s223, 2048, %s225, %s213, 512, 512, 32
        $region40: #{tpu_custom_call.1} parent=35 // pred_fallthru
          _
      $region36: #{tpu_custom_call.1} parent=5 // pred_fallthru
        _
      %p231 = scmp.le.s32.totalorder 1, %s18
      %p232 = scmp.lt.s32.totalorder %s18, 3
      %p233 = pnand %p231, %p232
      %p234 = pneg %p233
      // Predicated region
      $region41: #{tpu_custom_call.1} parent=5 // pred_check
        _
      $region42: #{tpu_custom_call.1} parent=5 // pred_check_branch
        %236 = sbr.rel (%p233) target = $region44
      $region43: #{tpu_custom_call.1} parent=5 // pred_region
        %s237 = ssub.s32 %s18, 1
        %s238 = sand.u32 %s31, 1
        %s239 = scalar_lea.sflag [#allocation5], %s238
        %s240 = sand.u32 %s31, 1
        %s241 = smul.addr %s240, 128
        %s242 = scalar_lea.vmem [#allocation4], %s241
        // Predicated region
        $region45: #{tpu_custom_call.1} parent=43 // pred_check
          %p243 = pneg %p44
        $region46: #{tpu_custom_call.1} parent=43 // pred_check_branch
          %245 = sbr.rel (%p243) target = $region48
        $region47: #{tpu_custom_call.1} parent=43 // pred_region
          %247 = dma.done %s239, 2048
        $region48: #{tpu_custom_call.1} parent=43 // pred_fallthru
          _
        %s248 = sand.u32 %s31, 1
        %s249 = scalar_lea.sflag [#allocation5], %s248
        %s250 = sand.u32 %s31, 1
        %s251 = smul.addr %s250, 128
        %s252 = scalar_lea.vmem [#allocation4], %s251
        %p253 = pneg %p44
        %p254 = pneg %p41
        %p255 = pneg %p65
        %p256 = pneg %p62
        %p257 = pneg %p86
        %p258 = pneg %p83
        %p259 = pneg %p107
        %p260 = pneg %p104
        %p261 = pneg %p128
        %p262 = pneg %p125
        %p263 = pneg %p149
        %p264 = pneg %p146
        %p265 = pneg %p175
        %p266 = pneg %p172
        %s267 = sand.u32 %s162, 1
        %s268 = scalar_lea.sflag [#allocation6], %s267
        %s269 = sand.u32 %s162, 1
        %s270 = smul.addr %s269, 128
        %s271 = scalar_lea.vmem [#allocation7], %s270
        %v273 = vld [vmem:[%s1] sm:$0xf]
        %v274 = vld [vmem:[%s1 + $0x4] sm:$0xf]
        %v275 = vld [vmem:[%s1 + $0x8] sm:$0xf]
        %v276 = vld [vmem:[%s1 + $0xc] sm:$0xf]
        %v277 = vld [vmem:[%s2] sm:$0xff]
        %v278 = vld [vmem:[%s2 + $0x8] sm:$0xff]
        %v279 = vld [vmem:[%s2 + $0x10] sm:$0xff]
        %v280 = vld [vmem:[%s2 + $0x18] sm:$0xff]
        %v281 = vld [vmem:[%s242] sm:$0xff]
        %v282 = vld [vmem:[%s242 + $0x8] sm:$0xff]
        %v283 = vld [vmem:[%s242 + $0x20] sm:$0xff]
        %v284 = vld [vmem:[%s242 + $0x28] sm:$0xff]
        %v285 = vld [vmem:[%s242 + $0x40] sm:$0xff]
        %v286 = vld [vmem:[%s242 + $0x48] sm:$0xff]
        %v287 = vld [vmem:[%s242 + $0x60] sm:$0xff]
        %v288 = vld [vmem:[%s242 + $0x68] sm:$0xff]
        %290 = vset.pattern.permute.xlu0 0
        %291 = vperm.xlu0 %290, %v277
        %v292 = vpop.permute.xlu0 %291
        %295 = vset.pattern.permute.xlu0 0
        %296 = vperm.xlu0 %295, %v278
        %v297 = vpop.permute.xlu0 %296
        %300 = vset.pattern.permute.xlu0 0
        %301 = vperm.xlu0 %300, %v279
        %v302 = vpop.permute.xlu0 %301
        %305 = vset.pattern.permute.xlu0 0
        %306 = vperm.xlu0 %305, %v280
        %v307 = vpop.permute.xlu0 %306
        %v313 = vunpack.c.l.b16 %v273
        %v314 = vunpack.c.l.b16 %v274
        %v315 = vunpack.c.l.b16 %v275
        %v316 = vunpack.c.l.b16 %v276
        %v317 = vpack.c.b16 %v314, %v313
        %v318 = vpack.c.b16 %v316, %v315
        %v327 = vunpack.c.l.b16 %v281
        %v328 = vunpack.c.h.b16 %v281
        %v329 = vunpack.c.l.b16 %v282
        %v330 = vunpack.c.h.b16 %v282
        %v331 = vunpack.c.l.b16 %v283
        %v332 = vunpack.c.h.b16 %v283
        %v333 = vunpack.c.l.b16 %v284
        %v334 = vunpack.c.h.b16 %v284
        %v335 = vunpack.c.l.b16 %v285
        %v336 = vunpack.c.h.b16 %v285
        %v337 = vunpack.c.l.b16 %v286
        %v338 = vunpack.c.h.b16 %v286
        %v339 = vunpack.c.l.b16 %v287
        %v340 = vunpack.c.h.b16 %v287
        %v341 = vunpack.c.l.b16 %v288
        %v342 = vunpack.c.h.b16 %v288
        %v343 = vpack.c.b16 %v331, %v327
        %v344 = vpack.c.b16 %v332, %v328
        %v345 = vpack.c.b16 %v333, %v329
        %v346 = vpack.c.b16 %v334, %v330
        %v347 = vpack.c.b16 %v339, %v335
        %v348 = vpack.c.b16 %v340, %v336
        %v349 = vpack.c.b16 %v341, %v337
        %v350 = vpack.c.b16 %v342, %v338
        %vm359 = vcmask 261120
        %v361 = vsel %vm359, %v317, 0
        %v364 = vsel %vm359, %v318, 0
        %366 = vmatpush.bf16.msra.mxu0 0
        %367 = vmatpush.bf16.msra.mxu0 0
        %368 = vmatpush.bf16.msra.mxu0 0
        %369 = vmatpush.bf16.msra.mxu0 0
        %370 = vmatpush.bf16.msra.mxu0 0
        %371 = vmatpush.bf16.msra.mxu0 0
        %372 = vmatpush.bf16.msra.mxu0 %v347
        %373 = vmatpush.bf16.msra.mxu0 %v343
        %374 = vmatmul.bf16.gmra.mxu0 %v361
        %v375 = vpop.f32.mrf.mxu0
        %v376 = vadd.f32 %v292, %v375
        %v377 = vpop.f32.mrf.mxu0
        %v378 = vadd.f32 %v297, %v377
        %379 = vmatmul.bf16.gmra.mxu0 %v364
        %v380 = vpop.f32.mrf.mxu0
        %v381 = vadd.f32 %v302, %v380
        %v382 = vpop.f32.mrf.mxu0
        %v383 = vadd.f32 %v307, %v382
        %384 = vdwg.mxu0
        %385 = vmatpush.bf16.msra.mxu0 0
        %386 = vmatpush.bf16.msra.mxu0 0
        %387 = vmatpush.bf16.msra.mxu0 0
        %388 = vmatpush.bf16.msra.mxu0 0
        %389 = vmatpush.bf16.msra.mxu0 0
        %390 = vmatpush.bf16.msra.mxu0 0
        %391 = vmatpush.bf16.msra.mxu0 %v348
        %392 = vmatpush.bf16.msra.mxu0 %v344
        %393 = vmatmul.bf16.gmra.mxu0 %v361
        %v394 = vpop.f32.mrf.mxu0
        %v395 = vadd.f32 %v292, %v394
        %v396 = vpop.f32.mrf.mxu0
        %v397 = vadd.f32 %v297, %v396
        %398 = vmatmul.bf16.gmra.mxu0 %v364
        %v399 = vpop.f32.mrf.mxu0
        %v400 = vadd.f32 %v302, %v399
        %v401 = vpop.f32.mrf.mxu0
        %v402 = vadd.f32 %v307, %v401
        %403 = vdwg.mxu0
        %404 = vmatpush.bf16.msra.mxu0 0
        %405 = vmatpush.bf16.msra.mxu0 0
        %406 = vmatpush.bf16.msra.mxu0 0
        %407 = vmatpush.bf16.msra.mxu0 0
        %408 = vmatpush.bf16.msra.mxu0 0
        %409 = vmatpush.bf16.msra.mxu0 0
        %410 = vmatpush.bf16.msra.mxu0 %v349
        %411 = vmatpush.bf16.msra.mxu0 %v345
        %412 = vmatmul.bf16.gmra.mxu0 %v361
        %v413 = vpop.f32.mrf.mxu0
        %v414 = vadd.f32 %v292, %v413
        %v415 = vpop.f32.mrf.mxu0
        %v416 = vadd.f32 %v297, %v415
        %417 = vmatmul.bf16.gmra.mxu0 %v364
        %v418 = vpop.f32.mrf.mxu0
        %v419 = vadd.f32 %v302, %v418
        %v420 = vpop.f32.mrf.mxu0
        %v421 = vadd.f32 %v307, %v420
        %422 = vdwg.mxu0
        %423 = vmatpush.bf16.msra.mxu0 0
        %424 = vmatpush.bf16.msra.mxu0 0
        %425 = vmatpush.bf16.msra.mxu0 0
        %426 = vmatpush.bf16.msra.mxu0 0
        %427 = vmatpush.bf16.msra.mxu0 0
        %428 = vmatpush.bf16.msra.mxu0 0
        %429 = vmatpush.bf16.msra.mxu0 %v350
        %430 = vmatpush.bf16.msra.mxu0 %v346
        %431 = vmatmul.bf16.gmra.mxu0 %v361
        %v432 = vpop.f32.mrf.mxu0
        %v433 = vadd.f32 %v292, %v432
        %v434 = vpop.f32.mrf.mxu0
        %v435 = vadd.f32 %v297, %v434
        %436 = vmatmul.bf16.gmra.mxu0 %v364
        %v437 = vpop.f32.mrf.mxu0
        %v438 = vadd.f32 %v302, %v437
        %v439 = vpop.f32.mrf.mxu0
        %v440 = vadd.f32 %v307, %v439
        %441 = vdwg.mxu0
        %v442 = vpack.c.bf16 %v395, %v376
        %v443 = vpack.c.bf16 %v433, %v414
        %v444 = vpack.c.bf16 %v397, %v378
        %v445 = vpack.c.bf16 %v435, %v416
        %v446 = vpack.c.bf16 %v400, %v381
        %v447 = vpack.c.bf16 %v438, %v419
        %v448 = vpack.c.bf16 %v402, %v383
        %v449 = vpack.c.bf16 %v440, %v421
        %450 = vst [vmem:[#allocation2] sm:$0xff] %v442
        %451 = vst [vmem:[#allocation2 + $0x8] sm:$0xff] %v443
        %452 = vst [vmem:[#allocation2 + $0x20] sm:$0xff] %v444
        %453 = vst [vmem:[#allocation2 + $0x28] sm:$0xff] %v445
        %454 = vst [vmem:[#allocation2 + $0x40] sm:$0xff] %v446
        %455 = vst [vmem:[#allocation2 + $0x48] sm:$0xff] %v447
        %456 = vst [vmem:[#allocation2 + $0x60] sm:$0xff] %v448
        %457 = vst [vmem:[#allocation2 + $0x68] sm:$0xff] %v449
        %s458 = scalar_lea.vmem %s242, 16 [#allocation4]
        %v459 = vld [vmem:[%s458] sm:$0xff]
        %v460 = vld [vmem:[%s458 + $0x8] sm:$0xff]
        %v461 = vld [vmem:[%s458 + $0x20] sm:$0xff]
        %v462 = vld [vmem:[%s458 + $0x28] sm:$0xff]
        %v463 = vld [vmem:[%s458 + $0x40] sm:$0xff]
        %v464 = vld [vmem:[%s458 + $0x48] sm:$0xff]
        %v465 = vld [vmem:[%s458 + $0x60] sm:$0xff]
        %v466 = vld [vmem:[%s458 + $0x68] sm:$0xff]
        %v475 = vunpack.c.l.b16 %v459
        %v476 = vunpack.c.h.b16 %v459
        %v477 = vunpack.c.l.b16 %v460
        %v478 = vunpack.c.h.b16 %v460
        %v479 = vunpack.c.l.b16 %v461
        %v480 = vunpack.c.h.b16 %v461
        %v481 = vunpack.c.l.b16 %v462
        %v482 = vunpack.c.h.b16 %v462
        %v483 = vunpack.c.l.b16 %v463
        %v484 = vunpack.c.h.b16 %v463
        %v485 = vunpack.c.l.b16 %v464
        %v486 = vunpack.c.h.b16 %v464
        %v487 = vunpack.c.l.b16 %v465
        %v488 = vunpack.c.h.b16 %v465
        %v489 = vunpack.c.l.b16 %v466
        %v490 = vunpack.c.h.b16 %v466
        %v491 = vpack.c.b16 %v479, %v475
        %v492 = vpack.c.b16 %v480, %v476
        %v493 = vpack.c.b16 %v481, %v477
        %v494 = vpack.c.b16 %v482, %v478
        %v495 = vpack.c.b16 %v487, %v483
        %v496 = vpack.c.b16 %v488, %v484
        %v497 = vpack.c.b16 %v489, %v485
        %v498 = vpack.c.b16 %v490, %v486
        %507 = vmatpush.bf16.msra.mxu0 0
        %508 = vmatpush.bf16.msra.mxu0 0
        %509 = vmatpush.bf16.msra.mxu0 0
        %510 = vmatpush.bf16.msra.mxu0 0
        %511 = vmatpush.bf16.msra.mxu0 0
        %512 = vmatpush.bf16.msra.mxu0 0
        %513 = vmatpush.bf16.msra.mxu0 %v495
        %514 = vmatpush.bf16.msra.mxu0 %v491
        %515 = vmatmul.bf16.gmra.mxu0 %v361
        %v516 = vpop.f32.mrf.mxu0
        %v517 = vadd.f32 %v292, %v516
        %v518 = vpop.f32.mrf.mxu0
        %v519 = vadd.f32 %v297, %v518
        %520 = vmatmul.bf16.gmra.mxu0 %v364
        %v521 = vpop.f32.mrf.mxu0
        %v522 = vadd.f32 %v302, %v521
        %v523 = vpop.f32.mrf.mxu0
        %v524 = vadd.f32 %v307, %v523
        %525 = vdwg.mxu0
        %526 = vmatpush.bf16.msra.mxu0 0
        %527 = vmatpush.bf16.msra.mxu0 0
        %528 = vmatpush.bf16.msra.mxu0 0
        %529 = vmatpush.bf16.msra.mxu0 0
        %530 = vmatpush.bf16.msra.mxu0 0
        %531 = vmatpush.bf16.msra.mxu0 0
        %532 = vmatpush.bf16.msra.mxu0 %v496
        %533 = vmatpush.bf16.msra.mxu0 %v492
        %534 = vmatmul.bf16.gmra.mxu0 %v361
        %v535 = vpop.f32.mrf.mxu0
        %v536 = vadd.f32 %v292, %v535
        %v537 = vpop.f32.mrf.mxu0
        %v538 = vadd.f32 %v297, %v537
        %539 = vmatmul.bf16.gmra.mxu0 %v364
        %v540 = vpop.f32.mrf.mxu0
        %v541 = vadd.f32 %v302, %v540
        %v542 = vpop.f32.mrf.mxu0
        %v543 = vadd.f32 %v307, %v542
        %544 = vdwg.mxu0
        %545 = vmatpush.bf16.msra.mxu0 0
        %546 = vmatpush.bf16.msra.mxu0 0
        %547 = vmatpush.bf16.msra.mxu0 0
        %548 = vmatpush.bf16.msra.mxu0 0
        %549 = vmatpush.bf16.msra.mxu0 0
        %550 = vmatpush.bf16.msra.mxu0 0
        %551 = vmatpush.bf16.msra.mxu0 %v497
        %552 = vmatpush.bf16.msra.mxu0 %v493
        %553 = vmatmul.bf16.gmra.mxu0 %v361
        %v554 = vpop.f32.mrf.mxu0
        %v555 = vadd.f32 %v292, %v554
        %v556 = vpop.f32.mrf.mxu0
        %v557 = vadd.f32 %v297, %v556
        %558 = vmatmul.bf16.gmra.mxu0 %v364
        %v559 = vpop.f32.mrf.mxu0
        %v560 = vadd.f32 %v302, %v559
        %v561 = vpop.f32.mrf.mxu0
        %v562 = vadd.f32 %v307, %v561
        %563 = vdwg.mxu0
        %564 = vmatpush.bf16.msra.mxu0 0
        %565 = vmatpush.bf16.msra.mxu0 0
        %566 = vmatpush.bf16.msra.mxu0 0
        %567 = vmatpush.bf16.msra.mxu0 0
        %568 = vmatpush.bf16.msra.mxu0 0
        %569 = vmatpush.bf16.msra.mxu0 0
        %570 = vmatpush.bf16.msra.mxu0 %v498
        %571 = vmatpush.bf16.msra.mxu0 %v494
        %572 = vmatmul.bf16.gmra.mxu0 %v361
        %v573 = vpop.f32.mrf.mxu0
        %v574 = vadd.f32 %v292, %v573
        %v575 = vpop.f32.mrf.mxu0
        %v576 = vadd.f32 %v297, %v575
        %577 = vmatmul.bf16.gmra.mxu0 %v364
        %v578 = vpop.f32.mrf.mxu0
        %v579 = vadd.f32 %v302, %v578
        %v580 = vpop.f32.mrf.mxu0
        %v581 = vadd.f32 %v307, %v580
        %582 = vdwg.mxu0
        %v583 = vpack.c.bf16 %v536, %v517
        %v584 = vpack.c.bf16 %v574, %v555
        %v585 = vpack.c.bf16 %v538, %v519
        %v586 = vpack.c.bf16 %v576, %v557
        %v587 = vpack.c.bf16 %v541, %v522
        %v588 = vpack.c.bf16 %v579, %v560
        %v589 = vpack.c.bf16 %v543, %v524
        %v590 = vpack.c.bf16 %v581, %v562
        %s591 = scalar_lea.vmem [#allocation2], 16
        %592 = vst [vmem:[%s591] sm:$0xff] %v583
        %593 = vst [vmem:[%s591 + $0x8] sm:$0xff] %v584
        %594 = vst [vmem:[%s591 + $0x20] sm:$0xff] %v585
        %595 = vst [vmem:[%s591 + $0x28] sm:$0xff] %v586
        %596 = vst [vmem:[%s591 + $0x40] sm:$0xff] %v587
        %597 = vst [vmem:[%s591 + $0x48] sm:$0xff] %v588
        %598 = vst [vmem:[%s591 + $0x60] sm:$0xff] %v589
        %599 = vst [vmem:[%s591 + $0x68] sm:$0xff] %v590
        %v600 = vld [vmem:[#allocation2] sm:$0xff]
        %v601 = vld [vmem:[#allocation2 + $0x8] sm:$0xff]
        %v602 = vld [vmem:[#allocation2 + $0x10] sm:$0xff]
        %v603 = vld [vmem:[#allocation2 + $0x18] sm:$0xff]
        %v604 = vld [vmem:[#allocation2 + $0x20] sm:$0xff]
        %v605 = vld [vmem:[#allocation2 + $0x28] sm:$0xff]
        %v606 = vld [vmem:[#allocation2 + $0x30] sm:$0xff]
        %v607 = vld [vmem:[#allocation2 + $0x38] sm:$0xff]
        %v608 = vld [vmem:[#allocation2 + $0x40] sm:$0xff]
        %v609 = vld [vmem:[#allocation2 + $0x48] sm:$0xff]
        %v610 = vld [vmem:[#allocation2 + $0x50] sm:$0xff]
        %v611 = vld [vmem:[#allocation2 + $0x58] sm:$0xff]
        %v612 = vld [vmem:[#allocation2 + $0x60] sm:$0xff]
        %v613 = vld [vmem:[#allocation2 + $0x68] sm:$0xff]
        %v614 = vld [vmem:[#allocation2 + $0x70] sm:$0xff]
        %v615 = vld [vmem:[#allocation2 + $0x78] sm:$0xff]
        %v616 = vld [vmem:[%s3] sm:$0xff]
        %v617 = vld [vmem:[%s3 + $0x8] sm:$0xff]
        %v618 = vld [vmem:[%s3 + $0x10] sm:$0xff]
        %v619 = vld [vmem:[%s3 + $0x18] sm:$0xff]
        %v620 = vlaneseq
        %v621 = vshrl.u32 %v620, 7
        %v622 = vadd.s32 %v621, 8
        %v623 = vadd.s32 %v621, 16
        %v624 = vadd.s32 %v621, 24
        %v625 = vadd.s32 %v621, 32
        %v626 = vadd.s32 %v621, 40
        %v627 = vadd.s32 %v621, 48
        %v628 = vadd.s32 %v621, 56
        %v629 = vadd.s32 %v621, 64
        %v630 = vadd.s32 %v621, 72
        %v631 = vadd.s32 %v621, 80
        %v632 = vadd.s32 %v621, 88
        %v633 = vadd.s32 %v621, 96
        %v634 = vadd.s32 %v621, 104
        %v635 = vadd.s32 %v621, 112
        %v636 = vadd.s32 %v621, 120
        %vm637 = vcmp.lt.s32.totalorder %v621, 16
        %vm638 = vcmp.lt.s32.totalorder %v622, 16
        %vm639 = vcmp.lt.s32.totalorder %v623, 16
        %vm640 = vcmp.lt.s32.totalorder %v624, 16
        %vm641 = vcmp.lt.s32.totalorder %v625, 16
        %vm642 = vcmp.lt.s32.totalorder %v626, 16
        %vm643 = vcmp.lt.s32.totalorder %v627, 16
        %vm644 = vcmp.lt.s32.totalorder %v628, 16
        %vm645 = vcmp.lt.s32.totalorder %v629, 16
        %vm646 = vcmp.lt.s32.totalorder %v630, 16
        %vm647 = vcmp.lt.s32.totalorder %v631, 16
        %vm648 = vcmp.lt.s32.totalorder %v632, 16
        %vm649 = vcmp.lt.s32.totalorder %v633, 16
        %vm650 = vcmp.lt.s32.totalorder %v634, 16
        %vm651 = vcmp.lt.s32.totalorder %v635, 16
        %vm652 = vcmp.lt.s32.totalorder %v636, 16
        %v653 = vpack.c.bf16 %v617, %v616
        %v654 = vpack.c.bf16 %v619, %v618
        %655 = vxpose.xlu0.c.b16.start [1/8] %v653, 128
        %656 = vxpose.xlu0.c.b16.cont [2/8] %v654, 128
        %657 = vxpose.xlu0.c.b16.cont [3/8] 0, 128
        %658 = vxpose.xlu0.c.b16.cont [4/8] 0, 128
        %659 = vxpose.xlu0.c.b16.cont [5/8] 0, 128
        %660 = vxpose.xlu0.c.b16.cont [6/8] 0, 128
        %661 = vxpose.xlu0.c.b16.cont [7/8] 0, 128
        %662 = vxpose.xlu0.c.b16.end [8/8] 0, 128
        %v663 = vpop.trf.xlu0
        %v664 = vpop.trf.xlu0
        %v665 = vpop.trf.xlu0
        %v666 = vpop.trf.xlu0
        %v667 = vpop.trf.xlu0
        %v668 = vpop.trf.xlu0
        %v669 = vpop.trf.xlu0
        %v670 = vpop.trf.xlu0
        %v687 = vunpack.c.l.b16 %v600
        %v688 = vunpack.c.h.b16 %v600
        %v689 = vunpack.c.l.b16 %v601
        %v690 = vunpack.c.h.b16 %v601
        %v691 = vunpack.c.l.b16 %v602
        %v692 = vunpack.c.h.b16 %v602
        %v693 = vunpack.c.l.b16 %v603
        %v694 = vunpack.c.h.b16 %v603
        %v695 = vunpack.c.l.b16 %v604
        %v696 = vunpack.c.h.b16 %v604
        %v697 = vunpack.c.l.b16 %v605
        %v698 = vunpack.c.h.b16 %v605
        %v699 = vunpack.c.l.b16 %v606
        %v700 = vunpack.c.h.b16 %v606
        %v701 = vunpack.c.l.b16 %v607
        %v702 = vunpack.c.h.b16 %v607
        %v703 = vunpack.c.l.b16 %v608
        %v704 = vunpack.c.h.b16 %v608
        %v705 = vunpack.c.l.b16 %v609
        %v706 = vunpack.c.h.b16 %v609
        %v707 = vunpack.c.l.b16 %v610
        %v708 = vunpack.c.h.b16 %v610
        %v709 = vunpack.c.l.b16 %v611
        %v710 = vunpack.c.h.b16 %v611
        %v711 = vunpack.c.l.b16 %v612
        %v712 = vunpack.c.h.b16 %v612
        %v713 = vunpack.c.l.b16 %v613
        %v714 = vunpack.c.h.b16 %v613
        %v715 = vunpack.c.l.b16 %v614
        %v716 = vunpack.c.h.b16 %v614
        %v717 = vunpack.c.l.b16 %v615
        %v718 = vunpack.c.h.b16 %v615
        %v719 = vpack.c.b16 %v695, %v687
        %v720 = vpack.c.b16 %v696, %v688
        %v721 = vpack.c.b16 %v697, %v689
        %v722 = vpack.c.b16 %v698, %v690
        %v723 = vpack.c.b16 %v699, %v691
        %v724 = vpack.c.b16 %v700, %v692
        %v725 = vpack.c.b16 %v701, %v693
        %v726 = vpack.c.b16 %v702, %v694
        %v727 = vpack.c.b16 %v711, %v703
        %v728 = vpack.c.b16 %v712, %v704
        %v729 = vpack.c.b16 %v713, %v705
        %v730 = vpack.c.b16 %v714, %v706
        %v731 = vpack.c.b16 %v715, %v707
        %v732 = vpack.c.b16 %v716, %v708
        %v733 = vpack.c.b16 %v717, %v709
        %v734 = vpack.c.b16 %v718, %v710
        %v752 = vsel %vm359, %v663, 0
        %v755 = vsel %vm359, %v664, 0
        %v758 = vsel %vm359, %v665, 0
        %v761 = vsel %vm359, %v666, 0
        %v764 = vsel %vm359, %v667, 0
        %v767 = vsel %vm359, %v668, 0
        %v770 = vsel %vm359, %v669, 0
        %v773 = vsel %vm359, %v670, 0
        %775 = vmatpush.bf16.msra.mxu0 0
        %776 = vmatpush.bf16.msra.mxu0 0
        %777 = vmatpush.bf16.msra.mxu0 0
        %778 = vmatpush.bf16.msra.mxu0 0
        %779 = vmatpush.bf16.msra.mxu0 0
        %780 = vmatpush.bf16.msra.mxu0 0
        %781 = vmatpush.bf16.msra.mxu0 %v727
        %782 = vmatpush.bf16.msra.mxu0 %v719
        %783 = vmatmul.bf16.gmra.mxu0 %v752
        %v784 = vpop.f32.mrf.mxu0
        %v785 = vadd.f32 0.0, %v784
        %v786 = vpop.f32.mrf.mxu0
        %v787 = vadd.f32 0.0, %v786
        %788 = vmatmul.bf16.gmra.mxu0 %v755
        %v789 = vpop.f32.mrf.mxu0
        %v790 = vadd.f32 0.0, %v789
        %v791 = vpop.f32.mrf.mxu0
        %v792 = vadd.f32 0.0, %v791
        %793 = vmatmul.bf16.gmra.mxu0 %v758
        %v794 = vpop.f32.mrf.mxu0
        %v795 = vadd.f32 0.0, %v794
        %v796 = vpop.f32.mrf.mxu0
        %v797 = vadd.f32 0.0, %v796
        %798 = vmatmul.bf16.gmra.mxu0 %v761
        %v799 = vpop.f32.mrf.mxu0
        %v800 = vadd.f32 0.0, %v799
        %v801 = vpop.f32.mrf.mxu0
        %v802 = vadd.f32 0.0, %v801
        %803 = vmatmul.bf16.gmra.mxu0 %v764
        %v804 = vpop.f32.mrf.mxu0
        %v805 = vadd.f32 0.0, %v804
        %v806 = vpop.f32.mrf.mxu0
        %v807 = vadd.f32 0.0, %v806
        %808 = vmatmul.bf16.gmra.mxu0 %v767
        %v809 = vpop.f32.mrf.mxu0
        %v810 = vadd.f32 0.0, %v809
        %v811 = vpop.f32.mrf.mxu0
        %v812 = vadd.f32 0.0, %v811
        %813 = vmatmul.bf16.gmra.mxu0 %v770
        %v814 = vpop.f32.mrf.mxu0
        %v815 = vadd.f32 0.0, %v814
        %v816 = vpop.f32.mrf.mxu0
        %v817 = vadd.f32 0.0, %v816
        %818 = vmatmul.bf16.gmra.mxu0 %v773
        %v819 = vpop.f32.mrf.mxu0
        %v820 = vadd.f32 0.0, %v819
        %v821 = vpop.f32.mrf.mxu0
        %v822 = vadd.f32 0.0, %v821
        %823 = vdwg.mxu0
        %824 = vmatpush.bf16.msra.mxu0 0
        %825 = vmatpush.bf16.msra.mxu0 0
        %826 = vmatpush.bf16.msra.mxu0 0
        %827 = vmatpush.bf16.msra.mxu0 0
        %828 = vmatpush.bf16.msra.mxu0 0
        %829 = vmatpush.bf16.msra.mxu0 0
        %830 = vmatpush.bf16.msra.mxu0 %v728
        %831 = vmatpush.bf16.msra.mxu0 %v720
        %832 = vmatmul.bf16.gmra.mxu0 %v752
        %v833 = vpop.f32.mrf.mxu0
        %v834 = vadd.f32 0.0, %v833
        %v835 = vpop.f32.mrf.mxu0
        %v836 = vadd.f32 0.0, %v835
        %837 = vmatmul.bf16.gmra.mxu0 %v755
        %v838 = vpop.f32.mrf.mxu0
        %v839 = vadd.f32 0.0, %v838
        %v840 = vpop.f32.mrf.mxu0
        %v841 = vadd.f32 0.0, %v840
        %842 = vmatmul.bf16.gmra.mxu0 %v758
        %v843 = vpop.f32.mrf.mxu0
        %v844 = vadd.f32 0.0, %v843
        %v845 = vpop.f32.mrf.mxu0
        %v846 = vadd.f32 0.0, %v845
        %847 = vmatmul.bf16.gmra.mxu0 %v761
        %v848 = vpop.f32.mrf.mxu0
        %v849 = vadd.f32 0.0, %v848
        %v850 = vpop.f32.mrf.mxu0
        %v851 = vadd.f32 0.0, %v850
        %852 = vmatmul.bf16.gmra.mxu0 %v764
        %v853 = vpop.f32.mrf.mxu0
        %v854 = vadd.f32 0.0, %v853
        %v855 = vpop.f32.mrf.mxu0
        %v856 = vadd.f32 0.0, %v855
        %857 = vmatmul.bf16.gmra.mxu0 %v767
        %v858 = vpop.f32.mrf.mxu0
        %v859 = vadd.f32 0.0, %v858
        %v860 = vpop.f32.mrf.mxu0
        %v861 = vadd.f32 0.0, %v860
        %862 = vmatmul.bf16.gmra.mxu0 %v770
        %v863 = vpop.f32.mrf.mxu0
        %v864 = vadd.f32 0.0, %v863
        %v865 = vpop.f32.mrf.mxu0
        %v866 = vadd.f32 0.0, %v865
        %867 = vmatmul.bf16.gmra.mxu0 %v773
        %v868 = vpop.f32.mrf.mxu0
        %v869 = vadd.f32 0.0, %v868
        %v870 = vpop.f32.mrf.mxu0
        %v871 = vadd.f32 0.0, %v870
        %872 = vdwg.mxu0
        %873 = vmatpush.bf16.msra.mxu0 0
        %874 = vmatpush.bf16.msra.mxu0 0
        %875 = vmatpush.bf16.msra.mxu0 0
        %876 = vmatpush.bf16.msra.mxu0 0
        %877 = vmatpush.bf16.msra.mxu0 0
        %878 = vmatpush.bf16.msra.mxu0 0
        %879 = vmatpush.bf16.msra.mxu0 %v729
        %880 = vmatpush.bf16.msra.mxu0 %v721
        %881 = vmatmul.bf16.gmra.mxu0 %v752
        %v882 = vpop.f32.mrf.mxu0
        %v883 = vadd.f32 0.0, %v882
        %v884 = vpop.f32.mrf.mxu0
        %v885 = vadd.f32 0.0, %v884
        %886 = vmatmul.bf16.gmra.mxu0 %v755
        %v887 = vpop.f32.mrf.mxu0
        %v888 = vadd.f32 0.0, %v887
        %v889 = vpop.f32.mrf.mxu0
        %v890 = vadd.f32 0.0, %v889
        %891 = vmatmul.bf16.gmra.mxu0 %v758
        %v892 = vpop.f32.mrf.mxu0
        %v893 = vadd.f32 0.0, %v892
        %v894 = vpop.f32.mrf.mxu0
        %v895 = vadd.f32 0.0, %v894
        %896 = vmatmul.bf16.gmra.mxu0 %v761
        %v897 = vpop.f32.mrf.mxu0
        %v898 = vadd.f32 0.0, %v897
        %v899 = vpop.f32.mrf.mxu0
        %v900 = vadd.f32 0.0, %v899
        %901 = vmatmul.bf16.gmra.mxu0 %v764
        %v902 = vpop.f32.mrf.mxu0
        %v903 = vadd.f32 0.0, %v902
        %v904 = vpop.f32.mrf.mxu0
        %v905 = vadd.f32 0.0, %v904
        %906 = vmatmul.bf16.gmra.mxu0 %v767
        %v907 = vpop.f32.mrf.mxu0
        %v908 = vadd.f32 0.0, %v907
        %v909 = vpop.f32.mrf.mxu0
        %v910 = vadd.f32 0.0, %v909
        %911 = vmatmul.bf16.gmra.mxu0 %v770
        %v912 = vpop.f32.mrf.mxu0
        %v913 = vadd.f32 0.0, %v912
        %v914 = vpop.f32.mrf.mxu0
        %v915 = vadd.f32 0.0, %v914
        %916 = vmatmul.bf16.gmra.mxu0 %v773
        %v917 = vpop.f32.mrf.mxu0
        %v918 = vadd.f32 0.0, %v917
        %v919 = vpop.f32.mrf.mxu0
        %v920 = vadd.f32 0.0, %v919
        %921 = vdwg.mxu0
        %922 = vmatpush.bf16.msra.mxu0 0
        %923 = vmatpush.bf16.msra.mxu0 0
        %924 = vmatpush.bf16.msra.mxu0 0
        %925 = vmatpush.bf16.msra.mxu0 0
        %926 = vmatpush.bf16.msra.mxu0 0
        %927 = vmatpush.bf16.msra.mxu0 0
        %928 = vmatpush.bf16.msra.mxu0 %v730
        %929 = vmatpush.bf16.msra.mxu0 %v722
        %930 = vmatmul.bf16.gmra.mxu0 %v752
        %v931 = vpop.f32.mrf.mxu0
        %v932 = vadd.f32 0.0, %v931
        %v933 = vpop.f32.mrf.mxu0
        %v934 = vadd.f32 0.0, %v933
        %935 = vmatmul.bf16.gmra.mxu0 %v755
        %v936 = vpop.f32.mrf.mxu0
        %v937 = vadd.f32 0.0, %v936
        %v938 = vpop.f32.mrf.mxu0
        %v939 = vadd.f32 0.0, %v938
        %940 = vmatmul.bf16.gmra.mxu0 %v758
        %v941 = vpop.f32.mrf.mxu0
        %v942 = vadd.f32 0.0, %v941
        %v943 = vpop.f32.mrf.mxu0
        %v944 = vadd.f32 0.0, %v943
        %945 = vmatmul.bf16.gmra.mxu0 %v761
        %v946 = vpop.f32.mrf.mxu0
        %v947 = vadd.f32 0.0, %v946
        %v948 = vpop.f32.mrf.mxu0
        %v949 = vadd.f32 0.0, %v948
        %950 = vmatmul.bf16.gmra.mxu0 %v764
        %v951 = vpop.f32.mrf.mxu0
        %v952 = vadd.f32 0.0, %v951
        %v953 = vpop.f32.mrf.mxu0
        %v954 = vadd.f32 0.0, %v953
        %955 = vmatmul.bf16.gmra.mxu0 %v767
        %v956 = vpop.f32.mrf.mxu0
        %v957 = vadd.f32 0.0, %v956
        %v958 = vpop.f32.mrf.mxu0
        %v959 = vadd.f32 0.0, %v958
        %960 = vmatmul.bf16.gmra.mxu0 %v770
        %v961 = vpop.f32.mrf.mxu0
        %v962 = vadd.f32 0.0, %v961
        %v963 = vpop.f32.mrf.mxu0
        %v964 = vadd.f32 0.0, %v963
        %965 = vmatmul.bf16.gmra.mxu0 %v773
        %v966 = vpop.f32.mrf.mxu0
        %v967 = vadd.f32 0.0, %v966
        %v968 = vpop.f32.mrf.mxu0
        %v969 = vadd.f32 0.0, %v968
        %970 = vdwg.mxu0
        %971 = vmatpush.bf16.msra.mxu0 0
        %972 = vmatpush.bf16.msra.mxu0 0
        %973 = vmatpush.bf16.msra.mxu0 0
        %974 = vmatpush.bf16.msra.mxu0 0
        %975 = vmatpush.bf16.msra.mxu0 0
        %976 = vmatpush.bf16.msra.mxu0 0
        %977 = vmatpush.bf16.msra.mxu0 %v731
        %978 = vmatpush.bf16.msra.mxu0 %v723
        %979 = vmatmul.bf16.gmra.mxu0 %v752
        %v980 = vpop.f32.mrf.mxu0
        %v981 = vadd.f32 0.0, %v980
        %v982 = vpop.f32.mrf.mxu0
        %v983 = vadd.f32 0.0, %v982
        %984 = vmatmul.bf16.gmra.mxu0 %v755
        %v985 = vpop.f32.mrf.mxu0
        %v986 = vadd.f32 0.0, %v985
        %v987 = vpop.f32.mrf.mxu0
        %v988 = vadd.f32 0.0, %v987
        %989 = vmatmul.bf16.gmra.mxu0 %v758
        %v990 = vpop.f32.mrf.mxu0
        %v991 = vadd.f32 0.0, %v990
        %v992 = vpop.f32.mrf.mxu0
        %v993 = vadd.f32 0.0, %v992
        %994 = vmatmul.bf16.gmra.mxu0 %v761
        %v995 = vpop.f32.mrf.mxu0
        %v996 = vadd.f32 0.0, %v995
        %v997 = vpop.f32.mrf.mxu0
        %v998 = vadd.f32 0.0, %v997
        %999 = vmatmul.bf16.gmra.mxu0 %v764
        %v1000 = vpop.f32.mrf.mxu0
        %v1001 = vadd.f32 0.0, %v1000
        %v1002 = vpop.f32.mrf.mxu0
        %v1003 = vadd.f32 0.0, %v1002
        %1004 = vmatmul.bf16.gmra.mxu0 %v767
        %v1005 = vpop.f32.mrf.mxu0
        %v1006 = vadd.f32 0.0, %v1005
        %v1007 = vpop.f32.mrf.mxu0
        %v1008 = vadd.f32 0.0, %v1007
        %1009 = vmatmul.bf16.gmra.mxu0 %v770
        %v1010 = vpop.f32.mrf.mxu0
        %v1011 = vadd.f32 0.0, %v1010
        %v1012 = vpop.f32.mrf.mxu0
        %v1013 = vadd.f32 0.0, %v1012
        %1014 = vmatmul.bf16.gmra.mxu0 %v773
        %v1015 = vpop.f32.mrf.mxu0
        %v1016 = vadd.f32 0.0, %v1015
        %v1017 = vpop.f32.mrf.mxu0
        %v1018 = vadd.f32 0.0, %v1017
        %1019 = vdwg.mxu0
        %1020 = vmatpush.bf16.msra.mxu0 0
        %1021 = vmatpush.bf16.msra.mxu0 0
        %1022 = vmatpush.bf16.msra.mxu0 0
        %1023 = vmatpush.bf16.msra.mxu0 0
        %1024 = vmatpush.bf16.msra.mxu0 0
        %1025 = vmatpush.bf16.msra.mxu0 0
        %1026 = vmatpush.bf16.msra.mxu0 %v732
        %1027 = vmatpush.bf16.msra.mxu0 %v724
        %1028 = vmatmul.bf16.gmra.mxu0 %v752
        %v1029 = vpop.f32.mrf.mxu0
        %v1030 = vadd.f32 0.0, %v1029
        %v1031 = vpop.f32.mrf.mxu0
        %v1032 = vadd.f32 0.0, %v1031
        %1033 = vmatmul.bf16.gmra.mxu0 %v755
        %v1034 = vpop.f32.mrf.mxu0
        %v1035 = vadd.f32 0.0, %v1034
        %v1036 = vpop.f32.mrf.mxu0
        %v1037 = vadd.f32 0.0, %v1036
        %1038 = vmatmul.bf16.gmra.mxu0 %v758
        %v1039 = vpop.f32.mrf.mxu0
        %v1040 = vadd.f32 0.0, %v1039
        %v1041 = vpop.f32.mrf.mxu0
        %v1042 = vadd.f32 0.0, %v1041
        %1043 = vmatmul.bf16.gmra.mxu0 %v761
        %v1044 = vpop.f32.mrf.mxu0
        %v1045 = vadd.f32 0.0, %v1044
        %v1046 = vpop.f32.mrf.mxu0
        %v1047 = vadd.f32 0.0, %v1046
        %1048 = vmatmul.bf16.gmra.mxu0 %v764
        %v1049 = vpop.f32.mrf.mxu0
        %v1050 = vadd.f32 0.0, %v1049
        %v1051 = vpop.f32.mrf.mxu0
        %v1052 = vadd.f32 0.0, %v1051
        %1053 = vmatmul.bf16.gmra.mxu0 %v767
        %v1054 = vpop.f32.mrf.mxu0
        %v1055 = vadd.f32 0.0, %v1054
        %v1056 = vpop.f32.mrf.mxu0
        %v1057 = vadd.f32 0.0, %v1056
        %1058 = vmatmul.bf16.gmra.mxu0 %v770
        %v1059 = vpop.f32.mrf.mxu0
        %v1060 = vadd.f32 0.0, %v1059
        %v1061 = vpop.f32.mrf.mxu0
        %v1062 = vadd.f32 0.0, %v1061
        %1063 = vmatmul.bf16.gmra.mxu0 %v773
        %v1064 = vpop.f32.mrf.mxu0
        %v1065 = vadd.f32 0.0, %v1064
        %v1066 = vpop.f32.mrf.mxu0
        %v1067 = vadd.f32 0.0, %v1066
        %1068 = vdwg.mxu0
        %1069 = vmatpush.bf16.msra.mxu0 0
        %1070 = vmatpush.bf16.msra.mxu0 0
        %1071 = vmatpush.bf16.msra.mxu0 0
        %1072 = vmatpush.bf16.msra.mxu0 0
        %1073 = vmatpush.bf16.msra.mxu0 0
        %1074 = vmatpush.bf16.msra.mxu0 0
        %1075 = vmatpush.bf16.msra.mxu0 %v733
        %1076 = vmatpush.bf16.msra.mxu0 %v725
        %1077 = vmatmul.bf16.gmra.mxu0 %v752
        %v1078 = vpop.f32.mrf.mxu0
        %v1079 = vadd.f32 0.0, %v1078
        %v1080 = vpop.f32.mrf.mxu0
        %v1081 = vadd.f32 0.0, %v1080
        %1082 = vmatmul.bf16.gmra.mxu0 %v755
        %v1083 = vpop.f32.mrf.mxu0
        %v1084 = vadd.f32 0.0, %v1083
        %v1085 = vpop.f32.mrf.mxu0
        %v1086 = vadd.f32 0.0, %v1085
        %1087 = vmatmul.bf16.gmra.mxu0 %v758
        %v1088 = vpop.f32.mrf.mxu0
        %v1089 = vadd.f32 0.0, %v1088
        %v1090 = vpop.f32.mrf.mxu0
        %v1091 = vadd.f32 0.0, %v1090
        %1092 = vmatmul.bf16.gmra.mxu0 %v761
        %v1093 = vpop.f32.mrf.mxu0
        %v1094 = vadd.f32 0.0, %v1093
        %v1095 = vpop.f32.mrf.mxu0
        %v1096 = vadd.f32 0.0, %v1095
        %1097 = vmatmul.bf16.gmra.mxu0 %v764
        %v1098 = vpop.f32.mrf.mxu0
        %v1099 = vadd.f32 0.0, %v1098
        %v1100 = vpop.f32.mrf.mxu0
        %v1101 = vadd.f32 0.0, %v1100
        %1102 = vmatmul.bf16.gmra.mxu0 %v767
        %v1103 = vpop.f32.mrf.mxu0
        %v1104 = vadd.f32 0.0, %v1103
        %v1105 = vpop.f32.mrf.mxu0
        %v1106 = vadd.f32 0.0, %v1105
        %1107 = vmatmul.bf16.gmra.mxu0 %v770
        %v1108 = vpop.f32.mrf.mxu0
        %v1109 = vadd.f32 0.0, %v1108
        %v1110 = vpop.f32.mrf.mxu0
        %v1111 = vadd.f32 0.0, %v1110
        %1112 = vmatmul.bf16.gmra.mxu0 %v773
        %v1113 = vpop.f32.mrf.mxu0
        %v1114 = vadd.f32 0.0, %v1113
        %v1115 = vpop.f32.mrf.mxu0
        %v1116 = vadd.f32 0.0, %v1115
        %1117 = vdwg.mxu0
        %1118 = vmatpush.bf16.msra.mxu0 0
        %1119 = vmatpush.bf16.msra.mxu0 0
        %1120 = vmatpush.bf16.msra.mxu0 0
        %1121 = vmatpush.bf16.msra.mxu0 0
        %1122 = vmatpush.bf16.msra.mxu0 0
        %1123 = vmatpush.bf16.msra.mxu0 0
        %1124 = vmatpush.bf16.msra.mxu0 %v734
        %1125 = vmatpush.bf16.msra.mxu0 %v726
        %1126 = vmatmul.bf16.gmra.mxu0 %v752
        %v1127 = vpop.f32.mrf.mxu0
        %v1128 = vadd.f32 0.0, %v1127
        %v1129 = vpop.f32.mrf.mxu0
        %v1130 = vadd.f32 0.0, %v1129
        %1131 = vmatmul.bf16.gmra.mxu0 %v755
        %v1132 = vpop.f32.mrf.mxu0
        %v1133 = vadd.f32 0.0, %v1132
        %v1134 = vpop.f32.mrf.mxu0
        %v1135 = vadd.f32 0.0, %v1134
        %1136 = vmatmul.bf16.gmra.mxu0 %v758
        %v1137 = vpop.f32.mrf.mxu0
        %v1138 = vadd.f32 0.0, %v1137
        %v1139 = vpop.f32.mrf.mxu0
        %v1140 = vadd.f32 0.0, %v1139
        %1141 = vmatmul.bf16.gmra.mxu0 %v761
        %v1142 = vpop.f32.mrf.mxu0
        %v1143 = vadd.f32 0.0, %v1142
        %v1144 = vpop.f32.mrf.mxu0
        %v1145 = vadd.f32 0.0, %v1144
        %1146 = vmatmul.bf16.gmra.mxu0 %v764
        %v1147 = vpop.f32.mrf.mxu0
        %v1148 = vadd.f32 0.0, %v1147
        %v1149 = vpop.f32.mrf.mxu0
        %v1150 = vadd.f32 0.0, %v1149
        %1151 = vmatmul.bf16.gmra.mxu0 %v767
        %v1152 = vpop.f32.mrf.mxu0
        %v1153 = vadd.f32 0.0, %v1152
        %v1154 = vpop.f32.mrf.mxu0
        %v1155 = vadd.f32 0.0, %v1154
        %1156 = vmatmul.bf16.gmra.mxu0 %v770
        %v1157 = vpop.f32.mrf.mxu0
        %v1158 = vadd.f32 0.0, %v1157
        %v1159 = vpop.f32.mrf.mxu0
        %v1160 = vadd.f32 0.0, %v1159
        %1161 = vmatmul.bf16.gmra.mxu0 %v773
        %v1162 = vpop.f32.mrf.mxu0
        %v1163 = vadd.f32 0.0, %v1162
        %v1164 = vpop.f32.mrf.mxu0
        %v1165 = vadd.f32 0.0, %v1164
        %1166 = vdwg.mxu0
        %v1167 = vsel %vm637, 1, 0
        %v1168 = vsel %vm638, 1, 0
        %v1169 = vsel %vm639, 1, 0
        %v1170 = vsel %vm640, 1, 0
        %v1171 = vsel %vm641, 1, 0
        %v1172 = vsel %vm642, 1, 0
        %v1173 = vsel %vm643, 1, 0
        %v1174 = vsel %vm644, 1, 0
        %v1175 = vsel %vm645, 1, 0
        %v1176 = vsel %vm646, 1, 0
        %v1177 = vsel %vm647, 1, 0
        %v1178 = vsel %vm648, 1, 0
        %v1179 = vsel %vm649, 1, 0
        %v1180 = vsel %vm650, 1, 0
        %v1181 = vsel %vm651, 1, 0
        %v1182 = vsel %vm652, 1, 0
        %vm1183 = vcmp.eq.s32.totalorder %v1167, 1
        %vm1184 = vcmp.eq.s32.totalorder %v1168, 1
        %vm1185 = vcmp.eq.s32.totalorder %v1169, 1
        %vm1186 = vcmp.eq.s32.totalorder %v1170, 1
        %vm1187 = vcmp.eq.s32.totalorder %v1171, 1
        %vm1188 = vcmp.eq.s32.totalorder %v1172, 1
        %vm1189 = vcmp.eq.s32.totalorder %v1173, 1
        %vm1190 = vcmp.eq.s32.totalorder %v1174, 1
        %vm1191 = vcmp.eq.s32.totalorder %v1175, 1
        %vm1192 = vcmp.eq.s32.totalorder %v1176, 1
        %vm1193 = vcmp.eq.s32.totalorder %v1177, 1
        %vm1194 = vcmp.eq.s32.totalorder %v1178, 1
        %vm1195 = vcmp.eq.s32.totalorder %v1179, 1
        %vm1196 = vcmp.eq.s32.totalorder %v1180, 1
        %vm1197 = vcmp.eq.s32.totalorder %v1181, 1
        %vm1198 = vcmp.eq.s32.totalorder %v1182, 1
        %v1199 = vsel %vm1183, %v785, -1e+30
        %v1200 = vsel %vm1183, %v834, -1e+30
        %v1201 = vsel %vm1183, %v883, -1e+30
        %v1202 = vsel %vm1183, %v932, -1e+30
        %v1203 = vsel %vm1183, %v981, -1e+30
        %v1204 = vsel %vm1183, %v1030, -1e+30
        %v1205 = vsel %vm1183, %v1079, -1e+30
        %v1206 = vsel %vm1183, %v1128, -1e+30
        %v1207 = vsel %vm1184, %v787, -1e+30
        %v1208 = vsel %vm1184, %v836, -1e+30
        %v1209 = vsel %vm1184, %v885, -1e+30
        %v1210 = vsel %vm1184, %v934, -1e+30
        %v1211 = vsel %vm1184, %v983, -1e+30
        %v1212 = vsel %vm1184, %v1032, -1e+30
        %v1213 = vsel %vm1184, %v1081, -1e+30
        %v1214 = vsel %vm1184, %v1130, -1e+30
        %v1215 = vsel %vm1185, %v790, -1e+30
        %v1216 = vsel %vm1185, %v839, -1e+30
        %v1217 = vsel %vm1185, %v888, -1e+30
        %v1218 = vsel %vm1185, %v937, -1e+30
        %v1219 = vsel %vm1185, %v986, -1e+30
        %v1220 = vsel %vm1185, %v1035, -1e+30
        %v1221 = vsel %vm1185, %v1084, -1e+30
        %v1222 = vsel %vm1185, %v1133, -1e+30
        %v1223 = vsel %vm1186, %v792, -1e+30
        %v1224 = vsel %vm1186, %v841, -1e+30
        %v1225 = vsel %vm1186, %v890, -1e+30
        %v1226 = vsel %vm1186, %v939, -1e+30
        %v1227 = vsel %vm1186, %v988, -1e+30
        %v1228 = vsel %vm1186, %v1037, -1e+30
        %v1229 = vsel %vm1186, %v1086, -1e+30
        %v1230 = vsel %vm1186, %v1135, -1e+30
        %v1231 = vsel %vm1187, %v795, -1e+30
        %v1232 = vsel %vm1187, %v844, -1e+30
        %v1233 = vsel %vm1187, %v893, -1e+30
        %v1234 = vsel %vm1187, %v942, -1e+30
        %v1235 = vsel %vm1187, %v991, -1e+30
        %v1236 = vsel %vm1187, %v1040, -1e+30
        %v1237 = vsel %vm1187, %v1089, -1e+30
        %v1238 = vsel %vm1187, %v1138, -1e+30
        %v1239 = vsel %vm1188, %v797, -1e+30
        %v1240 = vsel %vm1188, %v846, -1e+30
        %v1241 = vsel %vm1188, %v895, -1e+30
        %v1242 = vsel %vm1188, %v944, -1e+30
        %v1243 = vsel %vm1188, %v993, -1e+30
        %v1244 = vsel %vm1188, %v1042, -1e+30
        %v1245 = vsel %vm1188, %v1091, -1e+30
        %v1246 = vsel %vm1188, %v1140, -1e+30
        %v1247 = vsel %vm1189, %v800, -1e+30
        %v1248 = vsel %vm1189, %v849, -1e+30
        %v1249 = vsel %vm1189, %v898, -1e+30
        %v1250 = vsel %vm1189, %v947, -1e+30
        %v1251 = vsel %vm1189, %v996, -1e+30
        %v1252 = vsel %vm1189, %v1045, -1e+30
        %v1253 = vsel %vm1189, %v1094, -1e+30
        %v1254 = vsel %vm1189, %v1143, -1e+30
        %v1255 = vsel %vm1190, %v802, -1e+30
        %v1256 = vsel %vm1190, %v851, -1e+30
        %v1257 = vsel %vm1190, %v900, -1e+30
        %v1258 = vsel %vm1190, %v949, -1e+30
        %v1259 = vsel %vm1190, %v998, -1e+30
        %v1260 = vsel %vm1190, %v1047, -1e+30
        %v1261 = vsel %vm1190, %v1096, -1e+30
        %v1262 = vsel %vm1190, %v1145, -1e+30
        %v1263 = vsel %vm1191, %v805, -1e+30
        %v1264 = vsel %vm1191, %v854, -1e+30
        %v1265 = vsel %vm1191, %v903, -1e+30
        %v1266 = vsel %vm1191, %v952, -1e+30
        %v1267 = vsel %vm1191, %v1001, -1e+30
        %v1268 = vsel %vm1191, %v1050, -1e+30
        %v1269 = vsel %vm1191, %v1099, -1e+30
        %v1270 = vsel %vm1191, %v1148, -1e+30
        %v1271 = vsel %vm1192, %v807, -1e+30
        %v1272 = vsel %vm1192, %v856, -1e+30
        %v1273 = vsel %vm1192, %v905, -1e+30
        %v1274 = vsel %vm1192, %v954, -1e+30
        %v1275 = vsel %vm1192, %v1003, -1e+30
        %v1276 = vsel %vm1192, %v1052, -1e+30
        %v1277 = vsel %vm1192, %v1101, -1e+30
        %v1278 = vsel %vm1192, %v1150, -1e+30
        %v1279 = vsel %vm1193, %v810, -1e+30
        %v1280 = vsel %vm1193, %v859, -1e+30
        %v1281 = vsel %vm1193, %v908, -1e+30
        %v1282 = vsel %vm1193, %v957, -1e+30
        %v1283 = vsel %vm1193, %v1006, -1e+30
        %v1284 = vsel %vm1193, %v1055, -1e+30
        %v1285 = vsel %vm1193, %v1104, -1e+30
        %v1286 = vsel %vm1193, %v1153, -1e+30
        %v1287 = vsel %vm1194, %v812, -1e+30
        %v1288 = vsel %vm1194, %v861, -1e+30
        %v1289 = vsel %vm1194, %v910, -1e+30
        %v1290 = vsel %vm1194, %v959, -1e+30
        %v1291 = vsel %vm1194, %v1008, -1e+30
        %v1292 = vsel %vm1194, %v1057, -1e+30
        %v1293 = vsel %vm1194, %v1106, -1e+30
        %v1294 = vsel %vm1194, %v1155, -1e+30
        %v1295 = vsel %vm1195, %v815, -1e+30
        %v1296 = vsel %vm1195, %v864, -1e+30
        %v1297 = vsel %vm1195, %v913, -1e+30
        %v1298 = vsel %vm1195, %v962, -1e+30
        %v1299 = vsel %vm1195, %v1011, -1e+30
        %v1300 = vsel %vm1195, %v1060, -1e+30
        %v1301 = vsel %vm1195, %v1109, -1e+30
        %v1302 = vsel %vm1195, %v1158, -1e+30
        %v1303 = vsel %vm1196, %v817, -1e+30
        %v1304 = vsel %vm1196, %v866, -1e+30
        %v1305 = vsel %vm1196, %v915, -1e+30
        %v1306 = vsel %vm1196, %v964, -1e+30
        %v1307 = vsel %vm1196, %v1013, -1e+30
        %v1308 = vsel %vm1196, %v1062, -1e+30
        %v1309 = vsel %vm1196, %v1111, -1e+30
        %v1310 = vsel %vm1196, %v1160, -1e+30
        %v1311 = vsel %vm1197, %v820, -1e+30
        %v1312 = vsel %vm1197, %v869, -1e+30
        %v1313 = vsel %vm1197, %v918, -1e+30
        %v1314 = vsel %vm1197, %v967, -1e+30
        %v1315 = vsel %vm1197, %v1016, -1e+30
        %v1316 = vsel %vm1197, %v1065, -1e+30
        %v1317 = vsel %vm1197, %v1114, -1e+30
        %v1318 = vsel %vm1197, %v1163, -1e+30
        %v1319 = vsel %vm1198, %v822, -1e+30
        %v1320 = vsel %vm1198, %v871, -1e+30
        %v1321 = vsel %vm1198, %v920, -1e+30
        %v1322 = vsel %vm1198, %v969, -1e+30
        %v1323 = vsel %vm1198, %v1018, -1e+30
        %v1324 = vsel %vm1198, %v1067, -1e+30
        %v1325 = vsel %vm1198, %v1116, -1e+30
        %v1326 = vsel %vm1198, %v1165, -1e+30
        %v1327 = vmax.f32 %v1199, %v1207
        %v1328 = vmax.f32 %v1327, %v1215
        %v1329 = vmax.f32 %v1328, %v1223
        %v1330 = vmax.f32 %v1329, %v1231
        %v1331 = vmax.f32 %v1330, %v1239
        %v1332 = vmax.f32 %v1331, %v1247
        %v1333 = vmax.f32 %v1332, %v1255
        %v1334 = vmax.f32 %v1333, %v1263
        %v1335 = vmax.f32 %v1334, %v1271
        %v1336 = vmax.f32 %v1335, %v1279
        %v1337 = vmax.f32 %v1336, %v1287
        %v1338 = vmax.f32 %v1337, %v1295
        %v1339 = vmax.f32 %v1338, %v1303
        %v1340 = vmax.f32 %v1339, %v1311
        %v1341 = vmax.f32 %v1340, %v1319
        %v1342 = vrot.slane %v1341, 4
        %v1343 = vmax.f32 %v1341, %v1342
        %v1344 = vrot.slane %v1343, 2
        %v1345 = vmax.f32 %v1343, %v1344
        %v1346 = vrot.slane %v1345, 1
        %v1347 = vmax.f32 %v1345, %v1346
        %v1348 = vmax.f32 %v1200, %v1208
        %v1349 = vmax.f32 %v1348, %v1216
        %v1350 = vmax.f32 %v1349, %v1224
        %v1351 = vmax.f32 %v1350, %v1232
        %v1352 = vmax.f32 %v1351, %v1240
        %v1353 = vmax.f32 %v1352, %v1248
        %v1354 = vmax.f32 %v1353, %v1256
        %v1355 = vmax.f32 %v1354, %v1264
        %v1356 = vmax.f32 %v1355, %v1272
        %v1357 = vmax.f32 %v1356, %v1280
        %v1358 = vmax.f32 %v1357, %v1288
        %v1359 = vmax.f32 %v1358, %v1296
        %v1360 = vmax.f32 %v1359, %v1304
        %v1361 = vmax.f32 %v1360, %v1312
        %v1362 = vmax.f32 %v1361, %v1320
        %v1363 = vrot.slane %v1362, 4
        %v1364 = vmax.f32 %v1362, %v1363
        %v1365 = vrot.slane %v1364, 2
        %v1366 = vmax.f32 %v1364, %v1365
        %v1367 = vrot.slane %v1366, 1
        %v1368 = vmax.f32 %v1366, %v1367
        %v1369 = vmax.f32 %v1201, %v1209
        %v1370 = vmax.f32 %v1369, %v1217
        %v1371 = vmax.f32 %v1370, %v1225
        %v1372 = vmax.f32 %v1371, %v1233
        %v1373 = vmax.f32 %v1372, %v1241
        %v1374 = vmax.f32 %v1373, %v1249
        %v1375 = vmax.f32 %v1374, %v1257
        %v1376 = vmax.f32 %v1375, %v1265
        %v1377 = vmax.f32 %v1376, %v1273
        %v1378 = vmax.f32 %v1377, %v1281
        %v1379 = vmax.f32 %v1378, %v1289
        %v1380 = vmax.f32 %v1379, %v1297
        %v1381 = vmax.f32 %v1380, %v1305
        %v1382 = vmax.f32 %v1381, %v1313
        %v1383 = vmax.f32 %v1382, %v1321
        %v1384 = vrot.slane %v1383, 4
        %v1385 = vmax.f32 %v1383, %v1384
        %v1386 = vrot.slane %v1385, 2
        %v1387 = vmax.f32 %v1385, %v1386
        %v1388 = vrot.slane %v1387, 1
        %v1389 = vmax.f32 %v1387, %v1388
        %v1390 = vmax.f32 %v1202, %v1210
        %v1391 = vmax.f32 %v1390, %v1218
        %v1392 = vmax.f32 %v1391, %v1226
        %v1393 = vmax.f32 %v1392, %v1234
        %v1394 = vmax.f32 %v1393, %v1242
        %v1395 = vmax.f32 %v1394, %v1250
        %v1396 = vmax.f32 %v1395, %v1258
        %v1397 = vmax.f32 %v1396, %v1266
        %v1398 = vmax.f32 %v1397, %v1274
        %v1399 = vmax.f32 %v1398, %v1282
        %v1400 = vmax.f32 %v1399, %v1290
        %v1401 = vmax.f32 %v1400, %v1298
        %v1402 = vmax.f32 %v1401, %v1306
        %v1403 = vmax.f32 %v1402, %v1314
        %v1404 = vmax.f32 %v1403, %v1322
        %v1405 = vrot.slane %v1404, 4
        %v1406 = vmax.f32 %v1404, %v1405
        %v1407 = vrot.slane %v1406, 2
        %v1408 = vmax.f32 %v1406, %v1407
        %v1409 = vrot.slane %v1408, 1
        %v1410 = vmax.f32 %v1408, %v1409
        %v1411 = vmax.f32 %v1203, %v1211
        %v1412 = vmax.f32 %v1411, %v1219
        %v1413 = vmax.f32 %v1412, %v1227
        %v1414 = vmax.f32 %v1413, %v1235
        %v1415 = vmax.f32 %v1414, %v1243
        %v1416 = vmax.f32 %v1415, %v1251
        %v1417 = vmax.f32 %v1416, %v1259
        %v1418 = vmax.f32 %v1417, %v1267
        %v1419 = vmax.f32 %v1418, %v1275
        %v1420 = vmax.f32 %v1419, %v1283
        %v1421 = vmax.f32 %v1420, %v1291
        %v1422 = vmax.f32 %v1421, %v1299
        %v1423 = vmax.f32 %v1422, %v1307
        %v1424 = vmax.f32 %v1423, %v1315
        %v1425 = vmax.f32 %v1424, %v1323
        %v1426 = vrot.slane %v1425, 4
        %v1427 = vmax.f32 %v1425, %v1426
        %v1428 = vrot.slane %v1427, 2
        %v1429 = vmax.f32 %v1427, %v1428
        %v1430 = vrot.slane %v1429, 1
        %v1431 = vmax.f32 %v1429, %v1430
        %v1432 = vmax.f32 %v1204, %v1212
        %v1433 = vmax.f32 %v1432, %v1220
        %v1434 = vmax.f32 %v1433, %v1228
        %v1435 = vmax.f32 %v1434, %v1236
        %v1436 = vmax.f32 %v1435, %v1244
        %v1437 = vmax.f32 %v1436, %v1252
        %v1438 = vmax.f32 %v1437, %v1260
        %v1439 = vmax.f32 %v1438, %v1268
        %v1440 = vmax.f32 %v1439, %v1276
        %v1441 = vmax.f32 %v1440, %v1284
        %v1442 = vmax.f32 %v1441, %v1292
        %v1443 = vmax.f32 %v1442, %v1300
        %v1444 = vmax.f32 %v1443, %v1308
        %v1445 = vmax.f32 %v1444, %v1316
        %v1446 = vmax.f32 %v1445, %v1324
        %v1447 = vrot.slane %v1446, 4
        %v1448 = vmax.f32 %v1446, %v1447
        %v1449 = vrot.slane %v1448, 2
        %v1450 = vmax.f32 %v1448, %v1449
        %v1451 = vrot.slane %v1450, 1
        %v1452 = vmax.f32 %v1450, %v1451
        %v1453 = vmax.f32 %v1205, %v1213
        %v1454 = vmax.f32 %v1453, %v1221
        %v1455 = vmax.f32 %v1454, %v1229
        %v1456 = vmax.f32 %v1455, %v1237
        %v1457 = vmax.f32 %v1456, %v1245
        %v1458 = vmax.f32 %v1457, %v1253
        %v1459 = vmax.f32 %v1458, %v1261
        %v1460 = vmax.f32 %v1459, %v1269
        %v1461 = vmax.f32 %v1460, %v1277
        %v1462 = vmax.f32 %v1461, %v1285
        %v1463 = vmax.f32 %v1462, %v1293
        %v1464 = vmax.f32 %v1463, %v1301
        %v1465 = vmax.f32 %v1464, %v1309
        %v1466 = vmax.f32 %v1465, %v1317
        %v1467 = vmax.f32 %v1466, %v1325
        %v1468 = vrot.slane %v1467, 4
        %v1469 = vmax.f32 %v1467, %v1468
        %v1470 = vrot.slane %v1469, 2
        %v1471 = vmax.f32 %v1469, %v1470
        %v1472 = vrot.slane %v1471, 1
        %v1473 = vmax.f32 %v1471, %v1472
        %v1474 = vmax.f32 %v1206, %v1214
        %v1475 = vmax.f32 %v1474, %v1222
        %v1476 = vmax.f32 %v1475, %v1230
        %v1477 = vmax.f32 %v1476, %v1238
        %v1478 = vmax.f32 %v1477, %v1246
        %v1479 = vmax.f32 %v1478, %v1254
        %v1480 = vmax.f32 %v1479, %v1262
        %v1481 = vmax.f32 %v1480, %v1270
        %v1482 = vmax.f32 %v1481, %v1278
        %v1483 = vmax.f32 %v1482, %v1286
        %v1484 = vmax.f32 %v1483, %v1294
        %v1485 = vmax.f32 %v1484, %v1302
        %v1486 = vmax.f32 %v1485, %v1310
        %v1487 = vmax.f32 %v1486, %v1318
        %v1488 = vmax.f32 %v1487, %v1326
        %v1489 = vrot.slane %v1488, 4
        %v1490 = vmax.f32 %v1488, %v1489
        %v1491 = vrot.slane %v1490, 2
        %v1492 = vmax.f32 %v1490, %v1491
        %v1493 = vrot.slane %v1492, 1
        %v1494 = vmax.f32 %v1492, %v1493
        %v1495 = vsub.f32 %v1199, %v1347
        %v1496 = vsub.f32 %v1200, %v1368
        %v1497 = vsub.f32 %v1201, %v1389
        %v1498 = vsub.f32 %v1202, %v1410
        %v1499 = vsub.f32 %v1203, %v1431
        %v1500 = vsub.f32 %v1204, %v1452
        %v1501 = vsub.f32 %v1205, %v1473
        %v1502 = vsub.f32 %v1206, %v1494
        %v1503 = vsub.f32 %v1207, %v1347
        %v1504 = vsub.f32 %v1208, %v1368
        %v1505 = vsub.f32 %v1209, %v1389
        %v1506 = vsub.f32 %v1210, %v1410
        %v1507 = vsub.f32 %v1211, %v1431
        %v1508 = vsub.f32 %v1212, %v1452
        %v1509 = vsub.f32 %v1213, %v1473
        %v1510 = vsub.f32 %v1214, %v1494
        %v1511 = vsub.f32 %v1215, %v1347
        %v1512 = vsub.f32 %v1216, %v1368
        %v1513 = vsub.f32 %v1217, %v1389
        %v1514 = vsub.f32 %v1218, %v1410
        %v1515 = vsub.f32 %v1219, %v1431
        %v1516 = vsub.f32 %v1220, %v1452
        %v1517 = vsub.f32 %v1221, %v1473
        %v1518 = vsub.f32 %v1222, %v1494
        %v1519 = vsub.f32 %v1223, %v1347
        %v1520 = vsub.f32 %v1224, %v1368
        %v1521 = vsub.f32 %v1225, %v1389
        %v1522 = vsub.f32 %v1226, %v1410
        %v1523 = vsub.f32 %v1227, %v1431
        %v1524 = vsub.f32 %v1228, %v1452
        %v1525 = vsub.f32 %v1229, %v1473
        %v1526 = vsub.f32 %v1230, %v1494
        %v1527 = vsub.f32 %v1231, %v1347
        %v1528 = vsub.f32 %v1232, %v1368
        %v1529 = vsub.f32 %v1233, %v1389
        %v1530 = vsub.f32 %v1234, %v1410
        %v1531 = vsub.f32 %v1235, %v1431
        %v1532 = vsub.f32 %v1236, %v1452
        %v1533 = vsub.f32 %v1237, %v1473
        %v1534 = vsub.f32 %v1238, %v1494
        %v1535 = vsub.f32 %v1239, %v1347
        %v1536 = vsub.f32 %v1240, %v1368
        %v1537 = vsub.f32 %v1241, %v1389
        %v1538 = vsub.f32 %v1242, %v1410
        %v1539 = vsub.f32 %v1243, %v1431
        %v1540 = vsub.f32 %v1244, %v1452
        %v1541 = vsub.f32 %v1245, %v1473
        %v1542 = vsub.f32 %v1246, %v1494
        %v1543 = vsub.f32 %v1247, %v1347
        %v1544 = vsub.f32 %v1248, %v1368
        %v1545 = vsub.f32 %v1249, %v1389
        %v1546 = vsub.f32 %v1250, %v1410
        %v1547 = vsub.f32 %v1251, %v1431
        %v1548 = vsub.f32 %v1252, %v1452
        %v1549 = vsub.f32 %v1253, %v1473
        %v1550 = vsub.f32 %v1254, %v1494
        %v1551 = vsub.f32 %v1255, %v1347
        %v1552 = vsub.f32 %v1256, %v1368
        %v1553 = vsub.f32 %v1257, %v1389
        %v1554 = vsub.f32 %v1258, %v1410
        %v1555 = vsub.f32 %v1259, %v1431
        %v1556 = vsub.f32 %v1260, %v1452
        %v1557 = vsub.f32 %v1261, %v1473
        %v1558 = vsub.f32 %v1262, %v1494
        %v1559 = vsub.f32 %v1263, %v1347
        %v1560 = vsub.f32 %v1264, %v1368
        %v1561 = vsub.f32 %v1265, %v1389
        %v1562 = vsub.f32 %v1266, %v1410
        %v1563 = vsub.f32 %v1267, %v1431
        %v1564 = vsub.f32 %v1268, %v1452
        %v1565 = vsub.f32 %v1269, %v1473
        %v1566 = vsub.f32 %v1270, %v1494
        %v1567 = vsub.f32 %v1271, %v1347
        %v1568 = vsub.f32 %v1272, %v1368
        %v1569 = vsub.f32 %v1273, %v1389
        %v1570 = vsub.f32 %v1274, %v1410
        %v1571 = vsub.f32 %v1275, %v1431
        %v1572 = vsub.f32 %v1276, %v1452
        %v1573 = vsub.f32 %v1277, %v1473
        %v1574 = vsub.f32 %v1278, %v1494
        %v1575 = vsub.f32 %v1279, %v1347
        %v1576 = vsub.f32 %v1280, %v1368
        %v1577 = vsub.f32 %v1281, %v1389
        %v1578 = vsub.f32 %v1282, %v1410
        %v1579 = vsub.f32 %v1283, %v1431
        %v1580 = vsub.f32 %v1284, %v1452
        %v1581 = vsub.f32 %v1285, %v1473
        %v1582 = vsub.f32 %v1286, %v1494
        %v1583 = vsub.f32 %v1287, %v1347
        %v1584 = vsub.f32 %v1288, %v1368
        %v1585 = vsub.f32 %v1289, %v1389
        %v1586 = vsub.f32 %v1290, %v1410
        %v1587 = vsub.f32 %v1291, %v1431
        %v1588 = vsub.f32 %v1292, %v1452
        %v1589 = vsub.f32 %v1293, %v1473
        %v1590 = vsub.f32 %v1294, %v1494
        %v1591 = vsub.f32 %v1295, %v1347
        %v1592 = vsub.f32 %v1296, %v1368
        %v1593 = vsub.f32 %v1297, %v1389
        %v1594 = vsub.f32 %v1298, %v1410
        %v1595 = vsub.f32 %v1299, %v1431
        %v1596 = vsub.f32 %v1300, %v1452
        %v1597 = vsub.f32 %v1301, %v1473
        %v1598 = vsub.f32 %v1302, %v1494
        %v1599 = vsub.f32 %v1303, %v1347
        %v1600 = vsub.f32 %v1304, %v1368
        %v1601 = vsub.f32 %v1305, %v1389
        %v1602 = vsub.f32 %v1306, %v1410
        %v1603 = vsub.f32 %v1307, %v1431
        %v1604 = vsub.f32 %v1308, %v1452
        %v1605 = vsub.f32 %v1309, %v1473
        %v1606 = vsub.f32 %v1310, %v1494
        %v1607 = vsub.f32 %v1311, %v1347
        %v1608 = vsub.f32 %v1312, %v1368
        %v1609 = vsub.f32 %v1313, %v1389
        %v1610 = vsub.f32 %v1314, %v1410
        %v1611 = vsub.f32 %v1315, %v1431
        %v1612 = vsub.f32 %v1316, %v1452
        %v1613 = vsub.f32 %v1317, %v1473
        %v1614 = vsub.f32 %v1318, %v1494
        %v1615 = vsub.f32 %v1319, %v1347
        %v1616 = vsub.f32 %v1320, %v1368
        %v1617 = vsub.f32 %v1321, %v1389
        %v1618 = vsub.f32 %v1322, %v1410
        %v1619 = vsub.f32 %v1323, %v1431
        %v1620 = vsub.f32 %v1324, %v1452
        %v1621 = vsub.f32 %v1325, %v1473
        %v1622 = vsub.f32 %v1326, %v1494
        %v1623 = vmul.f32 %v1495, 1.442695
        %v1624 = vpow.pop %v1623
        %v1625 = vmul.f32 %v1496, 1.442695
        %v1626 = vpow.pop %v1625
        %v1627 = vmul.f32 %v1497, 1.442695
        %v1628 = vpow.pop %v1627
        %v1629 = vmul.f32 %v1498, 1.442695
        %v1630 = vpow.pop %v1629
        %v1631 = vmul.f32 %v1499, 1.442695
        %v1632 = vpow.pop %v1631
        %v1633 = vmul.f32 %v1500, 1.442695
        %v1634 = vpow.pop %v1633
        %v1635 = vmul.f32 %v1501, 1.442695
        %v1636 = vpow.pop %v1635
        %v1637 = vmul.f32 %v1502, 1.442695
        %v1638 = vpow.pop %v1637
        %v1639 = vmul.f32 %v1503, 1.442695
        %v1640 = vpow.pop %v1639
        %v1641 = vmul.f32 %v1504, 1.442695
        %v1642 = vpow.pop %v1641
        %v1643 = vmul.f32 %v1505, 1.442695
        %v1644 = vpow.pop %v1643
        %v1645 = vmul.f32 %v1506, 1.442695
        %v1646 = vpow.pop %v1645
        %v1647 = vmul.f32 %v1507, 1.442695
        %v1648 = vpow.pop %v1647
        %v1649 = vmul.f32 %v1508, 1.442695
        %v1650 = vpow.pop %v1649
        %v1651 = vmul.f32 %v1509, 1.442695
        %v1652 = vpow.pop %v1651
        %v1653 = vmul.f32 %v1510, 1.442695
        %v1654 = vpow.pop %v1653
        %v1655 = vmul.f32 %v1511, 1.442695
        %v1656 = vpow.pop %v1655
        %v1657 = vmul.f32 %v1512, 1.442695
        %v1658 = vpow.pop %v1657
        %v1659 = vmul.f32 %v1513, 1.442695
        %v1660 = vpow.pop %v1659
        %v1661 = vmul.f32 %v1514, 1.442695
        %v1662 = vpow.pop %v1661
        %v1663 = vmul.f32 %v1515, 1.442695
        %v1664 = vpow.pop %v1663
        %v1665 = vmul.f32 %v1516, 1.442695
        %v1666 = vpow.pop %v1665
        %v1667 = vmul.f32 %v1517, 1.442695
        %v1668 = vpow.pop %v1667
        %v1669 = vmul.f32 %v1518, 1.442695
        %v1670 = vpow.pop %v1669
        %v1671 = vmul.f32 %v1519, 1.442695
        %v1672 = vpow.pop %v1671
        %v1673 = vmul.f32 %v1520, 1.442695
        %v1674 = vpow.pop %v1673
        %v1675 = vmul.f32 %v1521, 1.442695
        %v1676 = vpow.pop %v1675
        %v1677 = vmul.f32 %v1522, 1.442695
        %v1678 = vpow.pop %v1677
        %v1679 = vmul.f32 %v1523, 1.442695
        %v1680 = vpow.pop %v1679
        %v1681 = vmul.f32 %v1524, 1.442695
        %v1682 = vpow.pop %v1681
        %v1683 = vmul.f32 %v1525, 1.442695
        %v1684 = vpow.pop %v1683
        %v1685 = vmul.f32 %v1526, 1.442695
        %v1686 = vpow.pop %v1685
        %v1687 = vmul.f32 %v1527, 1.442695
        %v1688 = vpow.pop %v1687
        %v1689 = vmul.f32 %v1528, 1.442695
        %v1690 = vpow.pop %v1689
        %v1691 = vmul.f32 %v1529, 1.442695
        %v1692 = vpow.pop %v1691
        %v1693 = vmul.f32 %v1530, 1.442695
        %v1694 = vpow.pop %v1693
        %v1695 = vmul.f32 %v1531, 1.442695
        %v1696 = vpow.pop %v1695
        %v1697 = vmul.f32 %v1532, 1.442695
        %v1698 = vpow.pop %v1697
        %v1699 = vmul.f32 %v1533, 1.442695
        %v1700 = vpow.pop %v1699
        %v1701 = vmul.f32 %v1534, 1.442695
        %v1702 = vpow.pop %v1701
        %v1703 = vmul.f32 %v1535, 1.442695
        %v1704 = vpow.pop %v1703
        %v1705 = vmul.f32 %v1536, 1.442695
        %v1706 = vpow.pop %v1705
        %v1707 = vmul.f32 %v1537, 1.442695
        %v1708 = vpow.pop %v1707
        %v1709 = vmul.f32 %v1538, 1.442695
        %v1710 = vpow.pop %v1709
        %v1711 = vmul.f32 %v1539, 1.442695
        %v1712 = vpow.pop %v1711
        %v1713 = vmul.f32 %v1540, 1.442695
        %v1714 = vpow.pop %v1713
        %v1715 = vmul.f32 %v1541, 1.442695
        %v1716 = vpow.pop %v1715
        %v1717 = vmul.f32 %v1542, 1.442695
        %v1718 = vpow.pop %v1717
        %v1719 = vmul.f32 %v1543, 1.442695
        %v1720 = vpow.pop %v1719
        %v1721 = vmul.f32 %v1544, 1.442695
        %v1722 = vpow.pop %v1721
        %v1723 = vmul.f32 %v1545, 1.442695
        %v1724 = vpow.pop %v1723
        %v1725 = vmul.f32 %v1546, 1.442695
        %v1726 = vpow.pop %v1725
        %v1727 = vmul.f32 %v1547, 1.442695
        %v1728 = vpow.pop %v1727
        %v1729 = vmul.f32 %v1548, 1.442695
        %v1730 = vpow.pop %v1729
        %v1731 = vmul.f32 %v1549, 1.442695
        %v1732 = vpow.pop %v1731
        %v1733 = vmul.f32 %v1550, 1.442695
        %v1734 = vpow.pop %v1733
        %v1735 = vmul.f32 %v1551, 1.442695
        %v1736 = vpow.pop %v1735
        %v1737 = vmul.f32 %v1552, 1.442695
        %v1738 = vpow.pop %v1737
        %v1739 = vmul.f32 %v1553, 1.442695
        %v1740 = vpow.pop %v1739
        %v1741 = vmul.f32 %v1554, 1.442695
        %v1742 = vpow.pop %v1741
        %v1743 = vmul.f32 %v1555, 1.442695
        %v1744 = vpow.pop %v1743
        %v1745 = vmul.f32 %v1556, 1.442695
        %v1746 = vpow.pop %v1745
        %v1747 = vmul.f32 %v1557, 1.442695
        %v1748 = vpow.pop %v1747
        %v1749 = vmul.f32 %v1558, 1.442695
        %v1750 = vpow.pop %v1749
        %v1751 = vmul.f32 %v1559, 1.442695
        %v1752 = vpow.pop %v1751
        %v1753 = vmul.f32 %v1560, 1.442695
        %v1754 = vpow.pop %v1753
        %v1755 = vmul.f32 %v1561, 1.442695
        %v1756 = vpow.pop %v1755
        %v1757 = vmul.f32 %v1562, 1.442695
        %v1758 = vpow.pop %v1757
        %v1759 = vmul.f32 %v1563, 1.442695
        %v1760 = vpow.pop %v1759
        %v1761 = vmul.f32 %v1564, 1.442695
        %v1762 = vpow.pop %v1761
        %v1763 = vmul.f32 %v1565, 1.442695
        %v1764 = vpow.pop %v1763
        %v1765 = vmul.f32 %v1566, 1.442695
        %v1766 = vpow.pop %v1765
        %v1767 = vmul.f32 %v1567, 1.442695
        %v1768 = vpow.pop %v1767
        %v1769 = vmul.f32 %v1568, 1.442695
        %v1770 = vpow.pop %v1769
        %v1771 = vmul.f32 %v1569, 1.442695
        %v1772 = vpow.pop %v1771
        %v1773 = vmul.f32 %v1570, 1.442695
        %v1774 = vpow.pop %v1773
        %v1775 = vmul.f32 %v1571, 1.442695
        %v1776 = vpow.pop %v1775
        %v1777 = vmul.f32 %v1572, 1.442695
        %v1778 = vpow.pop %v1777
        %v1779 = vmul.f32 %v1573, 1.442695
        %v1780 = vpow.pop %v1779
        %v1781 = vmul.f32 %v1574, 1.442695
        %v1782 = vpow.pop %v1781
        %v1783 = vmul.f32 %v1575, 1.442695
        %v1784 = vpow.pop %v1783
        %v1785 = vmul.f32 %v1576, 1.442695
        %v1786 = vpow.pop %v1785
        %v1787 = vmul.f32 %v1577, 1.442695
        %v1788 = vpow.pop %v1787
        %v1789 = vmul.f32 %v1578, 1.442695
        %v1790 = vpow.pop %v1789
        %v1791 = vmul.f32 %v1579, 1.442695
        %v1792 = vpow.pop %v1791
        %v1793 = vmul.f32 %v1580, 1.442695
        %v1794 = vpow.pop %v1793
        %v1795 = vmul.f32 %v1581, 1.442695
        %v1796 = vpow.pop %v1795
        %v1797 = vmul.f32 %v1582, 1.442695
        %v1798 = vpow.pop %v1797
        %v1799 = vmul.f32 %v1583, 1.442695
        %v1800 = vpow.pop %v1799
        %v1801 = vmul.f32 %v1584, 1.442695
        %v1802 = vpow.pop %v1801
        %v1803 = vmul.f32 %v1585, 1.442695
        %v1804 = vpow.pop %v1803
        %v1805 = vmul.f32 %v1586, 1.442695
        %v1806 = vpow.pop %v1805
        %v1807 = vmul.f32 %v1587, 1.442695
        %v1808 = vpow.pop %v1807
        %v1809 = vmul.f32 %v1588, 1.442695
        %v1810 = vpow.pop %v1809
        %v1811 = vmul.f32 %v1589, 1.442695
        %v1812 = vpow.pop %v1811
        %v1813 = vmul.f32 %v1590, 1.442695
        %v1814 = vpow.pop %v1813
        %v1815 = vmul.f32 %v1591, 1.442695
        %v1816 = vpow.pop %v1815
        %v1817 = vmul.f32 %v1592, 1.442695
        %v1818 = vpow.pop %v1817
        %v1819 = vmul.f32 %v1593, 1.442695
        %v1820 = vpow.pop %v1819
        %v1821 = vmul.f32 %v1594, 1.442695
        %v1822 = vpow.pop %v1821
        %v1823 = vmul.f32 %v1595, 1.442695
        %v1824 = vpow.pop %v1823
        %v1825 = vmul.f32 %v1596, 1.442695
        %v1826 = vpow.pop %v1825
        %v1827 = vmul.f32 %v1597, 1.442695
        %v1828 = vpow.pop %v1827
        %v1829 = vmul.f32 %v1598, 1.442695
        %v1830 = vpow.pop %v1829
        %v1831 = vmul.f32 %v1599, 1.442695
        %v1832 = vpow.pop %v1831
        %v1833 = vmul.f32 %v1600, 1.442695
        %v1834 = vpow.pop %v1833
        %v1835 = vmul.f32 %v1601, 1.442695
        %v1836 = vpow.pop %v1835
        %v1837 = vmul.f32 %v1602, 1.442695
        %v1838 = vpow.pop %v1837
        %v1839 = vmul.f32 %v1603, 1.442695
        %v1840 = vpow.pop %v1839
        %v1841 = vmul.f32 %v1604, 1.442695
        %v1842 = vpow.pop %v1841
        %v1843 = vmul.f32 %v1605, 1.442695
        %v1844 = vpow.pop %v1843
        %v1845 = vmul.f32 %v1606, 1.442695
        %v1846 = vpow.pop %v1845
        %v1847 = vmul.f32 %v1607, 1.442695
        %v1848 = vpow.pop %v1847
        %v1849 = vmul.f32 %v1608, 1.442695
        %v1850 = vpow.pop %v1849
        %v1851 = vmul.f32 %v1609, 1.442695
        %v1852 = vpow.pop %v1851
        %v1853 = vmul.f32 %v1610, 1.442695
        %v1854 = vpow.pop %v1853
        %v1855 = vmul.f32 %v1611, 1.442695
        %v1856 = vpow.pop %v1855
        %v1857 = vmul.f32 %v1612, 1.442695
        %v1858 = vpow.pop %v1857
        %v1859 = vmul.f32 %v1613, 1.442695
        %v1860 = vpow.pop %v1859
        %v1861 = vmul.f32 %v1614, 1.442695
        %v1862 = vpow.pop %v1861
        %v1863 = vmul.f32 %v1615, 1.442695
        %v1864 = vpow.pop %v1863
        %v1865 = vmul.f32 %v1616, 1.442695
        %v1866 = vpow.pop %v1865
        %v1867 = vmul.f32 %v1617, 1.442695
        %v1868 = vpow.pop %v1867
        %v1869 = vmul.f32 %v1618, 1.442695
        %v1870 = vpow.pop %v1869
        %v1871 = vmul.f32 %v1619, 1.442695
        %v1872 = vpow.pop %v1871
        %v1873 = vmul.f32 %v1620, 1.442695
        %v1874 = vpow.pop %v1873
        %v1875 = vmul.f32 %v1621, 1.442695
        %v1876 = vpow.pop %v1875
        %v1877 = vmul.f32 %v1622, 1.442695
        %v1878 = vpow.pop %v1877
        %v1879 = vadd.f32 %v1624, %v1640
        %v1880 = vadd.f32 %v1879, %v1656
        %v1881 = vadd.f32 %v1880, %v1672
        %v1882 = vadd.f32 %v1881, %v1688
        %v1883 = vadd.f32 %v1882, %v1704
        %v1884 = vadd.f32 %v1883, %v1720
        %v1885 = vadd.f32 %v1884, %v1736
        %v1886 = vadd.f32 %v1885, %v1752
        %v1887 = vadd.f32 %v1886, %v1768
        %v1888 = vadd.f32 %v1887, %v1784
        %v1889 = vadd.f32 %v1888, %v1800
        %v1890 = vadd.f32 %v1889, %v1816
        %v1891 = vadd.f32 %v1890, %v1832
        %v1892 = vadd.f32 %v1891, %v1848
        %v1893 = vadd.f32 %v1892, %v1864
        %v1894 = vrot.slane %v1893, 4
        %v1895 = vadd.f32 %v1893, %v1894
        %v1896 = vrot.slane %v1895, 2
        %v1897 = vadd.f32 %v1895, %v1896
        %v1898 = vrot.slane %v1897, 1
        %v1899 = vadd.f32 %v1897, %v1898
        %v1900 = vadd.f32 %v1626, %v1642
        %v1901 = vadd.f32 %v1900, %v1658
        %v1902 = vadd.f32 %v1901, %v1674
        %v1903 = vadd.f32 %v1902, %v1690
        %v1904 = vadd.f32 %v1903, %v1706
        %v1905 = vadd.f32 %v1904, %v1722
        %v1906 = vadd.f32 %v1905, %v1738
        %v1907 = vadd.f32 %v1906, %v1754
        %v1908 = vadd.f32 %v1907, %v1770
        %v1909 = vadd.f32 %v1908, %v1786
        %v1910 = vadd.f32 %v1909, %v1802
        %v1911 = vadd.f32 %v1910, %v1818
        %v1912 = vadd.f32 %v1911, %v1834
        %v1913 = vadd.f32 %v1912, %v1850
        %v1914 = vadd.f32 %v1913, %v1866
        %v1915 = vrot.slane %v1914, 4
        %v1916 = vadd.f32 %v1914, %v1915
        %v1917 = vrot.slane %v1916, 2
        %v1918 = vadd.f32 %v1916, %v1917
        %v1919 = vrot.slane %v1918, 1
        %v1920 = vadd.f32 %v1918, %v1919
        %v1921 = vadd.f32 %v1628, %v1644
        %v1922 = vadd.f32 %v1921, %v1660
        %v1923 = vadd.f32 %v1922, %v1676
        %v1924 = vadd.f32 %v1923, %v1692
        %v1925 = vadd.f32 %v1924, %v1708
        %v1926 = vadd.f32 %v1925, %v1724
        %v1927 = vadd.f32 %v1926, %v1740
        %v1928 = vadd.f32 %v1927, %v1756
        %v1929 = vadd.f32 %v1928, %v1772
        %v1930 = vadd.f32 %v1929, %v1788
        %v1931 = vadd.f32 %v1930, %v1804
        %v1932 = vadd.f32 %v1931, %v1820
        %v1933 = vadd.f32 %v1932, %v1836
        %v1934 = vadd.f32 %v1933, %v1852
        %v1935 = vadd.f32 %v1934, %v1868
        %v1936 = vrot.slane %v1935, 4
        %v1937 = vadd.f32 %v1935, %v1936
        %v1938 = vrot.slane %v1937, 2
        %v1939 = vadd.f32 %v1937, %v1938
        %v1940 = vrot.slane %v1939, 1
        %v1941 = vadd.f32 %v1939, %v1940
        %v1942 = vadd.f32 %v1630, %v1646
        %v1943 = vadd.f32 %v1942, %v1662
        %v1944 = vadd.f32 %v1943, %v1678
        %v1945 = vadd.f32 %v1944, %v1694
        %v1946 = vadd.f32 %v1945, %v1710
        %v1947 = vadd.f32 %v1946, %v1726
        %v1948 = vadd.f32 %v1947, %v1742
        %v1949 = vadd.f32 %v1948, %v1758
        %v1950 = vadd.f32 %v1949, %v1774
        %v1951 = vadd.f32 %v1950, %v1790
        %v1952 = vadd.f32 %v1951, %v1806
        %v1953 = vadd.f32 %v1952, %v1822
        %v1954 = vadd.f32 %v1953, %v1838
        %v1955 = vadd.f32 %v1954, %v1854
        %v1956 = vadd.f32 %v1955, %v1870
        %v1957 = vrot.slane %v1956, 4
        %v1958 = vadd.f32 %v1956, %v1957
        %v1959 = vrot.slane %v1958, 2
        %v1960 = vadd.f32 %v1958, %v1959
        %v1961 = vrot.slane %v1960, 1
        %v1962 = vadd.f32 %v1960, %v1961
        %v1963 = vadd.f32 %v1632, %v1648
        %v1964 = vadd.f32 %v1963, %v1664
        %v1965 = vadd.f32 %v1964, %v1680
        %v1966 = vadd.f32 %v1965, %v1696
        %v1967 = vadd.f32 %v1966, %v1712
        %v1968 = vadd.f32 %v1967, %v1728
        %v1969 = vadd.f32 %v1968, %v1744
        %v1970 = vadd.f32 %v1969, %v1760
        %v1971 = vadd.f32 %v1970, %v1776
        %v1972 = vadd.f32 %v1971, %v1792
        %v1973 = vadd.f32 %v1972, %v1808
        %v1974 = vadd.f32 %v1973, %v1824
        %v1975 = vadd.f32 %v1974, %v1840
        %v1976 = vadd.f32 %v1975, %v1856
        %v1977 = vadd.f32 %v1976, %v1872
        %v1978 = vrot.slane %v1977, 4
        %v1979 = vadd.f32 %v1977, %v1978
        %v1980 = vrot.slane %v1979, 2
        %v1981 = vadd.f32 %v1979, %v1980
        %v1982 = vrot.slane %v1981, 1
        %v1983 = vadd.f32 %v1981, %v1982
        %v1984 = vadd.f32 %v1634, %v1650
        %v1985 = vadd.f32 %v1984, %v1666
        %v1986 = vadd.f32 %v1985, %v1682
        %v1987 = vadd.f32 %v1986, %v1698
        %v1988 = vadd.f32 %v1987, %v1714
        %v1989 = vadd.f32 %v1988, %v1730
        %v1990 = vadd.f32 %v1989, %v1746
        %v1991 = vadd.f32 %v1990, %v1762
        %v1992 = vadd.f32 %v1991, %v1778
        %v1993 = vadd.f32 %v1992, %v1794
        %v1994 = vadd.f32 %v1993, %v1810
        %v1995 = vadd.f32 %v1994, %v1826
        %v1996 = vadd.f32 %v1995, %v1842
        %v1997 = vadd.f32 %v1996, %v1858
        %v1998 = vadd.f32 %v1997, %v1874
        %v1999 = vrot.slane %v1998, 4
        %v2000 = vadd.f32 %v1998, %v1999
        %v2001 = vrot.slane %v2000, 2
        %v2002 = vadd.f32 %v2000, %v2001
        %v2003 = vrot.slane %v2002, 1
        %v2004 = vadd.f32 %v2002, %v2003
        %v2005 = vadd.f32 %v1636, %v1652
        %v2006 = vadd.f32 %v2005, %v1668
        %v2007 = vadd.f32 %v2006, %v1684
        %v2008 = vadd.f32 %v2007, %v1700
        %v2009 = vadd.f32 %v2008, %v1716
        %v2010 = vadd.f32 %v2009, %v1732
        %v2011 = vadd.f32 %v2010, %v1748
        %v2012 = vadd.f32 %v2011, %v1764
        %v2013 = vadd.f32 %v2012, %v1780
        %v2014 = vadd.f32 %v2013, %v1796
        %v2015 = vadd.f32 %v2014, %v1812
        %v2016 = vadd.f32 %v2015, %v1828
        %v2017 = vadd.f32 %v2016, %v1844
        %v2018 = vadd.f32 %v2017, %v1860
        %v2019 = vadd.f32 %v2018, %v1876
        %v2020 = vrot.slane %v2019, 4
        %v2021 = vadd.f32 %v2019, %v2020
        %v2022 = vrot.slane %v2021, 2
        %v2023 = vadd.f32 %v2021, %v2022
        %v2024 = vrot.slane %v2023, 1
        %v2025 = vadd.f32 %v2023, %v2024
        %v2026 = vadd.f32 %v1638, %v1654
        %v2027 = vadd.f32 %v2026, %v1670
        %v2028 = vadd.f32 %v2027, %v1686
        %v2029 = vadd.f32 %v2028, %v1702
        %v2030 = vadd.f32 %v2029, %v1718
        %v2031 = vadd.f32 %v2030, %v1734
        %v2032 = vadd.f32 %v2031, %v1750
        %v2033 = vadd.f32 %v2032, %v1766
        %v2034 = vadd.f32 %v2033, %v1782
        %v2035 = vadd.f32 %v2034, %v1798
        %v2036 = vadd.f32 %v2035, %v1814
        %v2037 = vadd.f32 %v2036, %v1830
        %v2038 = vadd.f32 %v2037, %v1846
        %v2039 = vadd.f32 %v2038, %v1862
        %v2040 = vadd.f32 %v2039, %v1878
        %v2041 = vrot.slane %v2040, 4
        %v2042 = vadd.f32 %v2040, %v2041
        %v2043 = vrot.slane %v2042, 2
        %v2044 = vadd.f32 %v2042, %v2043
        %v2045 = vrot.slane %v2044, 1
        %v2046 = vadd.f32 %v2044, %v2045
        %v2047 = vrcp.pop %v1899
        %v2048 = vmul.f32 %v1899, %v2047
        %v2049 = vsub.f32 1.0, %v2048
        %v2050 = vmul.f32 %v2047, %v2049
        %v2051 = vadd.f32 %v2047, %v2050
        %vm2052 = vweird.f32 %v1899
        %vm2053 = vweird.f32 %v2047
        %vm2054 = vmor %vm2052, %vm2053
        %v2055 = vsel %vm2054, %v2047, %v2051
        %v2056 = vand.u32 2147483647, %v1899
        %vm2057 = vcmp.eq.f32.partialorder %v2056, 8.507059e+37
        %v2058 = vand.u32 %v1899, 2147483648
        %v2059 = vor.u32 1.1754944e-38, %v2058
        %v2060 = vsel %vm2057, %v2059, %v2055
        %v2061 = vrcp.pop %v1920
        %v2062 = vmul.f32 %v1920, %v2061
        %v2063 = vsub.f32 1.0, %v2062
        %v2064 = vmul.f32 %v2061, %v2063
        %v2065 = vadd.f32 %v2061, %v2064
        %vm2066 = vweird.f32 %v1920
        %vm2067 = vweird.f32 %v2061
        %vm2068 = vmor %vm2066, %vm2067
        %v2069 = vsel %vm2068, %v2061, %v2065
        %v2070 = vand.u32 2147483647, %v1920
        %vm2071 = vcmp.eq.f32.partialorder %v2070, 8.507059e+37
        %v2072 = vand.u32 %v1920, 2147483648
        %v2073 = vor.u32 1.1754944e-38, %v2072
        %v2074 = vsel %vm2071, %v2073, %v2069
        %v2075 = vrcp.pop %v1941
        %v2076 = vmul.f32 %v1941, %v2075
        %v2077 = vsub.f32 1.0, %v2076
        %v2078 = vmul.f32 %v2075, %v2077
        %v2079 = vadd.f32 %v2075, %v2078
        %vm2080 = vweird.f32 %v1941
        %vm2081 = vweird.f32 %v2075
        %vm2082 = vmor %vm2080, %vm2081
        %v2083 = vsel %vm2082, %v2075, %v2079
        %v2084 = vand.u32 2147483647, %v1941
        %vm2085 = vcmp.eq.f32.partialorder %v2084, 8.507059e+37
        %v2086 = vand.u32 %v1941, 2147483648
        %v2087 = vor.u32 1.1754944e-38, %v2086
        %v2088 = vsel %vm2085, %v2087, %v2083
        %v2089 = vrcp.pop %v1962
        %v2090 = vmul.f32 %v1962, %v2089
        %v2091 = vsub.f32 1.0, %v2090
        %v2092 = vmul.f32 %v2089, %v2091
        %v2093 = vadd.f32 %v2089, %v2092
        %vm2094 = vweird.f32 %v1962
        %vm2095 = vweird.f32 %v2089
        %vm2096 = vmor %vm2094, %vm2095
        %v2097 = vsel %vm2096, %v2089, %v2093
        %v2098 = vand.u32 2147483647, %v1962
        %vm2099 = vcmp.eq.f32.partialorder %v2098, 8.507059e+37
        %v2100 = vand.u32 %v1962, 2147483648
        %v2101 = vor.u32 1.1754944e-38, %v2100
        %v2102 = vsel %vm2099, %v2101, %v2097
        %v2103 = vrcp.pop %v1983
        %v2104 = vmul.f32 %v1983, %v2103
        %v2105 = vsub.f32 1.0, %v2104
        %v2106 = vmul.f32 %v2103, %v2105
        %v2107 = vadd.f32 %v2103, %v2106
        %vm2108 = vweird.f32 %v1983
        %vm2109 = vweird.f32 %v2103
        %vm2110 = vmor %vm2108, %vm2109
        %v2111 = vsel %vm2110, %v2103, %v2107
        %v2112 = vand.u32 2147483647, %v1983
        %vm2113 = vcmp.eq.f32.partialorder %v2112, 8.507059e+37
        %v2114 = vand.u32 %v1983, 2147483648
        %v2115 = vor.u32 1.1754944e-38, %v2114
        %v2116 = vsel %vm2113, %v2115, %v2111
        %v2117 = vrcp.pop %v2004
        %v2118 = vmul.f32 %v2004, %v2117
        %v2119 = vsub.f32 1.0, %v2118
        %v2120 = vmul.f32 %v2117, %v2119
        %v2121 = vadd.f32 %v2117, %v2120
        %vm2122 = vweird.f32 %v2004
        %vm2123 = vweird.f32 %v2117
        %vm2124 = vmor %vm2122, %vm2123
        %v2125 = vsel %vm2124, %v2117, %v2121
        %v2126 = vand.u32 2147483647, %v2004
        %vm2127 = vcmp.eq.f32.partialorder %v2126, 8.507059e+37
        %v2128 = vand.u32 %v2004, 2147483648
        %v2129 = vor.u32 1.1754944e-38, %v2128
        %v2130 = vsel %vm2127, %v2129, %v2125
        %v2131 = vrcp.pop %v2025
        %v2132 = vmul.f32 %v2025, %v2131
        %v2133 = vsub.f32 1.0, %v2132
        %v2134 = vmul.f32 %v2131, %v2133
        %v2135 = vadd.f32 %v2131, %v2134
        %vm2136 = vweird.f32 %v2025
        %vm2137 = vweird.f32 %v2131
        %vm2138 = vmor %vm2136, %vm2137
        %v2139 = vsel %vm2138, %v2131, %v2135
        %v2140 = vand.u32 2147483647, %v2025
        %vm2141 = vcmp.eq.f32.partialorder %v2140, 8.507059e+37
        %v2142 = vand.u32 %v2025, 2147483648
        %v2143 = vor.u32 1.1754944e-38, %v2142
        %v2144 = vsel %vm2141, %v2143, %v2139
        %v2145 = vrcp.pop %v2046
        %v2146 = vmul.f32 %v2046, %v2145
        %v2147 = vsub.f32 1.0, %v2146
        %v2148 = vmul.f32 %v2145, %v2147
        %v2149 = vadd.f32 %v2145, %v2148
        %vm2150 = vweird.f32 %v2046
        %vm2151 = vweird.f32 %v2145
        %vm2152 = vmor %vm2150, %vm2151
        %v2153 = vsel %vm2152, %v2145, %v2149
        %v2154 = vand.u32 2147483647, %v2046
        %vm2155 = vcmp.eq.f32.partialorder %v2154, 8.507059e+37
        %v2156 = vand.u32 %v2046, 2147483648
        %v2157 = vor.u32 1.1754944e-38, %v2156
        %v2158 = vsel %vm2155, %v2157, %v2153
        %v2159 = vmul.f32 %v1624, %v2060
        %v2160 = vmul.f32 %v1626, %v2074
        %v2161 = vmul.f32 %v1628, %v2088
        %v2162 = vmul.f32 %v1630, %v2102
        %v2163 = vmul.f32 %v1632, %v2116
        %v2164 = vmul.f32 %v1634, %v2130
        %v2165 = vmul.f32 %v1636, %v2144
        %v2166 = vmul.f32 %v1638, %v2158
        %v2167 = vmul.f32 %v1640, %v2060
        %v2168 = vmul.f32 %v1642, %v2074
        %v2169 = vmul.f32 %v1644, %v2088
        %v2170 = vmul.f32 %v1646, %v2102
        %v2171 = vmul.f32 %v1648, %v2116
        %v2172 = vmul.f32 %v1650, %v2130
        %v2173 = vmul.f32 %v1652, %v2144
        %v2174 = vmul.f32 %v1654, %v2158
        %v2175 = vmul.f32 %v1656, %v2060
        %v2176 = vmul.f32 %v1658, %v2074
        %v2177 = vmul.f32 %v1660, %v2088
        %v2178 = vmul.f32 %v1662, %v2102
        %v2179 = vmul.f32 %v1664, %v2116
        %v2180 = vmul.f32 %v1666, %v2130
        %v2181 = vmul.f32 %v1668, %v2144
        %v2182 = vmul.f32 %v1670, %v2158
        %v2183 = vmul.f32 %v1672, %v2060
        %v2184 = vmul.f32 %v1674, %v2074
        %v2185 = vmul.f32 %v1676, %v2088
        %v2186 = vmul.f32 %v1678, %v2102
        %v2187 = vmul.f32 %v1680, %v2116
        %v2188 = vmul.f32 %v1682, %v2130
        %v2189 = vmul.f32 %v1684, %v2144
        %v2190 = vmul.f32 %v1686, %v2158
        %v2191 = vmul.f32 %v1688, %v2060
        %v2192 = vmul.f32 %v1690, %v2074
        %v2193 = vmul.f32 %v1692, %v2088
        %v2194 = vmul.f32 %v1694, %v2102
        %v2195 = vmul.f32 %v1696, %v2116
        %v2196 = vmul.f32 %v1698, %v2130
        %v2197 = vmul.f32 %v1700, %v2144
        %v2198 = vmul.f32 %v1702, %v2158
        %v2199 = vmul.f32 %v1704, %v2060
        %v2200 = vmul.f32 %v1706, %v2074
        %v2201 = vmul.f32 %v1708, %v2088
        %v2202 = vmul.f32 %v1710, %v2102
        %v2203 = vmul.f32 %v1712, %v2116
        %v2204 = vmul.f32 %v1714, %v2130
        %v2205 = vmul.f32 %v1716, %v2144
        %v2206 = vmul.f32 %v1718, %v2158
        %v2207 = vmul.f32 %v1720, %v2060
        %v2208 = vmul.f32 %v1722, %v2074
        %v2209 = vmul.f32 %v1724, %v2088
        %v2210 = vmul.f32 %v1726, %v2102
        %v2211 = vmul.f32 %v1728, %v2116
        %v2212 = vmul.f32 %v1730, %v2130
        %v2213 = vmul.f32 %v1732, %v2144
        %v2214 = vmul.f32 %v1734, %v2158
        %v2215 = vmul.f32 %v1736, %v2060
        %v2216 = vmul.f32 %v1738, %v2074
        %v2217 = vmul.f32 %v1740, %v2088
        %v2218 = vmul.f32 %v1742, %v2102
        %v2219 = vmul.f32 %v1744, %v2116
        %v2220 = vmul.f32 %v1746, %v2130
        %v2221 = vmul.f32 %v1748, %v2144
        %v2222 = vmul.f32 %v1750, %v2158
        %v2223 = vmul.f32 %v1752, %v2060
        %v2224 = vmul.f32 %v1754, %v2074
        %v2225 = vmul.f32 %v1756, %v2088
        %v2226 = vmul.f32 %v1758, %v2102
        %v2227 = vmul.f32 %v1760, %v2116
        %v2228 = vmul.f32 %v1762, %v2130
        %v2229 = vmul.f32 %v1764, %v2144
        %v2230 = vmul.f32 %v1766, %v2158
        %v2231 = vmul.f32 %v1768, %v2060
        %v2232 = vmul.f32 %v1770, %v2074
        %v2233 = vmul.f32 %v1772, %v2088
        %v2234 = vmul.f32 %v1774, %v2102
        %v2235 = vmul.f32 %v1776, %v2116
        %v2236 = vmul.f32 %v1778, %v2130
        %v2237 = vmul.f32 %v1780, %v2144
        %v2238 = vmul.f32 %v1782, %v2158
        %v2239 = vmul.f32 %v1784, %v2060
        %v2240 = vmul.f32 %v1786, %v2074
        %v2241 = vmul.f32 %v1788, %v2088
        %v2242 = vmul.f32 %v1790, %v2102
        %v2243 = vmul.f32 %v1792, %v2116
        %v2244 = vmul.f32 %v1794, %v2130
        %v2245 = vmul.f32 %v1796, %v2144
        %v2246 = vmul.f32 %v1798, %v2158
        %v2247 = vmul.f32 %v1800, %v2060
        %v2248 = vmul.f32 %v1802, %v2074
        %v2249 = vmul.f32 %v1804, %v2088
        %v2250 = vmul.f32 %v1806, %v2102
        %v2251 = vmul.f32 %v1808, %v2116
        %v2252 = vmul.f32 %v1810, %v2130
        %v2253 = vmul.f32 %v1812, %v2144
        %v2254 = vmul.f32 %v1814, %v2158
        %v2255 = vmul.f32 %v1816, %v2060
        %v2256 = vmul.f32 %v1818, %v2074
        %v2257 = vmul.f32 %v1820, %v2088
        %v2258 = vmul.f32 %v1822, %v2102
        %v2259 = vmul.f32 %v1824, %v2116
        %v2260 = vmul.f32 %v1826, %v2130
        %v2261 = vmul.f32 %v1828, %v2144
        %v2262 = vmul.f32 %v1830, %v2158
        %v2263 = vmul.f32 %v1832, %v2060
        %v2264 = vmul.f32 %v1834, %v2074
        %v2265 = vmul.f32 %v1836, %v2088
        %v2266 = vmul.f32 %v1838, %v2102
        %v2267 = vmul.f32 %v1840, %v2116
        %v2268 = vmul.f32 %v1842, %v2130
        %v2269 = vmul.f32 %v1844, %v2144
        %v2270 = vmul.f32 %v1846, %v2158
        %v2271 = vmul.f32 %v1848, %v2060
        %v2272 = vmul.f32 %v1850, %v2074
        %v2273 = vmul.f32 %v1852, %v2088
        %v2274 = vmul.f32 %v1854, %v2102
        %v2275 = vmul.f32 %v1856, %v2116
        %v2276 = vmul.f32 %v1858, %v2130
        %v2277 = vmul.f32 %v1860, %v2144
        %v2278 = vmul.f32 %v1862, %v2158
        %v2279 = vmul.f32 %v1864, %v2060
        %v2280 = vmul.f32 %v1866, %v2074
        %v2281 = vmul.f32 %v1868, %v2088
        %v2282 = vmul.f32 %v1870, %v2102
        %v2283 = vmul.f32 %v1872, %v2116
        %v2284 = vmul.f32 %v1874, %v2130
        %v2285 = vmul.f32 %v1876, %v2144
        %v2286 = vmul.f32 %v1878, %v2158
        %v2287 = vadd.f32 %v2159, %v2160
        %v2288 = vadd.f32 %v2287, %v2161
        %v2289 = vadd.f32 %v2288, %v2162
        %v2290 = vadd.f32 %v2289, %v2163
        %v2291 = vadd.f32 %v2290, %v2164
        %v2292 = vadd.f32 %v2291, %v2165
        %v2293 = vadd.f32 %v2292, %v2166
        %2294 = vadd.xlane.f32.xlu0 %v2293
        %v2295 = vpop.xlane.xlu0 %2294
        %v2296 = vadd.f32 %v2167, %v2168
        %v2297 = vadd.f32 %v2296, %v2169
        %v2298 = vadd.f32 %v2297, %v2170
        %v2299 = vadd.f32 %v2298, %v2171
        %v2300 = vadd.f32 %v2299, %v2172
        %v2301 = vadd.f32 %v2300, %v2173
        %v2302 = vadd.f32 %v2301, %v2174
        %2303 = vadd.xlane.f32.xlu0 %v2302
        %v2304 = vpop.xlane.xlu0 %2303
        %v2305 = vadd.f32 %v2175, %v2176
        %v2306 = vadd.f32 %v2305, %v2177
        %v2307 = vadd.f32 %v2306, %v2178
        %v2308 = vadd.f32 %v2307, %v2179
        %v2309 = vadd.f32 %v2308, %v2180
        %v2310 = vadd.f32 %v2309, %v2181
        %v2311 = vadd.f32 %v2310, %v2182
        %2312 = vadd.xlane.f32.xlu0 %v2311
        %v2313 = vpop.xlane.xlu0 %2312
        %v2314 = vadd.f32 %v2183, %v2184
        %v2315 = vadd.f32 %v2314, %v2185
        %v2316 = vadd.f32 %v2315, %v2186
        %v2317 = vadd.f32 %v2316, %v2187
        %v2318 = vadd.f32 %v2317, %v2188
        %v2319 = vadd.f32 %v2318, %v2189
        %v2320 = vadd.f32 %v2319, %v2190
        %2321 = vadd.xlane.f32.xlu0 %v2320
        %v2322 = vpop.xlane.xlu0 %2321
        %v2323 = vadd.f32 %v2191, %v2192
        %v2324 = vadd.f32 %v2323, %v2193
        %v2325 = vadd.f32 %v2324, %v2194
        %v2326 = vadd.f32 %v2325, %v2195
        %v2327 = vadd.f32 %v2326, %v2196
        %v2328 = vadd.f32 %v2327, %v2197
        %v2329 = vadd.f32 %v2328, %v2198
        %2330 = vadd.xlane.f32.xlu0 %v2329
        %v2331 = vpop.xlane.xlu0 %2330
        %v2332 = vadd.f32 %v2199, %v2200
        %v2333 = vadd.f32 %v2332, %v2201
        %v2334 = vadd.f32 %v2333, %v2202
        %v2335 = vadd.f32 %v2334, %v2203
        %v2336 = vadd.f32 %v2335, %v2204
        %v2337 = vadd.f32 %v2336, %v2205
        %v2338 = vadd.f32 %v2337, %v2206
        %2339 = vadd.xlane.f32.xlu0 %v2338
        %v2340 = vpop.xlane.xlu0 %2339
        %v2341 = vadd.f32 %v2207, %v2208
        %v2342 = vadd.f32 %v2341, %v2209
        %v2343 = vadd.f32 %v2342, %v2210
        %v2344 = vadd.f32 %v2343, %v2211
        %v2345 = vadd.f32 %v2344, %v2212
        %v2346 = vadd.f32 %v2345, %v2213
        %v2347 = vadd.f32 %v2346, %v2214
        %2348 = vadd.xlane.f32.xlu0 %v2347
        %v2349 = vpop.xlane.xlu0 %2348
        %v2350 = vadd.f32 %v2215, %v2216
        %v2351 = vadd.f32 %v2350, %v2217
        %v2352 = vadd.f32 %v2351, %v2218
        %v2353 = vadd.f32 %v2352, %v2219
        %v2354 = vadd.f32 %v2353, %v2220
        %v2355 = vadd.f32 %v2354, %v2221
        %v2356 = vadd.f32 %v2355, %v2222
        %2357 = vadd.xlane.f32.xlu0 %v2356
        %v2358 = vpop.xlane.xlu0 %2357
        %v2359 = vadd.f32 %v2223, %v2224
        %v2360 = vadd.f32 %v2359, %v2225
        %v2361 = vadd.f32 %v2360, %v2226
        %v2362 = vadd.f32 %v2361, %v2227
        %v2363 = vadd.f32 %v2362, %v2228
        %v2364 = vadd.f32 %v2363, %v2229
        %v2365 = vadd.f32 %v2364, %v2230
        %2366 = vadd.xlane.f32.xlu0 %v2365
        %v2367 = vpop.xlane.xlu0 %2366
        %v2368 = vadd.f32 %v2231, %v2232
        %v2369 = vadd.f32 %v2368, %v2233
        %v2370 = vadd.f32 %v2369, %v2234
        %v2371 = vadd.f32 %v2370, %v2235
        %v2372 = vadd.f32 %v2371, %v2236
        %v2373 = vadd.f32 %v2372, %v2237
        %v2374 = vadd.f32 %v2373, %v2238
        %2375 = vadd.xlane.f32.xlu0 %v2374
        %v2376 = vpop.xlane.xlu0 %2375
        %v2377 = vadd.f32 %v2239, %v2240
        %v2378 = vadd.f32 %v2377, %v2241
        %v2379 = vadd.f32 %v2378, %v2242
        %v2380 = vadd.f32 %v2379, %v2243
        %v2381 = vadd.f32 %v2380, %v2244
        %v2382 = vadd.f32 %v2381, %v2245
        %v2383 = vadd.f32 %v2382, %v2246
        %2384 = vadd.xlane.f32.xlu0 %v2383
        %v2385 = vpop.xlane.xlu0 %2384
        %v2386 = vadd.f32 %v2247, %v2248
        %v2387 = vadd.f32 %v2386, %v2249
        %v2388 = vadd.f32 %v2387, %v2250
        %v2389 = vadd.f32 %v2388, %v2251
        %v2390 = vadd.f32 %v2389, %v2252
        %v2391 = vadd.f32 %v2390, %v2253
        %v2392 = vadd.f32 %v2391, %v2254
        %2393 = vadd.xlane.f32.xlu0 %v2392
        %v2394 = vpop.xlane.xlu0 %2393
        %v2395 = vadd.f32 %v2255, %v2256
        %v2396 = vadd.f32 %v2395, %v2257
        %v2397 = vadd.f32 %v2396, %v2258
        %v2398 = vadd.f32 %v2397, %v2259
        %v2399 = vadd.f32 %v2398, %v2260
        %v2400 = vadd.f32 %v2399, %v2261
        %v2401 = vadd.f32 %v2400, %v2262
        %2402 = vadd.xlane.f32.xlu0 %v2401
        %v2403 = vpop.xlane.xlu0 %2402
        %v2404 = vadd.f32 %v2263, %v2264
        %v2405 = vadd.f32 %v2404, %v2265
        %v2406 = vadd.f32 %v2405, %v2266
        %v2407 = vadd.f32 %v2406, %v2267
        %v2408 = vadd.f32 %v2407, %v2268
        %v2409 = vadd.f32 %v2408, %v2269
        %v2410 = vadd.f32 %v2409, %v2270
        %2411 = vadd.xlane.f32.xlu0 %v2410
        %v2412 = vpop.xlane.xlu0 %2411
        %v2413 = vadd.f32 %v2271, %v2272
        %v2414 = vadd.f32 %v2413, %v2273
        %v2415 = vadd.f32 %v2414, %v2274
        %v2416 = vadd.f32 %v2415, %v2275
        %v2417 = vadd.f32 %v2416, %v2276
        %v2418 = vadd.f32 %v2417, %v2277
        %v2419 = vadd.f32 %v2418, %v2278
        %2420 = vadd.xlane.f32.xlu0 %v2419
        %v2421 = vpop.xlane.xlu0 %2420
        %v2422 = vadd.f32 %v2279, %v2280
        %v2423 = vadd.f32 %v2422, %v2281
        %v2424 = vadd.f32 %v2423, %v2282
        %v2425 = vadd.f32 %v2424, %v2283
        %v2426 = vadd.f32 %v2425, %v2284
        %v2427 = vadd.f32 %v2426, %v2285
        %v2428 = vadd.f32 %v2427, %v2286
        %2429 = vadd.xlane.f32.xlu0 %v2428
        %v2430 = vpop.xlane.xlu0 %2429
        %v2431 = vadd.f32 %v2295, 1e-06
        %v2432 = vadd.f32 %v2304, 1e-06
        %v2433 = vadd.f32 %v2313, 1e-06
        %v2434 = vadd.f32 %v2322, 1e-06
        %v2435 = vadd.f32 %v2331, 1e-06
        %v2436 = vadd.f32 %v2340, 1e-06
        %v2437 = vadd.f32 %v2349, 1e-06
        %v2438 = vadd.f32 %v2358, 1e-06
        %v2439 = vadd.f32 %v2367, 1e-06
        %v2440 = vadd.f32 %v2376, 1e-06
        %v2441 = vadd.f32 %v2385, 1e-06
        %v2442 = vadd.f32 %v2394, 1e-06
        %v2443 = vadd.f32 %v2403, 1e-06
        %v2444 = vadd.f32 %v2412, 1e-06
        %v2445 = vadd.f32 %v2421, 1e-06
        %v2446 = vadd.f32 %v2430, 1e-06
        %v2447 = vrcp.pop %v2431
        %v2448 = vrcp.pop %v2432
        %v2449 = vrcp.pop %v2433
        %v2450 = vrcp.pop %v2434
        %v2451 = vrcp.pop %v2435
        %v2452 = vrcp.pop %v2436
        %v2453 = vrcp.pop %v2437
        %v2454 = vrcp.pop %v2438
        %v2455 = vrcp.pop %v2439
        %v2456 = vrcp.pop %v2440
        %v2457 = vrcp.pop %v2441
        %v2458 = vrcp.pop %v2442
        %v2459 = vrcp.pop %v2443
        %v2460 = vrcp.pop %v2444
        %v2461 = vrcp.pop %v2445
        %v2462 = vrcp.pop %v2446
        %v2463 = vmul.f32 %v2159, %v2447
        %v2464 = vmul.f32 %v2160, %v2447
        %v2465 = vmul.f32 %v2161, %v2447
        %v2466 = vmul.f32 %v2162, %v2447
        %v2467 = vmul.f32 %v2163, %v2447
        %v2468 = vmul.f32 %v2164, %v2447
        %v2469 = vmul.f32 %v2165, %v2447
        %v2470 = vmul.f32 %v2166, %v2447
        %v2471 = vmul.f32 %v2167, %v2448
        %v2472 = vmul.f32 %v2168, %v2448
        %v2473 = vmul.f32 %v2169, %v2448
        %v2474 = vmul.f32 %v2170, %v2448
        %v2475 = vmul.f32 %v2171, %v2448
        %v2476 = vmul.f32 %v2172, %v2448
        %v2477 = vmul.f32 %v2173, %v2448
        %v2478 = vmul.f32 %v2174, %v2448
        %v2479 = vmul.f32 %v2175, %v2449
        %v2480 = vmul.f32 %v2176, %v2449
        %v2481 = vmul.f32 %v2177, %v2449
        %v2482 = vmul.f32 %v2178, %v2449
        %v2483 = vmul.f32 %v2179, %v2449
        %v2484 = vmul.f32 %v2180, %v2449
        %v2485 = vmul.f32 %v2181, %v2449
        %v2486 = vmul.f32 %v2182, %v2449
        %v2487 = vmul.f32 %v2183, %v2450
        %v2488 = vmul.f32 %v2184, %v2450
        %v2489 = vmul.f32 %v2185, %v2450
        %v2490 = vmul.f32 %v2186, %v2450
        %v2491 = vmul.f32 %v2187, %v2450
        %v2492 = vmul.f32 %v2188, %v2450
        %v2493 = vmul.f32 %v2189, %v2450
        %v2494 = vmul.f32 %v2190, %v2450
        %v2495 = vmul.f32 %v2191, %v2451
        %v2496 = vmul.f32 %v2192, %v2451
        %v2497 = vmul.f32 %v2193, %v2451
        %v2498 = vmul.f32 %v2194, %v2451
        %v2499 = vmul.f32 %v2195, %v2451
        %v2500 = vmul.f32 %v2196, %v2451
        %v2501 = vmul.f32 %v2197, %v2451
        %v2502 = vmul.f32 %v2198, %v2451
        %v2503 = vmul.f32 %v2199, %v2452
        %v2504 = vmul.f32 %v2200, %v2452
        %v2505 = vmul.f32 %v2201, %v2452
        %v2506 = vmul.f32 %v2202, %v2452
        %v2507 = vmul.f32 %v2203, %v2452
        %v2508 = vmul.f32 %v2204, %v2452
        %v2509 = vmul.f32 %v2205, %v2452
        %v2510 = vmul.f32 %v2206, %v2452
        %v2511 = vmul.f32 %v2207, %v2453
        %v2512 = vmul.f32 %v2208, %v2453
        %v2513 = vmul.f32 %v2209, %v2453
        %v2514 = vmul.f32 %v2210, %v2453
        %v2515 = vmul.f32 %v2211, %v2453
        %v2516 = vmul.f32 %v2212, %v2453
        %v2517 = vmul.f32 %v2213, %v2453
        %v2518 = vmul.f32 %v2214, %v2453
        %v2519 = vmul.f32 %v2215, %v2454
        %v2520 = vmul.f32 %v2216, %v2454
        %v2521 = vmul.f32 %v2217, %v2454
        %v2522 = vmul.f32 %v2218, %v2454
        %v2523 = vmul.f32 %v2219, %v2454
        %v2524 = vmul.f32 %v2220, %v2454
        %v2525 = vmul.f32 %v2221, %v2454
        %v2526 = vmul.f32 %v2222, %v2454
        %v2527 = vmul.f32 %v2223, %v2455
        %v2528 = vmul.f32 %v2224, %v2455
        %v2529 = vmul.f32 %v2225, %v2455
        %v2530 = vmul.f32 %v2226, %v2455
        %v2531 = vmul.f32 %v2227, %v2455
        %v2532 = vmul.f32 %v2228, %v2455
        %v2533 = vmul.f32 %v2229, %v2455
        %v2534 = vmul.f32 %v2230, %v2455
        %v2535 = vmul.f32 %v2231, %v2456
        %v2536 = vmul.f32 %v2232, %v2456
        %v2537 = vmul.f32 %v2233, %v2456
        %v2538 = vmul.f32 %v2234, %v2456
        %v2539 = vmul.f32 %v2235, %v2456
        %v2540 = vmul.f32 %v2236, %v2456
        %v2541 = vmul.f32 %v2237, %v2456
        %v2542 = vmul.f32 %v2238, %v2456
        %v2543 = vmul.f32 %v2239, %v2457
        %v2544 = vmul.f32 %v2240, %v2457
        %v2545 = vmul.f32 %v2241, %v2457
        %v2546 = vmul.f32 %v2242, %v2457
        %v2547 = vmul.f32 %v2243, %v2457
        %v2548 = vmul.f32 %v2244, %v2457
        %v2549 = vmul.f32 %v2245, %v2457
        %v2550 = vmul.f32 %v2246, %v2457
        %v2551 = vmul.f32 %v2247, %v2458
        %v2552 = vmul.f32 %v2248, %v2458
        %v2553 = vmul.f32 %v2249, %v2458
        %v2554 = vmul.f32 %v2250, %v2458
        %v2555 = vmul.f32 %v2251, %v2458
        %v2556 = vmul.f32 %v2252, %v2458
        %v2557 = vmul.f32 %v2253, %v2458
        %v2558 = vmul.f32 %v2254, %v2458
        %v2559 = vmul.f32 %v2255, %v2459
        %v2560 = vmul.f32 %v2256, %v2459
        %v2561 = vmul.f32 %v2257, %v2459
        %v2562 = vmul.f32 %v2258, %v2459
        %v2563 = vmul.f32 %v2259, %v2459
        %v2564 = vmul.f32 %v2260, %v2459
        %v2565 = vmul.f32 %v2261, %v2459
        %v2566 = vmul.f32 %v2262, %v2459
        %v2567 = vmul.f32 %v2263, %v2460
        %v2568 = vmul.f32 %v2264, %v2460
        %v2569 = vmul.f32 %v2265, %v2460
        %v2570 = vmul.f32 %v2266, %v2460
        %v2571 = vmul.f32 %v2267, %v2460
        %v2572 = vmul.f32 %v2268, %v2460
        %v2573 = vmul.f32 %v2269, %v2460
        %v2574 = vmul.f32 %v2270, %v2460
        %v2575 = vmul.f32 %v2271, %v2461
        %v2576 = vmul.f32 %v2272, %v2461
        %v2577 = vmul.f32 %v2273, %v2461
        %v2578 = vmul.f32 %v2274, %v2461
        %v2579 = vmul.f32 %v2275, %v2461
        %v2580 = vmul.f32 %v2276, %v2461
        %v2581 = vmul.f32 %v2277, %v2461
        %v2582 = vmul.f32 %v2278, %v2461
        %v2583 = vmul.f32 %v2279, %v2462
        %v2584 = vmul.f32 %v2280, %v2462
        %v2585 = vmul.f32 %v2281, %v2462
        %v2586 = vmul.f32 %v2282, %v2462
        %v2587 = vmul.f32 %v2283, %v2462
        %v2588 = vmul.f32 %v2284, %v2462
        %v2589 = vmul.f32 %v2285, %v2462
        %v2590 = vmul.f32 %v2286, %v2462
        %v2591 = vpack.c.bf16 %v2471, %v2463
        %v2592 = vpack.c.bf16 %v2472, %v2464
        %v2593 = vpack.c.bf16 %v2473, %v2465
        %v2594 = vpack.c.bf16 %v2474, %v2466
        %v2595 = vpack.c.bf16 %v2475, %v2467
        %v2596 = vpack.c.bf16 %v2476, %v2468
        %v2597 = vpack.c.bf16 %v2477, %v2469
        %v2598 = vpack.c.bf16 %v2478, %v2470
        %v2599 = vpack.c.bf16 %v2487, %v2479
        %v2600 = vpack.c.bf16 %v2488, %v2480
        %v2601 = vpack.c.bf16 %v2489, %v2481
        %v2602 = vpack.c.bf16 %v2490, %v2482
        %v2603 = vpack.c.bf16 %v2491, %v2483
        %v2604 = vpack.c.bf16 %v2492, %v2484
        %v2605 = vpack.c.bf16 %v2493, %v2485
        %v2606 = vpack.c.bf16 %v2494, %v2486
        %v2607 = vpack.c.bf16 %v2503, %v2495
        %v2608 = vpack.c.bf16 %v2504, %v2496
        %v2609 = vpack.c.bf16 %v2505, %v2497
        %v2610 = vpack.c.bf16 %v2506, %v2498
        %v2611 = vpack.c.bf16 %v2507, %v2499
        %v2612 = vpack.c.bf16 %v2508, %v2500
        %v2613 = vpack.c.bf16 %v2509, %v2501
        %v2614 = vpack.c.bf16 %v2510, %v2502
        %v2615 = vpack.c.bf16 %v2519, %v2511
        %v2616 = vpack.c.bf16 %v2520, %v2512
        %v2617 = vpack.c.bf16 %v2521, %v2513
        %v2618 = vpack.c.bf16 %v2522, %v2514
        %v2619 = vpack.c.bf16 %v2523, %v2515
        %v2620 = vpack.c.bf16 %v2524, %v2516
        %v2621 = vpack.c.bf16 %v2525, %v2517
        %v2622 = vpack.c.bf16 %v2526, %v2518
        %v2623 = vpack.c.bf16 %v2535, %v2527
        %v2624 = vpack.c.bf16 %v2536, %v2528
        %v2625 = vpack.c.bf16 %v2537, %v2529
        %v2626 = vpack.c.bf16 %v2538, %v2530
        %v2627 = vpack.c.bf16 %v2539, %v2531
        %v2628 = vpack.c.bf16 %v2540, %v2532
        %v2629 = vpack.c.bf16 %v2541, %v2533
        %v2630 = vpack.c.bf16 %v2542, %v2534
        %v2631 = vpack.c.bf16 %v2551, %v2543
        %v2632 = vpack.c.bf16 %v2552, %v2544
        %v2633 = vpack.c.bf16 %v2553, %v2545
        %v2634 = vpack.c.bf16 %v2554, %v2546
        %v2635 = vpack.c.bf16 %v2555, %v2547
        %v2636 = vpack.c.bf16 %v2556, %v2548
        %v2637 = vpack.c.bf16 %v2557, %v2549
        %v2638 = vpack.c.bf16 %v2558, %v2550
        %v2639 = vpack.c.bf16 %v2567, %v2559
        %v2640 = vpack.c.bf16 %v2568, %v2560
        %v2641 = vpack.c.bf16 %v2569, %v2561
        %v2642 = vpack.c.bf16 %v2570, %v2562
        %v2643 = vpack.c.bf16 %v2571, %v2563
        %v2644 = vpack.c.bf16 %v2572, %v2564
        %v2645 = vpack.c.bf16 %v2573, %v2565
        %v2646 = vpack.c.bf16 %v2574, %v2566
        %v2647 = vpack.c.bf16 %v2583, %v2575
        %v2648 = vpack.c.bf16 %v2584, %v2576
        %v2649 = vpack.c.bf16 %v2585, %v2577
        %v2650 = vpack.c.bf16 %v2586, %v2578
        %v2651 = vpack.c.bf16 %v2587, %v2579
        %v2652 = vpack.c.bf16 %v2588, %v2580
        %v2653 = vpack.c.bf16 %v2589, %v2581
        %v2654 = vpack.c.bf16 %v2590, %v2582
        %2655 = vmatpush.bf16.xpose.msra.mxu0 %v2647
        %2656 = vmatpush.bf16.xpose.msra.mxu0 %v2639
        %2657 = vmatpush.bf16.xpose.msra.mxu0 %v2631
        %2658 = vmatpush.bf16.xpose.msra.mxu0 %v2623
        %2659 = vmatpush.bf16.xpose.msra.mxu0 %v2615
        %2660 = vmatpush.bf16.xpose.msra.mxu0 %v2607
        %2661 = vmatpush.bf16.xpose.msra.mxu0 %v2599
        %2662 = vmatpush.bf16.xpose.msra.mxu0 %v2591
        %2663 = vmatmul.bf16.gmra.mxu0 %v719
        %v2664 = vpop.f32.mrf.mxu0
        %v2665 = vadd.f32 0.0, %v2664
        %v2666 = vpop.f32.mrf.mxu0
        %v2667 = vadd.f32 0.0, %v2666
        %2668 = vmatmul.bf16.gmra.mxu0 %v727
        %v2669 = vpop.f32.mrf.mxu0
        %v2670 = vadd.f32 0.0, %v2669
        %v2671 = vpop.f32.mrf.mxu0
        %v2672 = vadd.f32 0.0, %v2671
        %2673 = vdwg.mxu0
        %2674 = vmatpush.bf16.xpose.msra.mxu0 %v2648
        %2675 = vmatpush.bf16.xpose.msra.mxu0 %v2640
        %2676 = vmatpush.bf16.xpose.msra.mxu0 %v2632
        %2677 = vmatpush.bf16.xpose.msra.mxu0 %v2624
        %2678 = vmatpush.bf16.xpose.msra.mxu0 %v2616
        %2679 = vmatpush.bf16.xpose.msra.mxu0 %v2608
        %2680 = vmatpush.bf16.xpose.msra.mxu0 %v2600
        %2681 = vmatpush.bf16.xpose.msra.mxu0 %v2592
        %2682 = vmatmul.bf16.gmra.mxu0 %v720
        %v2683 = vpop.f32.mrf.mxu0
        %v2684 = vadd.f32 %v2665, %v2683
        %v2685 = vpop.f32.mrf.mxu0
        %v2686 = vadd.f32 %v2667, %v2685
        %2687 = vmatmul.bf16.gmra.mxu0 %v728
        %v2688 = vpop.f32.mrf.mxu0
        %v2689 = vadd.f32 %v2670, %v2688
        %v2690 = vpop.f32.mrf.mxu0
        %v2691 = vadd.f32 %v2672, %v2690
        %2692 = vdwg.mxu0
        %2693 = vmatpush.bf16.xpose.msra.mxu0 %v2649
        %2694 = vmatpush.bf16.xpose.msra.mxu0 %v2641
        %2695 = vmatpush.bf16.xpose.msra.mxu0 %v2633
        %2696 = vmatpush.bf16.xpose.msra.mxu0 %v2625
        %2697 = vmatpush.bf16.xpose.msra.mxu0 %v2617
        %2698 = vmatpush.bf16.xpose.msra.mxu0 %v2609
        %2699 = vmatpush.bf16.xpose.msra.mxu0 %v2601
        %2700 = vmatpush.bf16.xpose.msra.mxu0 %v2593
        %2701 = vmatmul.bf16.gmra.mxu0 %v721
        %v2702 = vpop.f32.mrf.mxu0
        %v2703 = vadd.f32 %v2684, %v2702
        %v2704 = vpop.f32.mrf.mxu0
        %v2705 = vadd.f32 %v2686, %v2704
        %2706 = vmatmul.bf16.gmra.mxu0 %v729
        %v2707 = vpop.f32.mrf.mxu0
        %v2708 = vadd.f32 %v2689, %v2707
        %v2709 = vpop.f32.mrf.mxu0
        %v2710 = vadd.f32 %v2691, %v2709
        %2711 = vdwg.mxu0
        %2712 = vmatpush.bf16.xpose.msra.mxu0 %v2650
        %2713 = vmatpush.bf16.xpose.msra.mxu0 %v2642
        %2714 = vmatpush.bf16.xpose.msra.mxu0 %v2634
        %2715 = vmatpush.bf16.xpose.msra.mxu0 %v2626
        %2716 = vmatpush.bf16.xpose.msra.mxu0 %v2618
        %2717 = vmatpush.bf16.xpose.msra.mxu0 %v2610
        %2718 = vmatpush.bf16.xpose.msra.mxu0 %v2602
        %2719 = vmatpush.bf16.xpose.msra.mxu0 %v2594
        %2720 = vmatmul.bf16.gmra.mxu0 %v722
        %v2721 = vpop.f32.mrf.mxu0
        %v2722 = vadd.f32 %v2703, %v2721
        %v2723 = vpop.f32.mrf.mxu0
        %v2724 = vadd.f32 %v2705, %v2723
        %2725 = vmatmul.bf16.gmra.mxu0 %v730
        %v2726 = vpop.f32.mrf.mxu0
        %v2727 = vadd.f32 %v2708, %v2726
        %v2728 = vpop.f32.mrf.mxu0
        %v2729 = vadd.f32 %v2710, %v2728
        %2730 = vdwg.mxu0
        %2731 = vmatpush.bf16.xpose.msra.mxu0 %v2651
        %2732 = vmatpush.bf16.xpose.msra.mxu0 %v2643
        %2733 = vmatpush.bf16.xpose.msra.mxu0 %v2635
        %2734 = vmatpush.bf16.xpose.msra.mxu0 %v2627
        %2735 = vmatpush.bf16.xpose.msra.mxu0 %v2619
        %2736 = vmatpush.bf16.xpose.msra.mxu0 %v2611
        %2737 = vmatpush.bf16.xpose.msra.mxu0 %v2603
        %2738 = vmatpush.bf16.xpose.msra.mxu0 %v2595
        %2739 = vmatmul.bf16.gmra.mxu0 %v723
        %v2740 = vpop.f32.mrf.mxu0
        %v2741 = vadd.f32 %v2722, %v2740
        %v2742 = vpop.f32.mrf.mxu0
        %v2743 = vadd.f32 %v2724, %v2742
        %2744 = vmatmul.bf16.gmra.mxu0 %v731
        %v2745 = vpop.f32.mrf.mxu0
        %v2746 = vadd.f32 %v2727, %v2745
        %v2747 = vpop.f32.mrf.mxu0
        %v2748 = vadd.f32 %v2729, %v2747
        %2749 = vdwg.mxu0
        %2750 = vmatpush.bf16.xpose.msra.mxu0 %v2652
        %2751 = vmatpush.bf16.xpose.msra.mxu0 %v2644
        %2752 = vmatpush.bf16.xpose.msra.mxu0 %v2636
        %2753 = vmatpush.bf16.xpose.msra.mxu0 %v2628
        %2754 = vmatpush.bf16.xpose.msra.mxu0 %v2620
        %2755 = vmatpush.bf16.xpose.msra.mxu0 %v2612
        %2756 = vmatpush.bf16.xpose.msra.mxu0 %v2604
        %2757 = vmatpush.bf16.xpose.msra.mxu0 %v2596
        %2758 = vmatmul.bf16.gmra.mxu0 %v724
        %v2759 = vpop.f32.mrf.mxu0
        %v2760 = vadd.f32 %v2741, %v2759
        %v2761 = vpop.f32.mrf.mxu0
        %v2762 = vadd.f32 %v2743, %v2761
        %2763 = vmatmul.bf16.gmra.mxu0 %v732
        %v2764 = vpop.f32.mrf.mxu0
        %v2765 = vadd.f32 %v2746, %v2764
        %v2766 = vpop.f32.mrf.mxu0
        %v2767 = vadd.f32 %v2748, %v2766
        %2768 = vdwg.mxu0
        %2769 = vmatpush.bf16.xpose.msra.mxu0 %v2653
        %2770 = vmatpush.bf16.xpose.msra.mxu0 %v2645
        %2771 = vmatpush.bf16.xpose.msra.mxu0 %v2637
        %2772 = vmatpush.bf16.xpose.msra.mxu0 %v2629
        %2773 = vmatpush.bf16.xpose.msra.mxu0 %v2621
        %2774 = vmatpush.bf16.xpose.msra.mxu0 %v2613
        %2775 = vmatpush.bf16.xpose.msra.mxu0 %v2605
        %2776 = vmatpush.bf16.xpose.msra.mxu0 %v2597
        %2777 = vmatmul.bf16.gmra.mxu0 %v725
        %v2778 = vpop.f32.mrf.mxu0
        %v2779 = vadd.f32 %v2760, %v2778
        %v2780 = vpop.f32.mrf.mxu0
        %v2781 = vadd.f32 %v2762, %v2780
        %2782 = vmatmul.bf16.gmra.mxu0 %v733
        %v2783 = vpop.f32.mrf.mxu0
        %v2784 = vadd.f32 %v2765, %v2783
        %v2785 = vpop.f32.mrf.mxu0
        %v2786 = vadd.f32 %v2767, %v2785
        %2787 = vdwg.mxu0
        %2788 = vmatpush.bf16.xpose.msra.mxu0 %v2654
        %2789 = vmatpush.bf16.xpose.msra.mxu0 %v2646
        %2790 = vmatpush.bf16.xpose.msra.mxu0 %v2638
        %2791 = vmatpush.bf16.xpose.msra.mxu0 %v2630
        %2792 = vmatpush.bf16.xpose.msra.mxu0 %v2622
        %2793 = vmatpush.bf16.xpose.msra.mxu0 %v2614
        %2794 = vmatpush.bf16.xpose.msra.mxu0 %v2606
        %2795 = vmatpush.bf16.xpose.msra.mxu0 %v2598
        %2796 = vmatmul.bf16.gmra.mxu0 %v726
        %v2797 = vpop.f32.mrf.mxu0
        %v2798 = vadd.f32 %v2779, %v2797
        %v2799 = vpop.f32.mrf.mxu0
        %v2800 = vadd.f32 %v2781, %v2799
        %2801 = vmatmul.bf16.gmra.mxu0 %v734
        %v2802 = vpop.f32.mrf.mxu0
        %v2803 = vadd.f32 %v2784, %v2802
        %v2804 = vpop.f32.mrf.mxu0
        %v2805 = vadd.f32 %v2786, %v2804
        %2806 = vdwg.mxu0
        %v2807 = vmul.f32 %v2798, %v2798
        %v2808 = vmul.f32 %v2800, %v2800
        %v2809 = vmul.f32 %v2803, %v2803
        %v2810 = vmul.f32 %v2805, %v2805
        %v2811 = vadd.f32 %v2807, %v2808
        %v2812 = vadd.f32 %v2811, %v2809
        %v2813 = vadd.f32 %v2812, %v2810
        %v2814 = vrot.slane %v2813, 4
        %v2815 = vadd.f32 %v2813, %v2814
        %v2816 = vrot.slane %v2815, 2
        %v2817 = vadd.f32 %v2815, %v2816
        %v2818 = vrot.slane %v2817, 1
        %v2819 = vadd.f32 %v2817, %v2818
        %v2820 = vrsqrt.pop %v2819
        %v2821 = vmul.f32 %v2820, %v2819
        %v2822 = vmul.f32 %v2821, %v2820
        %v2823 = vmul.f32 0.5, %v2822
        %v2824 = vsub.f32 1.5, %v2823
        %v2825 = vmul.f32 %v2820, %v2824
        %v2826 = vmul.f32 %v2819, %v2825
        %vm2827 = vcmp.eq.f32.partialorder %v2819, inf
        %v2828 = vsel %vm2827, %v2819, %v2826
        %vm2829 = vcmp.eq.f32.partialorder %v2819, 0.0
        %v2830 = vand.u32 %v2819, 2147483648
        %v2831 = vsel %vm2829, %v2830, %v2828
        %v2832 = vadd.f32 %v2831, 1e-06
        %v2833 = vrcp.pop %v2832
        %v2834 = vmul.f32 %v2832, %v2833
        %v2835 = vsub.f32 1.0, %v2834
        %v2836 = vmul.f32 %v2833, %v2835
        %v2837 = vadd.f32 %v2833, %v2836
        %vm2838 = vweird.f32 %v2832
        %vm2839 = vweird.f32 %v2833
        %vm2840 = vmor %vm2838, %vm2839
        %v2841 = vsel %vm2840, %v2833, %v2837
        %v2842 = vand.u32 2147483647, %v2832
        %vm2843 = vcmp.eq.f32.partialorder %v2842, 8.507059e+37
        %v2844 = vand.u32 %v2832, 2147483648
        %v2845 = vor.u32 1.1754944e-38, %v2844
        %v2846 = vsel %vm2843, %v2845, %v2841
        %v2847 = vmul.f32 %v2798, %v2846
        %v2848 = vmul.f32 %v2800, %v2846
        %v2849 = vmul.f32 %v2803, %v2846
        %v2850 = vmul.f32 %v2805, %v2846
        %v2851 = vpack.c.bf16 %v2848, %v2847
        %v2852 = vpack.c.bf16 %v2850, %v2849
        %2853 = vxpose.xlu0.c.b16.start [1/8] %v2851, 128
        %2854 = vxpose.xlu0.c.b16.cont [2/8] %v2852, 128
        %2855 = vxpose.xlu0.c.b16.cont [3/8] 0, 128
        %2856 = vxpose.xlu0.c.b16.cont [4/8] 0, 128
        %2857 = vxpose.xlu0.c.b16.cont [5/8] 0, 128
        %2858 = vxpose.xlu0.c.b16.cont [6/8] 0, 128
        %2859 = vxpose.xlu0.c.b16.cont [7/8] 0, 128
        %2860 = vxpose.xlu0.c.b16.end [8/8] 0, 128
        %v2861 = vpop.trf.xlu0
        %v2862 = vpop.trf.xlu0
        %v2863 = vpop.trf.xlu0
        %v2864 = vpop.trf.xlu0
        %v2865 = vpop.trf.xlu0
        %v2866 = vpop.trf.xlu0
        %v2867 = vpop.trf.xlu0
        %v2868 = vpop.trf.xlu0
        %v2870 = vsel %vm359, %v2861, 0
        %v2873 = vsel %vm359, %v2862, 0
        %v2876 = vsel %vm359, %v2863, 0
        %v2879 = vsel %vm359, %v2864, 0
        %v2882 = vsel %vm359, %v2865, 0
        %v2885 = vsel %vm359, %v2866, 0
        %v2888 = vsel %vm359, %v2867, 0
        %v2891 = vsel %vm359, %v2868, 0
        %2893 = vmatpush.bf16.msra.mxu0 0
        %2894 = vmatpush.bf16.msra.mxu0 0
        %2895 = vmatpush.bf16.msra.mxu0 0
        %2896 = vmatpush.bf16.msra.mxu0 0
        %2897 = vmatpush.bf16.msra.mxu0 0
        %2898 = vmatpush.bf16.msra.mxu0 0
        %2899 = vmatpush.bf16.msra.mxu0 %v727
        %2900 = vmatpush.bf16.msra.mxu0 %v719
        %2901 = vmatmul.bf16.gmra.mxu0 %v2870
        %v2902 = vpop.f32.mrf.mxu0
        %v2903 = vadd.f32 0.0, %v2902
        %v2904 = vpop.f32.mrf.mxu0
        %v2905 = vadd.f32 0.0, %v2904
        %2906 = vmatmul.bf16.gmra.mxu0 %v2873
        %v2907 = vpop.f32.mrf.mxu0
        %v2908 = vadd.f32 0.0, %v2907
        %v2909 = vpop.f32.mrf.mxu0
        %v2910 = vadd.f32 0.0, %v2909
        %2911 = vmatmul.bf16.gmra.mxu0 %v2876
        %v2912 = vpop.f32.mrf.mxu0
        %v2913 = vadd.f32 0.0, %v2912
        %v2914 = vpop.f32.mrf.mxu0
        %v2915 = vadd.f32 0.0, %v2914
        %2916 = vmatmul.bf16.gmra.mxu0 %v2879
        %v2917 = vpop.f32.mrf.mxu0
        %v2918 = vadd.f32 0.0, %v2917
        %v2919 = vpop.f32.mrf.mxu0
        %v2920 = vadd.f32 0.0, %v2919
        %2921 = vmatmul.bf16.gmra.mxu0 %v2882
        %v2922 = vpop.f32.mrf.mxu0
        %v2923 = vadd.f32 0.0, %v2922
        %v2924 = vpop.f32.mrf.mxu0
        %v2925 = vadd.f32 0.0, %v2924
        %2926 = vmatmul.bf16.gmra.mxu0 %v2885
        %v2927 = vpop.f32.mrf.mxu0
        %v2928 = vadd.f32 0.0, %v2927
        %v2929 = vpop.f32.mrf.mxu0
        %v2930 = vadd.f32 0.0, %v2929
        %2931 = vmatmul.bf16.gmra.mxu0 %v2888
        %v2932 = vpop.f32.mrf.mxu0
        %v2933 = vadd.f32 0.0, %v2932
        %v2934 = vpop.f32.mrf.mxu0
        %v2935 = vadd.f32 0.0, %v2934
        %2936 = vmatmul.bf16.gmra.mxu0 %v2891
        %v2937 = vpop.f32.mrf.mxu0
        %v2938 = vadd.f32 0.0, %v2937
        %v2939 = vpop.f32.mrf.mxu0
        %v2940 = vadd.f32 0.0, %v2939
        %2941 = vdwg.mxu0
        %2942 = vmatpush.bf16.msra.mxu0 0
        %2943 = vmatpush.bf16.msra.mxu0 0
        %2944 = vmatpush.bf16.msra.mxu0 0
        %2945 = vmatpush.bf16.msra.mxu0 0
        %2946 = vmatpush.bf16.msra.mxu0 0
        %2947 = vmatpush.bf16.msra.mxu0 0
        %2948 = vmatpush.bf16.msra.mxu0 %v728
        %2949 = vmatpush.bf16.msra.mxu0 %v720
        %2950 = vmatmul.bf16.gmra.mxu0 %v2870
        %v2951 = vpop.f32.mrf.mxu0
        %v2952 = vadd.f32 0.0, %v2951
        %v2953 = vpop.f32.mrf.mxu0
        %v2954 = vadd.f32 0.0, %v2953
        %2955 = vmatmul.bf16.gmra.mxu0 %v2873
        %v2956 = vpop.f32.mrf.mxu0
        %v2957 = vadd.f32 0.0, %v2956
        %v2958 = vpop.f32.mrf.mxu0
        %v2959 = vadd.f32 0.0, %v2958
        %2960 = vmatmul.bf16.gmra.mxu0 %v2876
        %v2961 = vpop.f32.mrf.mxu0
        %v2962 = vadd.f32 0.0, %v2961
        %v2963 = vpop.f32.mrf.mxu0
        %v2964 = vadd.f32 0.0, %v2963
        %2965 = vmatmul.bf16.gmra.mxu0 %v2879
        %v2966 = vpop.f32.mrf.mxu0
        %v2967 = vadd.f32 0.0, %v2966
        %v2968 = vpop.f32.mrf.mxu0
        %v2969 = vadd.f32 0.0, %v2968
        %2970 = vmatmul.bf16.gmra.mxu0 %v2882
        %v2971 = vpop.f32.mrf.mxu0
        %v2972 = vadd.f32 0.0, %v2971
        %v2973 = vpop.f32.mrf.mxu0
        %v2974 = vadd.f32 0.0, %v2973
        %2975 = vmatmul.bf16.gmra.mxu0 %v2885
        %v2976 = vpop.f32.mrf.mxu0
        %v2977 = vadd.f32 0.0, %v2976
        %v2978 = vpop.f32.mrf.mxu0
        %v2979 = vadd.f32 0.0, %v2978
        %2980 = vmatmul.bf16.gmra.mxu0 %v2888
        %v2981 = vpop.f32.mrf.mxu0
        %v2982 = vadd.f32 0.0, %v2981
        %v2983 = vpop.f32.mrf.mxu0
        %v2984 = vadd.f32 0.0, %v2983
        %2985 = vmatmul.bf16.gmra.mxu0 %v2891
        %v2986 = vpop.f32.mrf.mxu0
        %v2987 = vadd.f32 0.0, %v2986
        %v2988 = vpop.f32.mrf.mxu0
        %v2989 = vadd.f32 0.0, %v2988
        %2990 = vdwg.mxu0
        %2991 = vmatpush.bf16.msra.mxu0 0
        %2992 = vmatpush.bf16.msra.mxu0 0
        %2993 = vmatpush.bf16.msra.mxu0 0
        %2994 = vmatpush.bf16.msra.mxu0 0
        %2995 = vmatpush.bf16.msra.mxu0 0
        %2996 = vmatpush.bf16.msra.mxu0 0
        %2997 = vmatpush.bf16.msra.mxu0 %v729
        %2998 = vmatpush.bf16.msra.mxu0 %v721
        %2999 = vmatmul.bf16.gmra.mxu0 %v2870
        %v3000 = vpop.f32.mrf.mxu0
        %v3001 = vadd.f32 0.0, %v3000
        %v3002 = vpop.f32.mrf.mxu0
        %v3003 = vadd.f32 0.0, %v3002
        %3004 = vmatmul.bf16.gmra.mxu0 %v2873
        %v3005 = vpop.f32.mrf.mxu0
        %v3006 = vadd.f32 0.0, %v3005
        %v3007 = vpop.f32.mrf.mxu0
        %v3008 = vadd.f32 0.0, %v3007
        %3009 = vmatmul.bf16.gmra.mxu0 %v2876
        %v3010 = vpop.f32.mrf.mxu0
        %v3011 = vadd.f32 0.0, %v3010
        %v3012 = vpop.f32.mrf.mxu0
        %v3013 = vadd.f32 0.0, %v3012
        %3014 = vmatmul.bf16.gmra.mxu0 %v2879
        %v3015 = vpop.f32.mrf.mxu0
        %v3016 = vadd.f32 0.0, %v3015
        %v3017 = vpop.f32.mrf.mxu0
        %v3018 = vadd.f32 0.0, %v3017
        %3019 = vmatmul.bf16.gmra.mxu0 %v2882
        %v3020 = vpop.f32.mrf.mxu0
        %v3021 = vadd.f32 0.0, %v3020
        %v3022 = vpop.f32.mrf.mxu0
        %v3023 = vadd.f32 0.0, %v3022
        %3024 = vmatmul.bf16.gmra.mxu0 %v2885
        %v3025 = vpop.f32.mrf.mxu0
        %v3026 = vadd.f32 0.0, %v3025
        %v3027 = vpop.f32.mrf.mxu0
        %v3028 = vadd.f32 0.0, %v3027
        %3029 = vmatmul.bf16.gmra.mxu0 %v2888
        %v3030 = vpop.f32.mrf.mxu0
        %v3031 = vadd.f32 0.0, %v3030
        %v3032 = vpop.f32.mrf.mxu0
        %v3033 = vadd.f32 0.0, %v3032
        %3034 = vmatmul.bf16.gmra.mxu0 %v2891
        %v3035 = vpop.f32.mrf.mxu0
        %v3036 = vadd.f32 0.0, %v3035
        %v3037 = vpop.f32.mrf.mxu0
        %v3038 = vadd.f32 0.0, %v3037
        %3039 = vdwg.mxu0
        %3040 = vmatpush.bf16.msra.mxu0 0
        %3041 = vmatpush.bf16.msra.mxu0 0
        %3042 = vmatpush.bf16.msra.mxu0 0
        %3043 = vmatpush.bf16.msra.mxu0 0
        %3044 = vmatpush.bf16.msra.mxu0 0
        %3045 = vmatpush.bf16.msra.mxu0 0
        %3046 = vmatpush.bf16.msra.mxu0 %v730
        %3047 = vmatpush.bf16.msra.mxu0 %v722
        %3048 = vmatmul.bf16.gmra.mxu0 %v2870
        %v3049 = vpop.f32.mrf.mxu0
        %v3050 = vadd.f32 0.0, %v3049
        %v3051 = vpop.f32.mrf.mxu0
        %v3052 = vadd.f32 0.0, %v3051
        %3053 = vmatmul.bf16.gmra.mxu0 %v2873
        %v3054 = vpop.f32.mrf.mxu0
        %v3055 = vadd.f32 0.0, %v3054
        %v3056 = vpop.f32.mrf.mxu0
        %v3057 = vadd.f32 0.0, %v3056
        %3058 = vmatmul.bf16.gmra.mxu0 %v2876
        %v3059 = vpop.f32.mrf.mxu0
        %v3060 = vadd.f32 0.0, %v3059
        %v3061 = vpop.f32.mrf.mxu0
        %v3062 = vadd.f32 0.0, %v3061
        %3063 = vmatmul.bf16.gmra.mxu0 %v2879
        %v3064 = vpop.f32.mrf.mxu0
        %v3065 = vadd.f32 0.0, %v3064
        %v3066 = vpop.f32.mrf.mxu0
        %v3067 = vadd.f32 0.0, %v3066
        %3068 = vmatmul.bf16.gmra.mxu0 %v2882
        %v3069 = vpop.f32.mrf.mxu0
        %v3070 = vadd.f32 0.0, %v3069
        %v3071 = vpop.f32.mrf.mxu0
        %v3072 = vadd.f32 0.0, %v3071
        %3073 = vmatmul.bf16.gmra.mxu0 %v2885
        %v3074 = vpop.f32.mrf.mxu0
        %v3075 = vadd.f32 0.0, %v3074
        %v3076 = vpop.f32.mrf.mxu0
        %v3077 = vadd.f32 0.0, %v3076
        %3078 = vmatmul.bf16.gmra.mxu0 %v2888
        %v3079 = vpop.f32.mrf.mxu0
        %v3080 = vadd.f32 0.0, %v3079
        %v3081 = vpop.f32.mrf.mxu0
        %v3082 = vadd.f32 0.0, %v3081
        %3083 = vmatmul.bf16.gmra.mxu0 %v2891
        %v3084 = vpop.f32.mrf.mxu0
        %v3085 = vadd.f32 0.0, %v3084
        %v3086 = vpop.f32.mrf.mxu0
        %v3087 = vadd.f32 0.0, %v3086
        %3088 = vdwg.mxu0
        %3089 = vmatpush.bf16.msra.mxu0 0
        %3090 = vmatpush.bf16.msra.mxu0 0
        %3091 = vmatpush.bf16.msra.mxu0 0
        %3092 = vmatpush.bf16.msra.mxu0 0
        %3093 = vmatpush.bf16.msra.mxu0 0
        %3094 = vmatpush.bf16.msra.mxu0 0
        %3095 = vmatpush.bf16.msra.mxu0 %v731
        %3096 = vmatpush.bf16.msra.mxu0 %v723
        %3097 = vmatmul.bf16.gmra.mxu0 %v2870
        %v3098 = vpop.f32.mrf.mxu0
        %v3099 = vadd.f32 0.0, %v3098
        %v3100 = vpop.f32.mrf.mxu0
        %v3101 = vadd.f32 0.0, %v3100
        %3102 = vmatmul.bf16.gmra.mxu0 %v2873
        %v3103 = vpop.f32.mrf.mxu0
        %v3104 = vadd.f32 0.0, %v3103
        %v3105 = vpop.f32.mrf.mxu0
        %v3106 = vadd.f32 0.0, %v3105
        %3107 = vmatmul.bf16.gmra.mxu0 %v2876
        %v3108 = vpop.f32.mrf.mxu0
        %v3109 = vadd.f32 0.0, %v3108
        %v3110 = vpop.f32.mrf.mxu0
        %v3111 = vadd.f32 0.0, %v3110
        %3112 = vmatmul.bf16.gmra.mxu0 %v2879
        %v3113 = vpop.f32.mrf.mxu0
        %v3114 = vadd.f32 0.0, %v3113
        %v3115 = vpop.f32.mrf.mxu0
        %v3116 = vadd.f32 0.0, %v3115
        %3117 = vmatmul.bf16.gmra.mxu0 %v2882
        %v3118 = vpop.f32.mrf.mxu0
        %v3119 = vadd.f32 0.0, %v3118
        %v3120 = vpop.f32.mrf.mxu0
        %v3121 = vadd.f32 0.0, %v3120
        %3122 = vmatmul.bf16.gmra.mxu0 %v2885
        %v3123 = vpop.f32.mrf.mxu0
        %v3124 = vadd.f32 0.0, %v3123
        %v3125 = vpop.f32.mrf.mxu0
        %v3126 = vadd.f32 0.0, %v3125
        %3127 = vmatmul.bf16.gmra.mxu0 %v2888
        %v3128 = vpop.f32.mrf.mxu0
        %v3129 = vadd.f32 0.0, %v3128
        %v3130 = vpop.f32.mrf.mxu0
        %v3131 = vadd.f32 0.0, %v3130
        %3132 = vmatmul.bf16.gmra.mxu0 %v2891
        %v3133 = vpop.f32.mrf.mxu0
        %v3134 = vadd.f32 0.0, %v3133
        %v3135 = vpop.f32.mrf.mxu0
        %v3136 = vadd.f32 0.0, %v3135
        %3137 = vdwg.mxu0
        %3138 = vmatpush.bf16.msra.mxu0 0
        %3139 = vmatpush.bf16.msra.mxu0 0
        %3140 = vmatpush.bf16.msra.mxu0 0
        %3141 = vmatpush.bf16.msra.mxu0 0
        %3142 = vmatpush.bf16.msra.mxu0 0
        %3143 = vmatpush.bf16.msra.mxu0 0
        %3144 = vmatpush.bf16.msra.mxu0 %v732
        %3145 = vmatpush.bf16.msra.mxu0 %v724
        %3146 = vmatmul.bf16.gmra.mxu0 %v2870
        %v3147 = vpop.f32.mrf.mxu0
        %v3148 = vadd.f32 0.0, %v3147
        %v3149 = vpop.f32.mrf.mxu0
        %v3150 = vadd.f32 0.0, %v3149
        %3151 = vmatmul.bf16.gmra.mxu0 %v2873
        %v3152 = vpop.f32.mrf.mxu0
        %v3153 = vadd.f32 0.0, %v3152
        %v3154 = vpop.f32.mrf.mxu0
        %v3155 = vadd.f32 0.0, %v3154
        %3156 = vmatmul.bf16.gmra.mxu0 %v2876
        %v3157 = vpop.f32.mrf.mxu0
        %v3158 = vadd.f32 0.0, %v3157
        %v3159 = vpop.f32.mrf.mxu0
        %v3160 = vadd.f32 0.0, %v3159
        %3161 = vmatmul.bf16.gmra.mxu0 %v2879
        %v3162 = vpop.f32.mrf.mxu0
        %v3163 = vadd.f32 0.0, %v3162
        %v3164 = vpop.f32.mrf.mxu0
        %v3165 = vadd.f32 0.0, %v3164
        %3166 = vmatmul.bf16.gmra.mxu0 %v2882
        %v3167 = vpop.f32.mrf.mxu0
        %v3168 = vadd.f32 0.0, %v3167
        %v3169 = vpop.f32.mrf.mxu0
        %v3170 = vadd.f32 0.0, %v3169
        %3171 = vmatmul.bf16.gmra.mxu0 %v2885
        %v3172 = vpop.f32.mrf.mxu0
        %v3173 = vadd.f32 0.0, %v3172
        %v3174 = vpop.f32.mrf.mxu0
        %v3175 = vadd.f32 0.0, %v3174
        %3176 = vmatmul.bf16.gmra.mxu0 %v2888
        %v3177 = vpop.f32.mrf.mxu0
        %v3178 = vadd.f32 0.0, %v3177
        %v3179 = vpop.f32.mrf.mxu0
        %v3180 = vadd.f32 0.0, %v3179
        %3181 = vmatmul.bf16.gmra.mxu0 %v2891
        %v3182 = vpop.f32.mrf.mxu0
        %v3183 = vadd.f32 0.0, %v3182
        %v3184 = vpop.f32.mrf.mxu0
        %v3185 = vadd.f32 0.0, %v3184
        %3186 = vdwg.mxu0
        %3187 = vmatpush.bf16.msra.mxu0 0
        %3188 = vmatpush.bf16.msra.mxu0 0
        %3189 = vmatpush.bf16.msra.mxu0 0
        %3190 = vmatpush.bf16.msra.mxu0 0
        %3191 = vmatpush.bf16.msra.mxu0 0
        %3192 = vmatpush.bf16.msra.mxu0 0
        %3193 = vmatpush.bf16.msra.mxu0 %v733
        %3194 = vmatpush.bf16.msra.mxu0 %v725
        %3195 = vmatmul.bf16.gmra.mxu0 %v2870
        %v3196 = vpop.f32.mrf.mxu0
        %v3197 = vadd.f32 0.0, %v3196
        %v3198 = vpop.f32.mrf.mxu0
        %v3199 = vadd.f32 0.0, %v3198
        %3200 = vmatmul.bf16.gmra.mxu0 %v2873
        %v3201 = vpop.f32.mrf.mxu0
        %v3202 = vadd.f32 0.0, %v3201
        %v3203 = vpop.f32.mrf.mxu0
        %v3204 = vadd.f32 0.0, %v3203
        %3205 = vmatmul.bf16.gmra.mxu0 %v2876
        %v3206 = vpop.f32.mrf.mxu0
        %v3207 = vadd.f32 0.0, %v3206
        %v3208 = vpop.f32.mrf.mxu0
        %v3209 = vadd.f32 0.0, %v3208
        %3210 = vmatmul.bf16.gmra.mxu0 %v2879
        %v3211 = vpop.f32.mrf.mxu0
        %v3212 = vadd.f32 0.0, %v3211
        %v3213 = vpop.f32.mrf.mxu0
        %v3214 = vadd.f32 0.0, %v3213
        %3215 = vmatmul.bf16.gmra.mxu0 %v2882
        %v3216 = vpop.f32.mrf.mxu0
        %v3217 = vadd.f32 0.0, %v3216
        %v3218 = vpop.f32.mrf.mxu0
        %v3219 = vadd.f32 0.0, %v3218
        %3220 = vmatmul.bf16.gmra.mxu0 %v2885
        %v3221 = vpop.f32.mrf.mxu0
        %v3222 = vadd.f32 0.0, %v3221
        %v3223 = vpop.f32.mrf.mxu0
        %v3224 = vadd.f32 0.0, %v3223
        %3225 = vmatmul.bf16.gmra.mxu0 %v2888
        %v3226 = vpop.f32.mrf.mxu0
        %v3227 = vadd.f32 0.0, %v3226
        %v3228 = vpop.f32.mrf.mxu0
        %v3229 = vadd.f32 0.0, %v3228
        %3230 = vmatmul.bf16.gmra.mxu0 %v2891
        %v3231 = vpop.f32.mrf.mxu0
        %v3232 = vadd.f32 0.0, %v3231
        %v3233 = vpop.f32.mrf.mxu0
        %v3234 = vadd.f32 0.0, %v3233
        %3235 = vdwg.mxu0
        %3236 = vmatpush.bf16.msra.mxu0 0
        %3237 = vmatpush.bf16.msra.mxu0 0
        %3238 = vmatpush.bf16.msra.mxu0 0
        %3239 = vmatpush.bf16.msra.mxu0 0
        %3240 = vmatpush.bf16.msra.mxu0 0
        %3241 = vmatpush.bf16.msra.mxu0 0
        %3242 = vmatpush.bf16.msra.mxu0 %v734
        %3243 = vmatpush.bf16.msra.mxu0 %v726
        %3244 = vmatmul.bf16.gmra.mxu0 %v2870
        %v3245 = vpop.f32.mrf.mxu0
        %v3246 = vadd.f32 0.0, %v3245
        %v3247 = vpop.f32.mrf.mxu0
        %v3248 = vadd.f32 0.0, %v3247
        %3249 = vmatmul.bf16.gmra.mxu0 %v2873
        %v3250 = vpop.f32.mrf.mxu0
        %v3251 = vadd.f32 0.0, %v3250
        %v3252 = vpop.f32.mrf.mxu0
        %v3253 = vadd.f32 0.0, %v3252
        %3254 = vmatmul.bf16.gmra.mxu0 %v2876
        %v3255 = vpop.f32.mrf.mxu0
        %v3256 = vadd.f32 0.0, %v3255
        %v3257 = vpop.f32.mrf.mxu0
        %v3258 = vadd.f32 0.0, %v3257
        %3259 = vmatmul.bf16.gmra.mxu0 %v2879
        %v3260 = vpop.f32.mrf.mxu0
        %v3261 = vadd.f32 0.0, %v3260
        %v3262 = vpop.f32.mrf.mxu0
        %v3263 = vadd.f32 0.0, %v3262
        %3264 = vmatmul.bf16.gmra.mxu0 %v2882
        %v3265 = vpop.f32.mrf.mxu0
        %v3266 = vadd.f32 0.0, %v3265
        %v3267 = vpop.f32.mrf.mxu0
        %v3268 = vadd.f32 0.0, %v3267
        %3269 = vmatmul.bf16.gmra.mxu0 %v2885
        %v3270 = vpop.f32.mrf.mxu0
        %v3271 = vadd.f32 0.0, %v3270
        %v3272 = vpop.f32.mrf.mxu0
        %v3273 = vadd.f32 0.0, %v3272
        %3274 = vmatmul.bf16.gmra.mxu0 %v2888
        %v3275 = vpop.f32.mrf.mxu0
        %v3276 = vadd.f32 0.0, %v3275
        %v3277 = vpop.f32.mrf.mxu0
        %v3278 = vadd.f32 0.0, %v3277
        %3279 = vmatmul.bf16.gmra.mxu0 %v2891
        %v3280 = vpop.f32.mrf.mxu0
        %v3281 = vadd.f32 0.0, %v3280
        %v3282 = vpop.f32.mrf.mxu0
        %v3283 = vadd.f32 0.0, %v3282
        %3284 = vdwg.mxu0
        %v3285 = vsel %vm1183, %v2903, -1e+30
        %v3286 = vsel %vm1183, %v2952, -1e+30
        %v3287 = vsel %vm1183, %v3001, -1e+30
        %v3288 = vsel %vm1183, %v3050, -1e+30
        %v3289 = vsel %vm1183, %v3099, -1e+30
        %v3290 = vsel %vm1183, %v3148, -1e+30
        %v3291 = vsel %vm1183, %v3197, -1e+30
        %v3292 = vsel %vm1183, %v3246, -1e+30
        %v3293 = vsel %vm1184, %v2905, -1e+30
        %v3294 = vsel %vm1184, %v2954, -1e+30
        %v3295 = vsel %vm1184, %v3003, -1e+30
        %v3296 = vsel %vm1184, %v3052, -1e+30
        %v3297 = vsel %vm1184, %v3101, -1e+30
        %v3298 = vsel %vm1184, %v3150, -1e+30
        %v3299 = vsel %vm1184, %v3199, -1e+30
        %v3300 = vsel %vm1184, %v3248, -1e+30
        %v3301 = vsel %vm1185, %v2908, -1e+30
        %v3302 = vsel %vm1185, %v2957, -1e+30
        %v3303 = vsel %vm1185, %v3006, -1e+30
        %v3304 = vsel %vm1185, %v3055, -1e+30
        %v3305 = vsel %vm1185, %v3104, -1e+30
        %v3306 = vsel %vm1185, %v3153, -1e+30
        %v3307 = vsel %vm1185, %v3202, -1e+30
        %v3308 = vsel %vm1185, %v3251, -1e+30
        %v3309 = vsel %vm1186, %v2910, -1e+30
        %v3310 = vsel %vm1186, %v2959, -1e+30
        %v3311 = vsel %vm1186, %v3008, -1e+30
        %v3312 = vsel %vm1186, %v3057, -1e+30
        %v3313 = vsel %vm1186, %v3106, -1e+30
        %v3314 = vsel %vm1186, %v3155, -1e+30
        %v3315 = vsel %vm1186, %v3204, -1e+30
        %v3316 = vsel %vm1186, %v3253, -1e+30
        %v3317 = vsel %vm1187, %v2913, -1e+30
        %v3318 = vsel %vm1187, %v2962, -1e+30
        %v3319 = vsel %vm1187, %v3011, -1e+30
        %v3320 = vsel %vm1187, %v3060, -1e+30
        %v3321 = vsel %vm1187, %v3109, -1e+30
        %v3322 = vsel %vm1187, %v3158, -1e+30
        %v3323 = vsel %vm1187, %v3207, -1e+30
        %v3324 = vsel %vm1187, %v3256, -1e+30
        %v3325 = vsel %vm1188, %v2915, -1e+30
        %v3326 = vsel %vm1188, %v2964, -1e+30
        %v3327 = vsel %vm1188, %v3013, -1e+30
        %v3328 = vsel %vm1188, %v3062, -1e+30
        %v3329 = vsel %vm1188, %v3111, -1e+30
        %v3330 = vsel %vm1188, %v3160, -1e+30
        %v3331 = vsel %vm1188, %v3209, -1e+30
        %v3332 = vsel %vm1188, %v3258, -1e+30
        %v3333 = vsel %vm1189, %v2918, -1e+30
        %v3334 = vsel %vm1189, %v2967, -1e+30
        %v3335 = vsel %vm1189, %v3016, -1e+30
        %v3336 = vsel %vm1189, %v3065, -1e+30
        %v3337 = vsel %vm1189, %v3114, -1e+30
        %v3338 = vsel %vm1189, %v3163, -1e+30
        %v3339 = vsel %vm1189, %v3212, -1e+30
        %v3340 = vsel %vm1189, %v3261, -1e+30
        %v3341 = vsel %vm1190, %v2920, -1e+30
        %v3342 = vsel %vm1190, %v2969, -1e+30
        %v3343 = vsel %vm1190, %v3018, -1e+30
        %v3344 = vsel %vm1190, %v3067, -1e+30
        %v3345 = vsel %vm1190, %v3116, -1e+30
        %v3346 = vsel %vm1190, %v3165, -1e+30
        %v3347 = vsel %vm1190, %v3214, -1e+30
        %v3348 = vsel %vm1190, %v3263, -1e+30
        %v3349 = vsel %vm1191, %v2923, -1e+30
        %v3350 = vsel %vm1191, %v2972, -1e+30
        %v3351 = vsel %vm1191, %v3021, -1e+30
        %v3352 = vsel %vm1191, %v3070, -1e+30
        %v3353 = vsel %vm1191, %v3119, -1e+30
        %v3354 = vsel %vm1191, %v3168, -1e+30
        %v3355 = vsel %vm1191, %v3217, -1e+30
        %v3356 = vsel %vm1191, %v3266, -1e+30
        %v3357 = vsel %vm1192, %v2925, -1e+30
        %v3358 = vsel %vm1192, %v2974, -1e+30
        %v3359 = vsel %vm1192, %v3023, -1e+30
        %v3360 = vsel %vm1192, %v3072, -1e+30
        %v3361 = vsel %vm1192, %v3121, -1e+30
        %v3362 = vsel %vm1192, %v3170, -1e+30
        %v3363 = vsel %vm1192, %v3219, -1e+30
        %v3364 = vsel %vm1192, %v3268, -1e+30
        %v3365 = vsel %vm1193, %v2928, -1e+30
        %v3366 = vsel %vm1193, %v2977, -1e+30
        %v3367 = vsel %vm1193, %v3026, -1e+30
        %v3368 = vsel %vm1193, %v3075, -1e+30
        %v3369 = vsel %vm1193, %v3124, -1e+30
        %v3370 = vsel %vm1193, %v3173, -1e+30
        %v3371 = vsel %vm1193, %v3222, -1e+30
        %v3372 = vsel %vm1193, %v3271, -1e+30
        %v3373 = vsel %vm1194, %v2930, -1e+30
        %v3374 = vsel %vm1194, %v2979, -1e+30
        %v3375 = vsel %vm1194, %v3028, -1e+30
        %v3376 = vsel %vm1194, %v3077, -1e+30
        %v3377 = vsel %vm1194, %v3126, -1e+30
        %v3378 = vsel %vm1194, %v3175, -1e+30
        %v3379 = vsel %vm1194, %v3224, -1e+30
        %v3380 = vsel %vm1194, %v3273, -1e+30
        %v3381 = vsel %vm1195, %v2933, -1e+30
        %v3382 = vsel %vm1195, %v2982, -1e+30
        %v3383 = vsel %vm1195, %v3031, -1e+30
        %v3384 = vsel %vm1195, %v3080, -1e+30
        %v3385 = vsel %vm1195, %v3129, -1e+30
        %v3386 = vsel %vm1195, %v3178, -1e+30
        %v3387 = vsel %vm1195, %v3227, -1e+30
        %v3388 = vsel %vm1195, %v3276, -1e+30
        %v3389 = vsel %vm1196, %v2935, -1e+30
        %v3390 = vsel %vm1196, %v2984, -1e+30
        %v3391 = vsel %vm1196, %v3033, -1e+30
        %v3392 = vsel %vm1196, %v3082, -1e+30
        %v3393 = vsel %vm1196, %v3131, -1e+30
        %v3394 = vsel %vm1196, %v3180, -1e+30
        %v3395 = vsel %vm1196, %v3229, -1e+30
        %v3396 = vsel %vm1196, %v3278, -1e+30
        %v3397 = vsel %vm1197, %v2938, -1e+30
        %v3398 = vsel %vm1197, %v2987, -1e+30
        %v3399 = vsel %vm1197, %v3036, -1e+30
        %v3400 = vsel %vm1197, %v3085, -1e+30
        %v3401 = vsel %vm1197, %v3134, -1e+30
        %v3402 = vsel %vm1197, %v3183, -1e+30
        %v3403 = vsel %vm1197, %v3232, -1e+30
        %v3404 = vsel %vm1197, %v3281, -1e+30
        %v3405 = vsel %vm1198, %v2940, -1e+30
        %v3406 = vsel %vm1198, %v2989, -1e+30
        %v3407 = vsel %vm1198, %v3038, -1e+30
        %v3408 = vsel %vm1198, %v3087, -1e+30
        %v3409 = vsel %vm1198, %v3136, -1e+30
        %v3410 = vsel %vm1198, %v3185, -1e+30
        %v3411 = vsel %vm1198, %v3234, -1e+30
        %v3412 = vsel %vm1198, %v3283, -1e+30
        %v3413 = vmax.f32 %v3285, %v3293
        %v3414 = vmax.f32 %v3413, %v3301
        %v3415 = vmax.f32 %v3414, %v3309
        %v3416 = vmax.f32 %v3415, %v3317
        %v3417 = vmax.f32 %v3416, %v3325
        %v3418 = vmax.f32 %v3417, %v3333
        %v3419 = vmax.f32 %v3418, %v3341
        %v3420 = vmax.f32 %v3419, %v3349
        %v3421 = vmax.f32 %v3420, %v3357
        %v3422 = vmax.f32 %v3421, %v3365
        %v3423 = vmax.f32 %v3422, %v3373
        %v3424 = vmax.f32 %v3423, %v3381
        %v3425 = vmax.f32 %v3424, %v3389
        %v3426 = vmax.f32 %v3425, %v3397
        %v3427 = vmax.f32 %v3426, %v3405
        %v3428 = vrot.slane %v3427, 4
        %v3429 = vmax.f32 %v3427, %v3428
        %v3430 = vrot.slane %v3429, 2
        %v3431 = vmax.f32 %v3429, %v3430
        %v3432 = vrot.slane %v3431, 1
        %v3433 = vmax.f32 %v3431, %v3432
        %v3434 = vmax.f32 %v3286, %v3294
        %v3435 = vmax.f32 %v3434, %v3302
        %v3436 = vmax.f32 %v3435, %v3310
        %v3437 = vmax.f32 %v3436, %v3318
        %v3438 = vmax.f32 %v3437, %v3326
        %v3439 = vmax.f32 %v3438, %v3334
        %v3440 = vmax.f32 %v3439, %v3342
        %v3441 = vmax.f32 %v3440, %v3350
        %v3442 = vmax.f32 %v3441, %v3358
        %v3443 = vmax.f32 %v3442, %v3366
        %v3444 = vmax.f32 %v3443, %v3374
        %v3445 = vmax.f32 %v3444, %v3382
        %v3446 = vmax.f32 %v3445, %v3390
        %v3447 = vmax.f32 %v3446, %v3398
        %v3448 = vmax.f32 %v3447, %v3406
        %v3449 = vrot.slane %v3448, 4
        %v3450 = vmax.f32 %v3448, %v3449
        %v3451 = vrot.slane %v3450, 2
        %v3452 = vmax.f32 %v3450, %v3451
        %v3453 = vrot.slane %v3452, 1
        %v3454 = vmax.f32 %v3452, %v3453
        %v3455 = vmax.f32 %v3287, %v3295
        %v3456 = vmax.f32 %v3455, %v3303
        %v3457 = vmax.f32 %v3456, %v3311
        %v3458 = vmax.f32 %v3457, %v3319
        %v3459 = vmax.f32 %v3458, %v3327
        %v3460 = vmax.f32 %v3459, %v3335
        %v3461 = vmax.f32 %v3460, %v3343
        %v3462 = vmax.f32 %v3461, %v3351
        %v3463 = vmax.f32 %v3462, %v3359
        %v3464 = vmax.f32 %v3463, %v3367
        %v3465 = vmax.f32 %v3464, %v3375
        %v3466 = vmax.f32 %v3465, %v3383
        %v3467 = vmax.f32 %v3466, %v3391
        %v3468 = vmax.f32 %v3467, %v3399
        %v3469 = vmax.f32 %v3468, %v3407
        %v3470 = vrot.slane %v3469, 4
        %v3471 = vmax.f32 %v3469, %v3470
        %v3472 = vrot.slane %v3471, 2
        %v3473 = vmax.f32 %v3471, %v3472
        %v3474 = vrot.slane %v3473, 1
        %v3475 = vmax.f32 %v3473, %v3474
        %v3476 = vmax.f32 %v3288, %v3296
        %v3477 = vmax.f32 %v3476, %v3304
        %v3478 = vmax.f32 %v3477, %v3312
        %v3479 = vmax.f32 %v3478, %v3320
        %v3480 = vmax.f32 %v3479, %v3328
        %v3481 = vmax.f32 %v3480, %v3336
        %v3482 = vmax.f32 %v3481, %v3344
        %v3483 = vmax.f32 %v3482, %v3352
        %v3484 = vmax.f32 %v3483, %v3360
        %v3485 = vmax.f32 %v3484, %v3368
        %v3486 = vmax.f32 %v3485, %v3376
        %v3487 = vmax.f32 %v3486, %v3384
        %v3488 = vmax.f32 %v3487, %v3392
        %v3489 = vmax.f32 %v3488, %v3400
        %v3490 = vmax.f32 %v3489, %v3408
        %v3491 = vrot.slane %v3490, 4
        %v3492 = vmax.f32 %v3490, %v3491
        %v3493 = vrot.slane %v3492, 2
        %v3494 = vmax.f32 %v3492, %v3493
        %v3495 = vrot.slane %v3494, 1
        %v3496 = vmax.f32 %v3494, %v3495
        %v3497 = vmax.f32 %v3289, %v3297
        %v3498 = vmax.f32 %v3497, %v3305
        %v3499 = vmax.f32 %v3498, %v3313
        %v3500 = vmax.f32 %v3499, %v3321
        %v3501 = vmax.f32 %v3500, %v3329
        %v3502 = vmax.f32 %v3501, %v3337
        %v3503 = vmax.f32 %v3502, %v3345
        %v3504 = vmax.f32 %v3503, %v3353
        %v3505 = vmax.f32 %v3504, %v3361
        %v3506 = vmax.f32 %v3505, %v3369
        %v3507 = vmax.f32 %v3506, %v3377
        %v3508 = vmax.f32 %v3507, %v3385
        %v3509 = vmax.f32 %v3508, %v3393
        %v3510 = vmax.f32 %v3509, %v3401
        %v3511 = vmax.f32 %v3510, %v3409
        %v3512 = vrot.slane %v3511, 4
        %v3513 = vmax.f32 %v3511, %v3512
        %v3514 = vrot.slane %v3513, 2
        %v3515 = vmax.f32 %v3513, %v3514
        %v3516 = vrot.slane %v3515, 1
        %v3517 = vmax.f32 %v3515, %v3516
        %v3518 = vmax.f32 %v3290, %v3298
        %v3519 = vmax.f32 %v3518, %v3306
        %v3520 = vmax.f32 %v3519, %v3314
        %v3521 = vmax.f32 %v3520, %v3322
        %v3522 = vmax.f32 %v3521, %v3330
        %v3523 = vmax.f32 %v3522, %v3338
        %v3524 = vmax.f32 %v3523, %v3346
        %v3525 = vmax.f32 %v3524, %v3354
        %v3526 = vmax.f32 %v3525, %v3362
        %v3527 = vmax.f32 %v3526, %v3370
        %v3528 = vmax.f32 %v3527, %v3378
        %v3529 = vmax.f32 %v3528, %v3386
        %v3530 = vmax.f32 %v3529, %v3394
        %v3531 = vmax.f32 %v3530, %v3402
        %v3532 = vmax.f32 %v3531, %v3410
        %v3533 = vrot.slane %v3532, 4
        %v3534 = vmax.f32 %v3532, %v3533
        %v3535 = vrot.slane %v3534, 2
        %v3536 = vmax.f32 %v3534, %v3535
        %v3537 = vrot.slane %v3536, 1
        %v3538 = vmax.f32 %v3536, %v3537
        %v3539 = vmax.f32 %v3291, %v3299
        %v3540 = vmax.f32 %v3539, %v3307
        %v3541 = vmax.f32 %v3540, %v3315
        %v3542 = vmax.f32 %v3541, %v3323
        %v3543 = vmax.f32 %v3542, %v3331
        %v3544 = vmax.f32 %v3543, %v3339
        %v3545 = vmax.f32 %v3544, %v3347
        %v3546 = vmax.f32 %v3545, %v3355
        %v3547 = vmax.f32 %v3546, %v3363
        %v3548 = vmax.f32 %v3547, %v3371
        %v3549 = vmax.f32 %v3548, %v3379
        %v3550 = vmax.f32 %v3549, %v3387
        %v3551 = vmax.f32 %v3550, %v3395
        %v3552 = vmax.f32 %v3551, %v3403
        %v3553 = vmax.f32 %v3552, %v3411
        %v3554 = vrot.slane %v3553, 4
        %v3555 = vmax.f32 %v3553, %v3554
        %v3556 = vrot.slane %v3555, 2
        %v3557 = vmax.f32 %v3555, %v3556
        %v3558 = vrot.slane %v3557, 1
        %v3559 = vmax.f32 %v3557, %v3558
        %v3560 = vmax.f32 %v3292, %v3300
        %v3561 = vmax.f32 %v3560, %v3308
        %v3562 = vmax.f32 %v3561, %v3316
        %v3563 = vmax.f32 %v3562, %v3324
        %v3564 = vmax.f32 %v3563, %v3332
        %v3565 = vmax.f32 %v3564, %v3340
        %v3566 = vmax.f32 %v3565, %v3348
        %v3567 = vmax.f32 %v3566, %v3356
        %v3568 = vmax.f32 %v3567, %v3364
        %v3569 = vmax.f32 %v3568, %v3372
        %v3570 = vmax.f32 %v3569, %v3380
        %v3571 = vmax.f32 %v3570, %v3388
        %v3572 = vmax.f32 %v3571, %v3396
        %v3573 = vmax.f32 %v3572, %v3404
        %v3574 = vmax.f32 %v3573, %v3412
        %v3575 = vrot.slane %v3574, 4
        %v3576 = vmax.f32 %v3574, %v3575
        %v3577 = vrot.slane %v3576, 2
        %v3578 = vmax.f32 %v3576, %v3577
        %v3579 = vrot.slane %v3578, 1
        %v3580 = vmax.f32 %v3578, %v3579
        %v3581 = vsub.f32 %v3285, %v3433
        %v3582 = vsub.f32 %v3286, %v3454
        %v3583 = vsub.f32 %v3287, %v3475
        %v3584 = vsub.f32 %v3288, %v3496
        %v3585 = vsub.f32 %v3289, %v3517
        %v3586 = vsub.f32 %v3290, %v3538
        %v3587 = vsub.f32 %v3291, %v3559
        %v3588 = vsub.f32 %v3292, %v3580
        %v3589 = vsub.f32 %v3293, %v3433
        %v3590 = vsub.f32 %v3294, %v3454
        %v3591 = vsub.f32 %v3295, %v3475
        %v3592 = vsub.f32 %v3296, %v3496
        %v3593 = vsub.f32 %v3297, %v3517
        %v3594 = vsub.f32 %v3298, %v3538
        %v3595 = vsub.f32 %v3299, %v3559
        %v3596 = vsub.f32 %v3300, %v3580
        %v3597 = vsub.f32 %v3301, %v3433
        %v3598 = vsub.f32 %v3302, %v3454
        %v3599 = vsub.f32 %v3303, %v3475
        %v3600 = vsub.f32 %v3304, %v3496
        %v3601 = vsub.f32 %v3305, %v3517
        %v3602 = vsub.f32 %v3306, %v3538
        %v3603 = vsub.f32 %v3307, %v3559
        %v3604 = vsub.f32 %v3308, %v3580
        %v3605 = vsub.f32 %v3309, %v3433
        %v3606 = vsub.f32 %v3310, %v3454
        %v3607 = vsub.f32 %v3311, %v3475
        %v3608 = vsub.f32 %v3312, %v3496
        %v3609 = vsub.f32 %v3313, %v3517
        %v3610 = vsub.f32 %v3314, %v3538
        %v3611 = vsub.f32 %v3315, %v3559
        %v3612 = vsub.f32 %v3316, %v3580
        %v3613 = vsub.f32 %v3317, %v3433
        %v3614 = vsub.f32 %v3318, %v3454
        %v3615 = vsub.f32 %v3319, %v3475
        %v3616 = vsub.f32 %v3320, %v3496
        %v3617 = vsub.f32 %v3321, %v3517
        %v3618 = vsub.f32 %v3322, %v3538
        %v3619 = vsub.f32 %v3323, %v3559
        %v3620 = vsub.f32 %v3324, %v3580
        %v3621 = vsub.f32 %v3325, %v3433
        %v3622 = vsub.f32 %v3326, %v3454
        %v3623 = vsub.f32 %v3327, %v3475
        %v3624 = vsub.f32 %v3328, %v3496
        %v3625 = vsub.f32 %v3329, %v3517
        %v3626 = vsub.f32 %v3330, %v3538
        %v3627 = vsub.f32 %v3331, %v3559
        %v3628 = vsub.f32 %v3332, %v3580
        %v3629 = vsub.f32 %v3333, %v3433
        %v3630 = vsub.f32 %v3334, %v3454
        %v3631 = vsub.f32 %v3335, %v3475
        %v3632 = vsub.f32 %v3336, %v3496
        %v3633 = vsub.f32 %v3337, %v3517
        %v3634 = vsub.f32 %v3338, %v3538
        %v3635 = vsub.f32 %v3339, %v3559
        %v3636 = vsub.f32 %v3340, %v3580
        %v3637 = vsub.f32 %v3341, %v3433
        %v3638 = vsub.f32 %v3342, %v3454
        %v3639 = vsub.f32 %v3343, %v3475
        %v3640 = vsub.f32 %v3344, %v3496
        %v3641 = vsub.f32 %v3345, %v3517
        %v3642 = vsub.f32 %v3346, %v3538
        %v3643 = vsub.f32 %v3347, %v3559
        %v3644 = vsub.f32 %v3348, %v3580
        %v3645 = vsub.f32 %v3349, %v3433
        %v3646 = vsub.f32 %v3350, %v3454
        %v3647 = vsub.f32 %v3351, %v3475
        %v3648 = vsub.f32 %v3352, %v3496
        %v3649 = vsub.f32 %v3353, %v3517
        %v3650 = vsub.f32 %v3354, %v3538
        %v3651 = vsub.f32 %v3355, %v3559
        %v3652 = vsub.f32 %v3356, %v3580
        %v3653 = vsub.f32 %v3357, %v3433
        %v3654 = vsub.f32 %v3358, %v3454
        %v3655 = vsub.f32 %v3359, %v3475
        %v3656 = vsub.f32 %v3360, %v3496
        %v3657 = vsub.f32 %v3361, %v3517
        %v3658 = vsub.f32 %v3362, %v3538
        %v3659 = vsub.f32 %v3363, %v3559
        %v3660 = vsub.f32 %v3364, %v3580
        %v3661 = vsub.f32 %v3365, %v3433
        %v3662 = vsub.f32 %v3366, %v3454
        %v3663 = vsub.f32 %v3367, %v3475
        %v3664 = vsub.f32 %v3368, %v3496
        %v3665 = vsub.f32 %v3369, %v3517
        %v3666 = vsub.f32 %v3370, %v3538
        %v3667 = vsub.f32 %v3371, %v3559
        %v3668 = vsub.f32 %v3372, %v3580
        %v3669 = vsub.f32 %v3373, %v3433
        %v3670 = vsub.f32 %v3374, %v3454
        %v3671 = vsub.f32 %v3375, %v3475
        %v3672 = vsub.f32 %v3376, %v3496
        %v3673 = vsub.f32 %v3377, %v3517
        %v3674 = vsub.f32 %v3378, %v3538
        %v3675 = vsub.f32 %v3379, %v3559
        %v3676 = vsub.f32 %v3380, %v3580
        %v3677 = vsub.f32 %v3381, %v3433
        %v3678 = vsub.f32 %v3382, %v3454
        %v3679 = vsub.f32 %v3383, %v3475
        %v3680 = vsub.f32 %v3384, %v3496
        %v3681 = vsub.f32 %v3385, %v3517
        %v3682 = vsub.f32 %v3386, %v3538
        %v3683 = vsub.f32 %v3387, %v3559
        %v3684 = vsub.f32 %v3388, %v3580
        %v3685 = vsub.f32 %v3389, %v3433
        %v3686 = vsub.f32 %v3390, %v3454
        %v3687 = vsub.f32 %v3391, %v3475
        %v3688 = vsub.f32 %v3392, %v3496
        %v3689 = vsub.f32 %v3393, %v3517
        %v3690 = vsub.f32 %v3394, %v3538
        %v3691 = vsub.f32 %v3395, %v3559
        %v3692 = vsub.f32 %v3396, %v3580
        %v3693 = vsub.f32 %v3397, %v3433
        %v3694 = vsub.f32 %v3398, %v3454
        %v3695 = vsub.f32 %v3399, %v3475
        %v3696 = vsub.f32 %v3400, %v3496
        %v3697 = vsub.f32 %v3401, %v3517
        %v3698 = vsub.f32 %v3402, %v3538
        %v3699 = vsub.f32 %v3403, %v3559
        %v3700 = vsub.f32 %v3404, %v3580
        %v3701 = vsub.f32 %v3405, %v3433
        %v3702 = vsub.f32 %v3406, %v3454
        %v3703 = vsub.f32 %v3407, %v3475
        %v3704 = vsub.f32 %v3408, %v3496
        %v3705 = vsub.f32 %v3409, %v3517
        %v3706 = vsub.f32 %v3410, %v3538
        %v3707 = vsub.f32 %v3411, %v3559
        %v3708 = vsub.f32 %v3412, %v3580
        %v3709 = vmul.f32 %v3581, 1.442695
        %v3710 = vpow.pop %v3709
        %v3711 = vmul.f32 %v3582, 1.442695
        %v3712 = vpow.pop %v3711
        %v3713 = vmul.f32 %v3583, 1.442695
        %v3714 = vpow.pop %v3713
        %v3715 = vmul.f32 %v3584, 1.442695
        %v3716 = vpow.pop %v3715
        %v3717 = vmul.f32 %v3585, 1.442695
        %v3718 = vpow.pop %v3717
        %v3719 = vmul.f32 %v3586, 1.442695
        %v3720 = vpow.pop %v3719
        %v3721 = vmul.f32 %v3587, 1.442695
        %v3722 = vpow.pop %v3721
        %v3723 = vmul.f32 %v3588, 1.442695
        %v3724 = vpow.pop %v3723
        %v3725 = vmul.f32 %v3589, 1.442695
        %v3726 = vpow.pop %v3725
        %v3727 = vmul.f32 %v3590, 1.442695
        %v3728 = vpow.pop %v3727
        %v3729 = vmul.f32 %v3591, 1.442695
        %v3730 = vpow.pop %v3729
        %v3731 = vmul.f32 %v3592, 1.442695
        %v3732 = vpow.pop %v3731
        %v3733 = vmul.f32 %v3593, 1.442695
        %v3734 = vpow.pop %v3733
        %v3735 = vmul.f32 %v3594, 1.442695
        %v3736 = vpow.pop %v3735
        %v3737 = vmul.f32 %v3595, 1.442695
        %v3738 = vpow.pop %v3737
        %v3739 = vmul.f32 %v3596, 1.442695
        %v3740 = vpow.pop %v3739
        %v3741 = vmul.f32 %v3597, 1.442695
        %v3742 = vpow.pop %v3741
        %v3743 = vmul.f32 %v3598, 1.442695
        %v3744 = vpow.pop %v3743
        %v3745 = vmul.f32 %v3599, 1.442695
        %v3746 = vpow.pop %v3745
        %v3747 = vmul.f32 %v3600, 1.442695
        %v3748 = vpow.pop %v3747
        %v3749 = vmul.f32 %v3601, 1.442695
        %v3750 = vpow.pop %v3749
        %v3751 = vmul.f32 %v3602, 1.442695
        %v3752 = vpow.pop %v3751
        %v3753 = vmul.f32 %v3603, 1.442695
        %v3754 = vpow.pop %v3753
        %v3755 = vmul.f32 %v3604, 1.442695
        %v3756 = vpow.pop %v3755
        %v3757 = vmul.f32 %v3605, 1.442695
        %v3758 = vpow.pop %v3757
        %v3759 = vmul.f32 %v3606, 1.442695
        %v3760 = vpow.pop %v3759
        %v3761 = vmul.f32 %v3607, 1.442695
        %v3762 = vpow.pop %v3761
        %v3763 = vmul.f32 %v3608, 1.442695
        %v3764 = vpow.pop %v3763
        %v3765 = vmul.f32 %v3609, 1.442695
        %v3766 = vpow.pop %v3765
        %v3767 = vmul.f32 %v3610, 1.442695
        %v3768 = vpow.pop %v3767
        %v3769 = vmul.f32 %v3611, 1.442695
        %v3770 = vpow.pop %v3769
        %v3771 = vmul.f32 %v3612, 1.442695
        %v3772 = vpow.pop %v3771
        %v3773 = vmul.f32 %v3613, 1.442695
        %v3774 = vpow.pop %v3773
        %v3775 = vmul.f32 %v3614, 1.442695
        %v3776 = vpow.pop %v3775
        %v3777 = vmul.f32 %v3615, 1.442695
        %v3778 = vpow.pop %v3777
        %v3779 = vmul.f32 %v3616, 1.442695
        %v3780 = vpow.pop %v3779
        %v3781 = vmul.f32 %v3617, 1.442695
        %v3782 = vpow.pop %v3781
        %v3783 = vmul.f32 %v3618, 1.442695
        %v3784 = vpow.pop %v3783
        %v3785 = vmul.f32 %v3619, 1.442695
        %v3786 = vpow.pop %v3785
        %v3787 = vmul.f32 %v3620, 1.442695
        %v3788 = vpow.pop %v3787
        %v3789 = vmul.f32 %v3621, 1.442695
        %v3790 = vpow.pop %v3789
        %v3791 = vmul.f32 %v3622, 1.442695
        %v3792 = vpow.pop %v3791
        %v3793 = vmul.f32 %v3623, 1.442695
        %v3794 = vpow.pop %v3793
        %v3795 = vmul.f32 %v3624, 1.442695
        %v3796 = vpow.pop %v3795
        %v3797 = vmul.f32 %v3625, 1.442695
        %v3798 = vpow.pop %v3797
        %v3799 = vmul.f32 %v3626, 1.442695
        %v3800 = vpow.pop %v3799
        %v3801 = vmul.f32 %v3627, 1.442695
        %v3802 = vpow.pop %v3801
        %v3803 = vmul.f32 %v3628, 1.442695
        %v3804 = vpow.pop %v3803
        %v3805 = vmul.f32 %v3629, 1.442695
        %v3806 = vpow.pop %v3805
        %v3807 = vmul.f32 %v3630, 1.442695
        %v3808 = vpow.pop %v3807
        %v3809 = vmul.f32 %v3631, 1.442695
        %v3810 = vpow.pop %v3809
        %v3811 = vmul.f32 %v3632, 1.442695
        %v3812 = vpow.pop %v3811
        %v3813 = vmul.f32 %v3633, 1.442695
        %v3814 = vpow.pop %v3813
        %v3815 = vmul.f32 %v3634, 1.442695
        %v3816 = vpow.pop %v3815
        %v3817 = vmul.f32 %v3635, 1.442695
        %v3818 = vpow.pop %v3817
        %v3819 = vmul.f32 %v3636, 1.442695
        %v3820 = vpow.pop %v3819
        %v3821 = vmul.f32 %v3637, 1.442695
        %v3822 = vpow.pop %v3821
        %v3823 = vmul.f32 %v3638, 1.442695
        %v3824 = vpow.pop %v3823
        %v3825 = vmul.f32 %v3639, 1.442695
        %v3826 = vpow.pop %v3825
        %v3827 = vmul.f32 %v3640, 1.442695
        %v3828 = vpow.pop %v3827
        %v3829 = vmul.f32 %v3641, 1.442695
        %v3830 = vpow.pop %v3829
        %v3831 = vmul.f32 %v3642, 1.442695
        %v3832 = vpow.pop %v3831
        %v3833 = vmul.f32 %v3643, 1.442695
        %v3834 = vpow.pop %v3833
        %v3835 = vmul.f32 %v3644, 1.442695
        %v3836 = vpow.pop %v3835
        %v3837 = vmul.f32 %v3645, 1.442695
        %v3838 = vpow.pop %v3837
        %v3839 = vmul.f32 %v3646, 1.442695
        %v3840 = vpow.pop %v3839
        %v3841 = vmul.f32 %v3647, 1.442695
        %v3842 = vpow.pop %v3841
        %v3843 = vmul.f32 %v3648, 1.442695
        %v3844 = vpow.pop %v3843
        %v3845 = vmul.f32 %v3649, 1.442695
        %v3846 = vpow.pop %v3845
        %v3847 = vmul.f32 %v3650, 1.442695
        %v3848 = vpow.pop %v3847
        %v3849 = vmul.f32 %v3651, 1.442695
        %v3850 = vpow.pop %v3849
        %v3851 = vmul.f32 %v3652, 1.442695
        %v3852 = vpow.pop %v3851
        %v3853 = vmul.f32 %v3653, 1.442695
        %v3854 = vpow.pop %v3853
        %v3855 = vmul.f32 %v3654, 1.442695
        %v3856 = vpow.pop %v3855
        %v3857 = vmul.f32 %v3655, 1.442695
        %v3858 = vpow.pop %v3857
        %v3859 = vmul.f32 %v3656, 1.442695
        %v3860 = vpow.pop %v3859
        %v3861 = vmul.f32 %v3657, 1.442695
        %v3862 = vpow.pop %v3861
        %v3863 = vmul.f32 %v3658, 1.442695
        %v3864 = vpow.pop %v3863
        %v3865 = vmul.f32 %v3659, 1.442695
        %v3866 = vpow.pop %v3865
        %v3867 = vmul.f32 %v3660, 1.442695
        %v3868 = vpow.pop %v3867
        %v3869 = vmul.f32 %v3661, 1.442695
        %v3870 = vpow.pop %v3869
        %v3871 = vmul.f32 %v3662, 1.442695
        %v3872 = vpow.pop %v3871
        %v3873 = vmul.f32 %v3663, 1.442695
        %v3874 = vpow.pop %v3873
        %v3875 = vmul.f32 %v3664, 1.442695
        %v3876 = vpow.pop %v3875
        %v3877 = vmul.f32 %v3665, 1.442695
        %v3878 = vpow.pop %v3877
        %v3879 = vmul.f32 %v3666, 1.442695
        %v3880 = vpow.pop %v3879
        %v3881 = vmul.f32 %v3667, 1.442695
        %v3882 = vpow.pop %v3881
        %v3883 = vmul.f32 %v3668, 1.442695
        %v3884 = vpow.pop %v3883
        %v3885 = vmul.f32 %v3669, 1.442695
        %v3886 = vpow.pop %v3885
        %v3887 = vmul.f32 %v3670, 1.442695
        %v3888 = vpow.pop %v3887
        %v3889 = vmul.f32 %v3671, 1.442695
        %v3890 = vpow.pop %v3889
        %v3891 = vmul.f32 %v3672, 1.442695
        %v3892 = vpow.pop %v3891
        %v3893 = vmul.f32 %v3673, 1.442695
        %v3894 = vpow.pop %v3893
        %v3895 = vmul.f32 %v3674, 1.442695
        %v3896 = vpow.pop %v3895
        %v3897 = vmul.f32 %v3675, 1.442695
        %v3898 = vpow.pop %v3897
        %v3899 = vmul.f32 %v3676, 1.442695
        %v3900 = vpow.pop %v3899
        %v3901 = vmul.f32 %v3677, 1.442695
        %v3902 = vpow.pop %v3901
        %v3903 = vmul.f32 %v3678, 1.442695
        %v3904 = vpow.pop %v3903
        %v3905 = vmul.f32 %v3679, 1.442695
        %v3906 = vpow.pop %v3905
        %v3907 = vmul.f32 %v3680, 1.442695
        %v3908 = vpow.pop %v3907
        %v3909 = vmul.f32 %v3681, 1.442695
        %v3910 = vpow.pop %v3909
        %v3911 = vmul.f32 %v3682, 1.442695
        %v3912 = vpow.pop %v3911
        %v3913 = vmul.f32 %v3683, 1.442695
        %v3914 = vpow.pop %v3913
        %v3915 = vmul.f32 %v3684, 1.442695
        %v3916 = vpow.pop %v3915
        %v3917 = vmul.f32 %v3685, 1.442695
        %v3918 = vpow.pop %v3917
        %v3919 = vmul.f32 %v3686, 1.442695
        %v3920 = vpow.pop %v3919
        %v3921 = vmul.f32 %v3687, 1.442695
        %v3922 = vpow.pop %v3921
        %v3923 = vmul.f32 %v3688, 1.442695
        %v3924 = vpow.pop %v3923
        %v3925 = vmul.f32 %v3689, 1.442695
        %v3926 = vpow.pop %v3925
        %v3927 = vmul.f32 %v3690, 1.442695
        %v3928 = vpow.pop %v3927
        %v3929 = vmul.f32 %v3691, 1.442695
        %v3930 = vpow.pop %v3929
        %v3931 = vmul.f32 %v3692, 1.442695
        %v3932 = vpow.pop %v3931
        %v3933 = vmul.f32 %v3693, 1.442695
        %v3934 = vpow.pop %v3933
        %v3935 = vmul.f32 %v3694, 1.442695
        %v3936 = vpow.pop %v3935
        %v3937 = vmul.f32 %v3695, 1.442695
        %v3938 = vpow.pop %v3937
        %v3939 = vmul.f32 %v3696, 1.442695
        %v3940 = vpow.pop %v3939
        %v3941 = vmul.f32 %v3697, 1.442695
        %v3942 = vpow.pop %v3941
        %v3943 = vmul.f32 %v3698, 1.442695
        %v3944 = vpow.pop %v3943
        %v3945 = vmul.f32 %v3699, 1.442695
        %v3946 = vpow.pop %v3945
        %v3947 = vmul.f32 %v3700, 1.442695
        %v3948 = vpow.pop %v3947
        %v3949 = vmul.f32 %v3701, 1.442695
        %v3950 = vpow.pop %v3949
        %v3951 = vmul.f32 %v3702, 1.442695
        %v3952 = vpow.pop %v3951
        %v3953 = vmul.f32 %v3703, 1.442695
        %v3954 = vpow.pop %v3953
        %v3955 = vmul.f32 %v3704, 1.442695
        %v3956 = vpow.pop %v3955
        %v3957 = vmul.f32 %v3705, 1.442695
        %v3958 = vpow.pop %v3957
        %v3959 = vmul.f32 %v3706, 1.442695
        %v3960 = vpow.pop %v3959
        %v3961 = vmul.f32 %v3707, 1.442695
        %v3962 = vpow.pop %v3961
        %v3963 = vmul.f32 %v3708, 1.442695
        %v3964 = vpow.pop %v3963
        %v3965 = vadd.f32 %v3710, %v3726
        %v3966 = vadd.f32 %v3965, %v3742
        %v3967 = vadd.f32 %v3966, %v3758
        %v3968 = vadd.f32 %v3967, %v3774
        %v3969 = vadd.f32 %v3968, %v3790
        %v3970 = vadd.f32 %v3969, %v3806
        %v3971 = vadd.f32 %v3970, %v3822
        %v3972 = vadd.f32 %v3971, %v3838
        %v3973 = vadd.f32 %v3972, %v3854
        %v3974 = vadd.f32 %v3973, %v3870
        %v3975 = vadd.f32 %v3974, %v3886
        %v3976 = vadd.f32 %v3975, %v3902
        %v3977 = vadd.f32 %v3976, %v3918
        %v3978 = vadd.f32 %v3977, %v3934
        %v3979 = vadd.f32 %v3978, %v3950
        %v3980 = vrot.slane %v3979, 4
        %v3981 = vadd.f32 %v3979, %v3980
        %v3982 = vrot.slane %v3981, 2
        %v3983 = vadd.f32 %v3981, %v3982
        %v3984 = vrot.slane %v3983, 1
        %v3985 = vadd.f32 %v3983, %v3984
        %v3986 = vadd.f32 %v3712, %v3728
        %v3987 = vadd.f32 %v3986, %v3744
        %v3988 = vadd.f32 %v3987, %v3760
        %v3989 = vadd.f32 %v3988, %v3776
        %v3990 = vadd.f32 %v3989, %v3792
        %v3991 = vadd.f32 %v3990, %v3808
        %v3992 = vadd.f32 %v3991, %v3824
        %v3993 = vadd.f32 %v3992, %v3840
        %v3994 = vadd.f32 %v3993, %v3856
        %v3995 = vadd.f32 %v3994, %v3872
        %v3996 = vadd.f32 %v3995, %v3888
        %v3997 = vadd.f32 %v3996, %v3904
        %v3998 = vadd.f32 %v3997, %v3920
        %v3999 = vadd.f32 %v3998, %v3936
        %v4000 = vadd.f32 %v3999, %v3952
        %v4001 = vrot.slane %v4000, 4
        %v4002 = vadd.f32 %v4000, %v4001
        %v4003 = vrot.slane %v4002, 2
        %v4004 = vadd.f32 %v4002, %v4003
        %v4005 = vrot.slane %v4004, 1
        %v4006 = vadd.f32 %v4004, %v4005
        %v4007 = vadd.f32 %v3714, %v3730
        %v4008 = vadd.f32 %v4007, %v3746
        %v4009 = vadd.f32 %v4008, %v3762
        %v4010 = vadd.f32 %v4009, %v3778
        %v4011 = vadd.f32 %v4010, %v3794
        %v4012 = vadd.f32 %v4011, %v3810
        %v4013 = vadd.f32 %v4012, %v3826
        %v4014 = vadd.f32 %v4013, %v3842
        %v4015 = vadd.f32 %v4014, %v3858
        %v4016 = vadd.f32 %v4015, %v3874
        %v4017 = vadd.f32 %v4016, %v3890
        %v4018 = vadd.f32 %v4017, %v3906
        %v4019 = vadd.f32 %v4018, %v3922
        %v4020 = vadd.f32 %v4019, %v3938
        %v4021 = vadd.f32 %v4020, %v3954
        %v4022 = vrot.slane %v4021, 4
        %v4023 = vadd.f32 %v4021, %v4022
        %v4024 = vrot.slane %v4023, 2
        %v4025 = vadd.f32 %v4023, %v4024
        %v4026 = vrot.slane %v4025, 1
        %v4027 = vadd.f32 %v4025, %v4026
        %v4028 = vadd.f32 %v3716, %v3732
        %v4029 = vadd.f32 %v4028, %v3748
        %v4030 = vadd.f32 %v4029, %v3764
        %v4031 = vadd.f32 %v4030, %v3780
        %v4032 = vadd.f32 %v4031, %v3796
        %v4033 = vadd.f32 %v4032, %v3812
        %v4034 = vadd.f32 %v4033, %v3828
        %v4035 = vadd.f32 %v4034, %v3844
        %v4036 = vadd.f32 %v4035, %v3860
        %v4037 = vadd.f32 %v4036, %v3876
        %v4038 = vadd.f32 %v4037, %v3892
        %v4039 = vadd.f32 %v4038, %v3908
        %v4040 = vadd.f32 %v4039, %v3924
        %v4041 = vadd.f32 %v4040, %v3940
        %v4042 = vadd.f32 %v4041, %v3956
        %v4043 = vrot.slane %v4042, 4
        %v4044 = vadd.f32 %v4042, %v4043
        %v4045 = vrot.slane %v4044, 2
        %v4046 = vadd.f32 %v4044, %v4045
        %v4047 = vrot.slane %v4046, 1
        %v4048 = vadd.f32 %v4046, %v4047
        %v4049 = vadd.f32 %v3718, %v3734
        %v4050 = vadd.f32 %v4049, %v3750
        %v4051 = vadd.f32 %v4050, %v3766
        %v4052 = vadd.f32 %v4051, %v3782
        %v4053 = vadd.f32 %v4052, %v3798
        %v4054 = vadd.f32 %v4053, %v3814
        %v4055 = vadd.f32 %v4054, %v3830
        %v4056 = vadd.f32 %v4055, %v3846
        %v4057 = vadd.f32 %v4056, %v3862
        %v4058 = vadd.f32 %v4057, %v3878
        %v4059 = vadd.f32 %v4058, %v3894
        %v4060 = vadd.f32 %v4059, %v3910
        %v4061 = vadd.f32 %v4060, %v3926
        %v4062 = vadd.f32 %v4061, %v3942
        %v4063 = vadd.f32 %v4062, %v3958
        %v4064 = vrot.slane %v4063, 4
        %v4065 = vadd.f32 %v4063, %v4064
        %v4066 = vrot.slane %v4065, 2
        %v4067 = vadd.f32 %v4065, %v4066
        %v4068 = vrot.slane %v4067, 1
        %v4069 = vadd.f32 %v4067, %v4068
        %v4070 = vadd.f32 %v3720, %v3736
        %v4071 = vadd.f32 %v4070, %v3752
        %v4072 = vadd.f32 %v4071, %v3768
        %v4073 = vadd.f32 %v4072, %v3784
        %v4074 = vadd.f32 %v4073, %v3800
        %v4075 = vadd.f32 %v4074, %v3816
        %v4076 = vadd.f32 %v4075, %v3832
        %v4077 = vadd.f32 %v4076, %v3848
        %v4078 = vadd.f32 %v4077, %v3864
        %v4079 = vadd.f32 %v4078, %v3880
        %v4080 = vadd.f32 %v4079, %v3896
        %v4081 = vadd.f32 %v4080, %v3912
        %v4082 = vadd.f32 %v4081, %v3928
        %v4083 = vadd.f32 %v4082, %v3944
        %v4084 = vadd.f32 %v4083, %v3960
        %v4085 = vrot.slane %v4084, 4
        %v4086 = vadd.f32 %v4084, %v4085
        %v4087 = vrot.slane %v4086, 2
        %v4088 = vadd.f32 %v4086, %v4087
        %v4089 = vrot.slane %v4088, 1
        %v4090 = vadd.f32 %v4088, %v4089
        %v4091 = vadd.f32 %v3722, %v3738
        %v4092 = vadd.f32 %v4091, %v3754
        %v4093 = vadd.f32 %v4092, %v3770
        %v4094 = vadd.f32 %v4093, %v3786
        %v4095 = vadd.f32 %v4094, %v3802
        %v4096 = vadd.f32 %v4095, %v3818
        %v4097 = vadd.f32 %v4096, %v3834
        %v4098 = vadd.f32 %v4097, %v3850
        %v4099 = vadd.f32 %v4098, %v3866
        %v4100 = vadd.f32 %v4099, %v3882
        %v4101 = vadd.f32 %v4100, %v3898
        %v4102 = vadd.f32 %v4101, %v3914
        %v4103 = vadd.f32 %v4102, %v3930
        %v4104 = vadd.f32 %v4103, %v3946
        %v4105 = vadd.f32 %v4104, %v3962
        %v4106 = vrot.slane %v4105, 4
        %v4107 = vadd.f32 %v4105, %v4106
        %v4108 = vrot.slane %v4107, 2
        %v4109 = vadd.f32 %v4107, %v4108
        %v4110 = vrot.slane %v4109, 1
        %v4111 = vadd.f32 %v4109, %v4110
        %v4112 = vadd.f32 %v3724, %v3740
        %v4113 = vadd.f32 %v4112, %v3756
        %v4114 = vadd.f32 %v4113, %v3772
        %v4115 = vadd.f32 %v4114, %v3788
        %v4116 = vadd.f32 %v4115, %v3804
        %v4117 = vadd.f32 %v4116, %v3820
        %v4118 = vadd.f32 %v4117, %v3836
        %v4119 = vadd.f32 %v4118, %v3852
        %v4120 = vadd.f32 %v4119, %v3868
        %v4121 = vadd.f32 %v4120, %v3884
        %v4122 = vadd.f32 %v4121, %v3900
        %v4123 = vadd.f32 %v4122, %v3916
        %v4124 = vadd.f32 %v4123, %v3932
        %v4125 = vadd.f32 %v4124, %v3948
        %v4126 = vadd.f32 %v4125, %v3964
        %v4127 = vrot.slane %v4126, 4
        %v4128 = vadd.f32 %v4126, %v4127
        %v4129 = vrot.slane %v4128, 2
        %v4130 = vadd.f32 %v4128, %v4129
        %v4131 = vrot.slane %v4130, 1
        %v4132 = vadd.f32 %v4130, %v4131
        %v4133 = vrcp.pop %v3985
        %v4134 = vmul.f32 %v3985, %v4133
        %v4135 = vsub.f32 1.0, %v4134
        %v4136 = vmul.f32 %v4133, %v4135
        %v4137 = vadd.f32 %v4133, %v4136
        %vm4138 = vweird.f32 %v3985
        %vm4139 = vweird.f32 %v4133
        %vm4140 = vmor %vm4138, %vm4139
        %v4141 = vsel %vm4140, %v4133, %v4137
        %v4142 = vand.u32 2147483647, %v3985
        %vm4143 = vcmp.eq.f32.partialorder %v4142, 8.507059e+37
        %v4144 = vand.u32 %v3985, 2147483648
        %v4145 = vor.u32 1.1754944e-38, %v4144
        %v4146 = vsel %vm4143, %v4145, %v4141
        %v4147 = vrcp.pop %v4006
        %v4148 = vmul.f32 %v4006, %v4147
        %v4149 = vsub.f32 1.0, %v4148
        %v4150 = vmul.f32 %v4147, %v4149
        %v4151 = vadd.f32 %v4147, %v4150
        %vm4152 = vweird.f32 %v4006
        %vm4153 = vweird.f32 %v4147
        %vm4154 = vmor %vm4152, %vm4153
        %v4155 = vsel %vm4154, %v4147, %v4151
        %v4156 = vand.u32 2147483647, %v4006
        %vm4157 = vcmp.eq.f32.partialorder %v4156, 8.507059e+37
        %v4158 = vand.u32 %v4006, 2147483648
        %v4159 = vor.u32 1.1754944e-38, %v4158
        %v4160 = vsel %vm4157, %v4159, %v4155
        %v4161 = vrcp.pop %v4027
        %v4162 = vmul.f32 %v4027, %v4161
        %v4163 = vsub.f32 1.0, %v4162
        %v4164 = vmul.f32 %v4161, %v4163
        %v4165 = vadd.f32 %v4161, %v4164
        %vm4166 = vweird.f32 %v4027
        %vm4167 = vweird.f32 %v4161
        %vm4168 = vmor %vm4166, %vm4167
        %v4169 = vsel %vm4168, %v4161, %v4165
        %v4170 = vand.u32 2147483647, %v4027
        %vm4171 = vcmp.eq.f32.partialorder %v4170, 8.507059e+37
        %v4172 = vand.u32 %v4027, 2147483648
        %v4173 = vor.u32 1.1754944e-38, %v4172
        %v4174 = vsel %vm4171, %v4173, %v4169
        %v4175 = vrcp.pop %v4048
        %v4176 = vmul.f32 %v4048, %v4175
        %v4177 = vsub.f32 1.0, %v4176
        %v4178 = vmul.f32 %v4175, %v4177
        %v4179 = vadd.f32 %v4175, %v4178
        %vm4180 = vweird.f32 %v4048
        %vm4181 = vweird.f32 %v4175
        %vm4182 = vmor %vm4180, %vm4181
        %v4183 = vsel %vm4182, %v4175, %v4179
        %v4184 = vand.u32 2147483647, %v4048
        %vm4185 = vcmp.eq.f32.partialorder %v4184, 8.507059e+37
        %v4186 = vand.u32 %v4048, 2147483648
        %v4187 = vor.u32 1.1754944e-38, %v4186
        %v4188 = vsel %vm4185, %v4187, %v4183
        %v4189 = vrcp.pop %v4069
        %v4190 = vmul.f32 %v4069, %v4189
        %v4191 = vsub.f32 1.0, %v4190
        %v4192 = vmul.f32 %v4189, %v4191
        %v4193 = vadd.f32 %v4189, %v4192
        %vm4194 = vweird.f32 %v4069
        %vm4195 = vweird.f32 %v4189
        %vm4196 = vmor %vm4194, %vm4195
        %v4197 = vsel %vm4196, %v4189, %v4193
        %v4198 = vand.u32 2147483647, %v4069
        %vm4199 = vcmp.eq.f32.partialorder %v4198, 8.507059e+37
        %v4200 = vand.u32 %v4069, 2147483648
        %v4201 = vor.u32 1.1754944e-38, %v4200
        %v4202 = vsel %vm4199, %v4201, %v4197
        %v4203 = vrcp.pop %v4090
        %v4204 = vmul.f32 %v4090, %v4203
        %v4205 = vsub.f32 1.0, %v4204
        %v4206 = vmul.f32 %v4203, %v4205
        %v4207 = vadd.f32 %v4203, %v4206
        %vm4208 = vweird.f32 %v4090
        %vm4209 = vweird.f32 %v4203
        %vm4210 = vmor %vm4208, %vm4209
        %v4211 = vsel %vm4210, %v4203, %v4207
        %v4212 = vand.u32 2147483647, %v4090
        %vm4213 = vcmp.eq.f32.partialorder %v4212, 8.507059e+37
        %v4214 = vand.u32 %v4090, 2147483648
        %v4215 = vor.u32 1.1754944e-38, %v4214
        %v4216 = vsel %vm4213, %v4215, %v4211
        %v4217 = vrcp.pop %v4111
        %v4218 = vmul.f32 %v4111, %v4217
        %v4219 = vsub.f32 1.0, %v4218
        %v4220 = vmul.f32 %v4217, %v4219
        %v4221 = vadd.f32 %v4217, %v4220
        %vm4222 = vweird.f32 %v4111
        %vm4223 = vweird.f32 %v4217
        %vm4224 = vmor %vm4222, %vm4223
        %v4225 = vsel %vm4224, %v4217, %v4221
        %v4226 = vand.u32 2147483647, %v4111
        %vm4227 = vcmp.eq.f32.partialorder %v4226, 8.507059e+37
        %v4228 = vand.u32 %v4111, 2147483648
        %v4229 = vor.u32 1.1754944e-38, %v4228
        %v4230 = vsel %vm4227, %v4229, %v4225
        %v4231 = vrcp.pop %v4132
        %v4232 = vmul.f32 %v4132, %v4231
        %v4233 = vsub.f32 1.0, %v4232
        %v4234 = vmul.f32 %v4231, %v4233
        %v4235 = vadd.f32 %v4231, %v4234
        %vm4236 = vweird.f32 %v4132
        %vm4237 = vweird.f32 %v4231
        %vm4238 = vmor %vm4236, %vm4237
        %v4239 = vsel %vm4238, %v4231, %v4235
        %v4240 = vand.u32 2147483647, %v4132
        %vm4241 = vcmp.eq.f32.partialorder %v4240, 8.507059e+37
        %v4242 = vand.u32 %v4132, 2147483648
        %v4243 = vor.u32 1.1754944e-38, %v4242
        %v4244 = vsel %vm4241, %v4243, %v4239
        %v4245 = vmul.f32 %v3710, %v4146
        %v4246 = vmul.f32 %v3712, %v4160
        %v4247 = vmul.f32 %v3714, %v4174
        %v4248 = vmul.f32 %v3716, %v4188
        %v4249 = vmul.f32 %v3718, %v4202
        %v4250 = vmul.f32 %v3720, %v4216
        %v4251 = vmul.f32 %v3722, %v4230
        %v4252 = vmul.f32 %v3724, %v4244
        %v4253 = vmul.f32 %v3726, %v4146
        %v4254 = vmul.f32 %v3728, %v4160
        %v4255 = vmul.f32 %v3730, %v4174
        %v4256 = vmul.f32 %v3732, %v4188
        %v4257 = vmul.f32 %v3734, %v4202
        %v4258 = vmul.f32 %v3736, %v4216
        %v4259 = vmul.f32 %v3738, %v4230
        %v4260 = vmul.f32 %v3740, %v4244
        %v4261 = vmul.f32 %v3742, %v4146
        %v4262 = vmul.f32 %v3744, %v4160
        %v4263 = vmul.f32 %v3746, %v4174
        %v4264 = vmul.f32 %v3748, %v4188
        %v4265 = vmul.f32 %v3750, %v4202
        %v4266 = vmul.f32 %v3752, %v4216
        %v4267 = vmul.f32 %v3754, %v4230
        %v4268 = vmul.f32 %v3756, %v4244
        %v4269 = vmul.f32 %v3758, %v4146
        %v4270 = vmul.f32 %v3760, %v4160
        %v4271 = vmul.f32 %v3762, %v4174
        %v4272 = vmul.f32 %v3764, %v4188
        %v4273 = vmul.f32 %v3766, %v4202
        %v4274 = vmul.f32 %v3768, %v4216
        %v4275 = vmul.f32 %v3770, %v4230
        %v4276 = vmul.f32 %v3772, %v4244
        %v4277 = vmul.f32 %v3774, %v4146
        %v4278 = vmul.f32 %v3776, %v4160
        %v4279 = vmul.f32 %v3778, %v4174
        %v4280 = vmul.f32 %v3780, %v4188
        %v4281 = vmul.f32 %v3782, %v4202
        %v4282 = vmul.f32 %v3784, %v4216
        %v4283 = vmul.f32 %v3786, %v4230
        %v4284 = vmul.f32 %v3788, %v4244
        %v4285 = vmul.f32 %v3790, %v4146
        %v4286 = vmul.f32 %v3792, %v4160
        %v4287 = vmul.f32 %v3794, %v4174
        %v4288 = vmul.f32 %v3796, %v4188
        %v4289 = vmul.f32 %v3798, %v4202
        %v4290 = vmul.f32 %v3800, %v4216
        %v4291 = vmul.f32 %v3802, %v4230
        %v4292 = vmul.f32 %v3804, %v4244
        %v4293 = vmul.f32 %v3806, %v4146
        %v4294 = vmul.f32 %v3808, %v4160
        %v4295 = vmul.f32 %v3810, %v4174
        %v4296 = vmul.f32 %v3812, %v4188
        %v4297 = vmul.f32 %v3814, %v4202
        %v4298 = vmul.f32 %v3816, %v4216
        %v4299 = vmul.f32 %v3818, %v4230
        %v4300 = vmul.f32 %v3820, %v4244
        %v4301 = vmul.f32 %v3822, %v4146
        %v4302 = vmul.f32 %v3824, %v4160
        %v4303 = vmul.f32 %v3826, %v4174
        %v4304 = vmul.f32 %v3828, %v4188
        %v4305 = vmul.f32 %v3830, %v4202
        %v4306 = vmul.f32 %v3832, %v4216
        %v4307 = vmul.f32 %v3834, %v4230
        %v4308 = vmul.f32 %v3836, %v4244
        %v4309 = vmul.f32 %v3838, %v4146
        %v4310 = vmul.f32 %v3840, %v4160
        %v4311 = vmul.f32 %v3842, %v4174
        %v4312 = vmul.f32 %v3844, %v4188
        %v4313 = vmul.f32 %v3846, %v4202
        %v4314 = vmul.f32 %v3848, %v4216
        %v4315 = vmul.f32 %v3850, %v4230
        %v4316 = vmul.f32 %v3852, %v4244
        %v4317 = vmul.f32 %v3854, %v4146
        %v4318 = vmul.f32 %v3856, %v4160
        %v4319 = vmul.f32 %v3858, %v4174
        %v4320 = vmul.f32 %v3860, %v4188
        %v4321 = vmul.f32 %v3862, %v4202
        %v4322 = vmul.f32 %v3864, %v4216
        %v4323 = vmul.f32 %v3866, %v4230
        %v4324 = vmul.f32 %v3868, %v4244
        %v4325 = vmul.f32 %v3870, %v4146
        %v4326 = vmul.f32 %v3872, %v4160
        %v4327 = vmul.f32 %v3874, %v4174
        %v4328 = vmul.f32 %v3876, %v4188
        %v4329 = vmul.f32 %v3878, %v4202
        %v4330 = vmul.f32 %v3880, %v4216
        %v4331 = vmul.f32 %v3882, %v4230
        %v4332 = vmul.f32 %v3884, %v4244
        %v4333 = vmul.f32 %v3886, %v4146
        %v4334 = vmul.f32 %v3888, %v4160
        %v4335 = vmul.f32 %v3890, %v4174
        %v4336 = vmul.f32 %v3892, %v4188
        %v4337 = vmul.f32 %v3894, %v4202
        %v4338 = vmul.f32 %v3896, %v4216
        %v4339 = vmul.f32 %v3898, %v4230
        %v4340 = vmul.f32 %v3900, %v4244
        %v4341 = vmul.f32 %v3902, %v4146
        %v4342 = vmul.f32 %v3904, %v4160
        %v4343 = vmul.f32 %v3906, %v4174
        %v4344 = vmul.f32 %v3908, %v4188
        %v4345 = vmul.f32 %v3910, %v4202
        %v4346 = vmul.f32 %v3912, %v4216
        %v4347 = vmul.f32 %v3914, %v4230
        %v4348 = vmul.f32 %v3916, %v4244
        %v4349 = vmul.f32 %v3918, %v4146
        %v4350 = vmul.f32 %v3920, %v4160
        %v4351 = vmul.f32 %v3922, %v4174
        %v4352 = vmul.f32 %v3924, %v4188
        %v4353 = vmul.f32 %v3926, %v4202
        %v4354 = vmul.f32 %v3928, %v4216
        %v4355 = vmul.f32 %v3930, %v4230
        %v4356 = vmul.f32 %v3932, %v4244
        %v4357 = vmul.f32 %v3934, %v4146
        %v4358 = vmul.f32 %v3936, %v4160
        %v4359 = vmul.f32 %v3938, %v4174
        %v4360 = vmul.f32 %v3940, %v4188
        %v4361 = vmul.f32 %v3942, %v4202
        %v4362 = vmul.f32 %v3944, %v4216
        %v4363 = vmul.f32 %v3946, %v4230
        %v4364 = vmul.f32 %v3948, %v4244
        %v4365 = vmul.f32 %v3950, %v4146
        %v4366 = vmul.f32 %v3952, %v4160
        %v4367 = vmul.f32 %v3954, %v4174
        %v4368 = vmul.f32 %v3956, %v4188
        %v4369 = vmul.f32 %v3958, %v4202
        %v4370 = vmul.f32 %v3960, %v4216
        %v4371 = vmul.f32 %v3962, %v4230
        %v4372 = vmul.f32 %v3964, %v4244
        %v4373 = vadd.f32 %v4245, %v4246
        %v4374 = vadd.f32 %v4373, %v4247
        %v4375 = vadd.f32 %v4374, %v4248
        %v4376 = vadd.f32 %v4375, %v4249
        %v4377 = vadd.f32 %v4376, %v4250
        %v4378 = vadd.f32 %v4377, %v4251
        %v4379 = vadd.f32 %v4378, %v4252
        %4380 = vadd.xlane.f32.xlu0 %v4379
        %v4381 = vpop.xlane.xlu0 %4380
        %v4382 = vadd.f32 %v4253, %v4254
        %v4383 = vadd.f32 %v4382, %v4255
        %v4384 = vadd.f32 %v4383, %v4256
        %v4385 = vadd.f32 %v4384, %v4257
        %v4386 = vadd.f32 %v4385, %v4258
        %v4387 = vadd.f32 %v4386, %v4259
        %v4388 = vadd.f32 %v4387, %v4260
        %4389 = vadd.xlane.f32.xlu0 %v4388
        %v4390 = vpop.xlane.xlu0 %4389
        %v4391 = vadd.f32 %v4261, %v4262
        %v4392 = vadd.f32 %v4391, %v4263
        %v4393 = vadd.f32 %v4392, %v4264
        %v4394 = vadd.f32 %v4393, %v4265
        %v4395 = vadd.f32 %v4394, %v4266
        %v4396 = vadd.f32 %v4395, %v4267
        %v4397 = vadd.f32 %v4396, %v4268
        %4398 = vadd.xlane.f32.xlu0 %v4397
        %v4399 = vpop.xlane.xlu0 %4398
        %v4400 = vadd.f32 %v4269, %v4270
        %v4401 = vadd.f32 %v4400, %v4271
        %v4402 = vadd.f32 %v4401, %v4272
        %v4403 = vadd.f32 %v4402, %v4273
        %v4404 = vadd.f32 %v4403, %v4274
        %v4405 = vadd.f32 %v4404, %v4275
        %v4406 = vadd.f32 %v4405, %v4276
        %4407 = vadd.xlane.f32.xlu0 %v4406
        %v4408 = vpop.xlane.xlu0 %4407
        %v4409 = vadd.f32 %v4277, %v4278
        %v4410 = vadd.f32 %v4409, %v4279
        %v4411 = vadd.f32 %v4410, %v4280
        %v4412 = vadd.f32 %v4411, %v4281
        %v4413 = vadd.f32 %v4412, %v4282
        %v4414 = vadd.f32 %v4413, %v4283
        %v4415 = vadd.f32 %v4414, %v4284
        %4416 = vadd.xlane.f32.xlu0 %v4415
        %v4417 = vpop.xlane.xlu0 %4416
        %v4418 = vadd.f32 %v4285, %v4286
        %v4419 = vadd.f32 %v4418, %v4287
        %v4420 = vadd.f32 %v4419, %v4288
        %v4421 = vadd.f32 %v4420, %v4289
        %v4422 = vadd.f32 %v4421, %v4290
        %v4423 = vadd.f32 %v4422, %v4291
        %v4424 = vadd.f32 %v4423, %v4292
        %4425 = vadd.xlane.f32.xlu0 %v4424
        %v4426 = vpop.xlane.xlu0 %4425
        %v4427 = vadd.f32 %v4293, %v4294
        %v4428 = vadd.f32 %v4427, %v4295
        %v4429 = vadd.f32 %v4428, %v4296
        %v4430 = vadd.f32 %v4429, %v4297
        %v4431 = vadd.f32 %v4430, %v4298
        %v4432 = vadd.f32 %v4431, %v4299
        %v4433 = vadd.f32 %v4432, %v4300
        %4434 = vadd.xlane.f32.xlu0 %v4433
        %v4435 = vpop.xlane.xlu0 %4434
        %v4436 = vadd.f32 %v4301, %v4302
        %v4437 = vadd.f32 %v4436, %v4303
        %v4438 = vadd.f32 %v4437, %v4304
        %v4439 = vadd.f32 %v4438, %v4305
        %v4440 = vadd.f32 %v4439, %v4306
        %v4441 = vadd.f32 %v4440, %v4307
        %v4442 = vadd.f32 %v4441, %v4308
        %4443 = vadd.xlane.f32.xlu0 %v4442
        %v4444 = vpop.xlane.xlu0 %4443
        %v4445 = vadd.f32 %v4309, %v4310
        %v4446 = vadd.f32 %v4445, %v4311
        %v4447 = vadd.f32 %v4446, %v4312
        %v4448 = vadd.f32 %v4447, %v4313
        %v4449 = vadd.f32 %v4448, %v4314
        %v4450 = vadd.f32 %v4449, %v4315
        %v4451 = vadd.f32 %v4450, %v4316
        %4452 = vadd.xlane.f32.xlu0 %v4451
        %v4453 = vpop.xlane.xlu0 %4452
        %v4454 = vadd.f32 %v4317, %v4318
        %v4455 = vadd.f32 %v4454, %v4319
        %v4456 = vadd.f32 %v4455, %v4320
        %v4457 = vadd.f32 %v4456, %v4321
        %v4458 = vadd.f32 %v4457, %v4322
        %v4459 = vadd.f32 %v4458, %v4323
        %v4460 = vadd.f32 %v4459, %v4324
        %4461 = vadd.xlane.f32.xlu0 %v4460
        %v4462 = vpop.xlane.xlu0 %4461
        %v4463 = vadd.f32 %v4325, %v4326
        %v4464 = vadd.f32 %v4463, %v4327
        %v4465 = vadd.f32 %v4464, %v4328
        %v4466 = vadd.f32 %v4465, %v4329
        %v4467 = vadd.f32 %v4466, %v4330
        %v4468 = vadd.f32 %v4467, %v4331
        %v4469 = vadd.f32 %v4468, %v4332
        %4470 = vadd.xlane.f32.xlu0 %v4469
        %v4471 = vpop.xlane.xlu0 %4470
        %v4472 = vadd.f32 %v4333, %v4334
        %v4473 = vadd.f32 %v4472, %v4335
        %v4474 = vadd.f32 %v4473, %v4336
        %v4475 = vadd.f32 %v4474, %v4337
        %v4476 = vadd.f32 %v4475, %v4338
        %v4477 = vadd.f32 %v4476, %v4339
        %v4478 = vadd.f32 %v4477, %v4340
        %4479 = vadd.xlane.f32.xlu0 %v4478
        %v4480 = vpop.xlane.xlu0 %4479
        %v4481 = vadd.f32 %v4341, %v4342
        %v4482 = vadd.f32 %v4481, %v4343
        %v4483 = vadd.f32 %v4482, %v4344
        %v4484 = vadd.f32 %v4483, %v4345
        %v4485 = vadd.f32 %v4484, %v4346
        %v4486 = vadd.f32 %v4485, %v4347
        %v4487 = vadd.f32 %v4486, %v4348
        %4488 = vadd.xlane.f32.xlu0 %v4487
        %v4489 = vpop.xlane.xlu0 %4488
        %v4490 = vadd.f32 %v4349, %v4350
        %v4491 = vadd.f32 %v4490, %v4351
        %v4492 = vadd.f32 %v4491, %v4352
        %v4493 = vadd.f32 %v4492, %v4353
        %v4494 = vadd.f32 %v4493, %v4354
        %v4495 = vadd.f32 %v4494, %v4355
        %v4496 = vadd.f32 %v4495, %v4356
        %4497 = vadd.xlane.f32.xlu0 %v4496
        %v4498 = vpop.xlane.xlu0 %4497
        %v4499 = vadd.f32 %v4357, %v4358
        %v4500 = vadd.f32 %v4499, %v4359
        %v4501 = vadd.f32 %v4500, %v4360
        %v4502 = vadd.f32 %v4501, %v4361
        %v4503 = vadd.f32 %v4502, %v4362
        %v4504 = vadd.f32 %v4503, %v4363
        %v4505 = vadd.f32 %v4504, %v4364
        %4506 = vadd.xlane.f32.xlu0 %v4505
        %v4507 = vpop.xlane.xlu0 %4506
        %v4508 = vadd.f32 %v4365, %v4366
        %v4509 = vadd.f32 %v4508, %v4367
        %v4510 = vadd.f32 %v4509, %v4368
        %v4511 = vadd.f32 %v4510, %v4369
        %v4512 = vadd.f32 %v4511, %v4370
        %v4513 = vadd.f32 %v4512, %v4371
        %v4514 = vadd.f32 %v4513, %v4372
        %4515 = vadd.xlane.f32.xlu0 %v4514
        %v4516 = vpop.xlane.xlu0 %4515
        %v4517 = vadd.f32 %v4381, 1e-06
        %v4518 = vadd.f32 %v4390, 1e-06
        %v4519 = vadd.f32 %v4399, 1e-06
        %v4520 = vadd.f32 %v4408, 1e-06
        %v4521 = vadd.f32 %v4417, 1e-06
        %v4522 = vadd.f32 %v4426, 1e-06
        %v4523 = vadd.f32 %v4435, 1e-06
        %v4524 = vadd.f32 %v4444, 1e-06
        %v4525 = vadd.f32 %v4453, 1e-06
        %v4526 = vadd.f32 %v4462, 1e-06
        %v4527 = vadd.f32 %v4471, 1e-06
        %v4528 = vadd.f32 %v4480, 1e-06
        %v4529 = vadd.f32 %v4489, 1e-06
        %v4530 = vadd.f32 %v4498, 1e-06
        %v4531 = vadd.f32 %v4507, 1e-06
        %v4532 = vadd.f32 %v4516, 1e-06
        %v4533 = vrcp.pop %v4517
        %v4534 = vrcp.pop %v4518
        %v4535 = vrcp.pop %v4519
        %v4536 = vrcp.pop %v4520
        %v4537 = vrcp.pop %v4521
        %v4538 = vrcp.pop %v4522
        %v4539 = vrcp.pop %v4523
        %v4540 = vrcp.pop %v4524
        %v4541 = vrcp.pop %v4525
        %v4542 = vrcp.pop %v4526
        %v4543 = vrcp.pop %v4527
        %v4544 = vrcp.pop %v4528
        %v4545 = vrcp.pop %v4529
        %v4546 = vrcp.pop %v4530
        %v4547 = vrcp.pop %v4531
        %v4548 = vrcp.pop %v4532
        %v4549 = vmul.f32 %v4245, %v4533
        %v4550 = vmul.f32 %v4246, %v4533
        %v4551 = vmul.f32 %v4247, %v4533
        %v4552 = vmul.f32 %v4248, %v4533
        %v4553 = vmul.f32 %v4249, %v4533
        %v4554 = vmul.f32 %v4250, %v4533
        %v4555 = vmul.f32 %v4251, %v4533
        %v4556 = vmul.f32 %v4252, %v4533
        %v4557 = vmul.f32 %v4253, %v4534
        %v4558 = vmul.f32 %v4254, %v4534
        %v4559 = vmul.f32 %v4255, %v4534
        %v4560 = vmul.f32 %v4256, %v4534
        %v4561 = vmul.f32 %v4257, %v4534
        %v4562 = vmul.f32 %v4258, %v4534
        %v4563 = vmul.f32 %v4259, %v4534
        %v4564 = vmul.f32 %v4260, %v4534
        %v4565 = vmul.f32 %v4261, %v4535
        %v4566 = vmul.f32 %v4262, %v4535
        %v4567 = vmul.f32 %v4263, %v4535
        %v4568 = vmul.f32 %v4264, %v4535
        %v4569 = vmul.f32 %v4265, %v4535
        %v4570 = vmul.f32 %v4266, %v4535
        %v4571 = vmul.f32 %v4267, %v4535
        %v4572 = vmul.f32 %v4268, %v4535
        %v4573 = vmul.f32 %v4269, %v4536
        %v4574 = vmul.f32 %v4270, %v4536
        %v4575 = vmul.f32 %v4271, %v4536
        %v4576 = vmul.f32 %v4272, %v4536
        %v4577 = vmul.f32 %v4273, %v4536
        %v4578 = vmul.f32 %v4274, %v4536
        %v4579 = vmul.f32 %v4275, %v4536
        %v4580 = vmul.f32 %v4276, %v4536
        %v4581 = vmul.f32 %v4277, %v4537
        %v4582 = vmul.f32 %v4278, %v4537
        %v4583 = vmul.f32 %v4279, %v4537
        %v4584 = vmul.f32 %v4280, %v4537
        %v4585 = vmul.f32 %v4281, %v4537
        %v4586 = vmul.f32 %v4282, %v4537
        %v4587 = vmul.f32 %v4283, %v4537
        %v4588 = vmul.f32 %v4284, %v4537
        %v4589 = vmul.f32 %v4285, %v4538
        %v4590 = vmul.f32 %v4286, %v4538
        %v4591 = vmul.f32 %v4287, %v4538
        %v4592 = vmul.f32 %v4288, %v4538
        %v4593 = vmul.f32 %v4289, %v4538
        %v4594 = vmul.f32 %v4290, %v4538
        %v4595 = vmul.f32 %v4291, %v4538
        %v4596 = vmul.f32 %v4292, %v4538
        %v4597 = vmul.f32 %v4293, %v4539
        %v4598 = vmul.f32 %v4294, %v4539
        %v4599 = vmul.f32 %v4295, %v4539
        %v4600 = vmul.f32 %v4296, %v4539
        %v4601 = vmul.f32 %v4297, %v4539
        %v4602 = vmul.f32 %v4298, %v4539
        %v4603 = vmul.f32 %v4299, %v4539
        %v4604 = vmul.f32 %v4300, %v4539
        %v4605 = vmul.f32 %v4301, %v4540
        %v4606 = vmul.f32 %v4302, %v4540
        %v4607 = vmul.f32 %v4303, %v4540
        %v4608 = vmul.f32 %v4304, %v4540
        %v4609 = vmul.f32 %v4305, %v4540
        %v4610 = vmul.f32 %v4306, %v4540
        %v4611 = vmul.f32 %v4307, %v4540
        %v4612 = vmul.f32 %v4308, %v4540
        %v4613 = vmul.f32 %v4309, %v4541
        %v4614 = vmul.f32 %v4310, %v4541
        %v4615 = vmul.f32 %v4311, %v4541
        %v4616 = vmul.f32 %v4312, %v4541
        %v4617 = vmul.f32 %v4313, %v4541
        %v4618 = vmul.f32 %v4314, %v4541
        %v4619 = vmul.f32 %v4315, %v4541
        %v4620 = vmul.f32 %v4316, %v4541
        %v4621 = vmul.f32 %v4317, %v4542
        %v4622 = vmul.f32 %v4318, %v4542
        %v4623 = vmul.f32 %v4319, %v4542
        %v4624 = vmul.f32 %v4320, %v4542
        %v4625 = vmul.f32 %v4321, %v4542
        %v4626 = vmul.f32 %v4322, %v4542
        %v4627 = vmul.f32 %v4323, %v4542
        %v4628 = vmul.f32 %v4324, %v4542
        %v4629 = vmul.f32 %v4325, %v4543
        %v4630 = vmul.f32 %v4326, %v4543
        %v4631 = vmul.f32 %v4327, %v4543
        %v4632 = vmul.f32 %v4328, %v4543
        %v4633 = vmul.f32 %v4329, %v4543
        %v4634 = vmul.f32 %v4330, %v4543
        %v4635 = vmul.f32 %v4331, %v4543
        %v4636 = vmul.f32 %v4332, %v4543
        %v4637 = vmul.f32 %v4333, %v4544
        %v4638 = vmul.f32 %v4334, %v4544
        %v4639 = vmul.f32 %v4335, %v4544
        %v4640 = vmul.f32 %v4336, %v4544
        %v4641 = vmul.f32 %v4337, %v4544
        %v4642 = vmul.f32 %v4338, %v4544
        %v4643 = vmul.f32 %v4339, %v4544
        %v4644 = vmul.f32 %v4340, %v4544
        %v4645 = vmul.f32 %v4341, %v4545
        %v4646 = vmul.f32 %v4342, %v4545
        %v4647 = vmul.f32 %v4343, %v4545
        %v4648 = vmul.f32 %v4344, %v4545
        %v4649 = vmul.f32 %v4345, %v4545
        %v4650 = vmul.f32 %v4346, %v4545
        %v4651 = vmul.f32 %v4347, %v4545
        %v4652 = vmul.f32 %v4348, %v4545
        %v4653 = vmul.f32 %v4349, %v4546
        %v4654 = vmul.f32 %v4350, %v4546
        %v4655 = vmul.f32 %v4351, %v4546
        %v4656 = vmul.f32 %v4352, %v4546
        %v4657 = vmul.f32 %v4353, %v4546
        %v4658 = vmul.f32 %v4354, %v4546
        %v4659 = vmul.f32 %v4355, %v4546
        %v4660 = vmul.f32 %v4356, %v4546
        %v4661 = vmul.f32 %v4357, %v4547
        %v4662 = vmul.f32 %v4358, %v4547
        %v4663 = vmul.f32 %v4359, %v4547
        %v4664 = vmul.f32 %v4360, %v4547
        %v4665 = vmul.f32 %v4361, %v4547
        %v4666 = vmul.f32 %v4362, %v4547
        %v4667 = vmul.f32 %v4363, %v4547
        %v4668 = vmul.f32 %v4364, %v4547
        %v4669 = vmul.f32 %v4365, %v4548
        %v4670 = vmul.f32 %v4366, %v4548
        %v4671 = vmul.f32 %v4367, %v4548
        %v4672 = vmul.f32 %v4368, %v4548
        %v4673 = vmul.f32 %v4369, %v4548
        %v4674 = vmul.f32 %v4370, %v4548
        %v4675 = vmul.f32 %v4371, %v4548
        %v4676 = vmul.f32 %v4372, %v4548
        %v4677 = vpack.c.bf16 %v4557, %v4549
        %v4678 = vpack.c.bf16 %v4558, %v4550
        %v4679 = vpack.c.bf16 %v4559, %v4551
        %v4680 = vpack.c.bf16 %v4560, %v4552
        %v4681 = vpack.c.bf16 %v4561, %v4553
        %v4682 = vpack.c.bf16 %v4562, %v4554
        %v4683 = vpack.c.bf16 %v4563, %v4555
        %v4684 = vpack.c.bf16 %v4564, %v4556
        %v4685 = vpack.c.bf16 %v4573, %v4565
        %v4686 = vpack.c.bf16 %v4574, %v4566
        %v4687 = vpack.c.bf16 %v4575, %v4567
        %v4688 = vpack.c.bf16 %v4576, %v4568
        %v4689 = vpack.c.bf16 %v4577, %v4569
        %v4690 = vpack.c.bf16 %v4578, %v4570
        %v4691 = vpack.c.bf16 %v4579, %v4571
        %v4692 = vpack.c.bf16 %v4580, %v4572
        %v4693 = vpack.c.bf16 %v4589, %v4581
        %v4694 = vpack.c.bf16 %v4590, %v4582
        %v4695 = vpack.c.bf16 %v4591, %v4583
        %v4696 = vpack.c.bf16 %v4592, %v4584
        %v4697 = vpack.c.bf16 %v4593, %v4585
        %v4698 = vpack.c.bf16 %v4594, %v4586
        %v4699 = vpack.c.bf16 %v4595, %v4587
        %v4700 = vpack.c.bf16 %v4596, %v4588
        %v4701 = vpack.c.bf16 %v4605, %v4597
        %v4702 = vpack.c.bf16 %v4606, %v4598
        %v4703 = vpack.c.bf16 %v4607, %v4599
        %v4704 = vpack.c.bf16 %v4608, %v4600
        %v4705 = vpack.c.bf16 %v4609, %v4601
        %v4706 = vpack.c.bf16 %v4610, %v4602
        %v4707 = vpack.c.bf16 %v4611, %v4603
        %v4708 = vpack.c.bf16 %v4612, %v4604
        %v4709 = vpack.c.bf16 %v4621, %v4613
        %v4710 = vpack.c.bf16 %v4622, %v4614
        %v4711 = vpack.c.bf16 %v4623, %v4615
        %v4712 = vpack.c.bf16 %v4624, %v4616
        %v4713 = vpack.c.bf16 %v4625, %v4617
        %v4714 = vpack.c.bf16 %v4626, %v4618
        %v4715 = vpack.c.bf16 %v4627, %v4619
        %v4716 = vpack.c.bf16 %v4628, %v4620
        %v4717 = vpack.c.bf16 %v4637, %v4629
        %v4718 = vpack.c.bf16 %v4638, %v4630
        %v4719 = vpack.c.bf16 %v4639, %v4631
        %v4720 = vpack.c.bf16 %v4640, %v4632
        %v4721 = vpack.c.bf16 %v4641, %v4633
        %v4722 = vpack.c.bf16 %v4642, %v4634
        %v4723 = vpack.c.bf16 %v4643, %v4635
        %v4724 = vpack.c.bf16 %v4644, %v4636
        %v4725 = vpack.c.bf16 %v4653, %v4645
        %v4726 = vpack.c.bf16 %v4654, %v4646
        %v4727 = vpack.c.bf16 %v4655, %v4647
        %v4728 = vpack.c.bf16 %v4656, %v4648
        %v4729 = vpack.c.bf16 %v4657, %v4649
        %v4730 = vpack.c.bf16 %v4658, %v4650
        %v4731 = vpack.c.bf16 %v4659, %v4651
        %v4732 = vpack.c.bf16 %v4660, %v4652
        %v4733 = vpack.c.bf16 %v4669, %v4661
        %v4734 = vpack.c.bf16 %v4670, %v4662
        %v4735 = vpack.c.bf16 %v4671, %v4663
        %v4736 = vpack.c.bf16 %v4672, %v4664
        %v4737 = vpack.c.bf16 %v4673, %v4665
        %v4738 = vpack.c.bf16 %v4674, %v4666
        %v4739 = vpack.c.bf16 %v4675, %v4667
        %v4740 = vpack.c.bf16 %v4676, %v4668
        %4741 = vmatpush.bf16.xpose.msra.mxu0 %v4733
        %4742 = vmatpush.bf16.xpose.msra.mxu0 %v4725
        %4743 = vmatpush.bf16.xpose.msra.mxu0 %v4717
        %4744 = vmatpush.bf16.xpose.msra.mxu0 %v4709
        %4745 = vmatpush.bf16.xpose.msra.mxu0 %v4701
        %4746 = vmatpush.bf16.xpose.msra.mxu0 %v4693
        %4747 = vmatpush.bf16.xpose.msra.mxu0 %v4685
        %4748 = vmatpush.bf16.xpose.msra.mxu0 %v4677
        %4749 = vmatmul.bf16.gmra.mxu0 %v719
        %v4750 = vpop.f32.mrf.mxu0
        %v4751 = vadd.f32 0.0, %v4750
        %v4752 = vpop.f32.mrf.mxu0
        %v4753 = vadd.f32 0.0, %v4752
        %4754 = vmatmul.bf16.gmra.mxu0 %v727
        %v4755 = vpop.f32.mrf.mxu0
        %v4756 = vadd.f32 0.0, %v4755
        %v4757 = vpop.f32.mrf.mxu0
        %v4758 = vadd.f32 0.0, %v4757
        %4759 = vdwg.mxu0
        %4760 = vmatpush.bf16.xpose.msra.mxu0 %v4734
        %4761 = vmatpush.bf16.xpose.msra.mxu0 %v4726
        %4762 = vmatpush.bf16.xpose.msra.mxu0 %v4718
        %4763 = vmatpush.bf16.xpose.msra.mxu0 %v4710
        %4764 = vmatpush.bf16.xpose.msra.mxu0 %v4702
        %4765 = vmatpush.bf16.xpose.msra.mxu0 %v4694
        %4766 = vmatpush.bf16.xpose.msra.mxu0 %v4686
        %4767 = vmatpush.bf16.xpose.msra.mxu0 %v4678
        %4768 = vmatmul.bf16.gmra.mxu0 %v720
        %v4769 = vpop.f32.mrf.mxu0
        %v4770 = vadd.f32 %v4751, %v4769
        %v4771 = vpop.f32.mrf.mxu0
        %v4772 = vadd.f32 %v4753, %v4771
        %4773 = vmatmul.bf16.gmra.mxu0 %v728
        %v4774 = vpop.f32.mrf.mxu0
        %v4775 = vadd.f32 %v4756, %v4774
        %v4776 = vpop.f32.mrf.mxu0
        %v4777 = vadd.f32 %v4758, %v4776
        %4778 = vdwg.mxu0
        %4779 = vmatpush.bf16.xpose.msra.mxu0 %v4735
        %4780 = vmatpush.bf16.xpose.msra.mxu0 %v4727
        %4781 = vmatpush.bf16.xpose.msra.mxu0 %v4719
        %4782 = vmatpush.bf16.xpose.msra.mxu0 %v4711
        %4783 = vmatpush.bf16.xpose.msra.mxu0 %v4703
        %4784 = vmatpush.bf16.xpose.msra.mxu0 %v4695
        %4785 = vmatpush.bf16.xpose.msra.mxu0 %v4687
        %4786 = vmatpush.bf16.xpose.msra.mxu0 %v4679
        %4787 = vmatmul.bf16.gmra.mxu0 %v721
        %v4788 = vpop.f32.mrf.mxu0
        %v4789 = vadd.f32 %v4770, %v4788
        %v4790 = vpop.f32.mrf.mxu0
        %v4791 = vadd.f32 %v4772, %v4790
        %4792 = vmatmul.bf16.gmra.mxu0 %v729
        %v4793 = vpop.f32.mrf.mxu0
        %v4794 = vadd.f32 %v4775, %v4793
        %v4795 = vpop.f32.mrf.mxu0
        %v4796 = vadd.f32 %v4777, %v4795
        %4797 = vdwg.mxu0
        %4798 = vmatpush.bf16.xpose.msra.mxu0 %v4736
        %4799 = vmatpush.bf16.xpose.msra.mxu0 %v4728
        %4800 = vmatpush.bf16.xpose.msra.mxu0 %v4720
        %4801 = vmatpush.bf16.xpose.msra.mxu0 %v4712
        %4802 = vmatpush.bf16.xpose.msra.mxu0 %v4704
        %4803 = vmatpush.bf16.xpose.msra.mxu0 %v4696
        %4804 = vmatpush.bf16.xpose.msra.mxu0 %v4688
        %4805 = vmatpush.bf16.xpose.msra.mxu0 %v4680
        %4806 = vmatmul.bf16.gmra.mxu0 %v722
        %v4807 = vpop.f32.mrf.mxu0
        %v4808 = vadd.f32 %v4789, %v4807
        %v4809 = vpop.f32.mrf.mxu0
        %v4810 = vadd.f32 %v4791, %v4809
        %4811 = vmatmul.bf16.gmra.mxu0 %v730
        %v4812 = vpop.f32.mrf.mxu0
        %v4813 = vadd.f32 %v4794, %v4812
        %v4814 = vpop.f32.mrf.mxu0
        %v4815 = vadd.f32 %v4796, %v4814
        %4816 = vdwg.mxu0
        %4817 = vmatpush.bf16.xpose.msra.mxu0 %v4737
        %4818 = vmatpush.bf16.xpose.msra.mxu0 %v4729
        %4819 = vmatpush.bf16.xpose.msra.mxu0 %v4721
        %4820 = vmatpush.bf16.xpose.msra.mxu0 %v4713
        %4821 = vmatpush.bf16.xpose.msra.mxu0 %v4705
        %4822 = vmatpush.bf16.xpose.msra.mxu0 %v4697
        %4823 = vmatpush.bf16.xpose.msra.mxu0 %v4689
        %4824 = vmatpush.bf16.xpose.msra.mxu0 %v4681
        %4825 = vmatmul.bf16.gmra.mxu0 %v723
        %v4826 = vpop.f32.mrf.mxu0
        %v4827 = vadd.f32 %v4808, %v4826
        %v4828 = vpop.f32.mrf.mxu0
        %v4829 = vadd.f32 %v4810, %v4828
        %4830 = vmatmul.bf16.gmra.mxu0 %v731
        %v4831 = vpop.f32.mrf.mxu0
        %v4832 = vadd.f32 %v4813, %v4831
        %v4833 = vpop.f32.mrf.mxu0
        %v4834 = vadd.f32 %v4815, %v4833
        %4835 = vdwg.mxu0
        %4836 = vmatpush.bf16.xpose.msra.mxu0 %v4738
        %4837 = vmatpush.bf16.xpose.msra.mxu0 %v4730
        %4838 = vmatpush.bf16.xpose.msra.mxu0 %v4722
        %4839 = vmatpush.bf16.xpose.msra.mxu0 %v4714
        %4840 = vmatpush.bf16.xpose.msra.mxu0 %v4706
        %4841 = vmatpush.bf16.xpose.msra.mxu0 %v4698
        %4842 = vmatpush.bf16.xpose.msra.mxu0 %v4690
        %4843 = vmatpush.bf16.xpose.msra.mxu0 %v4682
        %4844 = vmatmul.bf16.gmra.mxu0 %v724
        %v4845 = vpop.f32.mrf.mxu0
        %v4846 = vadd.f32 %v4827, %v4845
        %v4847 = vpop.f32.mrf.mxu0
        %v4848 = vadd.f32 %v4829, %v4847
        %4849 = vmatmul.bf16.gmra.mxu0 %v732
        %v4850 = vpop.f32.mrf.mxu0
        %v4851 = vadd.f32 %v4832, %v4850
        %v4852 = vpop.f32.mrf.mxu0
        %v4853 = vadd.f32 %v4834, %v4852
        %4854 = vdwg.mxu0
        %4855 = vmatpush.bf16.xpose.msra.mxu0 %v4739
        %4856 = vmatpush.bf16.xpose.msra.mxu0 %v4731
        %4857 = vmatpush.bf16.xpose.msra.mxu0 %v4723
        %4858 = vmatpush.bf16.xpose.msra.mxu0 %v4715
        %4859 = vmatpush.bf16.xpose.msra.mxu0 %v4707
        %4860 = vmatpush.bf16.xpose.msra.mxu0 %v4699
        %4861 = vmatpush.bf16.xpose.msra.mxu0 %v4691
        %4862 = vmatpush.bf16.xpose.msra.mxu0 %v4683
        %4863 = vmatmul.bf16.gmra.mxu0 %v725
        %v4864 = vpop.f32.mrf.mxu0
        %v4865 = vadd.f32 %v4846, %v4864
        %v4866 = vpop.f32.mrf.mxu0
        %v4867 = vadd.f32 %v4848, %v4866
        %4868 = vmatmul.bf16.gmra.mxu0 %v733
        %v4869 = vpop.f32.mrf.mxu0
        %v4870 = vadd.f32 %v4851, %v4869
        %v4871 = vpop.f32.mrf.mxu0
        %v4872 = vadd.f32 %v4853, %v4871
        %4873 = vdwg.mxu0
        %4874 = vmatpush.bf16.xpose.msra.mxu0 %v4740
        %4875 = vmatpush.bf16.xpose.msra.mxu0 %v4732
        %4876 = vmatpush.bf16.xpose.msra.mxu0 %v4724
        %4877 = vmatpush.bf16.xpose.msra.mxu0 %v4716
        %4878 = vmatpush.bf16.xpose.msra.mxu0 %v4708
        %4879 = vmatpush.bf16.xpose.msra.mxu0 %v4700
        %4880 = vmatpush.bf16.xpose.msra.mxu0 %v4692
        %4881 = vmatpush.bf16.xpose.msra.mxu0 %v4684
        %4882 = vmatmul.bf16.gmra.mxu0 %v726
        %v4883 = vpop.f32.mrf.mxu0
        %v4884 = vadd.f32 %v4865, %v4883
        %v4885 = vpop.f32.mrf.mxu0
        %v4886 = vadd.f32 %v4867, %v4885
        %4887 = vmatmul.bf16.gmra.mxu0 %v734
        %v4888 = vpop.f32.mrf.mxu0
        %v4889 = vadd.f32 %v4870, %v4888
        %v4890 = vpop.f32.mrf.mxu0
        %v4891 = vadd.f32 %v4872, %v4890
        %4892 = vdwg.mxu0
        %v4893 = vmul.f32 %v4884, %v4884
        %v4894 = vmul.f32 %v4886, %v4886
        %v4895 = vmul.f32 %v4889, %v4889
        %v4896 = vmul.f32 %v4891, %v4891
        %v4897 = vadd.f32 %v4893, %v4894
        %v4898 = vadd.f32 %v4897, %v4895
        %v4899 = vadd.f32 %v4898, %v4896
        %v4900 = vrot.slane %v4899, 4
        %v4901 = vadd.f32 %v4899, %v4900
        %v4902 = vrot.slane %v4901, 2
        %v4903 = vadd.f32 %v4901, %v4902
        %v4904 = vrot.slane %v4903, 1
        %v4905 = vadd.f32 %v4903, %v4904
        %v4906 = vrsqrt.pop %v4905
        %v4907 = vmul.f32 %v4906, %v4905
        %v4908 = vmul.f32 %v4907, %v4906
        %v4909 = vmul.f32 0.5, %v4908
        %v4910 = vsub.f32 1.5, %v4909
        %v4911 = vmul.f32 %v4906, %v4910
        %v4912 = vmul.f32 %v4905, %v4911
        %vm4913 = vcmp.eq.f32.partialorder %v4905, inf
        %v4914 = vsel %vm4913, %v4905, %v4912
        %vm4915 = vcmp.eq.f32.partialorder %v4905, 0.0
        %v4916 = vand.u32 %v4905, 2147483648
        %v4917 = vsel %vm4915, %v4916, %v4914
        %v4918 = vadd.f32 %v4917, 1e-06
        %v4919 = vrcp.pop %v4918
        %v4920 = vmul.f32 %v4918, %v4919
        %v4921 = vsub.f32 1.0, %v4920
        %v4922 = vmul.f32 %v4919, %v4921
        %v4923 = vadd.f32 %v4919, %v4922
        %vm4924 = vweird.f32 %v4918
        %vm4925 = vweird.f32 %v4919
        %vm4926 = vmor %vm4924, %vm4925
        %v4927 = vsel %vm4926, %v4919, %v4923
        %v4928 = vand.u32 2147483647, %v4918
        %vm4929 = vcmp.eq.f32.partialorder %v4928, 8.507059e+37
        %v4930 = vand.u32 %v4918, 2147483648
        %v4931 = vor.u32 1.1754944e-38, %v4930
        %v4932 = vsel %vm4929, %v4931, %v4927
        %v4933 = vmul.f32 %v4884, %v4932
        %v4934 = vmul.f32 %v4886, %v4932
        %v4935 = vmul.f32 %v4889, %v4932
        %v4936 = vmul.f32 %v4891, %v4932
        %v4937 = vpack.c.bf16 %v4934, %v4933
        %v4938 = vpack.c.bf16 %v4936, %v4935
        %4939 = vxpose.xlu0.c.b16.start [1/8] %v4937, 128
        %4940 = vxpose.xlu0.c.b16.cont [2/8] %v4938, 128
        %4941 = vxpose.xlu0.c.b16.cont [3/8] 0, 128
        %4942 = vxpose.xlu0.c.b16.cont [4/8] 0, 128
        %4943 = vxpose.xlu0.c.b16.cont [5/8] 0, 128
        %4944 = vxpose.xlu0.c.b16.cont [6/8] 0, 128
        %4945 = vxpose.xlu0.c.b16.cont [7/8] 0, 128
        %4946 = vxpose.xlu0.c.b16.end [8/8] 0, 128
        %v4947 = vpop.trf.xlu0
        %v4948 = vpop.trf.xlu0
        %v4949 = vpop.trf.xlu0
        %v4950 = vpop.trf.xlu0
        %v4951 = vpop.trf.xlu0
        %v4952 = vpop.trf.xlu0
        %v4953 = vpop.trf.xlu0
        %v4954 = vpop.trf.xlu0
        %v4956 = vsel %vm359, %v4947, 0
        %v4959 = vsel %vm359, %v4948, 0
        %v4962 = vsel %vm359, %v4949, 0
        %v4965 = vsel %vm359, %v4950, 0
        %v4968 = vsel %vm359, %v4951, 0
        %v4971 = vsel %vm359, %v4952, 0
        %v4974 = vsel %vm359, %v4953, 0
        %v4977 = vsel %vm359, %v4954, 0
        %4979 = vmatpush.bf16.msra.mxu0 0
        %4980 = vmatpush.bf16.msra.mxu0 0
        %4981 = vmatpush.bf16.msra.mxu0 0
        %4982 = vmatpush.bf16.msra.mxu0 0
        %4983 = vmatpush.bf16.msra.mxu0 0
        %4984 = vmatpush.bf16.msra.mxu0 0
        %4985 = vmatpush.bf16.msra.mxu0 %v727
        %4986 = vmatpush.bf16.msra.mxu0 %v719
        %4987 = vmatmul.bf16.gmra.mxu0 %v4956
        %v4988 = vpop.f32.mrf.mxu0
        %v4989 = vadd.f32 0.0, %v4988
        %v4990 = vpop.f32.mrf.mxu0
        %v4991 = vadd.f32 0.0, %v4990
        %4992 = vmatmul.bf16.gmra.mxu0 %v4959
        %v4993 = vpop.f32.mrf.mxu0
        %v4994 = vadd.f32 0.0, %v4993
        %v4995 = vpop.f32.mrf.mxu0
        %v4996 = vadd.f32 0.0, %v4995
        %4997 = vmatmul.bf16.gmra.mxu0 %v4962
        %v4998 = vpop.f32.mrf.mxu0
        %v4999 = vadd.f32 0.0, %v4998
        %v5000 = vpop.f32.mrf.mxu0
        %v5001 = vadd.f32 0.0, %v5000
        %5002 = vmatmul.bf16.gmra.mxu0 %v4965
        %v5003 = vpop.f32.mrf.mxu0
        %v5004 = vadd.f32 0.0, %v5003
        %v5005 = vpop.f32.mrf.mxu0
        %v5006 = vadd.f32 0.0, %v5005
        %5007 = vmatmul.bf16.gmra.mxu0 %v4968
        %v5008 = vpop.f32.mrf.mxu0
        %v5009 = vadd.f32 0.0, %v5008
        %v5010 = vpop.f32.mrf.mxu0
        %v5011 = vadd.f32 0.0, %v5010
        %5012 = vmatmul.bf16.gmra.mxu0 %v4971
        %v5013 = vpop.f32.mrf.mxu0
        %v5014 = vadd.f32 0.0, %v5013
        %v5015 = vpop.f32.mrf.mxu0
        %v5016 = vadd.f32 0.0, %v5015
        %5017 = vmatmul.bf16.gmra.mxu0 %v4974
        %v5018 = vpop.f32.mrf.mxu0
        %v5019 = vadd.f32 0.0, %v5018
        %v5020 = vpop.f32.mrf.mxu0
        %v5021 = vadd.f32 0.0, %v5020
        %5022 = vmatmul.bf16.gmra.mxu0 %v4977
        %v5023 = vpop.f32.mrf.mxu0
        %v5024 = vadd.f32 0.0, %v5023
        %v5025 = vpop.f32.mrf.mxu0
        %v5026 = vadd.f32 0.0, %v5025
        %5027 = vdwg.mxu0
        %5028 = vmatpush.bf16.msra.mxu0 0
        %5029 = vmatpush.bf16.msra.mxu0 0
        %5030 = vmatpush.bf16.msra.mxu0 0
        %5031 = vmatpush.bf16.msra.mxu0 0
        %5032 = vmatpush.bf16.msra.mxu0 0
        %5033 = vmatpush.bf16.msra.mxu0 0
        %5034 = vmatpush.bf16.msra.mxu0 %v728
        %5035 = vmatpush.bf16.msra.mxu0 %v720
        %5036 = vmatmul.bf16.gmra.mxu0 %v4956
        %v5037 = vpop.f32.mrf.mxu0
        %v5038 = vadd.f32 0.0, %v5037
        %v5039 = vpop.f32.mrf.mxu0
        %v5040 = vadd.f32 0.0, %v5039
        %5041 = vmatmul.bf16.gmra.mxu0 %v4959
        %v5042 = vpop.f32.mrf.mxu0
        %v5043 = vadd.f32 0.0, %v5042
        %v5044 = vpop.f32.mrf.mxu0
        %v5045 = vadd.f32 0.0, %v5044
        %5046 = vmatmul.bf16.gmra.mxu0 %v4962
        %v5047 = vpop.f32.mrf.mxu0
        %v5048 = vadd.f32 0.0, %v5047
        %v5049 = vpop.f32.mrf.mxu0
        %v5050 = vadd.f32 0.0, %v5049
        %5051 = vmatmul.bf16.gmra.mxu0 %v4965
        %v5052 = vpop.f32.mrf.mxu0
        %v5053 = vadd.f32 0.0, %v5052
        %v5054 = vpop.f32.mrf.mxu0
        %v5055 = vadd.f32 0.0, %v5054
        %5056 = vmatmul.bf16.gmra.mxu0 %v4968
        %v5057 = vpop.f32.mrf.mxu0
        %v5058 = vadd.f32 0.0, %v5057
        %v5059 = vpop.f32.mrf.mxu0
        %v5060 = vadd.f32 0.0, %v5059
        %5061 = vmatmul.bf16.gmra.mxu0 %v4971
        %v5062 = vpop.f32.mrf.mxu0
        %v5063 = vadd.f32 0.0, %v5062
        %v5064 = vpop.f32.mrf.mxu0
        %v5065 = vadd.f32 0.0, %v5064
        %5066 = vmatmul.bf16.gmra.mxu0 %v4974
        %v5067 = vpop.f32.mrf.mxu0
        %v5068 = vadd.f32 0.0, %v5067
        %v5069 = vpop.f32.mrf.mxu0
        %v5070 = vadd.f32 0.0, %v5069
        %5071 = vmatmul.bf16.gmra.mxu0 %v4977
        %v5072 = vpop.f32.mrf.mxu0
        %v5073 = vadd.f32 0.0, %v5072
        %v5074 = vpop.f32.mrf.mxu0
        %v5075 = vadd.f32 0.0, %v5074
        %5076 = vdwg.mxu0
        %5077 = vmatpush.bf16.msra.mxu0 0
        %5078 = vmatpush.bf16.msra.mxu0 0
        %5079 = vmatpush.bf16.msra.mxu0 0
        %5080 = vmatpush.bf16.msra.mxu0 0
        %5081 = vmatpush.bf16.msra.mxu0 0
        %5082 = vmatpush.bf16.msra.mxu0 0
        %5083 = vmatpush.bf16.msra.mxu0 %v729
        %5084 = vmatpush.bf16.msra.mxu0 %v721
        %5085 = vmatmul.bf16.gmra.mxu0 %v4956
        %v5086 = vpop.f32.mrf.mxu0
        %v5087 = vadd.f32 0.0, %v5086
        %v5088 = vpop.f32.mrf.mxu0
        %v5089 = vadd.f32 0.0, %v5088
        %5090 = vmatmul.bf16.gmra.mxu0 %v4959
        %v5091 = vpop.f32.mrf.mxu0
        %v5092 = vadd.f32 0.0, %v5091
        %v5093 = vpop.f32.mrf.mxu0
        %v5094 = vadd.f32 0.0, %v5093
        %5095 = vmatmul.bf16.gmra.mxu0 %v4962
        %v5096 = vpop.f32.mrf.mxu0
        %v5097 = vadd.f32 0.0, %v5096
        %v5098 = vpop.f32.mrf.mxu0
        %v5099 = vadd.f32 0.0, %v5098
        %5100 = vmatmul.bf16.gmra.mxu0 %v4965
        %v5101 = vpop.f32.mrf.mxu0
        %v5102 = vadd.f32 0.0, %v5101
        %v5103 = vpop.f32.mrf.mxu0
        %v5104 = vadd.f32 0.0, %v5103
        %5105 = vmatmul.bf16.gmra.mxu0 %v4968
        %v5106 = vpop.f32.mrf.mxu0
        %v5107 = vadd.f32 0.0, %v5106
        %v5108 = vpop.f32.mrf.mxu0
        %v5109 = vadd.f32 0.0, %v5108
        %5110 = vmatmul.bf16.gmra.mxu0 %v4971
        %v5111 = vpop.f32.mrf.mxu0
        %v5112 = vadd.f32 0.0, %v5111
        %v5113 = vpop.f32.mrf.mxu0
        %v5114 = vadd.f32 0.0, %v5113
        %5115 = vmatmul.bf16.gmra.mxu0 %v4974
        %v5116 = vpop.f32.mrf.mxu0
        %v5117 = vadd.f32 0.0, %v5116
        %v5118 = vpop.f32.mrf.mxu0
        %v5119 = vadd.f32 0.0, %v5118
        %5120 = vmatmul.bf16.gmra.mxu0 %v4977
        %v5121 = vpop.f32.mrf.mxu0
        %v5122 = vadd.f32 0.0, %v5121
        %v5123 = vpop.f32.mrf.mxu0
        %v5124 = vadd.f32 0.0, %v5123
        %5125 = vdwg.mxu0
        %5126 = vmatpush.bf16.msra.mxu0 0
        %5127 = vmatpush.bf16.msra.mxu0 0
        %5128 = vmatpush.bf16.msra.mxu0 0
        %5129 = vmatpush.bf16.msra.mxu0 0
        %5130 = vmatpush.bf16.msra.mxu0 0
        %5131 = vmatpush.bf16.msra.mxu0 0
        %5132 = vmatpush.bf16.msra.mxu0 %v730
        %5133 = vmatpush.bf16.msra.mxu0 %v722
        %5134 = vmatmul.bf16.gmra.mxu0 %v4956
        %v5135 = vpop.f32.mrf.mxu0
        %v5136 = vadd.f32 0.0, %v5135
        %v5137 = vpop.f32.mrf.mxu0
        %v5138 = vadd.f32 0.0, %v5137
        %5139 = vmatmul.bf16.gmra.mxu0 %v4959
        %v5140 = vpop.f32.mrf.mxu0
        %v5141 = vadd.f32 0.0, %v5140
        %v5142 = vpop.f32.mrf.mxu0
        %v5143 = vadd.f32 0.0, %v5142
        %5144 = vmatmul.bf16.gmra.mxu0 %v4962
        %v5145 = vpop.f32.mrf.mxu0
        %v5146 = vadd.f32 0.0, %v5145
        %v5147 = vpop.f32.mrf.mxu0
        %v5148 = vadd.f32 0.0, %v5147
        %5149 = vmatmul.bf16.gmra.mxu0 %v4965
        %v5150 = vpop.f32.mrf.mxu0
        %v5151 = vadd.f32 0.0, %v5150
        %v5152 = vpop.f32.mrf.mxu0
        %v5153 = vadd.f32 0.0, %v5152
        %5154 = vmatmul.bf16.gmra.mxu0 %v4968
        %v5155 = vpop.f32.mrf.mxu0
        %v5156 = vadd.f32 0.0, %v5155
        %v5157 = vpop.f32.mrf.mxu0
        %v5158 = vadd.f32 0.0, %v5157
        %5159 = vmatmul.bf16.gmra.mxu0 %v4971
        %v5160 = vpop.f32.mrf.mxu0
        %v5161 = vadd.f32 0.0, %v5160
        %v5162 = vpop.f32.mrf.mxu0
        %v5163 = vadd.f32 0.0, %v5162
        %5164 = vmatmul.bf16.gmra.mxu0 %v4974
        %v5165 = vpop.f32.mrf.mxu0
        %v5166 = vadd.f32 0.0, %v5165
        %v5167 = vpop.f32.mrf.mxu0
        %v5168 = vadd.f32 0.0, %v5167
        %5169 = vmatmul.bf16.gmra.mxu0 %v4977
        %v5170 = vpop.f32.mrf.mxu0
        %v5171 = vadd.f32 0.0, %v5170
        %v5172 = vpop.f32.mrf.mxu0
        %v5173 = vadd.f32 0.0, %v5172
        %5174 = vdwg.mxu0
        %5175 = vmatpush.bf16.msra.mxu0 0
        %5176 = vmatpush.bf16.msra.mxu0 0
        %5177 = vmatpush.bf16.msra.mxu0 0
        %5178 = vmatpush.bf16.msra.mxu0 0
        %5179 = vmatpush.bf16.msra.mxu0 0
        %5180 = vmatpush.bf16.msra.mxu0 0
        %5181 = vmatpush.bf16.msra.mxu0 %v731
        %5182 = vmatpush.bf16.msra.mxu0 %v723
        %5183 = vmatmul.bf16.gmra.mxu0 %v4956
        %v5184 = vpop.f32.mrf.mxu0
        %v5185 = vadd.f32 0.0, %v5184
        %v5186 = vpop.f32.mrf.mxu0
        %v5187 = vadd.f32 0.0, %v5186
        %5188 = vmatmul.bf16.gmra.mxu0 %v4959
        %v5189 = vpop.f32.mrf.mxu0
        %v5190 = vadd.f32 0.0, %v5189
        %v5191 = vpop.f32.mrf.mxu0
        %v5192 = vadd.f32 0.0, %v5191
        %5193 = vmatmul.bf16.gmra.mxu0 %v4962
        %v5194 = vpop.f32.mrf.mxu0
        %v5195 = vadd.f32 0.0, %v5194
        %v5196 = vpop.f32.mrf.mxu0
        %v5197 = vadd.f32 0.0, %v5196
        %5198 = vmatmul.bf16.gmra.mxu0 %v4965
        %v5199 = vpop.f32.mrf.mxu0
        %v5200 = vadd.f32 0.0, %v5199
        %v5201 = vpop.f32.mrf.mxu0
        %v5202 = vadd.f32 0.0, %v5201
        %5203 = vmatmul.bf16.gmra.mxu0 %v4968
        %v5204 = vpop.f32.mrf.mxu0
        %v5205 = vadd.f32 0.0, %v5204
        %v5206 = vpop.f32.mrf.mxu0
        %v5207 = vadd.f32 0.0, %v5206
        %5208 = vmatmul.bf16.gmra.mxu0 %v4971
        %v5209 = vpop.f32.mrf.mxu0
        %v5210 = vadd.f32 0.0, %v5209
        %v5211 = vpop.f32.mrf.mxu0
        %v5212 = vadd.f32 0.0, %v5211
        %5213 = vmatmul.bf16.gmra.mxu0 %v4974
        %v5214 = vpop.f32.mrf.mxu0
        %v5215 = vadd.f32 0.0, %v5214
        %v5216 = vpop.f32.mrf.mxu0
        %v5217 = vadd.f32 0.0, %v5216
        %5218 = vmatmul.bf16.gmra.mxu0 %v4977
        %v5219 = vpop.f32.mrf.mxu0
        %v5220 = vadd.f32 0.0, %v5219
        %v5221 = vpop.f32.mrf.mxu0
        %v5222 = vadd.f32 0.0, %v5221
        %5223 = vdwg.mxu0
        %5224 = vmatpush.bf16.msra.mxu0 0
        %5225 = vmatpush.bf16.msra.mxu0 0
        %5226 = vmatpush.bf16.msra.mxu0 0
        %5227 = vmatpush.bf16.msra.mxu0 0
        %5228 = vmatpush.bf16.msra.mxu0 0
        %5229 = vmatpush.bf16.msra.mxu0 0
        %5230 = vmatpush.bf16.msra.mxu0 %v732
        %5231 = vmatpush.bf16.msra.mxu0 %v724
        %5232 = vmatmul.bf16.gmra.mxu0 %v4956
        %v5233 = vpop.f32.mrf.mxu0
        %v5234 = vadd.f32 0.0, %v5233
        %v5235 = vpop.f32.mrf.mxu0
        %v5236 = vadd.f32 0.0, %v5235
        %5237 = vmatmul.bf16.gmra.mxu0 %v4959
        %v5238 = vpop.f32.mrf.mxu0
        %v5239 = vadd.f32 0.0, %v5238
        %v5240 = vpop.f32.mrf.mxu0
        %v5241 = vadd.f32 0.0, %v5240
        %5242 = vmatmul.bf16.gmra.mxu0 %v4962
        %v5243 = vpop.f32.mrf.mxu0
        %v5244 = vadd.f32 0.0, %v5243
        %v5245 = vpop.f32.mrf.mxu0
        %v5246 = vadd.f32 0.0, %v5245
        %5247 = vmatmul.bf16.gmra.mxu0 %v4965
        %v5248 = vpop.f32.mrf.mxu0
        %v5249 = vadd.f32 0.0, %v5248
        %v5250 = vpop.f32.mrf.mxu0
        %v5251 = vadd.f32 0.0, %v5250
        %5252 = vmatmul.bf16.gmra.mxu0 %v4968
        %v5253 = vpop.f32.mrf.mxu0
        %v5254 = vadd.f32 0.0, %v5253
        %v5255 = vpop.f32.mrf.mxu0
        %v5256 = vadd.f32 0.0, %v5255
        %5257 = vmatmul.bf16.gmra.mxu0 %v4971
        %v5258 = vpop.f32.mrf.mxu0
        %v5259 = vadd.f32 0.0, %v5258
        %v5260 = vpop.f32.mrf.mxu0
        %v5261 = vadd.f32 0.0, %v5260
        %5262 = vmatmul.bf16.gmra.mxu0 %v4974
        %v5263 = vpop.f32.mrf.mxu0
        %v5264 = vadd.f32 0.0, %v5263
        %v5265 = vpop.f32.mrf.mxu0
        %v5266 = vadd.f32 0.0, %v5265
        %5267 = vmatmul.bf16.gmra.mxu0 %v4977
        %v5268 = vpop.f32.mrf.mxu0
        %v5269 = vadd.f32 0.0, %v5268
        %v5270 = vpop.f32.mrf.mxu0
        %v5271 = vadd.f32 0.0, %v5270
        %5272 = vdwg.mxu0
        %5273 = vmatpush.bf16.msra.mxu0 0
        %5274 = vmatpush.bf16.msra.mxu0 0
        %5275 = vmatpush.bf16.msra.mxu0 0
        %5276 = vmatpush.bf16.msra.mxu0 0
        %5277 = vmatpush.bf16.msra.mxu0 0
        %5278 = vmatpush.bf16.msra.mxu0 0
        %5279 = vmatpush.bf16.msra.mxu0 %v733
        %5280 = vmatpush.bf16.msra.mxu0 %v725
        %5281 = vmatmul.bf16.gmra.mxu0 %v4956
        %v5282 = vpop.f32.mrf.mxu0
        %v5283 = vadd.f32 0.0, %v5282
        %v5284 = vpop.f32.mrf.mxu0
        %v5285 = vadd.f32 0.0, %v5284
        %5286 = vmatmul.bf16.gmra.mxu0 %v4959
        %v5287 = vpop.f32.mrf.mxu0
        %v5288 = vadd.f32 0.0, %v5287
        %v5289 = vpop.f32.mrf.mxu0
        %v5290 = vadd.f32 0.0, %v5289
        %5291 = vmatmul.bf16.gmra.mxu0 %v4962
        %v5292 = vpop.f32.mrf.mxu0
        %v5293 = vadd.f32 0.0, %v5292
        %v5294 = vpop.f32.mrf.mxu0
        %v5295 = vadd.f32 0.0, %v5294
        %5296 = vmatmul.bf16.gmra.mxu0 %v4965
        %v5297 = vpop.f32.mrf.mxu0
        %v5298 = vadd.f32 0.0, %v5297
        %v5299 = vpop.f32.mrf.mxu0
        %v5300 = vadd.f32 0.0, %v5299
        %5301 = vmatmul.bf16.gmra.mxu0 %v4968
        %v5302 = vpop.f32.mrf.mxu0
        %v5303 = vadd.f32 0.0, %v5302
        %v5304 = vpop.f32.mrf.mxu0
        %v5305 = vadd.f32 0.0, %v5304
        %5306 = vmatmul.bf16.gmra.mxu0 %v4971
        %v5307 = vpop.f32.mrf.mxu0
        %v5308 = vadd.f32 0.0, %v5307
        %v5309 = vpop.f32.mrf.mxu0
        %v5310 = vadd.f32 0.0, %v5309
        %5311 = vmatmul.bf16.gmra.mxu0 %v4974
        %v5312 = vpop.f32.mrf.mxu0
        %v5313 = vadd.f32 0.0, %v5312
        %v5314 = vpop.f32.mrf.mxu0
        %v5315 = vadd.f32 0.0, %v5314
        %5316 = vmatmul.bf16.gmra.mxu0 %v4977
        %v5317 = vpop.f32.mrf.mxu0
        %v5318 = vadd.f32 0.0, %v5317
        %v5319 = vpop.f32.mrf.mxu0
        %v5320 = vadd.f32 0.0, %v5319
        %5321 = vdwg.mxu0
        %5322 = vmatpush.bf16.msra.mxu0 0
        %5323 = vmatpush.bf16.msra.mxu0 0
        %5324 = vmatpush.bf16.msra.mxu0 0
        %5325 = vmatpush.bf16.msra.mxu0 0
        %5326 = vmatpush.bf16.msra.mxu0 0
        %5327 = vmatpush.bf16.msra.mxu0 0
        %5328 = vmatpush.bf16.msra.mxu0 %v734
        %5329 = vmatpush.bf16.msra.mxu0 %v726
        %5330 = vmatmul.bf16.gmra.mxu0 %v4956
        %v5331 = vpop.f32.mrf.mxu0
        %v5332 = vadd.f32 0.0, %v5331
        %v5333 = vpop.f32.mrf.mxu0
        %v5334 = vadd.f32 0.0, %v5333
        %5335 = vmatmul.bf16.gmra.mxu0 %v4959
        %v5336 = vpop.f32.mrf.mxu0
        %v5337 = vadd.f32 0.0, %v5336
        %v5338 = vpop.f32.mrf.mxu0
        %v5339 = vadd.f32 0.0, %v5338
        %5340 = vmatmul.bf16.gmra.mxu0 %v4962
        %v5341 = vpop.f32.mrf.mxu0
        %v5342 = vadd.f32 0.0, %v5341
        %v5343 = vpop.f32.mrf.mxu0
        %v5344 = vadd.f32 0.0, %v5343
        %5345 = vmatmul.bf16.gmra.mxu0 %v4965
        %v5346 = vpop.f32.mrf.mxu0
        %v5347 = vadd.f32 0.0, %v5346
        %v5348 = vpop.f32.mrf.mxu0
        %v5349 = vadd.f32 0.0, %v5348
        %5350 = vmatmul.bf16.gmra.mxu0 %v4968
        %v5351 = vpop.f32.mrf.mxu0
        %v5352 = vadd.f32 0.0, %v5351
        %v5353 = vpop.f32.mrf.mxu0
        %v5354 = vadd.f32 0.0, %v5353
        %5355 = vmatmul.bf16.gmra.mxu0 %v4971
        %v5356 = vpop.f32.mrf.mxu0
        %v5357 = vadd.f32 0.0, %v5356
        %v5358 = vpop.f32.mrf.mxu0
        %v5359 = vadd.f32 0.0, %v5358
        %5360 = vmatmul.bf16.gmra.mxu0 %v4974
        %v5361 = vpop.f32.mrf.mxu0
        %v5362 = vadd.f32 0.0, %v5361
        %v5363 = vpop.f32.mrf.mxu0
        %v5364 = vadd.f32 0.0, %v5363
        %5365 = vmatmul.bf16.gmra.mxu0 %v4977
        %v5366 = vpop.f32.mrf.mxu0
        %v5367 = vadd.f32 0.0, %v5366
        %v5368 = vpop.f32.mrf.mxu0
        %v5369 = vadd.f32 0.0, %v5368
        %5370 = vdwg.mxu0
        %v5371 = vsel %vm1183, %v4989, -1e+30
        %v5372 = vsel %vm1183, %v5038, -1e+30
        %v5373 = vsel %vm1183, %v5087, -1e+30
        %v5374 = vsel %vm1183, %v5136, -1e+30
        %v5375 = vsel %vm1183, %v5185, -1e+30
        %v5376 = vsel %vm1183, %v5234, -1e+30
        %v5377 = vsel %vm1183, %v5283, -1e+30
        %v5378 = vsel %vm1183, %v5332, -1e+30
        %v5379 = vsel %vm1184, %v4991, -1e+30
        %v5380 = vsel %vm1184, %v5040, -1e+30
        %v5381 = vsel %vm1184, %v5089, -1e+30
        %v5382 = vsel %vm1184, %v5138, -1e+30
        %v5383 = vsel %vm1184, %v5187, -1e+30
        %v5384 = vsel %vm1184, %v5236, -1e+30
        %v5385 = vsel %vm1184, %v5285, -1e+30
        %v5386 = vsel %vm1184, %v5334, -1e+30
        %v5387 = vsel %vm1185, %v4994, -1e+30
        %v5388 = vsel %vm1185, %v5043, -1e+30
        %v5389 = vsel %vm1185, %v5092, -1e+30
        %v5390 = vsel %vm1185, %v5141, -1e+30
        %v5391 = vsel %vm1185, %v5190, -1e+30
        %v5392 = vsel %vm1185, %v5239, -1e+30
        %v5393 = vsel %vm1185, %v5288, -1e+30
        %v5394 = vsel %vm1185, %v5337, -1e+30
        %v5395 = vsel %vm1186, %v4996, -1e+30
        %v5396 = vsel %vm1186, %v5045, -1e+30
        %v5397 = vsel %vm1186, %v5094, -1e+30
        %v5398 = vsel %vm1186, %v5143, -1e+30
        %v5399 = vsel %vm1186, %v5192, -1e+30
        %v5400 = vsel %vm1186, %v5241, -1e+30
        %v5401 = vsel %vm1186, %v5290, -1e+30
        %v5402 = vsel %vm1186, %v5339, -1e+30
        %v5403 = vsel %vm1187, %v4999, -1e+30
        %v5404 = vsel %vm1187, %v5048, -1e+30
        %v5405 = vsel %vm1187, %v5097, -1e+30
        %v5406 = vsel %vm1187, %v5146, -1e+30
        %v5407 = vsel %vm1187, %v5195, -1e+30
        %v5408 = vsel %vm1187, %v5244, -1e+30
        %v5409 = vsel %vm1187, %v5293, -1e+30
        %v5410 = vsel %vm1187, %v5342, -1e+30
        %v5411 = vsel %vm1188, %v5001, -1e+30
        %v5412 = vsel %vm1188, %v5050, -1e+30
        %v5413 = vsel %vm1188, %v5099, -1e+30
        %v5414 = vsel %vm1188, %v5148, -1e+30
        %v5415 = vsel %vm1188, %v5197, -1e+30
        %v5416 = vsel %vm1188, %v5246, -1e+30
        %v5417 = vsel %vm1188, %v5295, -1e+30
        %v5418 = vsel %vm1188, %v5344, -1e+30
        %v5419 = vsel %vm1189, %v5004, -1e+30
        %v5420 = vsel %vm1189, %v5053, -1e+30
        %v5421 = vsel %vm1189, %v5102, -1e+30
        %v5422 = vsel %vm1189, %v5151, -1e+30
        %v5423 = vsel %vm1189, %v5200, -1e+30
        %v5424 = vsel %vm1189, %v5249, -1e+30
        %v5425 = vsel %vm1189, %v5298, -1e+30
        %v5426 = vsel %vm1189, %v5347, -1e+30
        %v5427 = vsel %vm1190, %v5006, -1e+30
        %v5428 = vsel %vm1190, %v5055, -1e+30
        %v5429 = vsel %vm1190, %v5104, -1e+30
        %v5430 = vsel %vm1190, %v5153, -1e+30
        %v5431 = vsel %vm1190, %v5202, -1e+30
        %v5432 = vsel %vm1190, %v5251, -1e+30
        %v5433 = vsel %vm1190, %v5300, -1e+30
        %v5434 = vsel %vm1190, %v5349, -1e+30
        %v5435 = vsel %vm1191, %v5009, -1e+30
        %v5436 = vsel %vm1191, %v5058, -1e+30
        %v5437 = vsel %vm1191, %v5107, -1e+30
        %v5438 = vsel %vm1191, %v5156, -1e+30
        %v5439 = vsel %vm1191, %v5205, -1e+30
        %v5440 = vsel %vm1191, %v5254, -1e+30
        %v5441 = vsel %vm1191, %v5303, -1e+30
        %v5442 = vsel %vm1191, %v5352, -1e+30
        %v5443 = vsel %vm1192, %v5011, -1e+30
        %v5444 = vsel %vm1192, %v5060, -1e+30
        %v5445 = vsel %vm1192, %v5109, -1e+30
        %v5446 = vsel %vm1192, %v5158, -1e+30
        %v5447 = vsel %vm1192, %v5207, -1e+30
        %v5448 = vsel %vm1192, %v5256, -1e+30
        %v5449 = vsel %vm1192, %v5305, -1e+30
        %v5450 = vsel %vm1192, %v5354, -1e+30
        %v5451 = vsel %vm1193, %v5014, -1e+30
        %v5452 = vsel %vm1193, %v5063, -1e+30
        %v5453 = vsel %vm1193, %v5112, -1e+30
        %v5454 = vsel %vm1193, %v5161, -1e+30
        %v5455 = vsel %vm1193, %v5210, -1e+30
        %v5456 = vsel %vm1193, %v5259, -1e+30
        %v5457 = vsel %vm1193, %v5308, -1e+30
        %v5458 = vsel %vm1193, %v5357, -1e+30
        %v5459 = vsel %vm1194, %v5016, -1e+30
        %v5460 = vsel %vm1194, %v5065, -1e+30
        %v5461 = vsel %vm1194, %v5114, -1e+30
        %v5462 = vsel %vm1194, %v5163, -1e+30
        %v5463 = vsel %vm1194, %v5212, -1e+30
        %v5464 = vsel %vm1194, %v5261, -1e+30
        %v5465 = vsel %vm1194, %v5310, -1e+30
        %v5466 = vsel %vm1194, %v5359, -1e+30
        %v5467 = vsel %vm1195, %v5019, -1e+30
        %v5468 = vsel %vm1195, %v5068, -1e+30
        %v5469 = vsel %vm1195, %v5117, -1e+30
        %v5470 = vsel %vm1195, %v5166, -1e+30
        %v5471 = vsel %vm1195, %v5215, -1e+30
        %v5472 = vsel %vm1195, %v5264, -1e+30
        %v5473 = vsel %vm1195, %v5313, -1e+30
        %v5474 = vsel %vm1195, %v5362, -1e+30
        %v5475 = vsel %vm1196, %v5021, -1e+30
        %v5476 = vsel %vm1196, %v5070, -1e+30
        %v5477 = vsel %vm1196, %v5119, -1e+30
        %v5478 = vsel %vm1196, %v5168, -1e+30
        %v5479 = vsel %vm1196, %v5217, -1e+30
        %v5480 = vsel %vm1196, %v5266, -1e+30
        %v5481 = vsel %vm1196, %v5315, -1e+30
        %v5482 = vsel %vm1196, %v5364, -1e+30
        %v5483 = vsel %vm1197, %v5024, -1e+30
        %v5484 = vsel %vm1197, %v5073, -1e+30
        %v5485 = vsel %vm1197, %v5122, -1e+30
        %v5486 = vsel %vm1197, %v5171, -1e+30
        %v5487 = vsel %vm1197, %v5220, -1e+30
        %v5488 = vsel %vm1197, %v5269, -1e+30
        %v5489 = vsel %vm1197, %v5318, -1e+30
        %v5490 = vsel %vm1197, %v5367, -1e+30
        %v5491 = vsel %vm1198, %v5026, -1e+30
        %v5492 = vsel %vm1198, %v5075, -1e+30
        %v5493 = vsel %vm1198, %v5124, -1e+30
        %v5494 = vsel %vm1198, %v5173, -1e+30
        %v5495 = vsel %vm1198, %v5222, -1e+30
        %v5496 = vsel %vm1198, %v5271, -1e+30
        %v5497 = vsel %vm1198, %v5320, -1e+30
        %v5498 = vsel %vm1198, %v5369, -1e+30
        %v5499 = vmax.f32 %v5371, %v5379
        %v5500 = vmax.f32 %v5499, %v5387
        %v5501 = vmax.f32 %v5500, %v5395
        %v5502 = vmax.f32 %v5501, %v5403
        %v5503 = vmax.f32 %v5502, %v5411
        %v5504 = vmax.f32 %v5503, %v5419
        %v5505 = vmax.f32 %v5504, %v5427
        %v5506 = vmax.f32 %v5505, %v5435
        %v5507 = vmax.f32 %v5506, %v5443
        %v5508 = vmax.f32 %v5507, %v5451
        %v5509 = vmax.f32 %v5508, %v5459
        %v5510 = vmax.f32 %v5509, %v5467
        %v5511 = vmax.f32 %v5510, %v5475
        %v5512 = vmax.f32 %v5511, %v5483
        %v5513 = vmax.f32 %v5512, %v5491
        %v5514 = vrot.slane %v5513, 4
        %v5515 = vmax.f32 %v5513, %v5514
        %v5516 = vrot.slane %v5515, 2
        %v5517 = vmax.f32 %v5515, %v5516
        %v5518 = vrot.slane %v5517, 1
        %v5519 = vmax.f32 %v5517, %v5518
        %v5520 = vmax.f32 %v5372, %v5380
        %v5521 = vmax.f32 %v5520, %v5388
        %v5522 = vmax.f32 %v5521, %v5396
        %v5523 = vmax.f32 %v5522, %v5404
        %v5524 = vmax.f32 %v5523, %v5412
        %v5525 = vmax.f32 %v5524, %v5420
        %v5526 = vmax.f32 %v5525, %v5428
        %v5527 = vmax.f32 %v5526, %v5436
        %v5528 = vmax.f32 %v5527, %v5444
        %v5529 = vmax.f32 %v5528, %v5452
        %v5530 = vmax.f32 %v5529, %v5460
        %v5531 = vmax.f32 %v5530, %v5468
        %v5532 = vmax.f32 %v5531, %v5476
        %v5533 = vmax.f32 %v5532, %v5484
        %v5534 = vmax.f32 %v5533, %v5492
        %v5535 = vrot.slane %v5534, 4
        %v5536 = vmax.f32 %v5534, %v5535
        %v5537 = vrot.slane %v5536, 2
        %v5538 = vmax.f32 %v5536, %v5537
        %v5539 = vrot.slane %v5538, 1
        %v5540 = vmax.f32 %v5538, %v5539
        %v5541 = vmax.f32 %v5373, %v5381
        %v5542 = vmax.f32 %v5541, %v5389
        %v5543 = vmax.f32 %v5542, %v5397
        %v5544 = vmax.f32 %v5543, %v5405
        %v5545 = vmax.f32 %v5544, %v5413
        %v5546 = vmax.f32 %v5545, %v5421
        %v5547 = vmax.f32 %v5546, %v5429
        %v5548 = vmax.f32 %v5547, %v5437
        %v5549 = vmax.f32 %v5548, %v5445
        %v5550 = vmax.f32 %v5549, %v5453
        %v5551 = vmax.f32 %v5550, %v5461
        %v5552 = vmax.f32 %v5551, %v5469
        %v5553 = vmax.f32 %v5552, %v5477
        %v5554 = vmax.f32 %v5553, %v5485
        %v5555 = vmax.f32 %v5554, %v5493
        %v5556 = vrot.slane %v5555, 4
        %v5557 = vmax.f32 %v5555, %v5556
        %v5558 = vrot.slane %v5557, 2
        %v5559 = vmax.f32 %v5557, %v5558
        %v5560 = vrot.slane %v5559, 1
        %v5561 = vmax.f32 %v5559, %v5560
        %v5562 = vmax.f32 %v5374, %v5382
        %v5563 = vmax.f32 %v5562, %v5390
        %v5564 = vmax.f32 %v5563, %v5398
        %v5565 = vmax.f32 %v5564, %v5406
        %v5566 = vmax.f32 %v5565, %v5414
        %v5567 = vmax.f32 %v5566, %v5422
        %v5568 = vmax.f32 %v5567, %v5430
        %v5569 = vmax.f32 %v5568, %v5438
        %v5570 = vmax.f32 %v5569, %v5446
        %v5571 = vmax.f32 %v5570, %v5454
        %v5572 = vmax.f32 %v5571, %v5462
        %v5573 = vmax.f32 %v5572, %v5470
        %v5574 = vmax.f32 %v5573, %v5478
        %v5575 = vmax.f32 %v5574, %v5486
        %v5576 = vmax.f32 %v5575, %v5494
        %v5577 = vrot.slane %v5576, 4
        %v5578 = vmax.f32 %v5576, %v5577
        %v5579 = vrot.slane %v5578, 2
        %v5580 = vmax.f32 %v5578, %v5579
        %v5581 = vrot.slane %v5580, 1
        %v5582 = vmax.f32 %v5580, %v5581
        %v5583 = vmax.f32 %v5375, %v5383
        %v5584 = vmax.f32 %v5583, %v5391
        %v5585 = vmax.f32 %v5584, %v5399
        %v5586 = vmax.f32 %v5585, %v5407
        %v5587 = vmax.f32 %v5586, %v5415
        %v5588 = vmax.f32 %v5587, %v5423
        %v5589 = vmax.f32 %v5588, %v5431
        %v5590 = vmax.f32 %v5589, %v5439
        %v5591 = vmax.f32 %v5590, %v5447
        %v5592 = vmax.f32 %v5591, %v5455
        %v5593 = vmax.f32 %v5592, %v5463
        %v5594 = vmax.f32 %v5593, %v5471
        %v5595 = vmax.f32 %v5594, %v5479
        %v5596 = vmax.f32 %v5595, %v5487
        %v5597 = vmax.f32 %v5596, %v5495
        %v5598 = vrot.slane %v5597, 4
        %v5599 = vmax.f32 %v5597, %v5598
        %v5600 = vrot.slane %v5599, 2
        %v5601 = vmax.f32 %v5599, %v5600
        %v5602 = vrot.slane %v5601, 1
        %v5603 = vmax.f32 %v5601, %v5602
        %v5604 = vmax.f32 %v5376, %v5384
        %v5605 = vmax.f32 %v5604, %v5392
        %v5606 = vmax.f32 %v5605, %v5400
        %v5607 = vmax.f32 %v5606, %v5408
        %v5608 = vmax.f32 %v5607, %v5416
        %v5609 = vmax.f32 %v5608, %v5424
        %v5610 = vmax.f32 %v5609, %v5432
        %v5611 = vmax.f32 %v5610, %v5440
        %v5612 = vmax.f32 %v5611, %v5448
        %v5613 = vmax.f32 %v5612, %v5456
        %v5614 = vmax.f32 %v5613, %v5464
        %v5615 = vmax.f32 %v5614, %v5472
        %v5616 = vmax.f32 %v5615, %v5480
        %v5617 = vmax.f32 %v5616, %v5488
        %v5618 = vmax.f32 %v5617, %v5496
        %v5619 = vrot.slane %v5618, 4
        %v5620 = vmax.f32 %v5618, %v5619
        %v5621 = vrot.slane %v5620, 2
        %v5622 = vmax.f32 %v5620, %v5621
        %v5623 = vrot.slane %v5622, 1
        %v5624 = vmax.f32 %v5622, %v5623
        %v5625 = vmax.f32 %v5377, %v5385
        %v5626 = vmax.f32 %v5625, %v5393
        %v5627 = vmax.f32 %v5626, %v5401
        %v5628 = vmax.f32 %v5627, %v5409
        %v5629 = vmax.f32 %v5628, %v5417
        %v5630 = vmax.f32 %v5629, %v5425
        %v5631 = vmax.f32 %v5630, %v5433
        %v5632 = vmax.f32 %v5631, %v5441
        %v5633 = vmax.f32 %v5632, %v5449
        %v5634 = vmax.f32 %v5633, %v5457
        %v5635 = vmax.f32 %v5634, %v5465
        %v5636 = vmax.f32 %v5635, %v5473
        %v5637 = vmax.f32 %v5636, %v5481
        %v5638 = vmax.f32 %v5637, %v5489
        %v5639 = vmax.f32 %v5638, %v5497
        %v5640 = vrot.slane %v5639, 4
        %v5641 = vmax.f32 %v5639, %v5640
        %v5642 = vrot.slane %v5641, 2
        %v5643 = vmax.f32 %v5641, %v5642
        %v5644 = vrot.slane %v5643, 1
        %v5645 = vmax.f32 %v5643, %v5644
        %v5646 = vmax.f32 %v5378, %v5386
        %v5647 = vmax.f32 %v5646, %v5394
        %v5648 = vmax.f32 %v5647, %v5402
        %v5649 = vmax.f32 %v5648, %v5410
        %v5650 = vmax.f32 %v5649, %v5418
        %v5651 = vmax.f32 %v5650, %v5426
        %v5652 = vmax.f32 %v5651, %v5434
        %v5653 = vmax.f32 %v5652, %v5442
        %v5654 = vmax.f32 %v5653, %v5450
        %v5655 = vmax.f32 %v5654, %v5458
        %v5656 = vmax.f32 %v5655, %v5466
        %v5657 = vmax.f32 %v5656, %v5474
        %v5658 = vmax.f32 %v5657, %v5482
        %v5659 = vmax.f32 %v5658, %v5490
        %v5660 = vmax.f32 %v5659, %v5498
        %v5661 = vrot.slane %v5660, 4
        %v5662 = vmax.f32 %v5660, %v5661
        %v5663 = vrot.slane %v5662, 2
        %v5664 = vmax.f32 %v5662, %v5663
        %v5665 = vrot.slane %v5664, 1
        %v5666 = vmax.f32 %v5664, %v5665
        %v5667 = vsub.f32 %v5371, %v5519
        %v5668 = vsub.f32 %v5372, %v5540
        %v5669 = vsub.f32 %v5373, %v5561
        %v5670 = vsub.f32 %v5374, %v5582
        %v5671 = vsub.f32 %v5375, %v5603
        %v5672 = vsub.f32 %v5376, %v5624
        %v5673 = vsub.f32 %v5377, %v5645
        %v5674 = vsub.f32 %v5378, %v5666
        %v5675 = vsub.f32 %v5379, %v5519
        %v5676 = vsub.f32 %v5380, %v5540
        %v5677 = vsub.f32 %v5381, %v5561
        %v5678 = vsub.f32 %v5382, %v5582
        %v5679 = vsub.f32 %v5383, %v5603
        %v5680 = vsub.f32 %v5384, %v5624
        %v5681 = vsub.f32 %v5385, %v5645
        %v5682 = vsub.f32 %v5386, %v5666
        %v5683 = vsub.f32 %v5387, %v5519
        %v5684 = vsub.f32 %v5388, %v5540
        %v5685 = vsub.f32 %v5389, %v5561
        %v5686 = vsub.f32 %v5390, %v5582
        %v5687 = vsub.f32 %v5391, %v5603
        %v5688 = vsub.f32 %v5392, %v5624
        %v5689 = vsub.f32 %v5393, %v5645
        %v5690 = vsub.f32 %v5394, %v5666
        %v5691 = vsub.f32 %v5395, %v5519
        %v5692 = vsub.f32 %v5396, %v5540
        %v5693 = vsub.f32 %v5397, %v5561
        %v5694 = vsub.f32 %v5398, %v5582
        %v5695 = vsub.f32 %v5399, %v5603
        %v5696 = vsub.f32 %v5400, %v5624
        %v5697 = vsub.f32 %v5401, %v5645
        %v5698 = vsub.f32 %v5402, %v5666
        %v5699 = vsub.f32 %v5403, %v5519
        %v5700 = vsub.f32 %v5404, %v5540
        %v5701 = vsub.f32 %v5405, %v5561
        %v5702 = vsub.f32 %v5406, %v5582
        %v5703 = vsub.f32 %v5407, %v5603
        %v5704 = vsub.f32 %v5408, %v5624
        %v5705 = vsub.f32 %v5409, %v5645
        %v5706 = vsub.f32 %v5410, %v5666
        %v5707 = vsub.f32 %v5411, %v5519
        %v5708 = vsub.f32 %v5412, %v5540
        %v5709 = vsub.f32 %v5413, %v5561
        %v5710 = vsub.f32 %v5414, %v5582
        %v5711 = vsub.f32 %v5415, %v5603
        %v5712 = vsub.f32 %v5416, %v5624
        %v5713 = vsub.f32 %v5417, %v5645
        %v5714 = vsub.f32 %v5418, %v5666
        %v5715 = vsub.f32 %v5419, %v5519
        %v5716 = vsub.f32 %v5420, %v5540
        %v5717 = vsub.f32 %v5421, %v5561
        %v5718 = vsub.f32 %v5422, %v5582
        %v5719 = vsub.f32 %v5423, %v5603
        %v5720 = vsub.f32 %v5424, %v5624
        %v5721 = vsub.f32 %v5425, %v5645
        %v5722 = vsub.f32 %v5426, %v5666
        %v5723 = vsub.f32 %v5427, %v5519
        %v5724 = vsub.f32 %v5428, %v5540
        %v5725 = vsub.f32 %v5429, %v5561
        %v5726 = vsub.f32 %v5430, %v5582
        %v5727 = vsub.f32 %v5431, %v5603
        %v5728 = vsub.f32 %v5432, %v5624
        %v5729 = vsub.f32 %v5433, %v5645
        %v5730 = vsub.f32 %v5434, %v5666
        %v5731 = vsub.f32 %v5435, %v5519
        %v5732 = vsub.f32 %v5436, %v5540
        %v5733 = vsub.f32 %v5437, %v5561
        %v5734 = vsub.f32 %v5438, %v5582
        %v5735 = vsub.f32 %v5439, %v5603
        %v5736 = vsub.f32 %v5440, %v5624
        %v5737 = vsub.f32 %v5441, %v5645
        %v5738 = vsub.f32 %v5442, %v5666
        %v5739 = vsub.f32 %v5443, %v5519
        %v5740 = vsub.f32 %v5444, %v5540
        %v5741 = vsub.f32 %v5445, %v5561
        %v5742 = vsub.f32 %v5446, %v5582
        %v5743 = vsub.f32 %v5447, %v5603
        %v5744 = vsub.f32 %v5448, %v5624
        %v5745 = vsub.f32 %v5449, %v5645
        %v5746 = vsub.f32 %v5450, %v5666
        %v5747 = vsub.f32 %v5451, %v5519
        %v5748 = vsub.f32 %v5452, %v5540
        %v5749 = vsub.f32 %v5453, %v5561
        %v5750 = vsub.f32 %v5454, %v5582
        %v5751 = vsub.f32 %v5455, %v5603
        %v5752 = vsub.f32 %v5456, %v5624
        %v5753 = vsub.f32 %v5457, %v5645
        %v5754 = vsub.f32 %v5458, %v5666
        %v5755 = vsub.f32 %v5459, %v5519
        %v5756 = vsub.f32 %v5460, %v5540
        %v5757 = vsub.f32 %v5461, %v5561
        %v5758 = vsub.f32 %v5462, %v5582
        %v5759 = vsub.f32 %v5463, %v5603
        %v5760 = vsub.f32 %v5464, %v5624
        %v5761 = vsub.f32 %v5465, %v5645
        %v5762 = vsub.f32 %v5466, %v5666
        %v5763 = vsub.f32 %v5467, %v5519
        %v5764 = vsub.f32 %v5468, %v5540
        %v5765 = vsub.f32 %v5469, %v5561
        %v5766 = vsub.f32 %v5470, %v5582
        %v5767 = vsub.f32 %v5471, %v5603
        %v5768 = vsub.f32 %v5472, %v5624
        %v5769 = vsub.f32 %v5473, %v5645
        %v5770 = vsub.f32 %v5474, %v5666
        %v5771 = vsub.f32 %v5475, %v5519
        %v5772 = vsub.f32 %v5476, %v5540
        %v5773 = vsub.f32 %v5477, %v5561
        %v5774 = vsub.f32 %v5478, %v5582
        %v5775 = vsub.f32 %v5479, %v5603
        %v5776 = vsub.f32 %v5480, %v5624
        %v5777 = vsub.f32 %v5481, %v5645
        %v5778 = vsub.f32 %v5482, %v5666
        %v5779 = vsub.f32 %v5483, %v5519
        %v5780 = vsub.f32 %v5484, %v5540
        %v5781 = vsub.f32 %v5485, %v5561
        %v5782 = vsub.f32 %v5486, %v5582
        %v5783 = vsub.f32 %v5487, %v5603
        %v5784 = vsub.f32 %v5488, %v5624
        %v5785 = vsub.f32 %v5489, %v5645
        %v5786 = vsub.f32 %v5490, %v5666
        %v5787 = vsub.f32 %v5491, %v5519
        %v5788 = vsub.f32 %v5492, %v5540
        %v5789 = vsub.f32 %v5493, %v5561
        %v5790 = vsub.f32 %v5494, %v5582
        %v5791 = vsub.f32 %v5495, %v5603
        %v5792 = vsub.f32 %v5496, %v5624
        %v5793 = vsub.f32 %v5497, %v5645
        %v5794 = vsub.f32 %v5498, %v5666
        %v5795 = vmul.f32 %v5667, 1.442695
        %v5796 = vpow.pop %v5795
        %v5797 = vmul.f32 %v5668, 1.442695
        %v5798 = vpow.pop %v5797
        %v5799 = vmul.f32 %v5669, 1.442695
        %v5800 = vpow.pop %v5799
        %v5801 = vmul.f32 %v5670, 1.442695
        %v5802 = vpow.pop %v5801
        %v5803 = vmul.f32 %v5671, 1.442695
        %v5804 = vpow.pop %v5803
        %v5805 = vmul.f32 %v5672, 1.442695
        %v5806 = vpow.pop %v5805
        %v5807 = vmul.f32 %v5673, 1.442695
        %v5808 = vpow.pop %v5807
        %v5809 = vmul.f32 %v5674, 1.442695
        %v5810 = vpow.pop %v5809
        %v5811 = vmul.f32 %v5675, 1.442695
        %v5812 = vpow.pop %v5811
        %v5813 = vmul.f32 %v5676, 1.442695
        %v5814 = vpow.pop %v5813
        %v5815 = vmul.f32 %v5677, 1.442695
        %v5816 = vpow.pop %v5815
        %v5817 = vmul.f32 %v5678, 1.442695
        %v5818 = vpow.pop %v5817
        %v5819 = vmul.f32 %v5679, 1.442695
        %v5820 = vpow.pop %v5819
        %v5821 = vmul.f32 %v5680, 1.442695
        %v5822 = vpow.pop %v5821
        %v5823 = vmul.f32 %v5681, 1.442695
        %v5824 = vpow.pop %v5823
        %v5825 = vmul.f32 %v5682, 1.442695
        %v5826 = vpow.pop %v5825
        %v5827 = vmul.f32 %v5683, 1.442695
        %v5828 = vpow.pop %v5827
        %v5829 = vmul.f32 %v5684, 1.442695
        %v5830 = vpow.pop %v5829
        %v5831 = vmul.f32 %v5685, 1.442695
        %v5832 = vpow.pop %v5831
        %v5833 = vmul.f32 %v5686, 1.442695
        %v5834 = vpow.pop %v5833
        %v5835 = vmul.f32 %v5687, 1.442695
        %v5836 = vpow.pop %v5835
        %v5837 = vmul.f32 %v5688, 1.442695
        %v5838 = vpow.pop %v5837
        %v5839 = vmul.f32 %v5689, 1.442695
        %v5840 = vpow.pop %v5839
        %v5841 = vmul.f32 %v5690, 1.442695
        %v5842 = vpow.pop %v5841
        %v5843 = vmul.f32 %v5691, 1.442695
        %v5844 = vpow.pop %v5843
        %v5845 = vmul.f32 %v5692, 1.442695
        %v5846 = vpow.pop %v5845
        %v5847 = vmul.f32 %v5693, 1.442695
        %v5848 = vpow.pop %v5847
        %v5849 = vmul.f32 %v5694, 1.442695
        %v5850 = vpow.pop %v5849
        %v5851 = vmul.f32 %v5695, 1.442695
        %v5852 = vpow.pop %v5851
        %v5853 = vmul.f32 %v5696, 1.442695
        %v5854 = vpow.pop %v5853
        %v5855 = vmul.f32 %v5697, 1.442695
        %v5856 = vpow.pop %v5855
        %v5857 = vmul.f32 %v5698, 1.442695
        %v5858 = vpow.pop %v5857
        %v5859 = vmul.f32 %v5699, 1.442695
        %v5860 = vpow.pop %v5859
        %v5861 = vmul.f32 %v5700, 1.442695
        %v5862 = vpow.pop %v5861
        %v5863 = vmul.f32 %v5701, 1.442695
        %v5864 = vpow.pop %v5863
        %v5865 = vmul.f32 %v5702, 1.442695
        %v5866 = vpow.pop %v5865
        %v5867 = vmul.f32 %v5703, 1.442695
        %v5868 = vpow.pop %v5867
        %v5869 = vmul.f32 %v5704, 1.442695
        %v5870 = vpow.pop %v5869
        %v5871 = vmul.f32 %v5705, 1.442695
        %v5872 = vpow.pop %v5871
        %v5873 = vmul.f32 %v5706, 1.442695
        %v5874 = vpow.pop %v5873
        %v5875 = vmul.f32 %v5707, 1.442695
        %v5876 = vpow.pop %v5875
        %v5877 = vmul.f32 %v5708, 1.442695
        %v5878 = vpow.pop %v5877
        %v5879 = vmul.f32 %v5709, 1.442695
        %v5880 = vpow.pop %v5879
        %v5881 = vmul.f32 %v5710, 1.442695
        %v5882 = vpow.pop %v5881
        %v5883 = vmul.f32 %v5711, 1.442695
        %v5884 = vpow.pop %v5883
        %v5885 = vmul.f32 %v5712, 1.442695
        %v5886 = vpow.pop %v5885
        %v5887 = vmul.f32 %v5713, 1.442695
        %v5888 = vpow.pop %v5887
        %v5889 = vmul.f32 %v5714, 1.442695
        %v5890 = vpow.pop %v5889
        %v5891 = vmul.f32 %v5715, 1.442695
        %v5892 = vpow.pop %v5891
        %v5893 = vmul.f32 %v5716, 1.442695
        %v5894 = vpow.pop %v5893
        %v5895 = vmul.f32 %v5717, 1.442695
        %v5896 = vpow.pop %v5895
        %v5897 = vmul.f32 %v5718, 1.442695
        %v5898 = vpow.pop %v5897
        %v5899 = vmul.f32 %v5719, 1.442695
        %v5900 = vpow.pop %v5899
        %v5901 = vmul.f32 %v5720, 1.442695
        %v5902 = vpow.pop %v5901
        %v5903 = vmul.f32 %v5721, 1.442695
        %v5904 = vpow.pop %v5903
        %v5905 = vmul.f32 %v5722, 1.442695
        %v5906 = vpow.pop %v5905
        %v5907 = vmul.f32 %v5723, 1.442695
        %v5908 = vpow.pop %v5907
        %v5909 = vmul.f32 %v5724, 1.442695
        %v5910 = vpow.pop %v5909
        %v5911 = vmul.f32 %v5725, 1.442695
        %v5912 = vpow.pop %v5911
        %v5913 = vmul.f32 %v5726, 1.442695
        %v5914 = vpow.pop %v5913
        %v5915 = vmul.f32 %v5727, 1.442695
        %v5916 = vpow.pop %v5915
        %v5917 = vmul.f32 %v5728, 1.442695
        %v5918 = vpow.pop %v5917
        %v5919 = vmul.f32 %v5729, 1.442695
        %v5920 = vpow.pop %v5919
        %v5921 = vmul.f32 %v5730, 1.442695
        %v5922 = vpow.pop %v5921
        %v5923 = vmul.f32 %v5731, 1.442695
        %v5924 = vpow.pop %v5923
        %v5925 = vmul.f32 %v5732, 1.442695
        %v5926 = vpow.pop %v5925
        %v5927 = vmul.f32 %v5733, 1.442695
        %v5928 = vpow.pop %v5927
        %v5929 = vmul.f32 %v5734, 1.442695
        %v5930 = vpow.pop %v5929
        %v5931 = vmul.f32 %v5735, 1.442695
        %v5932 = vpow.pop %v5931
        %v5933 = vmul.f32 %v5736, 1.442695
        %v5934 = vpow.pop %v5933
        %v5935 = vmul.f32 %v5737, 1.442695
        %v5936 = vpow.pop %v5935
        %v5937 = vmul.f32 %v5738, 1.442695
        %v5938 = vpow.pop %v5937
        %v5939 = vmul.f32 %v5739, 1.442695
        %v5940 = vpow.pop %v5939
        %v5941 = vmul.f32 %v5740, 1.442695
        %v5942 = vpow.pop %v5941
        %v5943 = vmul.f32 %v5741, 1.442695
        %v5944 = vpow.pop %v5943
        %v5945 = vmul.f32 %v5742, 1.442695
        %v5946 = vpow.pop %v5945
        %v5947 = vmul.f32 %v5743, 1.442695
        %v5948 = vpow.pop %v5947
        %v5949 = vmul.f32 %v5744, 1.442695
        %v5950 = vpow.pop %v5949
        %v5951 = vmul.f32 %v5745, 1.442695
        %v5952 = vpow.pop %v5951
        %v5953 = vmul.f32 %v5746, 1.442695
        %v5954 = vpow.pop %v5953
        %v5955 = vmul.f32 %v5747, 1.442695
        %v5956 = vpow.pop %v5955
        %v5957 = vmul.f32 %v5748, 1.442695
        %v5958 = vpow.pop %v5957
        %v5959 = vmul.f32 %v5749, 1.442695
        %v5960 = vpow.pop %v5959
        %v5961 = vmul.f32 %v5750, 1.442695
        %v5962 = vpow.pop %v5961
        %v5963 = vmul.f32 %v5751, 1.442695
        %v5964 = vpow.pop %v5963
        %v5965 = vmul.f32 %v5752, 1.442695
        %v5966 = vpow.pop %v5965
        %v5967 = vmul.f32 %v5753, 1.442695
        %v5968 = vpow.pop %v5967
        %v5969 = vmul.f32 %v5754, 1.442695
        %v5970 = vpow.pop %v5969
        %v5971 = vmul.f32 %v5755, 1.442695
        %v5972 = vpow.pop %v5971
        %v5973 = vmul.f32 %v5756, 1.442695
        %v5974 = vpow.pop %v5973
        %v5975 = vmul.f32 %v5757, 1.442695
        %v5976 = vpow.pop %v5975
        %v5977 = vmul.f32 %v5758, 1.442695
        %v5978 = vpow.pop %v5977
        %v5979 = vmul.f32 %v5759, 1.442695
        %v5980 = vpow.pop %v5979
        %v5981 = vmul.f32 %v5760, 1.442695
        %v5982 = vpow.pop %v5981
        %v5983 = vmul.f32 %v5761, 1.442695
        %v5984 = vpow.pop %v5983
        %v5985 = vmul.f32 %v5762, 1.442695
        %v5986 = vpow.pop %v5985
        %v5987 = vmul.f32 %v5763, 1.442695
        %v5988 = vpow.pop %v5987
        %v5989 = vmul.f32 %v5764, 1.442695
        %v5990 = vpow.pop %v5989
        %v5991 = vmul.f32 %v5765, 1.442695
        %v5992 = vpow.pop %v5991
        %v5993 = vmul.f32 %v5766, 1.442695
        %v5994 = vpow.pop %v5993
        %v5995 = vmul.f32 %v5767, 1.442695
        %v5996 = vpow.pop %v5995
        %v5997 = vmul.f32 %v5768, 1.442695
        %v5998 = vpow.pop %v5997
        %v5999 = vmul.f32 %v5769, 1.442695
        %v6000 = vpow.pop %v5999
        %v6001 = vmul.f32 %v5770, 1.442695
        %v6002 = vpow.pop %v6001
        %v6003 = vmul.f32 %v5771, 1.442695
        %v6004 = vpow.pop %v6003
        %v6005 = vmul.f32 %v5772, 1.442695
        %v6006 = vpow.pop %v6005
        %v6007 = vmul.f32 %v5773, 1.442695
        %v6008 = vpow.pop %v6007
        %v6009 = vmul.f32 %v5774, 1.442695
        %v6010 = vpow.pop %v6009
        %v6011 = vmul.f32 %v5775, 1.442695
        %v6012 = vpow.pop %v6011
        %v6013 = vmul.f32 %v5776, 1.442695
        %v6014 = vpow.pop %v6013
        %v6015 = vmul.f32 %v5777, 1.442695
        %v6016 = vpow.pop %v6015
        %v6017 = vmul.f32 %v5778, 1.442695
        %v6018 = vpow.pop %v6017
        %v6019 = vmul.f32 %v5779, 1.442695
        %v6020 = vpow.pop %v6019
        %v6021 = vmul.f32 %v5780, 1.442695
        %v6022 = vpow.pop %v6021
        %v6023 = vmul.f32 %v5781, 1.442695
        %v6024 = vpow.pop %v6023
        %v6025 = vmul.f32 %v5782, 1.442695
        %v6026 = vpow.pop %v6025
        %v6027 = vmul.f32 %v5783, 1.442695
        %v6028 = vpow.pop %v6027
        %v6029 = vmul.f32 %v5784, 1.442695
        %v6030 = vpow.pop %v6029
        %v6031 = vmul.f32 %v5785, 1.442695
        %v6032 = vpow.pop %v6031
        %v6033 = vmul.f32 %v5786, 1.442695
        %v6034 = vpow.pop %v6033
        %v6035 = vmul.f32 %v5787, 1.442695
        %v6036 = vpow.pop %v6035
        %v6037 = vmul.f32 %v5788, 1.442695
        %v6038 = vpow.pop %v6037
        %v6039 = vmul.f32 %v5789, 1.442695
        %v6040 = vpow.pop %v6039
        %v6041 = vmul.f32 %v5790, 1.442695
        %v6042 = vpow.pop %v6041
        %v6043 = vmul.f32 %v5791, 1.442695
        %v6044 = vpow.pop %v6043
        %v6045 = vmul.f32 %v5792, 1.442695
        %v6046 = vpow.pop %v6045
        %v6047 = vmul.f32 %v5793, 1.442695
        %v6048 = vpow.pop %v6047
        %v6049 = vmul.f32 %v5794, 1.442695
        %v6050 = vpow.pop %v6049
        %v6051 = vadd.f32 %v5796, %v5812
        %v6052 = vadd.f32 %v6051, %v5828
        %v6053 = vadd.f32 %v6052, %v5844
        %v6054 = vadd.f32 %v6053, %v5860
        %v6055 = vadd.f32 %v6054, %v5876
        %v6056 = vadd.f32 %v6055, %v5892
        %v6057 = vadd.f32 %v6056, %v5908
        %v6058 = vadd.f32 %v6057, %v5924
        %v6059 = vadd.f32 %v6058, %v5940
        %v6060 = vadd.f32 %v6059, %v5956
        %v6061 = vadd.f32 %v6060, %v5972
        %v6062 = vadd.f32 %v6061, %v5988
        %v6063 = vadd.f32 %v6062, %v6004
        %v6064 = vadd.f32 %v6063, %v6020
        %v6065 = vadd.f32 %v6064, %v6036
        %v6066 = vrot.slane %v6065, 4
        %v6067 = vadd.f32 %v6065, %v6066
        %v6068 = vrot.slane %v6067, 2
        %v6069 = vadd.f32 %v6067, %v6068
        %v6070 = vrot.slane %v6069, 1
        %v6071 = vadd.f32 %v6069, %v6070
        %v6072 = vadd.f32 %v5798, %v5814
        %v6073 = vadd.f32 %v6072, %v5830
        %v6074 = vadd.f32 %v6073, %v5846
        %v6075 = vadd.f32 %v6074, %v5862
        %v6076 = vadd.f32 %v6075, %v5878
        %v6077 = vadd.f32 %v6076, %v5894
        %v6078 = vadd.f32 %v6077, %v5910
        %v6079 = vadd.f32 %v6078, %v5926
        %v6080 = vadd.f32 %v6079, %v5942
        %v6081 = vadd.f32 %v6080, %v5958
        %v6082 = vadd.f32 %v6081, %v5974
        %v6083 = vadd.f32 %v6082, %v5990
        %v6084 = vadd.f32 %v6083, %v6006
        %v6085 = vadd.f32 %v6084, %v6022
        %v6086 = vadd.f32 %v6085, %v6038
        %v6087 = vrot.slane %v6086, 4
        %v6088 = vadd.f32 %v6086, %v6087
        %v6089 = vrot.slane %v6088, 2
        %v6090 = vadd.f32 %v6088, %v6089
        %v6091 = vrot.slane %v6090, 1
        %v6092 = vadd.f32 %v6090, %v6091
        %v6093 = vadd.f32 %v5800, %v5816
        %v6094 = vadd.f32 %v6093, %v5832
        %v6095 = vadd.f32 %v6094, %v5848
        %v6096 = vadd.f32 %v6095, %v5864
        %v6097 = vadd.f32 %v6096, %v5880
        %v6098 = vadd.f32 %v6097, %v5896
        %v6099 = vadd.f32 %v6098, %v5912
        %v6100 = vadd.f32 %v6099, %v5928
        %v6101 = vadd.f32 %v6100, %v5944
        %v6102 = vadd.f32 %v6101, %v5960
        %v6103 = vadd.f32 %v6102, %v5976
        %v6104 = vadd.f32 %v6103, %v5992
        %v6105 = vadd.f32 %v6104, %v6008
        %v6106 = vadd.f32 %v6105, %v6024
        %v6107 = vadd.f32 %v6106, %v6040
        %v6108 = vrot.slane %v6107, 4
        %v6109 = vadd.f32 %v6107, %v6108
        %v6110 = vrot.slane %v6109, 2
        %v6111 = vadd.f32 %v6109, %v6110
        %v6112 = vrot.slane %v6111, 1
        %v6113 = vadd.f32 %v6111, %v6112
        %v6114 = vadd.f32 %v5802, %v5818
        %v6115 = vadd.f32 %v6114, %v5834
        %v6116 = vadd.f32 %v6115, %v5850
        %v6117 = vadd.f32 %v6116, %v5866
        %v6118 = vadd.f32 %v6117, %v5882
        %v6119 = vadd.f32 %v6118, %v5898
        %v6120 = vadd.f32 %v6119, %v5914
        %v6121 = vadd.f32 %v6120, %v5930
        %v6122 = vadd.f32 %v6121, %v5946
        %v6123 = vadd.f32 %v6122, %v5962
        %v6124 = vadd.f32 %v6123, %v5978
        %v6125 = vadd.f32 %v6124, %v5994
        %v6126 = vadd.f32 %v6125, %v6010
        %v6127 = vadd.f32 %v6126, %v6026
        %v6128 = vadd.f32 %v6127, %v6042
        %v6129 = vrot.slane %v6128, 4
        %v6130 = vadd.f32 %v6128, %v6129
        %v6131 = vrot.slane %v6130, 2
        %v6132 = vadd.f32 %v6130, %v6131
        %v6133 = vrot.slane %v6132, 1
        %v6134 = vadd.f32 %v6132, %v6133
        %v6135 = vadd.f32 %v5804, %v5820
        %v6136 = vadd.f32 %v6135, %v5836
        %v6137 = vadd.f32 %v6136, %v5852
        %v6138 = vadd.f32 %v6137, %v5868
        %v6139 = vadd.f32 %v6138, %v5884
        %v6140 = vadd.f32 %v6139, %v5900
        %v6141 = vadd.f32 %v6140, %v5916
        %v6142 = vadd.f32 %v6141, %v5932
        %v6143 = vadd.f32 %v6142, %v5948
        %v6144 = vadd.f32 %v6143, %v5964
        %v6145 = vadd.f32 %v6144, %v5980
        %v6146 = vadd.f32 %v6145, %v5996
        %v6147 = vadd.f32 %v6146, %v6012
        %v6148 = vadd.f32 %v6147, %v6028
        %v6149 = vadd.f32 %v6148, %v6044
        %v6150 = vrot.slane %v6149, 4
        %v6151 = vadd.f32 %v6149, %v6150
        %v6152 = vrot.slane %v6151, 2
        %v6153 = vadd.f32 %v6151, %v6152
        %v6154 = vrot.slane %v6153, 1
        %v6155 = vadd.f32 %v6153, %v6154
        %v6156 = vadd.f32 %v5806, %v5822
        %v6157 = vadd.f32 %v6156, %v5838
        %v6158 = vadd.f32 %v6157, %v5854
        %v6159 = vadd.f32 %v6158, %v5870
        %v6160 = vadd.f32 %v6159, %v5886
        %v6161 = vadd.f32 %v6160, %v5902
        %v6162 = vadd.f32 %v6161, %v5918
        %v6163 = vadd.f32 %v6162, %v5934
        %v6164 = vadd.f32 %v6163, %v5950
        %v6165 = vadd.f32 %v6164, %v5966
        %v6166 = vadd.f32 %v6165, %v5982
        %v6167 = vadd.f32 %v6166, %v5998
        %v6168 = vadd.f32 %v6167, %v6014
        %v6169 = vadd.f32 %v6168, %v6030
        %v6170 = vadd.f32 %v6169, %v6046
        %v6171 = vrot.slane %v6170, 4
        %v6172 = vadd.f32 %v6170, %v6171
        %v6173 = vrot.slane %v6172, 2
        %v6174 = vadd.f32 %v6172, %v6173
        %v6175 = vrot.slane %v6174, 1
        %v6176 = vadd.f32 %v6174, %v6175
        %v6177 = vadd.f32 %v5808, %v5824
        %v6178 = vadd.f32 %v6177, %v5840
        %v6179 = vadd.f32 %v6178, %v5856
        %v6180 = vadd.f32 %v6179, %v5872
        %v6181 = vadd.f32 %v6180, %v5888
        %v6182 = vadd.f32 %v6181, %v5904
        %v6183 = vadd.f32 %v6182, %v5920
        %v6184 = vadd.f32 %v6183, %v5936
        %v6185 = vadd.f32 %v6184, %v5952
        %v6186 = vadd.f32 %v6185, %v5968
        %v6187 = vadd.f32 %v6186, %v5984
        %v6188 = vadd.f32 %v6187, %v6000
        %v6189 = vadd.f32 %v6188, %v6016
        %v6190 = vadd.f32 %v6189, %v6032
        %v6191 = vadd.f32 %v6190, %v6048
        %v6192 = vrot.slane %v6191, 4
        %v6193 = vadd.f32 %v6191, %v6192
        %v6194 = vrot.slane %v6193, 2
        %v6195 = vadd.f32 %v6193, %v6194
        %v6196 = vrot.slane %v6195, 1
        %v6197 = vadd.f32 %v6195, %v6196
        %v6198 = vadd.f32 %v5810, %v5826
        %v6199 = vadd.f32 %v6198, %v5842
        %v6200 = vadd.f32 %v6199, %v5858
        %v6201 = vadd.f32 %v6200, %v5874
        %v6202 = vadd.f32 %v6201, %v5890
        %v6203 = vadd.f32 %v6202, %v5906
        %v6204 = vadd.f32 %v6203, %v5922
        %v6205 = vadd.f32 %v6204, %v5938
        %v6206 = vadd.f32 %v6205, %v5954
        %v6207 = vadd.f32 %v6206, %v5970
        %v6208 = vadd.f32 %v6207, %v5986
        %v6209 = vadd.f32 %v6208, %v6002
        %v6210 = vadd.f32 %v6209, %v6018
        %v6211 = vadd.f32 %v6210, %v6034
        %v6212 = vadd.f32 %v6211, %v6050
        %v6213 = vrot.slane %v6212, 4
        %v6214 = vadd.f32 %v6212, %v6213
        %v6215 = vrot.slane %v6214, 2
        %v6216 = vadd.f32 %v6214, %v6215
        %v6217 = vrot.slane %v6216, 1
        %v6218 = vadd.f32 %v6216, %v6217
        %v6219 = vrcp.pop %v6071
        %v6220 = vmul.f32 %v6071, %v6219
        %v6221 = vsub.f32 1.0, %v6220
        %v6222 = vmul.f32 %v6219, %v6221
        %v6223 = vadd.f32 %v6219, %v6222
        %vm6224 = vweird.f32 %v6071
        %vm6225 = vweird.f32 %v6219
        %vm6226 = vmor %vm6224, %vm6225
        %v6227 = vsel %vm6226, %v6219, %v6223
        %v6228 = vand.u32 2147483647, %v6071
        %vm6229 = vcmp.eq.f32.partialorder %v6228, 8.507059e+37
        %v6230 = vand.u32 %v6071, 2147483648
        %v6231 = vor.u32 1.1754944e-38, %v6230
        %v6232 = vsel %vm6229, %v6231, %v6227
        %v6233 = vrcp.pop %v6092
        %v6234 = vmul.f32 %v6092, %v6233
        %v6235 = vsub.f32 1.0, %v6234
        %v6236 = vmul.f32 %v6233, %v6235
        %v6237 = vadd.f32 %v6233, %v6236
        %vm6238 = vweird.f32 %v6092
        %vm6239 = vweird.f32 %v6233
        %vm6240 = vmor %vm6238, %vm6239
        %v6241 = vsel %vm6240, %v6233, %v6237
        %v6242 = vand.u32 2147483647, %v6092
        %vm6243 = vcmp.eq.f32.partialorder %v6242, 8.507059e+37
        %v6244 = vand.u32 %v6092, 2147483648
        %v6245 = vor.u32 1.1754944e-38, %v6244
        %v6246 = vsel %vm6243, %v6245, %v6241
        %v6247 = vrcp.pop %v6113
        %v6248 = vmul.f32 %v6113, %v6247
        %v6249 = vsub.f32 1.0, %v6248
        %v6250 = vmul.f32 %v6247, %v6249
        %v6251 = vadd.f32 %v6247, %v6250
        %vm6252 = vweird.f32 %v6113
        %vm6253 = vweird.f32 %v6247
        %vm6254 = vmor %vm6252, %vm6253
        %v6255 = vsel %vm6254, %v6247, %v6251
        %v6256 = vand.u32 2147483647, %v6113
        %vm6257 = vcmp.eq.f32.partialorder %v6256, 8.507059e+37
        %v6258 = vand.u32 %v6113, 2147483648
        %v6259 = vor.u32 1.1754944e-38, %v6258
        %v6260 = vsel %vm6257, %v6259, %v6255
        %v6261 = vrcp.pop %v6134
        %v6262 = vmul.f32 %v6134, %v6261
        %v6263 = vsub.f32 1.0, %v6262
        %v6264 = vmul.f32 %v6261, %v6263
        %v6265 = vadd.f32 %v6261, %v6264
        %vm6266 = vweird.f32 %v6134
        %vm6267 = vweird.f32 %v6261
        %vm6268 = vmor %vm6266, %vm6267
        %v6269 = vsel %vm6268, %v6261, %v6265
        %v6270 = vand.u32 2147483647, %v6134
        %vm6271 = vcmp.eq.f32.partialorder %v6270, 8.507059e+37
        %v6272 = vand.u32 %v6134, 2147483648
        %v6273 = vor.u32 1.1754944e-38, %v6272
        %v6274 = vsel %vm6271, %v6273, %v6269
        %v6275 = vrcp.pop %v6155
        %v6276 = vmul.f32 %v6155, %v6275
        %v6277 = vsub.f32 1.0, %v6276
        %v6278 = vmul.f32 %v6275, %v6277
        %v6279 = vadd.f32 %v6275, %v6278
        %vm6280 = vweird.f32 %v6155
        %vm6281 = vweird.f32 %v6275
        %vm6282 = vmor %vm6280, %vm6281
        %v6283 = vsel %vm6282, %v6275, %v6279
        %v6284 = vand.u32 2147483647, %v6155
        %vm6285 = vcmp.eq.f32.partialorder %v6284, 8.507059e+37
        %v6286 = vand.u32 %v6155, 2147483648
        %v6287 = vor.u32 1.1754944e-38, %v6286
        %v6288 = vsel %vm6285, %v6287, %v6283
        %v6289 = vrcp.pop %v6176
        %v6290 = vmul.f32 %v6176, %v6289
        %v6291 = vsub.f32 1.0, %v6290
        %v6292 = vmul.f32 %v6289, %v6291
        %v6293 = vadd.f32 %v6289, %v6292
        %vm6294 = vweird.f32 %v6176
        %vm6295 = vweird.f32 %v6289
        %vm6296 = vmor %vm6294, %vm6295
        %v6297 = vsel %vm6296, %v6289, %v6293
        %v6298 = vand.u32 2147483647, %v6176
        %vm6299 = vcmp.eq.f32.partialorder %v6298, 8.507059e+37
        %v6300 = vand.u32 %v6176, 2147483648
        %v6301 = vor.u32 1.1754944e-38, %v6300
        %v6302 = vsel %vm6299, %v6301, %v6297
        %v6303 = vrcp.pop %v6197
        %v6304 = vmul.f32 %v6197, %v6303
        %v6305 = vsub.f32 1.0, %v6304
        %v6306 = vmul.f32 %v6303, %v6305
        %v6307 = vadd.f32 %v6303, %v6306
        %vm6308 = vweird.f32 %v6197
        %vm6309 = vweird.f32 %v6303
        %vm6310 = vmor %vm6308, %vm6309
        %v6311 = vsel %vm6310, %v6303, %v6307
        %v6312 = vand.u32 2147483647, %v6197
        %vm6313 = vcmp.eq.f32.partialorder %v6312, 8.507059e+37
        %v6314 = vand.u32 %v6197, 2147483648
        %v6315 = vor.u32 1.1754944e-38, %v6314
        %v6316 = vsel %vm6313, %v6315, %v6311
        %v6317 = vrcp.pop %v6218
        %v6318 = vmul.f32 %v6218, %v6317
        %v6319 = vsub.f32 1.0, %v6318
        %v6320 = vmul.f32 %v6317, %v6319
        %v6321 = vadd.f32 %v6317, %v6320
        %vm6322 = vweird.f32 %v6218
        %vm6323 = vweird.f32 %v6317
        %vm6324 = vmor %vm6322, %vm6323
        %v6325 = vsel %vm6324, %v6317, %v6321
        %v6326 = vand.u32 2147483647, %v6218
        %vm6327 = vcmp.eq.f32.partialorder %v6326, 8.507059e+37
        %v6328 = vand.u32 %v6218, 2147483648
        %v6329 = vor.u32 1.1754944e-38, %v6328
        %v6330 = vsel %vm6327, %v6329, %v6325
        %v6331 = vmul.f32 %v5796, %v6232
        %v6332 = vmul.f32 %v5798, %v6246
        %v6333 = vmul.f32 %v5800, %v6260
        %v6334 = vmul.f32 %v5802, %v6274
        %v6335 = vmul.f32 %v5804, %v6288
        %v6336 = vmul.f32 %v5806, %v6302
        %v6337 = vmul.f32 %v5808, %v6316
        %v6338 = vmul.f32 %v5810, %v6330
        %v6339 = vmul.f32 %v5812, %v6232
        %v6340 = vmul.f32 %v5814, %v6246
        %v6341 = vmul.f32 %v5816, %v6260
        %v6342 = vmul.f32 %v5818, %v6274
        %v6343 = vmul.f32 %v5820, %v6288
        %v6344 = vmul.f32 %v5822, %v6302
        %v6345 = vmul.f32 %v5824, %v6316
        %v6346 = vmul.f32 %v5826, %v6330
        %v6347 = vmul.f32 %v5828, %v6232
        %v6348 = vmul.f32 %v5830, %v6246
        %v6349 = vmul.f32 %v5832, %v6260
        %v6350 = vmul.f32 %v5834, %v6274
        %v6351 = vmul.f32 %v5836, %v6288
        %v6352 = vmul.f32 %v5838, %v6302
        %v6353 = vmul.f32 %v5840, %v6316
        %v6354 = vmul.f32 %v5842, %v6330
        %v6355 = vmul.f32 %v5844, %v6232
        %v6356 = vmul.f32 %v5846, %v6246
        %v6357 = vmul.f32 %v5848, %v6260
        %v6358 = vmul.f32 %v5850, %v6274
        %v6359 = vmul.f32 %v5852, %v6288
        %v6360 = vmul.f32 %v5854, %v6302
        %v6361 = vmul.f32 %v5856, %v6316
        %v6362 = vmul.f32 %v5858, %v6330
        %v6363 = vmul.f32 %v5860, %v6232
        %v6364 = vmul.f32 %v5862, %v6246
        %v6365 = vmul.f32 %v5864, %v6260
        %v6366 = vmul.f32 %v5866, %v6274
        %v6367 = vmul.f32 %v5868, %v6288
        %v6368 = vmul.f32 %v5870, %v6302
        %v6369 = vmul.f32 %v5872, %v6316
        %v6370 = vmul.f32 %v5874, %v6330
        %v6371 = vmul.f32 %v5876, %v6232
        %v6372 = vmul.f32 %v5878, %v6246
        %v6373 = vmul.f32 %v5880, %v6260
        %v6374 = vmul.f32 %v5882, %v6274
        %v6375 = vmul.f32 %v5884, %v6288
        %v6376 = vmul.f32 %v5886, %v6302
        %v6377 = vmul.f32 %v5888, %v6316
        %v6378 = vmul.f32 %v5890, %v6330
        %v6379 = vmul.f32 %v5892, %v6232
        %v6380 = vmul.f32 %v5894, %v6246
        %v6381 = vmul.f32 %v5896, %v6260
        %v6382 = vmul.f32 %v5898, %v6274
        %v6383 = vmul.f32 %v5900, %v6288
        %v6384 = vmul.f32 %v5902, %v6302
        %v6385 = vmul.f32 %v5904, %v6316
        %v6386 = vmul.f32 %v5906, %v6330
        %v6387 = vmul.f32 %v5908, %v6232
        %v6388 = vmul.f32 %v5910, %v6246
        %v6389 = vmul.f32 %v5912, %v6260
        %v6390 = vmul.f32 %v5914, %v6274
        %v6391 = vmul.f32 %v5916, %v6288
        %v6392 = vmul.f32 %v5918, %v6302
        %v6393 = vmul.f32 %v5920, %v6316
        %v6394 = vmul.f32 %v5922, %v6330
        %v6395 = vmul.f32 %v5924, %v6232
        %v6396 = vmul.f32 %v5926, %v6246
        %v6397 = vmul.f32 %v5928, %v6260
        %v6398 = vmul.f32 %v5930, %v6274
        %v6399 = vmul.f32 %v5932, %v6288
        %v6400 = vmul.f32 %v5934, %v6302
        %v6401 = vmul.f32 %v5936, %v6316
        %v6402 = vmul.f32 %v5938, %v6330
        %v6403 = vmul.f32 %v5940, %v6232
        %v6404 = vmul.f32 %v5942, %v6246
        %v6405 = vmul.f32 %v5944, %v6260
        %v6406 = vmul.f32 %v5946, %v6274
        %v6407 = vmul.f32 %v5948, %v6288
        %v6408 = vmul.f32 %v5950, %v6302
        %v6409 = vmul.f32 %v5952, %v6316
        %v6410 = vmul.f32 %v5954, %v6330
        %v6411 = vmul.f32 %v5956, %v6232
        %v6412 = vmul.f32 %v5958, %v6246
        %v6413 = vmul.f32 %v5960, %v6260
        %v6414 = vmul.f32 %v5962, %v6274
        %v6415 = vmul.f32 %v5964, %v6288
        %v6416 = vmul.f32 %v5966, %v6302
        %v6417 = vmul.f32 %v5968, %v6316
        %v6418 = vmul.f32 %v5970, %v6330
        %v6419 = vmul.f32 %v5972, %v6232
        %v6420 = vmul.f32 %v5974, %v6246
        %v6421 = vmul.f32 %v5976, %v6260
        %v6422 = vmul.f32 %v5978, %v6274
        %v6423 = vmul.f32 %v5980, %v6288
        %v6424 = vmul.f32 %v5982, %v6302
        %v6425 = vmul.f32 %v5984, %v6316
        %v6426 = vmul.f32 %v5986, %v6330
        %v6427 = vmul.f32 %v5988, %v6232
        %v6428 = vmul.f32 %v5990, %v6246
        %v6429 = vmul.f32 %v5992, %v6260
        %v6430 = vmul.f32 %v5994, %v6274
        %v6431 = vmul.f32 %v5996, %v6288
        %v6432 = vmul.f32 %v5998, %v6302
        %v6433 = vmul.f32 %v6000, %v6316
        %v6434 = vmul.f32 %v6002, %v6330
        %v6435 = vmul.f32 %v6004, %v6232
        %v6436 = vmul.f32 %v6006, %v6246
        %v6437 = vmul.f32 %v6008, %v6260
        %v6438 = vmul.f32 %v6010, %v6274
        %v6439 = vmul.f32 %v6012, %v6288
        %v6440 = vmul.f32 %v6014, %v6302
        %v6441 = vmul.f32 %v6016, %v6316
        %v6442 = vmul.f32 %v6018, %v6330
        %v6443 = vmul.f32 %v6020, %v6232
        %v6444 = vmul.f32 %v6022, %v6246
        %v6445 = vmul.f32 %v6024, %v6260
        %v6446 = vmul.f32 %v6026, %v6274
        %v6447 = vmul.f32 %v6028, %v6288
        %v6448 = vmul.f32 %v6030, %v6302
        %v6449 = vmul.f32 %v6032, %v6316
        %v6450 = vmul.f32 %v6034, %v6330
        %v6451 = vmul.f32 %v6036, %v6232
        %v6452 = vmul.f32 %v6038, %v6246
        %v6453 = vmul.f32 %v6040, %v6260
        %v6454 = vmul.f32 %v6042, %v6274
        %v6455 = vmul.f32 %v6044, %v6288
        %v6456 = vmul.f32 %v6046, %v6302
        %v6457 = vmul.f32 %v6048, %v6316
        %v6458 = vmul.f32 %v6050, %v6330
        %v6459 = vadd.f32 %v6331, %v6332
        %v6460 = vadd.f32 %v6459, %v6333
        %v6461 = vadd.f32 %v6460, %v6334
        %v6462 = vadd.f32 %v6461, %v6335
        %v6463 = vadd.f32 %v6462, %v6336
        %v6464 = vadd.f32 %v6463, %v6337
        %v6465 = vadd.f32 %v6464, %v6338
        %6466 = vadd.xlane.f32.xlu0 %v6465
        %v6467 = vpop.xlane.xlu0 %6466
        %v6468 = vadd.f32 %v6339, %v6340
        %v6469 = vadd.f32 %v6468, %v6341
        %v6470 = vadd.f32 %v6469, %v6342
        %v6471 = vadd.f32 %v6470, %v6343
        %v6472 = vadd.f32 %v6471, %v6344
        %v6473 = vadd.f32 %v6472, %v6345
        %v6474 = vadd.f32 %v6473, %v6346
        %6475 = vadd.xlane.f32.xlu0 %v6474
        %v6476 = vpop.xlane.xlu0 %6475
        %v6477 = vadd.f32 %v6347, %v6348
        %v6478 = vadd.f32 %v6477, %v6349
        %v6479 = vadd.f32 %v6478, %v6350
        %v6480 = vadd.f32 %v6479, %v6351
        %v6481 = vadd.f32 %v6480, %v6352
        %v6482 = vadd.f32 %v6481, %v6353
        %v6483 = vadd.f32 %v6482, %v6354
        %6484 = vadd.xlane.f32.xlu0 %v6483
        %v6485 = vpop.xlane.xlu0 %6484
        %v6486 = vadd.f32 %v6355, %v6356
        %v6487 = vadd.f32 %v6486, %v6357
        %v6488 = vadd.f32 %v6487, %v6358
        %v6489 = vadd.f32 %v6488, %v6359
        %v6490 = vadd.f32 %v6489, %v6360
        %v6491 = vadd.f32 %v6490, %v6361
        %v6492 = vadd.f32 %v6491, %v6362
        %6493 = vadd.xlane.f32.xlu0 %v6492
        %v6494 = vpop.xlane.xlu0 %6493
        %v6495 = vadd.f32 %v6363, %v6364
        %v6496 = vadd.f32 %v6495, %v6365
        %v6497 = vadd.f32 %v6496, %v6366
        %v6498 = vadd.f32 %v6497, %v6367
        %v6499 = vadd.f32 %v6498, %v6368
        %v6500 = vadd.f32 %v6499, %v6369
        %v6501 = vadd.f32 %v6500, %v6370
        %6502 = vadd.xlane.f32.xlu0 %v6501
        %v6503 = vpop.xlane.xlu0 %6502
        %v6504 = vadd.f32 %v6371, %v6372
        %v6505 = vadd.f32 %v6504, %v6373
        %v6506 = vadd.f32 %v6505, %v6374
        %v6507 = vadd.f32 %v6506, %v6375
        %v6508 = vadd.f32 %v6507, %v6376
        %v6509 = vadd.f32 %v6508, %v6377
        %v6510 = vadd.f32 %v6509, %v6378
        %6511 = vadd.xlane.f32.xlu0 %v6510
        %v6512 = vpop.xlane.xlu0 %6511
        %v6513 = vadd.f32 %v6379, %v6380
        %v6514 = vadd.f32 %v6513, %v6381
        %v6515 = vadd.f32 %v6514, %v6382
        %v6516 = vadd.f32 %v6515, %v6383
        %v6517 = vadd.f32 %v6516, %v6384
        %v6518 = vadd.f32 %v6517, %v6385
        %v6519 = vadd.f32 %v6518, %v6386
        %6520 = vadd.xlane.f32.xlu0 %v6519
        %v6521 = vpop.xlane.xlu0 %6520
        %v6522 = vadd.f32 %v6387, %v6388
        %v6523 = vadd.f32 %v6522, %v6389
        %v6524 = vadd.f32 %v6523, %v6390
        %v6525 = vadd.f32 %v6524, %v6391
        %v6526 = vadd.f32 %v6525, %v6392
        %v6527 = vadd.f32 %v6526, %v6393
        %v6528 = vadd.f32 %v6527, %v6394
        %6529 = vadd.xlane.f32.xlu0 %v6528
        %v6530 = vpop.xlane.xlu0 %6529
        %v6531 = vadd.f32 %v6395, %v6396
        %v6532 = vadd.f32 %v6531, %v6397
        %v6533 = vadd.f32 %v6532, %v6398
        %v6534 = vadd.f32 %v6533, %v6399
        %v6535 = vadd.f32 %v6534, %v6400
        %v6536 = vadd.f32 %v6535, %v6401
        %v6537 = vadd.f32 %v6536, %v6402
        %6538 = vadd.xlane.f32.xlu0 %v6537
        %v6539 = vpop.xlane.xlu0 %6538
        %v6540 = vadd.f32 %v6403, %v6404
        %v6541 = vadd.f32 %v6540, %v6405
        %v6542 = vadd.f32 %v6541, %v6406
        %v6543 = vadd.f32 %v6542, %v6407
        %v6544 = vadd.f32 %v6543, %v6408
        %v6545 = vadd.f32 %v6544, %v6409
        %v6546 = vadd.f32 %v6545, %v6410
        %6547 = vadd.xlane.f32.xlu0 %v6546
        %v6548 = vpop.xlane.xlu0 %6547
        %v6549 = vadd.f32 %v6411, %v6412
        %v6550 = vadd.f32 %v6549, %v6413
        %v6551 = vadd.f32 %v6550, %v6414
        %v6552 = vadd.f32 %v6551, %v6415
        %v6553 = vadd.f32 %v6552, %v6416
        %v6554 = vadd.f32 %v6553, %v6417
        %v6555 = vadd.f32 %v6554, %v6418
        %6556 = vadd.xlane.f32.xlu0 %v6555
        %v6557 = vpop.xlane.xlu0 %6556
        %v6558 = vadd.f32 %v6419, %v6420
        %v6559 = vadd.f32 %v6558, %v6421
        %v6560 = vadd.f32 %v6559, %v6422
        %v6561 = vadd.f32 %v6560, %v6423
        %v6562 = vadd.f32 %v6561, %v6424
        %v6563 = vadd.f32 %v6562, %v6425
        %v6564 = vadd.f32 %v6563, %v6426
        %6565 = vadd.xlane.f32.xlu0 %v6564
        %v6566 = vpop.xlane.xlu0 %6565
        %v6567 = vadd.f32 %v6427, %v6428
        %v6568 = vadd.f32 %v6567, %v6429
        %v6569 = vadd.f32 %v6568, %v6430
        %v6570 = vadd.f32 %v6569, %v6431
        %v6571 = vadd.f32 %v6570, %v6432
        %v6572 = vadd.f32 %v6571, %v6433
        %v6573 = vadd.f32 %v6572, %v6434
        %6574 = vadd.xlane.f32.xlu0 %v6573
        %v6575 = vpop.xlane.xlu0 %6574
        %v6576 = vadd.f32 %v6435, %v6436
        %v6577 = vadd.f32 %v6576, %v6437
        %v6578 = vadd.f32 %v6577, %v6438
        %v6579 = vadd.f32 %v6578, %v6439
        %v6580 = vadd.f32 %v6579, %v6440
        %v6581 = vadd.f32 %v6580, %v6441
        %v6582 = vadd.f32 %v6581, %v6442
        %6583 = vadd.xlane.f32.xlu0 %v6582
        %v6584 = vpop.xlane.xlu0 %6583
        %v6585 = vadd.f32 %v6443, %v6444
        %v6586 = vadd.f32 %v6585, %v6445
        %v6587 = vadd.f32 %v6586, %v6446
        %v6588 = vadd.f32 %v6587, %v6447
        %v6589 = vadd.f32 %v6588, %v6448
        %v6590 = vadd.f32 %v6589, %v6449
        %v6591 = vadd.f32 %v6590, %v6450
        %6592 = vadd.xlane.f32.xlu0 %v6591
        %v6593 = vpop.xlane.xlu0 %6592
        %v6594 = vadd.f32 %v6451, %v6452
        %v6595 = vadd.f32 %v6594, %v6453
        %v6596 = vadd.f32 %v6595, %v6454
        %v6597 = vadd.f32 %v6596, %v6455
        %v6598 = vadd.f32 %v6597, %v6456
        %v6599 = vadd.f32 %v6598, %v6457
        %v6600 = vadd.f32 %v6599, %v6458
        %6601 = vadd.xlane.f32.xlu0 %v6600
        %v6602 = vpop.xlane.xlu0 %6601
        %v6603 = vadd.f32 %v6467, 1e-06
        %v6604 = vadd.f32 %v6476, 1e-06
        %v6605 = vadd.f32 %v6485, 1e-06
        %v6606 = vadd.f32 %v6494, 1e-06
        %v6607 = vadd.f32 %v6503, 1e-06
        %v6608 = vadd.f32 %v6512, 1e-06
        %v6609 = vadd.f32 %v6521, 1e-06
        %v6610 = vadd.f32 %v6530, 1e-06
        %v6611 = vadd.f32 %v6539, 1e-06
        %v6612 = vadd.f32 %v6548, 1e-06
        %v6613 = vadd.f32 %v6557, 1e-06
        %v6614 = vadd.f32 %v6566, 1e-06
        %v6615 = vadd.f32 %v6575, 1e-06
        %v6616 = vadd.f32 %v6584, 1e-06
        %v6617 = vadd.f32 %v6593, 1e-06
        %v6618 = vadd.f32 %v6602, 1e-06
        %v6619 = vrcp.pop %v6603
        %v6620 = vrcp.pop %v6604
        %v6621 = vrcp.pop %v6605
        %v6622 = vrcp.pop %v6606
        %v6623 = vrcp.pop %v6607
        %v6624 = vrcp.pop %v6608
        %v6625 = vrcp.pop %v6609
        %v6626 = vrcp.pop %v6610
        %v6627 = vrcp.pop %v6611
        %v6628 = vrcp.pop %v6612
        %v6629 = vrcp.pop %v6613
        %v6630 = vrcp.pop %v6614
        %v6631 = vrcp.pop %v6615
        %v6632 = vrcp.pop %v6616
        %v6633 = vrcp.pop %v6617
        %v6634 = vrcp.pop %v6618
        %v6635 = vmul.f32 %v6331, %v6619
        %v6636 = vmul.f32 %v6332, %v6619
        %v6637 = vmul.f32 %v6333, %v6619
        %v6638 = vmul.f32 %v6334, %v6619
        %v6639 = vmul.f32 %v6335, %v6619
        %v6640 = vmul.f32 %v6336, %v6619
        %v6641 = vmul.f32 %v6337, %v6619
        %v6642 = vmul.f32 %v6338, %v6619
        %v6643 = vmul.f32 %v6339, %v6620
        %v6644 = vmul.f32 %v6340, %v6620
        %v6645 = vmul.f32 %v6341, %v6620
        %v6646 = vmul.f32 %v6342, %v6620
        %v6647 = vmul.f32 %v6343, %v6620
        %v6648 = vmul.f32 %v6344, %v6620
        %v6649 = vmul.f32 %v6345, %v6620
        %v6650 = vmul.f32 %v6346, %v6620
        %v6651 = vmul.f32 %v6347, %v6621
        %v6652 = vmul.f32 %v6348, %v6621
        %v6653 = vmul.f32 %v6349, %v6621
        %v6654 = vmul.f32 %v6350, %v6621
        %v6655 = vmul.f32 %v6351, %v6621
        %v6656 = vmul.f32 %v6352, %v6621
        %v6657 = vmul.f32 %v6353, %v6621
        %v6658 = vmul.f32 %v6354, %v6621
        %v6659 = vmul.f32 %v6355, %v6622
        %v6660 = vmul.f32 %v6356, %v6622
        %v6661 = vmul.f32 %v6357, %v6622
        %v6662 = vmul.f32 %v6358, %v6622
        %v6663 = vmul.f32 %v6359, %v6622
        %v6664 = vmul.f32 %v6360, %v6622
        %v6665 = vmul.f32 %v6361, %v6622
        %v6666 = vmul.f32 %v6362, %v6622
        %v6667 = vmul.f32 %v6363, %v6623
        %v6668 = vmul.f32 %v6364, %v6623
        %v6669 = vmul.f32 %v6365, %v6623
        %v6670 = vmul.f32 %v6366, %v6623
        %v6671 = vmul.f32 %v6367, %v6623
        %v6672 = vmul.f32 %v6368, %v6623
        %v6673 = vmul.f32 %v6369, %v6623
        %v6674 = vmul.f32 %v6370, %v6623
        %v6675 = vmul.f32 %v6371, %v6624
        %v6676 = vmul.f32 %v6372, %v6624
        %v6677 = vmul.f32 %v6373, %v6624
        %v6678 = vmul.f32 %v6374, %v6624
        %v6679 = vmul.f32 %v6375, %v6624
        %v6680 = vmul.f32 %v6376, %v6624
        %v6681 = vmul.f32 %v6377, %v6624
        %v6682 = vmul.f32 %v6378, %v6624
        %v6683 = vmul.f32 %v6379, %v6625
        %v6684 = vmul.f32 %v6380, %v6625
        %v6685 = vmul.f32 %v6381, %v6625
        %v6686 = vmul.f32 %v6382, %v6625
        %v6687 = vmul.f32 %v6383, %v6625
        %v6688 = vmul.f32 %v6384, %v6625
        %v6689 = vmul.f32 %v6385, %v6625
        %v6690 = vmul.f32 %v6386, %v6625
        %v6691 = vmul.f32 %v6387, %v6626
        %v6692 = vmul.f32 %v6388, %v6626
        %v6693 = vmul.f32 %v6389, %v6626
        %v6694 = vmul.f32 %v6390, %v6626
        %v6695 = vmul.f32 %v6391, %v6626
        %v6696 = vmul.f32 %v6392, %v6626
        %v6697 = vmul.f32 %v6393, %v6626
        %v6698 = vmul.f32 %v6394, %v6626
        %v6699 = vmul.f32 %v6395, %v6627
        %v6700 = vmul.f32 %v6396, %v6627
        %v6701 = vmul.f32 %v6397, %v6627
        %v6702 = vmul.f32 %v6398, %v6627
        %v6703 = vmul.f32 %v6399, %v6627
        %v6704 = vmul.f32 %v6400, %v6627
        %v6705 = vmul.f32 %v6401, %v6627
        %v6706 = vmul.f32 %v6402, %v6627
        %v6707 = vmul.f32 %v6403, %v6628
        %v6708 = vmul.f32 %v6404, %v6628
        %v6709 = vmul.f32 %v6405, %v6628
        %v6710 = vmul.f32 %v6406, %v6628
        %v6711 = vmul.f32 %v6407, %v6628
        %v6712 = vmul.f32 %v6408, %v6628
        %v6713 = vmul.f32 %v6409, %v6628
        %v6714 = vmul.f32 %v6410, %v6628
        %v6715 = vmul.f32 %v6411, %v6629
        %v6716 = vmul.f32 %v6412, %v6629
        %v6717 = vmul.f32 %v6413, %v6629
        %v6718 = vmul.f32 %v6414, %v6629
        %v6719 = vmul.f32 %v6415, %v6629
        %v6720 = vmul.f32 %v6416, %v6629
        %v6721 = vmul.f32 %v6417, %v6629
        %v6722 = vmul.f32 %v6418, %v6629
        %v6723 = vmul.f32 %v6419, %v6630
        %v6724 = vmul.f32 %v6420, %v6630
        %v6725 = vmul.f32 %v6421, %v6630
        %v6726 = vmul.f32 %v6422, %v6630
        %v6727 = vmul.f32 %v6423, %v6630
        %v6728 = vmul.f32 %v6424, %v6630
        %v6729 = vmul.f32 %v6425, %v6630
        %v6730 = vmul.f32 %v6426, %v6630
        %v6731 = vmul.f32 %v6427, %v6631
        %v6732 = vmul.f32 %v6428, %v6631
        %v6733 = vmul.f32 %v6429, %v6631
        %v6734 = vmul.f32 %v6430, %v6631
        %v6735 = vmul.f32 %v6431, %v6631
        %v6736 = vmul.f32 %v6432, %v6631
        %v6737 = vmul.f32 %v6433, %v6631
        %v6738 = vmul.f32 %v6434, %v6631
        %v6739 = vmul.f32 %v6435, %v6632
        %v6740 = vmul.f32 %v6436, %v6632
        %v6741 = vmul.f32 %v6437, %v6632
        %v6742 = vmul.f32 %v6438, %v6632
        %v6743 = vmul.f32 %v6439, %v6632
        %v6744 = vmul.f32 %v6440, %v6632
        %v6745 = vmul.f32 %v6441, %v6632
        %v6746 = vmul.f32 %v6442, %v6632
        %v6747 = vmul.f32 %v6443, %v6633
        %v6748 = vmul.f32 %v6444, %v6633
        %v6749 = vmul.f32 %v6445, %v6633
        %v6750 = vmul.f32 %v6446, %v6633
        %v6751 = vmul.f32 %v6447, %v6633
        %v6752 = vmul.f32 %v6448, %v6633
        %v6753 = vmul.f32 %v6449, %v6633
        %v6754 = vmul.f32 %v6450, %v6633
        %v6755 = vmul.f32 %v6451, %v6634
        %v6756 = vmul.f32 %v6452, %v6634
        %v6757 = vmul.f32 %v6453, %v6634
        %v6758 = vmul.f32 %v6454, %v6634
        %v6759 = vmul.f32 %v6455, %v6634
        %v6760 = vmul.f32 %v6456, %v6634
        %v6761 = vmul.f32 %v6457, %v6634
        %v6762 = vmul.f32 %v6458, %v6634
        %v6763 = vpack.c.bf16 %v6643, %v6635
        %v6764 = vpack.c.bf16 %v6644, %v6636
        %v6765 = vpack.c.bf16 %v6645, %v6637
        %v6766 = vpack.c.bf16 %v6646, %v6638
        %v6767 = vpack.c.bf16 %v6647, %v6639
        %v6768 = vpack.c.bf16 %v6648, %v6640
        %v6769 = vpack.c.bf16 %v6649, %v6641
        %v6770 = vpack.c.bf16 %v6650, %v6642
        %v6771 = vpack.c.bf16 %v6659, %v6651
        %v6772 = vpack.c.bf16 %v6660, %v6652
        %v6773 = vpack.c.bf16 %v6661, %v6653
        %v6774 = vpack.c.bf16 %v6662, %v6654
        %v6775 = vpack.c.bf16 %v6663, %v6655
        %v6776 = vpack.c.bf16 %v6664, %v6656
        %v6777 = vpack.c.bf16 %v6665, %v6657
        %v6778 = vpack.c.bf16 %v6666, %v6658
        %v6779 = vpack.c.bf16 %v6675, %v6667
        %v6780 = vpack.c.bf16 %v6676, %v6668
        %v6781 = vpack.c.bf16 %v6677, %v6669
        %v6782 = vpack.c.bf16 %v6678, %v6670
        %v6783 = vpack.c.bf16 %v6679, %v6671
        %v6784 = vpack.c.bf16 %v6680, %v6672
        %v6785 = vpack.c.bf16 %v6681, %v6673
        %v6786 = vpack.c.bf16 %v6682, %v6674
        %v6787 = vpack.c.bf16 %v6691, %v6683
        %v6788 = vpack.c.bf16 %v6692, %v6684
        %v6789 = vpack.c.bf16 %v6693, %v6685
        %v6790 = vpack.c.bf16 %v6694, %v6686
        %v6791 = vpack.c.bf16 %v6695, %v6687
        %v6792 = vpack.c.bf16 %v6696, %v6688
        %v6793 = vpack.c.bf16 %v6697, %v6689
        %v6794 = vpack.c.bf16 %v6698, %v6690
        %v6795 = vpack.c.bf16 %v6707, %v6699
        %v6796 = vpack.c.bf16 %v6708, %v6700
        %v6797 = vpack.c.bf16 %v6709, %v6701
        %v6798 = vpack.c.bf16 %v6710, %v6702
        %v6799 = vpack.c.bf16 %v6711, %v6703
        %v6800 = vpack.c.bf16 %v6712, %v6704
        %v6801 = vpack.c.bf16 %v6713, %v6705
        %v6802 = vpack.c.bf16 %v6714, %v6706
        %v6803 = vpack.c.bf16 %v6723, %v6715
        %v6804 = vpack.c.bf16 %v6724, %v6716
        %v6805 = vpack.c.bf16 %v6725, %v6717
        %v6806 = vpack.c.bf16 %v6726, %v6718
        %v6807 = vpack.c.bf16 %v6727, %v6719
        %v6808 = vpack.c.bf16 %v6728, %v6720
        %v6809 = vpack.c.bf16 %v6729, %v6721
        %v6810 = vpack.c.bf16 %v6730, %v6722
        %v6811 = vpack.c.bf16 %v6739, %v6731
        %v6812 = vpack.c.bf16 %v6740, %v6732
        %v6813 = vpack.c.bf16 %v6741, %v6733
        %v6814 = vpack.c.bf16 %v6742, %v6734
        %v6815 = vpack.c.bf16 %v6743, %v6735
        %v6816 = vpack.c.bf16 %v6744, %v6736
        %v6817 = vpack.c.bf16 %v6745, %v6737
        %v6818 = vpack.c.bf16 %v6746, %v6738
        %v6819 = vpack.c.bf16 %v6755, %v6747
        %v6820 = vpack.c.bf16 %v6756, %v6748
        %v6821 = vpack.c.bf16 %v6757, %v6749
        %v6822 = vpack.c.bf16 %v6758, %v6750
        %v6823 = vpack.c.bf16 %v6759, %v6751
        %v6824 = vpack.c.bf16 %v6760, %v6752
        %v6825 = vpack.c.bf16 %v6761, %v6753
        %v6826 = vpack.c.bf16 %v6762, %v6754
        %6827 = vmatpush.bf16.xpose.msra.mxu0 %v6819
        %6828 = vmatpush.bf16.xpose.msra.mxu0 %v6811
        %6829 = vmatpush.bf16.xpose.msra.mxu0 %v6803
        %6830 = vmatpush.bf16.xpose.msra.mxu0 %v6795
        %6831 = vmatpush.bf16.xpose.msra.mxu0 %v6787
        %6832 = vmatpush.bf16.xpose.msra.mxu0 %v6779
        %6833 = vmatpush.bf16.xpose.msra.mxu0 %v6771
        %6834 = vmatpush.bf16.xpose.msra.mxu0 %v6763
        %6835 = vmatmul.bf16.gmra.mxu0 %v719
        %v6836 = vpop.f32.mrf.mxu0
        %v6837 = vadd.f32 0.0, %v6836
        %v6838 = vpop.f32.mrf.mxu0
        %v6839 = vadd.f32 0.0, %v6838
        %6840 = vmatmul.bf16.gmra.mxu0 %v727
        %v6841 = vpop.f32.mrf.mxu0
        %v6842 = vadd.f32 0.0, %v6841
        %v6843 = vpop.f32.mrf.mxu0
        %v6844 = vadd.f32 0.0, %v6843
        %6845 = vdwg.mxu0
        %6846 = vmatpush.bf16.xpose.msra.mxu0 %v6820
        %6847 = vmatpush.bf16.xpose.msra.mxu0 %v6812
        %6848 = vmatpush.bf16.xpose.msra.mxu0 %v6804
        %6849 = vmatpush.bf16.xpose.msra.mxu0 %v6796
        %6850 = vmatpush.bf16.xpose.msra.mxu0 %v6788
        %6851 = vmatpush.bf16.xpose.msra.mxu0 %v6780
        %6852 = vmatpush.bf16.xpose.msra.mxu0 %v6772
        %6853 = vmatpush.bf16.xpose.msra.mxu0 %v6764
        %6854 = vmatmul.bf16.gmra.mxu0 %v720
        %v6855 = vpop.f32.mrf.mxu0
        %v6856 = vadd.f32 %v6837, %v6855
        %v6857 = vpop.f32.mrf.mxu0
        %v6858 = vadd.f32 %v6839, %v6857
        %6859 = vmatmul.bf16.gmra.mxu0 %v728
        %v6860 = vpop.f32.mrf.mxu0
        %v6861 = vadd.f32 %v6842, %v6860
        %v6862 = vpop.f32.mrf.mxu0
        %v6863 = vadd.f32 %v6844, %v6862
        %6864 = vdwg.mxu0
        %6865 = vmatpush.bf16.xpose.msra.mxu0 %v6821
        %6866 = vmatpush.bf16.xpose.msra.mxu0 %v6813
        %6867 = vmatpush.bf16.xpose.msra.mxu0 %v6805
        %6868 = vmatpush.bf16.xpose.msra.mxu0 %v6797
        %6869 = vmatpush.bf16.xpose.msra.mxu0 %v6789
        %6870 = vmatpush.bf16.xpose.msra.mxu0 %v6781
        %6871 = vmatpush.bf16.xpose.msra.mxu0 %v6773
        %6872 = vmatpush.bf16.xpose.msra.mxu0 %v6765
        %6873 = vmatmul.bf16.gmra.mxu0 %v721
        %v6874 = vpop.f32.mrf.mxu0
        %v6875 = vadd.f32 %v6856, %v6874
        %v6876 = vpop.f32.mrf.mxu0
        %v6877 = vadd.f32 %v6858, %v6876
        %6878 = vmatmul.bf16.gmra.mxu0 %v729
        %v6879 = vpop.f32.mrf.mxu0
        %v6880 = vadd.f32 %v6861, %v6879
        %v6881 = vpop.f32.mrf.mxu0
        %v6882 = vadd.f32 %v6863, %v6881
        %6883 = vdwg.mxu0
        %6884 = vmatpush.bf16.xpose.msra.mxu0 %v6822
        %6885 = vmatpush.bf16.xpose.msra.mxu0 %v6814
        %6886 = vmatpush.bf16.xpose.msra.mxu0 %v6806
        %6887 = vmatpush.bf16.xpose.msra.mxu0 %v6798
        %6888 = vmatpush.bf16.xpose.msra.mxu0 %v6790
        %6889 = vmatpush.bf16.xpose.msra.mxu0 %v6782
        %6890 = vmatpush.bf16.xpose.msra.mxu0 %v6774
        %6891 = vmatpush.bf16.xpose.msra.mxu0 %v6766
        %6892 = vmatmul.bf16.gmra.mxu0 %v722
        %v6893 = vpop.f32.mrf.mxu0
        %v6894 = vadd.f32 %v6875, %v6893
        %v6895 = vpop.f32.mrf.mxu0
        %v6896 = vadd.f32 %v6877, %v6895
        %6897 = vmatmul.bf16.gmra.mxu0 %v730
        %v6898 = vpop.f32.mrf.mxu0
        %v6899 = vadd.f32 %v6880, %v6898
        %v6900 = vpop.f32.mrf.mxu0
        %v6901 = vadd.f32 %v6882, %v6900
        %6902 = vdwg.mxu0
        %6903 = vmatpush.bf16.xpose.msra.mxu0 %v6823
        %6904 = vmatpush.bf16.xpose.msra.mxu0 %v6815
        %6905 = vmatpush.bf16.xpose.msra.mxu0 %v6807
        %6906 = vmatpush.bf16.xpose.msra.mxu0 %v6799
        %6907 = vmatpush.bf16.xpose.msra.mxu0 %v6791
        %6908 = vmatpush.bf16.xpose.msra.mxu0 %v6783
        %6909 = vmatpush.bf16.xpose.msra.mxu0 %v6775
        %6910 = vmatpush.bf16.xpose.msra.mxu0 %v6767
        %6911 = vmatmul.bf16.gmra.mxu0 %v723
        %v6912 = vpop.f32.mrf.mxu0
        %v6913 = vadd.f32 %v6894, %v6912
        %v6914 = vpop.f32.mrf.mxu0
        %v6915 = vadd.f32 %v6896, %v6914
        %6916 = vmatmul.bf16.gmra.mxu0 %v731
        %v6917 = vpop.f32.mrf.mxu0
        %v6918 = vadd.f32 %v6899, %v6917
        %v6919 = vpop.f32.mrf.mxu0
        %v6920 = vadd.f32 %v6901, %v6919
        %6921 = vdwg.mxu0
        %6922 = vmatpush.bf16.xpose.msra.mxu0 %v6824
        %6923 = vmatpush.bf16.xpose.msra.mxu0 %v6816
        %6924 = vmatpush.bf16.xpose.msra.mxu0 %v6808
        %6925 = vmatpush.bf16.xpose.msra.mxu0 %v6800
        %6926 = vmatpush.bf16.xpose.msra.mxu0 %v6792
        %6927 = vmatpush.bf16.xpose.msra.mxu0 %v6784
        %6928 = vmatpush.bf16.xpose.msra.mxu0 %v6776
        %6929 = vmatpush.bf16.xpose.msra.mxu0 %v6768
        %6930 = vmatmul.bf16.gmra.mxu0 %v724
        %v6931 = vpop.f32.mrf.mxu0
        %v6932 = vadd.f32 %v6913, %v6931
        %v6933 = vpop.f32.mrf.mxu0
        %v6934 = vadd.f32 %v6915, %v6933
        %6935 = vmatmul.bf16.gmra.mxu0 %v732
        %v6936 = vpop.f32.mrf.mxu0
        %v6937 = vadd.f32 %v6918, %v6936
        %v6938 = vpop.f32.mrf.mxu0
        %v6939 = vadd.f32 %v6920, %v6938
        %6940 = vdwg.mxu0
        %6941 = vmatpush.bf16.xpose.msra.mxu0 %v6825
        %6942 = vmatpush.bf16.xpose.msra.mxu0 %v6817
        %6943 = vmatpush.bf16.xpose.msra.mxu0 %v6809
        %6944 = vmatpush.bf16.xpose.msra.mxu0 %v6801
        %6945 = vmatpush.bf16.xpose.msra.mxu0 %v6793
        %6946 = vmatpush.bf16.xpose.msra.mxu0 %v6785
        %6947 = vmatpush.bf16.xpose.msra.mxu0 %v6777
        %6948 = vmatpush.bf16.xpose.msra.mxu0 %v6769
        %6949 = vmatmul.bf16.gmra.mxu0 %v725
        %v6950 = vpop.f32.mrf.mxu0
        %v6951 = vadd.f32 %v6932, %v6950
        %v6952 = vpop.f32.mrf.mxu0
        %v6953 = vadd.f32 %v6934, %v6952
        %6954 = vmatmul.bf16.gmra.mxu0 %v733
        %v6955 = vpop.f32.mrf.mxu0
        %v6956 = vadd.f32 %v6937, %v6955
        %v6957 = vpop.f32.mrf.mxu0
        %v6958 = vadd.f32 %v6939, %v6957
        %6959 = vdwg.mxu0
        %6960 = vmatpush.bf16.xpose.msra.mxu0 %v6826
        %6961 = vmatpush.bf16.xpose.msra.mxu0 %v6818
        %6962 = vmatpush.bf16.xpose.msra.mxu0 %v6810
        %6963 = vmatpush.bf16.xpose.msra.mxu0 %v6802
        %6964 = vmatpush.bf16.xpose.msra.mxu0 %v6794
        %6965 = vmatpush.bf16.xpose.msra.mxu0 %v6786
        %6966 = vmatpush.bf16.xpose.msra.mxu0 %v6778
        %6967 = vmatpush.bf16.xpose.msra.mxu0 %v6770
        %6968 = vmatmul.bf16.gmra.mxu0 %v726
        %v6969 = vpop.f32.mrf.mxu0
        %v6970 = vadd.f32 %v6951, %v6969
        %v6971 = vpop.f32.mrf.mxu0
        %v6972 = vadd.f32 %v6953, %v6971
        %6973 = vmatmul.bf16.gmra.mxu0 %v734
        %v6974 = vpop.f32.mrf.mxu0
        %v6975 = vadd.f32 %v6956, %v6974
        %v6976 = vpop.f32.mrf.mxu0
        %v6977 = vadd.f32 %v6958, %v6976
        %6978 = vdwg.mxu0
        %v6979 = vmul.f32 %v6970, %v6970
        %v6980 = vmul.f32 %v6972, %v6972
        %v6981 = vmul.f32 %v6975, %v6975
        %v6982 = vmul.f32 %v6977, %v6977
        %v6983 = vadd.f32 %v6979, %v6980
        %v6984 = vadd.f32 %v6983, %v6981
        %v6985 = vadd.f32 %v6984, %v6982
        %v6986 = vrot.slane %v6985, 4
        %v6987 = vadd.f32 %v6985, %v6986
        %v6988 = vrot.slane %v6987, 2
        %v6989 = vadd.f32 %v6987, %v6988
        %v6990 = vrot.slane %v6989, 1
        %v6991 = vadd.f32 %v6989, %v6990
        %v6992 = vrsqrt.pop %v6991
        %v6993 = vmul.f32 %v6992, %v6991
        %v6994 = vmul.f32 %v6993, %v6992
        %v6995 = vmul.f32 0.5, %v6994
        %v6996 = vsub.f32 1.5, %v6995
        %v6997 = vmul.f32 %v6992, %v6996
        %v6998 = vmul.f32 %v6991, %v6997
        %vm6999 = vcmp.eq.f32.partialorder %v6991, inf
        %v7000 = vsel %vm6999, %v6991, %v6998
        %vm7001 = vcmp.eq.f32.partialorder %v6991, 0.0
        %v7002 = vand.u32 %v6991, 2147483648
        %v7003 = vsel %vm7001, %v7002, %v7000
        %v7004 = vadd.f32 %v7003, 1e-06
        %v7005 = vrcp.pop %v7004
        %v7006 = vmul.f32 %v7004, %v7005
        %v7007 = vsub.f32 1.0, %v7006
        %v7008 = vmul.f32 %v7005, %v7007
        %v7009 = vadd.f32 %v7005, %v7008
        %vm7010 = vweird.f32 %v7004
        %vm7011 = vweird.f32 %v7005
        %vm7012 = vmor %vm7010, %vm7011
        %v7013 = vsel %vm7012, %v7005, %v7009
        %v7014 = vand.u32 2147483647, %v7004
        %vm7015 = vcmp.eq.f32.partialorder %v7014, 8.507059e+37
        %v7016 = vand.u32 %v7004, 2147483648
        %v7017 = vor.u32 1.1754944e-38, %v7016
        %v7018 = vsel %vm7015, %v7017, %v7013
        %v7019 = vmul.f32 %v6970, %v7018
        %v7020 = vmul.f32 %v6972, %v7018
        %v7021 = vmul.f32 %v6975, %v7018
        %v7022 = vmul.f32 %v6977, %v7018
        %v7023 = vpack.c.bf16 %v6332, %v6331
        %v7024 = vpack.c.bf16 %v6334, %v6333
        %v7025 = vpack.c.bf16 %v6336, %v6335
        %v7026 = vpack.c.bf16 %v6338, %v6337
        %v7027 = vpack.c.bf16 %v6340, %v6339
        %v7028 = vpack.c.bf16 %v6342, %v6341
        %v7029 = vpack.c.bf16 %v6344, %v6343
        %v7030 = vpack.c.bf16 %v6346, %v6345
        %v7031 = vpack.c.bf16 %v6348, %v6347
        %v7032 = vpack.c.bf16 %v6350, %v6349
        %v7033 = vpack.c.bf16 %v6352, %v6351
        %v7034 = vpack.c.bf16 %v6354, %v6353
        %v7035 = vpack.c.bf16 %v6356, %v6355
        %v7036 = vpack.c.bf16 %v6358, %v6357
        %v7037 = vpack.c.bf16 %v6360, %v6359
        %v7038 = vpack.c.bf16 %v6362, %v6361
        %v7039 = vpack.c.bf16 %v6364, %v6363
        %v7040 = vpack.c.bf16 %v6366, %v6365
        %v7041 = vpack.c.bf16 %v6368, %v6367
        %v7042 = vpack.c.bf16 %v6370, %v6369
        %v7043 = vpack.c.bf16 %v6372, %v6371
        %v7044 = vpack.c.bf16 %v6374, %v6373
        %v7045 = vpack.c.bf16 %v6376, %v6375
        %v7046 = vpack.c.bf16 %v6378, %v6377
        %v7047 = vpack.c.bf16 %v6380, %v6379
        %v7048 = vpack.c.bf16 %v6382, %v6381
        %v7049 = vpack.c.bf16 %v6384, %v6383
        %v7050 = vpack.c.bf16 %v6386, %v6385
        %v7051 = vpack.c.bf16 %v6388, %v6387
        %v7052 = vpack.c.bf16 %v6390, %v6389
        %v7053 = vpack.c.bf16 %v6392, %v6391
        %v7054 = vpack.c.bf16 %v6394, %v6393
        %v7055 = vpack.c.bf16 %v6396, %v6395
        %v7056 = vpack.c.bf16 %v6398, %v6397
        %v7057 = vpack.c.bf16 %v6400, %v6399
        %v7058 = vpack.c.bf16 %v6402, %v6401
        %v7059 = vpack.c.bf16 %v6404, %v6403
        %v7060 = vpack.c.bf16 %v6406, %v6405
        %v7061 = vpack.c.bf16 %v6408, %v6407
        %v7062 = vpack.c.bf16 %v6410, %v6409
        %v7063 = vpack.c.bf16 %v6412, %v6411
        %v7064 = vpack.c.bf16 %v6414, %v6413
        %v7065 = vpack.c.bf16 %v6416, %v6415
        %v7066 = vpack.c.bf16 %v6418, %v6417
        %v7067 = vpack.c.bf16 %v6420, %v6419
        %v7068 = vpack.c.bf16 %v6422, %v6421
        %v7069 = vpack.c.bf16 %v6424, %v6423
        %v7070 = vpack.c.bf16 %v6426, %v6425
        %v7071 = vpack.c.bf16 %v6428, %v6427
        %v7072 = vpack.c.bf16 %v6430, %v6429
        %v7073 = vpack.c.bf16 %v6432, %v6431
        %v7074 = vpack.c.bf16 %v6434, %v6433
        %v7075 = vpack.c.bf16 %v6436, %v6435
        %v7076 = vpack.c.bf16 %v6438, %v6437
        %v7077 = vpack.c.bf16 %v6440, %v6439
        %v7078 = vpack.c.bf16 %v6442, %v6441
        %v7079 = vpack.c.bf16 %v6444, %v6443
        %v7080 = vpack.c.bf16 %v6446, %v6445
        %v7081 = vpack.c.bf16 %v6448, %v6447
        %v7082 = vpack.c.bf16 %v6450, %v6449
        %v7083 = vpack.c.bf16 %v6452, %v6451
        %v7084 = vpack.c.bf16 %v6454, %v6453
        %v7085 = vpack.c.bf16 %v6456, %v6455
        %v7086 = vpack.c.bf16 %v6458, %v6457
        %7087 = vst [vmem:[#allocation3] sm:$0xff] %v7023
        %7088 = vst [vmem:[#allocation3 + $0x8] sm:$0xff] %v7024
        %7089 = vst [vmem:[#allocation3 + $0x10] sm:$0xff] %v7025
        %7090 = vst [vmem:[#allocation3 + $0x18] sm:$0xff] %v7026
        %7091 = vst [vmem:[#allocation3 + $0x20] sm:$0xff] %v7027
        %7092 = vst [vmem:[#allocation3 + $0x28] sm:$0xff] %v7028
        %7093 = vst [vmem:[#allocation3 + $0x30] sm:$0xff] %v7029
        %7094 = vst [vmem:[#allocation3 + $0x38] sm:$0xff] %v7030
        %7095 = vst [vmem:[#allocation3 + $0x40] sm:$0xff] %v7031
        %7096 = vst [vmem:[#allocation3 + $0x48] sm:$0xff] %v7032
        %7097 = vst [vmem:[#allocation3 + $0x50] sm:$0xff] %v7033
        %7098 = vst [vmem:[#allocation3 + $0x58] sm:$0xff] %v7034
        %7099 = vst [vmem:[#allocation3 + $0x60] sm:$0xff] %v7035
        %7100 = vst [vmem:[#allocation3 + $0x68] sm:$0xff] %v7036
        %7101 = vst [vmem:[#allocation3 + $0x70] sm:$0xff] %v7037
        %7102 = vst [vmem:[#allocation3 + $0x78] sm:$0xff] %v7038
        %7103 = vst [vmem:[#allocation3 + $0x80] sm:$0xff] %v7039
        %7104 = vst [vmem:[#allocation3 + $0x88] sm:$0xff] %v7040
        %7105 = vst [vmem:[#allocation3 + $0x90] sm:$0xff] %v7041
        %7106 = vst [vmem:[#allocation3 + $0x98] sm:$0xff] %v7042
        %7107 = vst [vmem:[#allocation3 + $0xa0] sm:$0xff] %v7043
        %7108 = vst [vmem:[#allocation3 + $0xa8] sm:$0xff] %v7044
        %7109 = vst [vmem:[#allocation3 + $0xb0] sm:$0xff] %v7045
        %7110 = vst [vmem:[#allocation3 + $0xb8] sm:$0xff] %v7046
        %7111 = vst [vmem:[#allocation3 + $0xc0] sm:$0xff] %v7047
        %7112 = vst [vmem:[#allocation3 + $0xc8] sm:$0xff] %v7048
        %7113 = vst [vmem:[#allocation3 + $0xd0] sm:$0xff] %v7049
        %7114 = vst [vmem:[#allocation3 + $0xd8] sm:$0xff] %v7050
        %7115 = vst [vmem:[#allocation3 + $0xe0] sm:$0xff] %v7051
        %7116 = vst [vmem:[#allocation3 + $0xe8] sm:$0xff] %v7052
        %7117 = vst [vmem:[#allocation3 + $0xf0] sm:$0xff] %v7053
        %7118 = vst [vmem:[#allocation3 + $0xf8] sm:$0xff] %v7054
        %7119 = vst [vmem:[#allocation3 + $0x100] sm:$0xff] %v7055
        %7120 = vst [vmem:[#allocation3 + $0x108] sm:$0xff] %v7056
        %7121 = vst [vmem:[#allocation3 + $0x110] sm:$0xff] %v7057
        %7122 = vst [vmem:[#allocation3 + $0x118] sm:$0xff] %v7058
        %7123 = vst [vmem:[#allocation3 + $0x120] sm:$0xff] %v7059
        %7124 = vst [vmem:[#allocation3 + $0x128] sm:$0xff] %v7060
        %7125 = vst [vmem:[#allocation3 + $0x130] sm:$0xff] %v7061
        %7126 = vst [vmem:[#allocation3 + $0x138] sm:$0xff] %v7062
        %7127 = vst [vmem:[#allocation3 + $0x140] sm:$0xff] %v7063
        %7128 = vst [vmem:[#allocation3 + $0x148] sm:$0xff] %v7064
        %7129 = vst [vmem:[#allocation3 + $0x150] sm:$0xff] %v7065
        %7130 = vst [vmem:[#allocation3 + $0x158] sm:$0xff] %v7066
        %7131 = vst [vmem:[#allocation3 + $0x160] sm:$0xff] %v7067
        %7132 = vst [vmem:[#allocation3 + $0x168] sm:$0xff] %v7068
        %7133 = vst [vmem:[#allocation3 + $0x170] sm:$0xff] %v7069
        %7134 = vst [vmem:[#allocation3 + $0x178] sm:$0xff] %v7070
        %7135 = vst [vmem:[#allocation3 + $0x180] sm:$0xff] %v7071
        %7136 = vst [vmem:[#allocation3 + $0x188] sm:$0xff] %v7072
        %7137 = vst [vmem:[#allocation3 + $0x190] sm:$0xff] %v7073
        %7138 = vst [vmem:[#allocation3 + $0x198] sm:$0xff] %v7074
        %7139 = vst [vmem:[#allocation3 + $0x1a0] sm:$0xff] %v7075
        %7140 = vst [vmem:[#allocation3 + $0x1a8] sm:$0xff] %v7076
        %7141 = vst [vmem:[#allocation3 + $0x1b0] sm:$0xff] %v7077
        %7142 = vst [vmem:[#allocation3 + $0x1b8] sm:$0xff] %v7078
        %7143 = vst [vmem:[#allocation3 + $0x1c0] sm:$0xff] %v7079
        %7144 = vst [vmem:[#allocation3 + $0x1c8] sm:$0xff] %v7080
        %7145 = vst [vmem:[#allocation3 + $0x1d0] sm:$0xff] %v7081
        %7146 = vst [vmem:[#allocation3 + $0x1d8] sm:$0xff] %v7082
        %7147 = vst [vmem:[#allocation3 + $0x1e0] sm:$0xff] %v7083
        %7148 = vst [vmem:[#allocation3 + $0x1e8] sm:$0xff] %v7084
        %7149 = vst [vmem:[#allocation3 + $0x1f0] sm:$0xff] %v7085
        %7150 = vst [vmem:[#allocation3 + $0x1f8] sm:$0xff] %v7086
        %v7151 = vpack.c.bf16 %v7020, %v7019
        %v7152 = vpack.c.bf16 %v7022, %v7021
        %v7153 = vld [vmem:[%s4] sm:$0xf]
        %v7154 = vld [vmem:[%s4 + $0x4] sm:$0xf]
        %v7155 = vld [vmem:[%s4 + $0x8] sm:$0xf]
        %v7156 = vld [vmem:[%s4 + $0xc] sm:$0xf]
        %v7157 = vld [vmem:[%s5] sm:$0xff]
        %v7158 = vld [vmem:[%s5 + $0x8] sm:$0xff]
        %v7159 = vld [vmem:[%s5 + $0x10] sm:$0xff]
        %v7160 = vld [vmem:[%s5 + $0x18] sm:$0xff]
        %v7161 = vld [vmem:[#allocation3] sm:$0xff]
        %v7162 = vld [vmem:[#allocation3 + $0x8] sm:$0xff]
        %v7163 = vld [vmem:[#allocation3 + $0x20] sm:$0xff]
        %v7164 = vld [vmem:[#allocation3 + $0x28] sm:$0xff]
        %v7165 = vld [vmem:[#allocation3 + $0x40] sm:$0xff]
        %v7166 = vld [vmem:[#allocation3 + $0x48] sm:$0xff]
        %v7167 = vld [vmem:[#allocation3 + $0x60] sm:$0xff]
        %v7168 = vld [vmem:[#allocation3 + $0x68] sm:$0xff]
        %v7169 = vld [vmem:[#allocation3 + $0x80] sm:$0xff]
        %v7170 = vld [vmem:[#allocation3 + $0x88] sm:$0xff]
        %v7171 = vld [vmem:[#allocation3 + $0xa0] sm:$0xff]
        %v7172 = vld [vmem:[#allocation3 + $0xa8] sm:$0xff]
        %v7173 = vld [vmem:[#allocation3 + $0xc0] sm:$0xff]
        %v7174 = vld [vmem:[#allocation3 + $0xc8] sm:$0xff]
        %v7175 = vld [vmem:[#allocation3 + $0xe0] sm:$0xff]
        %v7176 = vld [vmem:[#allocation3 + $0xe8] sm:$0xff]
        %v7177 = vld [vmem:[#allocation3 + $0x100] sm:$0xff]
        %v7178 = vld [vmem:[#allocation3 + $0x108] sm:$0xff]
        %v7179 = vld [vmem:[#allocation3 + $0x120] sm:$0xff]
        %v7180 = vld [vmem:[#allocation3 + $0x128] sm:$0xff]
        %v7181 = vld [vmem:[#allocation3 + $0x140] sm:$0xff]
        %v7182 = vld [vmem:[#allocation3 + $0x148] sm:$0xff]
        %v7183 = vld [vmem:[#allocation3 + $0x160] sm:$0xff]
        %v7184 = vld [vmem:[#allocation3 + $0x168] sm:$0xff]
        %v7185 = vld [vmem:[#allocation3 + $0x180] sm:$0xff]
        %v7186 = vld [vmem:[#allocation3 + $0x188] sm:$0xff]
        %v7187 = vld [vmem:[#allocation3 + $0x1a0] sm:$0xff]
        %v7188 = vld [vmem:[#allocation3 + $0x1a8] sm:$0xff]
        %v7189 = vld [vmem:[#allocation3 + $0x1c0] sm:$0xff]
        %v7190 = vld [vmem:[#allocation3 + $0x1c8] sm:$0xff]
        %v7191 = vld [vmem:[#allocation3 + $0x1e0] sm:$0xff]
        %v7192 = vld [vmem:[#allocation3 + $0x1e8] sm:$0xff]
        %v7225 = vunpack.c.l.b16 %v7161
        %v7226 = vunpack.c.h.b16 %v7161
        %v7227 = vunpack.c.l.b16 %v7162
        %v7228 = vunpack.c.h.b16 %v7162
        %v7229 = vunpack.c.l.b16 %v7163
        %v7230 = vunpack.c.h.b16 %v7163
        %v7231 = vunpack.c.l.b16 %v7164
        %v7232 = vunpack.c.h.b16 %v7164
        %v7233 = vunpack.c.l.b16 %v7165
        %v7234 = vunpack.c.h.b16 %v7165
        %v7235 = vunpack.c.l.b16 %v7166
        %v7236 = vunpack.c.h.b16 %v7166
        %v7237 = vunpack.c.l.b16 %v7167
        %v7238 = vunpack.c.h.b16 %v7167
        %v7239 = vunpack.c.l.b16 %v7168
        %v7240 = vunpack.c.h.b16 %v7168
        %v7241 = vunpack.c.l.b16 %v7169
        %v7242 = vunpack.c.h.b16 %v7169
        %v7243 = vunpack.c.l.b16 %v7170
        %v7244 = vunpack.c.h.b16 %v7170
        %v7245 = vunpack.c.l.b16 %v7171
        %v7246 = vunpack.c.h.b16 %v7171
        %v7247 = vunpack.c.l.b16 %v7172
        %v7248 = vunpack.c.h.b16 %v7172
        %v7249 = vunpack.c.l.b16 %v7173
        %v7250 = vunpack.c.h.b16 %v7173
        %v7251 = vunpack.c.l.b16 %v7174
        %v7252 = vunpack.c.h.b16 %v7174
        %v7253 = vunpack.c.l.b16 %v7175
        %v7254 = vunpack.c.h.b16 %v7175
        %v7255 = vunpack.c.l.b16 %v7176
        %v7256 = vunpack.c.h.b16 %v7176
        %v7257 = vunpack.c.l.b16 %v7177
        %v7258 = vunpack.c.h.b16 %v7177
        %v7259 = vunpack.c.l.b16 %v7178
        %v7260 = vunpack.c.h.b16 %v7178
        %v7261 = vunpack.c.l.b16 %v7179
        %v7262 = vunpack.c.h.b16 %v7179
        %v7263 = vunpack.c.l.b16 %v7180
        %v7264 = vunpack.c.h.b16 %v7180
        %v7265 = vunpack.c.l.b16 %v7181
        %v7266 = vunpack.c.h.b16 %v7181
        %v7267 = vunpack.c.l.b16 %v7182
        %v7268 = vunpack.c.h.b16 %v7182
        %v7269 = vunpack.c.l.b16 %v7183
        %v7270 = vunpack.c.h.b16 %v7183
        %v7271 = vunpack.c.l.b16 %v7184
        %v7272 = vunpack.c.h.b16 %v7184
        %v7273 = vunpack.c.l.b16 %v7185
        %v7274 = vunpack.c.h.b16 %v7185
        %v7275 = vunpack.c.l.b16 %v7186
        %v7276 = vunpack.c.h.b16 %v7186
        %v7277 = vunpack.c.l.b16 %v7187
        %v7278 = vunpack.c.h.b16 %v7187
        %v7279 = vunpack.c.l.b16 %v7188
        %v7280 = vunpack.c.h.b16 %v7188
        %v7281 = vunpack.c.l.b16 %v7189
        %v7282 = vunpack.c.h.b16 %v7189
        %v7283 = vunpack.c.l.b16 %v7190
        %v7284 = vunpack.c.h.b16 %v7190
        %v7285 = vunpack.c.l.b16 %v7191
        %v7286 = vunpack.c.h.b16 %v7191
        %v7287 = vunpack.c.l.b16 %v7192
        %v7288 = vunpack.c.h.b16 %v7192
        %v7289 = vpack.c.b16 %v7229, %v7225
        %v7290 = vpack.c.b16 %v7230, %v7226
        %v7291 = vpack.c.b16 %v7231, %v7227
        %v7292 = vpack.c.b16 %v7232, %v7228
        %v7293 = vpack.c.b16 %v7237, %v7233
        %v7294 = vpack.c.b16 %v7238, %v7234
        %v7295 = vpack.c.b16 %v7239, %v7235
        %v7296 = vpack.c.b16 %v7240, %v7236
        %v7297 = vpack.c.b16 %v7245, %v7241
        %v7298 = vpack.c.b16 %v7246, %v7242
        %v7299 = vpack.c.b16 %v7247, %v7243
        %v7300 = vpack.c.b16 %v7248, %v7244
        %v7301 = vpack.c.b16 %v7253, %v7249
        %v7302 = vpack.c.b16 %v7254, %v7250
        %v7303 = vpack.c.b16 %v7255, %v7251
        %v7304 = vpack.c.b16 %v7256, %v7252
        %v7305 = vpack.c.b16 %v7261, %v7257
        %v7306 = vpack.c.b16 %v7262, %v7258
        %v7307 = vpack.c.b16 %v7263, %v7259
        %v7308 = vpack.c.b16 %v7264, %v7260
        %v7309 = vpack.c.b16 %v7269, %v7265
        %v7310 = vpack.c.b16 %v7270, %v7266
        %v7311 = vpack.c.b16 %v7271, %v7267
        %v7312 = vpack.c.b16 %v7272, %v7268
        %v7313 = vpack.c.b16 %v7277, %v7273
        %v7314 = vpack.c.b16 %v7278, %v7274
        %v7315 = vpack.c.b16 %v7279, %v7275
        %v7316 = vpack.c.b16 %v7280, %v7276
        %v7317 = vpack.c.b16 %v7285, %v7281
        %v7318 = vpack.c.b16 %v7286, %v7282
        %v7319 = vpack.c.b16 %v7287, %v7283
        %v7320 = vpack.c.b16 %v7288, %v7284
        %7353 = vmatpush.bf16.msra.mxu0 %v7317
        %7354 = vmatpush.bf16.msra.mxu0 %v7313
        %7355 = vmatpush.bf16.msra.mxu0 %v7309
        %7356 = vmatpush.bf16.msra.mxu0 %v7305
        %7357 = vmatpush.bf16.msra.mxu0 %v7301
        %7358 = vmatpush.bf16.msra.mxu0 %v7297
        %7359 = vmatpush.bf16.msra.mxu0 %v7293
        %7360 = vmatpush.bf16.msra.mxu0 %v7289
        %7361 = vmatmul.bf16.gmra.mxu0 %v7151
        %v7362 = vpop.f32.mrf.mxu0
        %v7363 = vadd.f32 0.0, %v7362
        %v7364 = vpop.f32.mrf.mxu0
        %v7365 = vadd.f32 0.0, %v7364
        %7366 = vmatmul.bf16.gmra.mxu0 %v7152
        %v7367 = vpop.f32.mrf.mxu0
        %v7368 = vadd.f32 0.0, %v7367
        %v7369 = vpop.f32.mrf.mxu0
        %v7370 = vadd.f32 0.0, %v7369
        %7371 = vdwg.mxu0
        %7372 = vmatpush.bf16.msra.mxu0 %v7318
        %7373 = vmatpush.bf16.msra.mxu0 %v7314
        %7374 = vmatpush.bf16.msra.mxu0 %v7310
        %7375 = vmatpush.bf16.msra.mxu0 %v7306
        %7376 = vmatpush.bf16.msra.mxu0 %v7302
        %7377 = vmatpush.bf16.msra.mxu0 %v7298
        %7378 = vmatpush.bf16.msra.mxu0 %v7294
        %7379 = vmatpush.bf16.msra.mxu0 %v7290
        %7380 = vmatmul.bf16.gmra.mxu0 %v7151
        %v7381 = vpop.f32.mrf.mxu0
        %v7382 = vadd.f32 0.0, %v7381
        %v7383 = vpop.f32.mrf.mxu0
        %v7384 = vadd.f32 0.0, %v7383
        %7385 = vmatmul.bf16.gmra.mxu0 %v7152
        %v7386 = vpop.f32.mrf.mxu0
        %v7387 = vadd.f32 0.0, %v7386
        %v7388 = vpop.f32.mrf.mxu0
        %v7389 = vadd.f32 0.0, %v7388
        %7390 = vdwg.mxu0
        %7391 = vmatpush.bf16.msra.mxu0 %v7319
        %7392 = vmatpush.bf16.msra.mxu0 %v7315
        %7393 = vmatpush.bf16.msra.mxu0 %v7311
        %7394 = vmatpush.bf16.msra.mxu0 %v7307
        %7395 = vmatpush.bf16.msra.mxu0 %v7303
        %7396 = vmatpush.bf16.msra.mxu0 %v7299
        %7397 = vmatpush.bf16.msra.mxu0 %v7295
        %7398 = vmatpush.bf16.msra.mxu0 %v7291
        %7399 = vmatmul.bf16.gmra.mxu0 %v7151
        %v7400 = vpop.f32.mrf.mxu0
        %v7401 = vadd.f32 0.0, %v7400
        %v7402 = vpop.f32.mrf.mxu0
        %v7403 = vadd.f32 0.0, %v7402
        %7404 = vmatmul.bf16.gmra.mxu0 %v7152
        %v7405 = vpop.f32.mrf.mxu0
        %v7406 = vadd.f32 0.0, %v7405
        %v7407 = vpop.f32.mrf.mxu0
        %v7408 = vadd.f32 0.0, %v7407
        %7409 = vdwg.mxu0
        %7410 = vmatpush.bf16.msra.mxu0 %v7320
        %7411 = vmatpush.bf16.msra.mxu0 %v7316
        %7412 = vmatpush.bf16.msra.mxu0 %v7312
        %7413 = vmatpush.bf16.msra.mxu0 %v7308
        %7414 = vmatpush.bf16.msra.mxu0 %v7304
        %7415 = vmatpush.bf16.msra.mxu0 %v7300
        %7416 = vmatpush.bf16.msra.mxu0 %v7296
        %7417 = vmatpush.bf16.msra.mxu0 %v7292
        %7418 = vmatmul.bf16.gmra.mxu0 %v7151
        %v7419 = vpop.f32.mrf.mxu0
        %v7420 = vadd.f32 0.0, %v7419
        %v7421 = vpop.f32.mrf.mxu0
        %v7422 = vadd.f32 0.0, %v7421
        %7423 = vmatmul.bf16.gmra.mxu0 %v7152
        %v7424 = vpop.f32.mrf.mxu0
        %v7425 = vadd.f32 0.0, %v7424
        %v7426 = vpop.f32.mrf.mxu0
        %v7427 = vadd.f32 0.0, %v7426
        %7428 = vdwg.mxu0
        %v7429 = vmax.f32 %v7363, 0.0
        %v7430 = vmax.f32 %v7382, 0.0
        %v7431 = vmax.f32 %v7401, 0.0
        %v7432 = vmax.f32 %v7420, 0.0
        %v7433 = vmax.f32 %v7365, 0.0
        %v7434 = vmax.f32 %v7384, 0.0
        %v7435 = vmax.f32 %v7403, 0.0
        %v7436 = vmax.f32 %v7422, 0.0
        %v7437 = vmax.f32 %v7368, 0.0
        %v7438 = vmax.f32 %v7387, 0.0
        %v7439 = vmax.f32 %v7406, 0.0
        %v7440 = vmax.f32 %v7425, 0.0
        %v7441 = vmax.f32 %v7370, 0.0
        %v7442 = vmax.f32 %v7389, 0.0
        %v7443 = vmax.f32 %v7408, 0.0
        %v7444 = vmax.f32 %v7427, 0.0
        %v7445 = vpack.c.bf16 %v7433, %v7429
        %v7446 = vpack.c.bf16 %v7434, %v7430
        %v7447 = vpack.c.bf16 %v7435, %v7431
        %v7448 = vpack.c.bf16 %v7436, %v7432
        %v7449 = vpack.c.bf16 %v7441, %v7437
        %v7450 = vpack.c.bf16 %v7442, %v7438
        %v7451 = vpack.c.bf16 %v7443, %v7439
        %v7452 = vpack.c.bf16 %v7444, %v7440
        %7454 = vset.pattern.permute.xlu0 0
        %7455 = vperm.xlu0 %7454, %v7157
        %v7456 = vpop.permute.xlu0 %7455
        %7459 = vset.pattern.permute.xlu0 0
        %7460 = vperm.xlu0 %7459, %v7158
        %v7461 = vpop.permute.xlu0 %7460
        %7464 = vset.pattern.permute.xlu0 0
        %7465 = vperm.xlu0 %7464, %v7159
        %v7466 = vpop.permute.xlu0 %7465
        %7469 = vset.pattern.permute.xlu0 0
        %7470 = vperm.xlu0 %7469, %v7160
        %v7471 = vpop.permute.xlu0 %7470
        %v7477 = vunpack.c.l.b16 %v7153
        %v7478 = vunpack.c.l.b16 %v7154
        %v7479 = vunpack.c.l.b16 %v7155
        %v7480 = vunpack.c.l.b16 %v7156
        %v7481 = vpack.c.b16 %v7478, %v7477
        %v7482 = vpack.c.b16 %v7480, %v7479
        %v7484 = vsel %vm359, %v7481, 0
        %v7487 = vsel %vm359, %v7482, 0
        %7489 = vmatpush.bf16.msra.mxu0 0
        %7490 = vmatpush.bf16.msra.mxu0 0
        %7491 = vmatpush.bf16.msra.mxu0 0
        %7492 = vmatpush.bf16.msra.mxu0 0
        %7493 = vmatpush.bf16.msra.mxu0 0
        %7494 = vmatpush.bf16.msra.mxu0 0
        %7495 = vmatpush.bf16.msra.mxu0 %v7449
        %7496 = vmatpush.bf16.msra.mxu0 %v7445
        %7497 = vmatmul.bf16.gmra.mxu0 %v7484
        %v7498 = vpop.f32.mrf.mxu0
        %v7499 = vadd.f32 %v7456, %v7498
        %v7500 = vpop.f32.mrf.mxu0
        %v7501 = vadd.f32 %v7461, %v7500
        %7502 = vmatmul.bf16.gmra.mxu0 %v7487
        %v7503 = vpop.f32.mrf.mxu0
        %v7504 = vadd.f32 %v7466, %v7503
        %v7505 = vpop.f32.mrf.mxu0
        %v7506 = vadd.f32 %v7471, %v7505
        %7507 = vdwg.mxu0
        %7508 = vmatpush.bf16.msra.mxu0 0
        %7509 = vmatpush.bf16.msra.mxu0 0
        %7510 = vmatpush.bf16.msra.mxu0 0
        %7511 = vmatpush.bf16.msra.mxu0 0
        %7512 = vmatpush.bf16.msra.mxu0 0
        %7513 = vmatpush.bf16.msra.mxu0 0
        %7514 = vmatpush.bf16.msra.mxu0 %v7450
        %7515 = vmatpush.bf16.msra.mxu0 %v7446
        %7516 = vmatmul.bf16.gmra.mxu0 %v7484
        %v7517 = vpop.f32.mrf.mxu0
        %v7518 = vadd.f32 %v7456, %v7517
        %v7519 = vpop.f32.mrf.mxu0
        %v7520 = vadd.f32 %v7461, %v7519
        %7521 = vmatmul.bf16.gmra.mxu0 %v7487
        %v7522 = vpop.f32.mrf.mxu0
        %v7523 = vadd.f32 %v7466, %v7522
        %v7524 = vpop.f32.mrf.mxu0
        %v7525 = vadd.f32 %v7471, %v7524
        %7526 = vdwg.mxu0
        %7527 = vmatpush.bf16.msra.mxu0 0
        %7528 = vmatpush.bf16.msra.mxu0 0
        %7529 = vmatpush.bf16.msra.mxu0 0
        %7530 = vmatpush.bf16.msra.mxu0 0
        %7531 = vmatpush.bf16.msra.mxu0 0
        %7532 = vmatpush.bf16.msra.mxu0 0
        %7533 = vmatpush.bf16.msra.mxu0 %v7451
        %7534 = vmatpush.bf16.msra.mxu0 %v7447
        %7535 = vmatmul.bf16.gmra.mxu0 %v7484
        %v7536 = vpop.f32.mrf.mxu0
        %v7537 = vadd.f32 %v7456, %v7536
        %v7538 = vpop.f32.mrf.mxu0
        %v7539 = vadd.f32 %v7461, %v7538
        %7540 = vmatmul.bf16.gmra.mxu0 %v7487
        %v7541 = vpop.f32.mrf.mxu0
        %v7542 = vadd.f32 %v7466, %v7541
        %v7543 = vpop.f32.mrf.mxu0
        %v7544 = vadd.f32 %v7471, %v7543
        %7545 = vdwg.mxu0
        %7546 = vmatpush.bf16.msra.mxu0 0
        %7547 = vmatpush.bf16.msra.mxu0 0
        %7548 = vmatpush.bf16.msra.mxu0 0
        %7549 = vmatpush.bf16.msra.mxu0 0
        %7550 = vmatpush.bf16.msra.mxu0 0
        %7551 = vmatpush.bf16.msra.mxu0 0
        %7552 = vmatpush.bf16.msra.mxu0 %v7452
        %7553 = vmatpush.bf16.msra.mxu0 %v7448
        %7554 = vmatmul.bf16.gmra.mxu0 %v7484
        %v7555 = vpop.f32.mrf.mxu0
        %v7556 = vadd.f32 %v7456, %v7555
        %v7557 = vpop.f32.mrf.mxu0
        %v7558 = vadd.f32 %v7461, %v7557
        %7559 = vmatmul.bf16.gmra.mxu0 %v7487
        %v7560 = vpop.f32.mrf.mxu0
        %v7561 = vadd.f32 %v7466, %v7560
        %v7562 = vpop.f32.mrf.mxu0
        %v7563 = vadd.f32 %v7471, %v7562
        %7564 = vdwg.mxu0
        %v7565 = vpack.c.bf16 %v7518, %v7499
        %v7566 = vpack.c.bf16 %v7556, %v7537
        %v7567 = vpack.c.bf16 %v7520, %v7501
        %v7568 = vpack.c.bf16 %v7558, %v7539
        %v7569 = vpack.c.bf16 %v7523, %v7504
        %v7570 = vpack.c.bf16 %v7561, %v7542
        %v7571 = vpack.c.bf16 %v7525, %v7506
        %v7572 = vpack.c.bf16 %v7563, %v7544
        %7573 = vst [vmem:[%s271] sm:$0xff] %v7565
        %7574 = vst [vmem:[%s271 + $0x8] sm:$0xff] %v7566
        %7575 = vst [vmem:[%s271 + $0x20] sm:$0xff] %v7567
        %7576 = vst [vmem:[%s271 + $0x28] sm:$0xff] %v7568
        %7577 = vst [vmem:[%s271 + $0x40] sm:$0xff] %v7569
        %7578 = vst [vmem:[%s271 + $0x48] sm:$0xff] %v7570
        %7579 = vst [vmem:[%s271 + $0x60] sm:$0xff] %v7571
        %7580 = vst [vmem:[%s271 + $0x68] sm:$0xff] %v7572
        %s7581 = scalar_lea.vmem [#allocation3], 16
        %v7582 = vld [vmem:[%s7581] sm:$0xff]
        %v7583 = vld [vmem:[%s7581 + $0x8] sm:$0xff]
        %v7584 = vld [vmem:[%s7581 + $0x20] sm:$0xff]
        %v7585 = vld [vmem:[%s7581 + $0x28] sm:$0xff]
        %v7586 = vld [vmem:[%s7581 + $0x40] sm:$0xff]
        %v7587 = vld [vmem:[%s7581 + $0x48] sm:$0xff]
        %v7588 = vld [vmem:[%s7581 + $0x60] sm:$0xff]
        %v7589 = vld [vmem:[%s7581 + $0x68] sm:$0xff]
        %v7590 = vld [vmem:[%s7581 + $0x80] sm:$0xff]
        %v7591 = vld [vmem:[%s7581 + $0x88] sm:$0xff]
        %v7592 = vld [vmem:[%s7581 + $0xa0] sm:$0xff]
        %v7593 = vld [vmem:[%s7581 + $0xa8] sm:$0xff]
        %v7594 = vld [vmem:[%s7581 + $0xc0] sm:$0xff]
        %v7595 = vld [vmem:[%s7581 + $0xc8] sm:$0xff]
        %v7596 = vld [vmem:[%s7581 + $0xe0] sm:$0xff]
        %v7597 = vld [vmem:[%s7581 + $0xe8] sm:$0xff]
        %v7598 = vld [vmem:[%s7581 + $0x100] sm:$0xff]
        %v7599 = vld [vmem:[%s7581 + $0x108] sm:$0xff]
        %v7600 = vld [vmem:[%s7581 + $0x120] sm:$0xff]
        %v7601 = vld [vmem:[%s7581 + $0x128] sm:$0xff]
        %v7602 = vld [vmem:[%s7581 + $0x140] sm:$0xff]
        %v7603 = vld [vmem:[%s7581 + $0x148] sm:$0xff]
        %v7604 = vld [vmem:[%s7581 + $0x160] sm:$0xff]
        %v7605 = vld [vmem:[%s7581 + $0x168] sm:$0xff]
        %v7606 = vld [vmem:[%s7581 + $0x180] sm:$0xff]
        %v7607 = vld [vmem:[%s7581 + $0x188] sm:$0xff]
        %v7608 = vld [vmem:[%s7581 + $0x1a0] sm:$0xff]
        %v7609 = vld [vmem:[%s7581 + $0x1a8] sm:$0xff]
        %v7610 = vld [vmem:[%s7581 + $0x1c0] sm:$0xff]
        %v7611 = vld [vmem:[%s7581 + $0x1c8] sm:$0xff]
        %v7612 = vld [vmem:[%s7581 + $0x1e0] sm:$0xff]
        %v7613 = vld [vmem:[%s7581 + $0x1e8] sm:$0xff]
        %v7646 = vunpack.c.l.b16 %v7582
        %v7647 = vunpack.c.h.b16 %v7582
        %v7648 = vunpack.c.l.b16 %v7583
        %v7649 = vunpack.c.h.b16 %v7583
        %v7650 = vunpack.c.l.b16 %v7584
        %v7651 = vunpack.c.h.b16 %v7584
        %v7652 = vunpack.c.l.b16 %v7585
        %v7653 = vunpack.c.h.b16 %v7585
        %v7654 = vunpack.c.l.b16 %v7586
        %v7655 = vunpack.c.h.b16 %v7586
        %v7656 = vunpack.c.l.b16 %v7587
        %v7657 = vunpack.c.h.b16 %v7587
        %v7658 = vunpack.c.l.b16 %v7588
        %v7659 = vunpack.c.h.b16 %v7588
        %v7660 = vunpack.c.l.b16 %v7589
        %v7661 = vunpack.c.h.b16 %v7589
        %v7662 = vunpack.c.l.b16 %v7590
        %v7663 = vunpack.c.h.b16 %v7590
        %v7664 = vunpack.c.l.b16 %v7591
        %v7665 = vunpack.c.h.b16 %v7591
        %v7666 = vunpack.c.l.b16 %v7592
        %v7667 = vunpack.c.h.b16 %v7592
        %v7668 = vunpack.c.l.b16 %v7593
        %v7669 = vunpack.c.h.b16 %v7593
        %v7670 = vunpack.c.l.b16 %v7594
        %v7671 = vunpack.c.h.b16 %v7594
        %v7672 = vunpack.c.l.b16 %v7595
        %v7673 = vunpack.c.h.b16 %v7595
        %v7674 = vunpack.c.l.b16 %v7596
        %v7675 = vunpack.c.h.b16 %v7596
        %v7676 = vunpack.c.l.b16 %v7597
        %v7677 = vunpack.c.h.b16 %v7597
        %v7678 = vunpack.c.l.b16 %v7598
        %v7679 = vunpack.c.h.b16 %v7598
        %v7680 = vunpack.c.l.b16 %v7599
        %v7681 = vunpack.c.h.b16 %v7599
        %v7682 = vunpack.c.l.b16 %v7600
        %v7683 = vunpack.c.h.b16 %v7600
        %v7684 = vunpack.c.l.b16 %v7601
        %v7685 = vunpack.c.h.b16 %v7601
        %v7686 = vunpack.c.l.b16 %v7602
        %v7687 = vunpack.c.h.b16 %v7602
        %v7688 = vunpack.c.l.b16 %v7603
        %v7689 = vunpack.c.h.b16 %v7603
        %v7690 = vunpack.c.l.b16 %v7604
        %v7691 = vunpack.c.h.b16 %v7604
        %v7692 = vunpack.c.l.b16 %v7605
        %v7693 = vunpack.c.h.b16 %v7605
        %v7694 = vunpack.c.l.b16 %v7606
        %v7695 = vunpack.c.h.b16 %v7606
        %v7696 = vunpack.c.l.b16 %v7607
        %v7697 = vunpack.c.h.b16 %v7607
        %v7698 = vunpack.c.l.b16 %v7608
        %v7699 = vunpack.c.h.b16 %v7608
        %v7700 = vunpack.c.l.b16 %v7609
        %v7701 = vunpack.c.h.b16 %v7609
        %v7702 = vunpack.c.l.b16 %v7610
        %v7703 = vunpack.c.h.b16 %v7610
        %v7704 = vunpack.c.l.b16 %v7611
        %v7705 = vunpack.c.h.b16 %v7611
        %v7706 = vunpack.c.l.b16 %v7612
        %v7707 = vunpack.c.h.b16 %v7612
        %v7708 = vunpack.c.l.b16 %v7613
        %v7709 = vunpack.c.h.b16 %v7613
        %v7710 = vpack.c.b16 %v7650, %v7646
        %v7711 = vpack.c.b16 %v7651, %v7647
        %v7712 = vpack.c.b16 %v7652, %v7648
        %v7713 = vpack.c.b16 %v7653, %v7649
        %v7714 = vpack.c.b16 %v7658, %v7654
        %v7715 = vpack.c.b16 %v7659, %v7655
        %v7716 = vpack.c.b16 %v7660, %v7656
        %v7717 = vpack.c.b16 %v7661, %v7657
        %v7718 = vpack.c.b16 %v7666, %v7662
        %v7719 = vpack.c.b16 %v7667, %v7663
        %v7720 = vpack.c.b16 %v7668, %v7664
        %v7721 = vpack.c.b16 %v7669, %v7665
        %v7722 = vpack.c.b16 %v7674, %v7670
        %v7723 = vpack.c.b16 %v7675, %v7671
        %v7724 = vpack.c.b16 %v7676, %v7672
        %v7725 = vpack.c.b16 %v7677, %v7673
        %v7726 = vpack.c.b16 %v7682, %v7678
        %v7727 = vpack.c.b16 %v7683, %v7679
        %v7728 = vpack.c.b16 %v7684, %v7680
        %v7729 = vpack.c.b16 %v7685, %v7681
        %v7730 = vpack.c.b16 %v7690, %v7686
        %v7731 = vpack.c.b16 %v7691, %v7687
        %v7732 = vpack.c.b16 %v7692, %v7688
        %v7733 = vpack.c.b16 %v7693, %v7689
        %v7734 = vpack.c.b16 %v7698, %v7694
        %v7735 = vpack.c.b16 %v7699, %v7695
        %v7736 = vpack.c.b16 %v7700, %v7696
        %v7737 = vpack.c.b16 %v7701, %v7697
        %v7738 = vpack.c.b16 %v7706, %v7702
        %v7739 = vpack.c.b16 %v7707, %v7703
        %v7740 = vpack.c.b16 %v7708, %v7704
        %v7741 = vpack.c.b16 %v7709, %v7705
        %7774 = vmatpush.bf16.msra.mxu0 %v7738
        %7775 = vmatpush.bf16.msra.mxu0 %v7734
        %7776 = vmatpush.bf16.msra.mxu0 %v7730
        %7777 = vmatpush.bf16.msra.mxu0 %v7726
        %7778 = vmatpush.bf16.msra.mxu0 %v7722
        %7779 = vmatpush.bf16.msra.mxu0 %v7718
        %7780 = vmatpush.bf16.msra.mxu0 %v7714
        %7781 = vmatpush.bf16.msra.mxu0 %v7710
        %7782 = vmatmul.bf16.gmra.mxu0 %v7151
        %v7783 = vpop.f32.mrf.mxu0
        %v7784 = vadd.f32 0.0, %v7783
        %v7785 = vpop.f32.mrf.mxu0
        %v7786 = vadd.f32 0.0, %v7785
        %7787 = vmatmul.bf16.gmra.mxu0 %v7152
        %v7788 = vpop.f32.mrf.mxu0
        %v7789 = vadd.f32 0.0, %v7788
        %v7790 = vpop.f32.mrf.mxu0
        %v7791 = vadd.f32 0.0, %v7790
        %7792 = vdwg.mxu0
        %7793 = vmatpush.bf16.msra.mxu0 %v7739
        %7794 = vmatpush.bf16.msra.mxu0 %v7735
        %7795 = vmatpush.bf16.msra.mxu0 %v7731
        %7796 = vmatpush.bf16.msra.mxu0 %v7727
        %7797 = vmatpush.bf16.msra.mxu0 %v7723
        %7798 = vmatpush.bf16.msra.mxu0 %v7719
        %7799 = vmatpush.bf16.msra.mxu0 %v7715
        %7800 = vmatpush.bf16.msra.mxu0 %v7711
        %7801 = vmatmul.bf16.gmra.mxu0 %v7151
        %v7802 = vpop.f32.mrf.mxu0
        %v7803 = vadd.f32 0.0, %v7802
        %v7804 = vpop.f32.mrf.mxu0
        %v7805 = vadd.f32 0.0, %v7804
        %7806 = vmatmul.bf16.gmra.mxu0 %v7152
        %v7807 = vpop.f32.mrf.mxu0
        %v7808 = vadd.f32 0.0, %v7807
        %v7809 = vpop.f32.mrf.mxu0
        %v7810 = vadd.f32 0.0, %v7809
        %7811 = vdwg.mxu0
        %7812 = vmatpush.bf16.msra.mxu0 %v7740
        %7813 = vmatpush.bf16.msra.mxu0 %v7736
        %7814 = vmatpush.bf16.msra.mxu0 %v7732
        %7815 = vmatpush.bf16.msra.mxu0 %v7728
        %7816 = vmatpush.bf16.msra.mxu0 %v7724
        %7817 = vmatpush.bf16.msra.mxu0 %v7720
        %7818 = vmatpush.bf16.msra.mxu0 %v7716
        %7819 = vmatpush.bf16.msra.mxu0 %v7712
        %7820 = vmatmul.bf16.gmra.mxu0 %v7151
        %v7821 = vpop.f32.mrf.mxu0
        %v7822 = vadd.f32 0.0, %v7821
        %v7823 = vpop.f32.mrf.mxu0
        %v7824 = vadd.f32 0.0, %v7823
        %7825 = vmatmul.bf16.gmra.mxu0 %v7152
        %v7826 = vpop.f32.mrf.mxu0
        %v7827 = vadd.f32 0.0, %v7826
        %v7828 = vpop.f32.mrf.mxu0
        %v7829 = vadd.f32 0.0, %v7828
        %7830 = vdwg.mxu0
        %7831 = vmatpush.bf16.msra.mxu0 %v7741
        %7832 = vmatpush.bf16.msra.mxu0 %v7737
        %7833 = vmatpush.bf16.msra.mxu0 %v7733
        %7834 = vmatpush.bf16.msra.mxu0 %v7729
        %7835 = vmatpush.bf16.msra.mxu0 %v7725
        %7836 = vmatpush.bf16.msra.mxu0 %v7721
        %7837 = vmatpush.bf16.msra.mxu0 %v7717
        %7838 = vmatpush.bf16.msra.mxu0 %v7713
        %7839 = vmatmul.bf16.gmra.mxu0 %v7151
        %v7840 = vpop.f32.mrf.mxu0
        %v7841 = vadd.f32 0.0, %v7840
        %v7842 = vpop.f32.mrf.mxu0
        %v7843 = vadd.f32 0.0, %v7842
        %7844 = vmatmul.bf16.gmra.mxu0 %v7152
        %v7845 = vpop.f32.mrf.mxu0
        %v7846 = vadd.f32 0.0, %v7845
        %v7847 = vpop.f32.mrf.mxu0
        %v7848 = vadd.f32 0.0, %v7847
        %7849 = vdwg.mxu0
        %v7850 = vmax.f32 %v7784, 0.0
        %v7851 = vmax.f32 %v7803, 0.0
        %v7852 = vmax.f32 %v7822, 0.0
        %v7853 = vmax.f32 %v7841, 0.0
        %v7854 = vmax.f32 %v7786, 0.0
        %v7855 = vmax.f32 %v7805, 0.0
        %v7856 = vmax.f32 %v7824, 0.0
        %v7857 = vmax.f32 %v7843, 0.0
        %v7858 = vmax.f32 %v7789, 0.0
        %v7859 = vmax.f32 %v7808, 0.0
        %v7860 = vmax.f32 %v7827, 0.0
        %v7861 = vmax.f32 %v7846, 0.0
        %v7862 = vmax.f32 %v7791, 0.0
        %v7863 = vmax.f32 %v7810, 0.0
        %v7864 = vmax.f32 %v7829, 0.0
        %v7865 = vmax.f32 %v7848, 0.0
        %v7866 = vpack.c.bf16 %v7854, %v7850
        %v7867 = vpack.c.bf16 %v7855, %v7851
        %v7868 = vpack.c.bf16 %v7856, %v7852
        %v7869 = vpack.c.bf16 %v7857, %v7853
        %v7870 = vpack.c.bf16 %v7862, %v7858
        %v7871 = vpack.c.bf16 %v7863, %v7859
        %v7872 = vpack.c.bf16 %v7864, %v7860
        %v7873 = vpack.c.bf16 %v7865, %v7861
        %7874 = vmatpush.bf16.msra.mxu0 0
        %7875 = vmatpush.bf16.msra.mxu0 0
        %7876 = vmatpush.bf16.msra.mxu0 0
        %7877 = vmatpush.bf16.msra.mxu0 0
        %7878 = vmatpush.bf16.msra.mxu0 0
        %7879 = vmatpush.bf16.msra.mxu0 0
        %7880 = vmatpush.bf16.msra.mxu0 %v7870
        %7881 = vmatpush.bf16.msra.mxu0 %v7866
        %7882 = vmatmul.bf16.gmra.mxu0 %v7484
        %v7883 = vpop.f32.mrf.mxu0
        %v7884 = vadd.f32 %v7456, %v7883
        %v7885 = vpop.f32.mrf.mxu0
        %v7886 = vadd.f32 %v7461, %v7885
        %7887 = vmatmul.bf16.gmra.mxu0 %v7487
        %v7888 = vpop.f32.mrf.mxu0
        %v7889 = vadd.f32 %v7466, %v7888
        %v7890 = vpop.f32.mrf.mxu0
        %v7891 = vadd.f32 %v7471, %v7890
        %7892 = vdwg.mxu0
        %7893 = vmatpush.bf16.msra.mxu0 0
        %7894 = vmatpush.bf16.msra.mxu0 0
        %7895 = vmatpush.bf16.msra.mxu0 0
        %7896 = vmatpush.bf16.msra.mxu0 0
        %7897 = vmatpush.bf16.msra.mxu0 0
        %7898 = vmatpush.bf16.msra.mxu0 0
        %7899 = vmatpush.bf16.msra.mxu0 %v7871
        %7900 = vmatpush.bf16.msra.mxu0 %v7867
        %7901 = vmatmul.bf16.gmra.mxu0 %v7484
        %v7902 = vpop.f32.mrf.mxu0
        %v7903 = vadd.f32 %v7456, %v7902
        %v7904 = vpop.f32.mrf.mxu0
        %v7905 = vadd.f32 %v7461, %v7904
        %7906 = vmatmul.bf16.gmra.mxu0 %v7487
        %v7907 = vpop.f32.mrf.mxu0
        %v7908 = vadd.f32 %v7466, %v7907
        %v7909 = vpop.f32.mrf.mxu0
        %v7910 = vadd.f32 %v7471, %v7909
        %7911 = vdwg.mxu0
        %7912 = vmatpush.bf16.msra.mxu0 0
        %7913 = vmatpush.bf16.msra.mxu0 0
        %7914 = vmatpush.bf16.msra.mxu0 0
        %7915 = vmatpush.bf16.msra.mxu0 0
        %7916 = vmatpush.bf16.msra.mxu0 0
        %7917 = vmatpush.bf16.msra.mxu0 0
        %7918 = vmatpush.bf16.msra.mxu0 %v7872
        %7919 = vmatpush.bf16.msra.mxu0 %v7868
        %7920 = vmatmul.bf16.gmra.mxu0 %v7484
        %v7921 = vpop.f32.mrf.mxu0
        %v7922 = vadd.f32 %v7456, %v7921
        %v7923 = vpop.f32.mrf.mxu0
        %v7924 = vadd.f32 %v7461, %v7923
        %7925 = vmatmul.bf16.gmra.mxu0 %v7487
        %v7926 = vpop.f32.mrf.mxu0
        %v7927 = vadd.f32 %v7466, %v7926
        %v7928 = vpop.f32.mrf.mxu0
        %v7929 = vadd.f32 %v7471, %v7928
        %7930 = vdwg.mxu0
        %7931 = vmatpush.bf16.msra.mxu0 0
        %7932 = vmatpush.bf16.msra.mxu0 0
        %7933 = vmatpush.bf16.msra.mxu0 0
        %7934 = vmatpush.bf16.msra.mxu0 0
        %7935 = vmatpush.bf16.msra.mxu0 0
        %7936 = vmatpush.bf16.msra.mxu0 0
        %7937 = vmatpush.bf16.msra.mxu0 %v7873
        %7938 = vmatpush.bf16.msra.mxu0 %v7869
        %7939 = vmatmul.bf16.gmra.mxu0 %v7484
        %v7940 = vpop.f32.mrf.mxu0
        %v7941 = vadd.f32 %v7456, %v7940
        %v7942 = vpop.f32.mrf.mxu0
        %v7943 = vadd.f32 %v7461, %v7942
        %7944 = vmatmul.bf16.gmra.mxu0 %v7487
        %v7945 = vpop.f32.mrf.mxu0
        %v7946 = vadd.f32 %v7466, %v7945
        %v7947 = vpop.f32.mrf.mxu0
        %v7948 = vadd.f32 %v7471, %v7947
        %7949 = vdwg.mxu0
        %v7950 = vpack.c.bf16 %v7903, %v7884
        %v7951 = vpack.c.bf16 %v7941, %v7922
        %v7952 = vpack.c.bf16 %v7905, %v7886
        %v7953 = vpack.c.bf16 %v7943, %v7924
        %v7954 = vpack.c.bf16 %v7908, %v7889
        %v7955 = vpack.c.bf16 %v7946, %v7927
        %v7956 = vpack.c.bf16 %v7910, %v7891
        %v7957 = vpack.c.bf16 %v7948, %v7929
        %s7958 = scalar_lea.vmem %s271, 16 [#allocation7]
        %7959 = vst [vmem:[%s7958] sm:$0xff] %v7950
        %7960 = vst [vmem:[%s7958 + $0x8] sm:$0xff] %v7951
        %7961 = vst [vmem:[%s7958 + $0x20] sm:$0xff] %v7952
        %7962 = vst [vmem:[%s7958 + $0x28] sm:$0xff] %v7953
        %7963 = vst [vmem:[%s7958 + $0x40] sm:$0xff] %v7954
        %7964 = vst [vmem:[%s7958 + $0x48] sm:$0xff] %v7955
        %7965 = vst [vmem:[%s7958 + $0x60] sm:$0xff] %v7956
        %7966 = vst [vmem:[%s7958 + $0x68] sm:$0xff] %v7957
        %s7967 = sand.u32 %s162, 1
        %s7968 = scalar_lea.sflag [#allocation6], %s7967
        %s7969 = sand.u32 %s162, 1
        %s7970 = smul.addr %s7969, 128
        %s7971 = scalar_lea.vmem [#allocation7], %s7970
        // Predicated region
        $region49: #{tpu_custom_call.1} parent=43 // pred_check
          %p7972 = pneg %p172
        $region50: #{tpu_custom_call.1} parent=43 // pred_check_branch
          %7974 = sbr.rel (%p7972) target = $region52
        $region51: #{tpu_custom_call.1} parent=43 // pred_region
          %7976 = vsyncadd %s7968, 0
          %s7977 = smul.addr %s23, 32
          %s7978 = smul.addr %s7977, 4
          %s7979 = scalar_lea.hbm %s6, %s7978
          %s7980 = sshll.u32 %s7971, 4
          %s7981 = int_to_ptr.vmem [resolvable:$true] %s7980
          %s7982 = sshll.u32 %s7979, 4
          %s7983 = int_to_ptr.hbm [resolvable:$true] %s7982
          %7988 = dma.vmem_to_hbm [thread:$0]  %s7981, 2048, %s7983, %s7968, 512, 512, 32
        $region52: #{tpu_custom_call.1} parent=43 // pred_fallthru
          _
      $region44: #{tpu_custom_call.1} parent=5 // pred_fallthru
        _
      %p7989 = scmp.le.s32.totalorder 2, %s18
      // Predicated region
      $region53: #{tpu_custom_call.1} parent=5 // pred_check
        %p7990 = pneg %p7989
      $region54: #{tpu_custom_call.1} parent=5 // pred_check_branch
        %7992 = sbr.rel (%p7990) target = $region56
      $region55: #{tpu_custom_call.1} parent=5 // pred_region
        %s7993 = ssub.s32 %s18, 2
        // Predicated region
        $region57: #{tpu_custom_call.1} parent=55 // pred_check
          %p7994 = pneg %p178
        $region58: #{tpu_custom_call.1} parent=55 // pred_check_branch
          %7996 = sbr.rel (%p7994) target = $region60
        $region59: #{tpu_custom_call.1} parent=55 // pred_region
          %s7997 = sand.u32 %s163, 1
          %s7998 = scalar_lea.sflag [#allocation6], %s7997
          %s7999 = sand.u32 %s163, 1
          %s8000 = smul.addr %s7999, 128
          %s8001 = scalar_lea.vmem [#allocation7], %s8000
          %8003 = dma.done %s7998, 2048
        $region60: #{tpu_custom_call.1} parent=55 // pred_fallthru
          _
      $region56: #{tpu_custom_call.1} parent=5 // pred_fallthru
        _
    $region6: #{tpu_custom_call.1} parent=1 // loop_footer
      %s22 = sadd.s32 1, %s18
    $region7: #{tpu_custom_call.1} parent=1 // loop_footer_branch
      %17 = sbr.rel target = $region3
    $region8: #{tpu_custom_call.1} parent=1 // loop_exit
      _
    %8004 = vsyncpa [#allocation5], 1
    %s8005 = scalar_lea.sflag [#allocation5], 1
    %8006 = vsyncpa %s8005, 1
    %8007 = vsyncpa [#allocation6], 1
    %s8008 = scalar_lea.sflag [#allocation6], 1
    %8009 = vsyncpa %s8008, 1

</llo_original>
